<compile_context>
chip_gen: v6e
topology: v6e:2x2x1
jax: 0.10.0
libtpu: 0.0.40
codegen_flags: <defaults>
</compile_context>

<pallas_src>
import functools
import math

import jax
import jax.numpy as jnp
from jax.experimental import pallas as pl
from jax.experimental.pallas import tpu as pltpu


# Static conv geometry of the module (kernel, stride, pad) and per-branch Cout.
_CONV_GEOM = ((8, 4, 1), (4, 2, 1), (3, 1, 1))
_CONV_CH = (32, 64, 64)
_BN_EPS = 1e-5
_GAIN = math.sqrt(2.0)   # nn.init.calculate_gain('relu')


# ----------------------------------------------------------------------------
# Pallas kernels
# ----------------------------------------------------------------------------
def conv_bn_relu_kernel(p_ref, w_ref, g_ref, b_ref, o_ref, *, eps):
    """Fused conv-as-GEMM + training-mode BatchNorm (batch stats) + ReLU.

    p_ref: (M, K) bf16 im2col patches (rows = N*OH*OW),
    w_ref: (K, C) bf16 weights, g_ref/b_ref: (1, C) f32 BN gamma/beta,
    o_ref: (M, C) bf16 output.
    """
    y = jnp.dot(p_ref[...].astype(jnp.bfloat16), w_ref[...],
                preferred_element_type=jnp.float32)                # (M, C) f32
    mean = jnp.mean(y, axis=0, keepdims=True)                      # (1, C)
    var = jnp.mean(jnp.square(y - mean), axis=0, keepdims=True)    # biased var
    yn = (y - mean) * jax.lax.rsqrt(var + eps)
    yn = yn * g_ref[...] + b_ref[...]
    o_ref[...] = jnp.maximum(yn, 0.0).astype(o_ref.dtype)


def linear_kernel(x_ref, w_ref, b_ref, o_ref, *, relu):
    """Dense: y = x @ w + b (+ optional ReLU).  Full M/K block, tiled over N."""
    y = jnp.dot(x_ref[...].astype(jnp.bfloat16), w_ref[...],
                preferred_element_type=jnp.float32)
    y = y + b_ref[...]
    if relu:
        y = jnp.maximum(y, 0.0)
    o_ref[...] = y.astype(o_ref.dtype)


# ----------------------------------------------------------------------------
# Pallas wrappers
# ----------------------------------------------------------------------------
def conv_bn_relu_pallas(patches, w_gemm, gamma, beta, *, eps=_BN_EPS):
    """patches: (M, K) bf16, w_gemm: (K, C) bf16, gamma/beta: (1, C) f32."""
    M, K = patches.shape
    _, C = w_gemm.shape
    return pl.pallas_call(
        functools.partial(conv_bn_relu_kernel, eps=eps),
        out_shape=jax.ShapeDtypeStruct((M, C), jnp.bfloat16),
        grid_spec=pltpu.PrefetchScalarGridSpec(
            num_scalar_prefetch=0,
            grid=(1,),
            in_specs=[
                pl.BlockSpec((M, K), lambda i: (0, 0)),
                pl.BlockSpec((K, C), lambda i: (0, 0)),
                pl.BlockSpec((1, C), lambda i: (0, 0)),
                pl.BlockSpec((1, C), lambda i: (0, 0)),
            ],
            out_specs=pl.BlockSpec((M, C), lambda i: (0, 0)),
        ),
        compiler_params=pltpu.CompilerParams(
            dimension_semantics=("arbitrary",)),
    )(patches, w_gemm, gamma, beta)


def linear_pallas(x, w, b, *, relu=False, tn=256, out_dtype=jnp.float32):
    """x: (M, K), w: (K, N) bf16, b: (N,) f32 -> (M, N) out_dtype."""
    M, K = x.shape
    _, N = w.shape
    assert N % tn == 0, (N, tn)
    return pl.pallas_call(
        functools.partial(linear_kernel, relu=relu),
        out_shape=jax.ShapeDtypeStruct((M, N), out_dtype),
        grid_spec=pltpu.PrefetchScalarGridSpec(
            num_scalar_prefetch=0,
            grid=(N // tn,),
            in_specs=[
                pl.BlockSpec((M, K), lambda j: (0, 0)),
                pl.BlockSpec((K, tn), lambda j: (0, j)),
                pl.BlockSpec((1, tn), lambda j: (0, j)),
            ],
            out_specs=pl.BlockSpec((M, tn), lambda j: (0, j)),
        ),
        compiler_params=pltpu.CompilerParams(
            dimension_semantics=("parallel",)),
    )(x, w, b.reshape(1, N))


# ----------------------------------------------------------------------------
# im2col: static kernel-position loop of strided slices (no gather/transpose).
# Column order is (kh, kw, cin) -- weights are flattened to match.
# ----------------------------------------------------------------------------
def _im2col_nhwc(x, k, stride, pad):
    """x: (N, H, W, C) -> (N*OH*OW, k*k*C), OH, OW."""
    N, H, W, C = x.shape
    if pad:
        x = jnp.pad(x, ((0, 0), (pad, pad), (pad, pad), (0, 0)))
    Hp, Wp = H + 2 * pad, W + 2 * pad
    oh = (Hp - k) // stride + 1
    ow = (Wp - k) // stride + 1
    cols = []
    for i in range(k):
        for j in range(k):
            sl = jax.lax.slice(
                x, (0, i, j, 0),
                (N, i + (oh - 1) * stride + 1, j + (ow - 1) * stride + 1, C),
                (1, stride, stride, 1))          # (N, oh, ow, C)
            cols.append(sl)
    patches = jnp.concatenate(cols, axis=-1)     # (N, oh, ow, k*k*C)
    return patches.reshape(N * oh * ow, k * k * C), oh, ow


# ----------------------------------------------------------------------------
# Parameter construction (orthogonal init with relu gain, zero bias; BN gamma=1
# beta=0 -- mirrors the PyTorch _initialize_weights scheme).  Conv weights are
# pre-fused across the two branches and stored in GEMM layout (bf16).
# ----------------------------------------------------------------------------
def _ortho(key, rows, cols):
    return jax.nn.initializers.orthogonal(scale=_GAIN)(
        key, (rows, cols), jnp.float32)


def _conv_w_gemm(key, cin, cout, k):
    """Orthogonal conv weight in (KH, KW, Cin, Cout) layout."""
    w = _ortho(key, cout, cin * k * k).reshape(cout, cin, k, k)
    return jnp.transpose(w, (2, 3, 1, 0))        # (KH, KW, Cin, Cout)


def _fuse_shared_input(wp, wt):
    """Conv1: both branches share the raw input -> concat along Cout."""
    w = jnp.concatenate([wp, wt], axis=-1)       # (KH, KW, Cin, Cp+Ct)
    kh, kw, cin, cout = w.shape
    return w.reshape(kh * kw * cin, cout).astype(jnp.bfloat16)


def _fuse_block_diag(wp, wt):
    """Conv2/3: block-diagonal weights so one GEMM serves both branches."""
    kh, kw, cpi, cpo = wp.shape
    _, _, cti, cto = wt.shape
    w = jnp.zeros((kh, kw, cpi + cti, cpo + cto), jnp.float32)
    w = w.at[:, :, :cpi, :cpo].set(wp)
    w = w.at[:, :, cpi:, cpo:].set(wt)
    return w.reshape(kh * kw * (cpi + cti), cpo + cto).astype(jnp.bfloat16)


def make_linear_params(key, fin, fout):
    w = _ortho(key, fout, fin)                   # torch layout (out, in)
    return dict(w=w.T.astype(jnp.bfloat16),      # stored as (in, out) bf16
                b=jnp.zeros((fout,), jnp.float32))


def make_rnd_params(key, c, h, w):
    # spatial sizes after the conv stack
    sh, sw = h, w
    for (k, s, p) in _CONV_GEOM:
        sh = (sh + 2 * p - k) // s + 1
        sw = (sw + 2 * p - k) // s + 1
    flat = _CONV_CH[-1] * sh * sw

    keys = iter(jax.random.split(key, 10))
    cins = (c,) + _CONV_CH[:-1]

    wpred = [_conv_w_gemm(next(keys), ci, co, k)
             for ci, co, (k, _, _) in zip(cins, _CONV_CH, _CONV_GEOM)]
    wtarg = [_conv_w_gemm(next(keys), ci, co, k)
             for ci, co, (k, _, _) in zip(cins, _CONV_CH, _CONV_GEOM)]

    conv_w = [_fuse_shared_input(wpred[0], wtarg[0]),
              _fuse_block_diag(wpred[1], wtarg[1]),
              _fuse_block_diag(wpred[2], wtarg[2])]
    conv_gamma = [jnp.ones((1, 2 * co), jnp.float32) for co in _CONV_CH]
    conv_beta = [jnp.zeros((1, 2 * co), jnp.float32) for co in _CONV_CH]

    predictor_dense = [make_linear_params(next(keys), flat, 512),
                       make_linear_params(next(keys), 512, 512),
                       make_linear_params(next(keys), 512, 512)]
    target_dense = [make_linear_params(next(keys), flat, 512)]

    return dict(conv_w=conv_w, conv_gamma=conv_gamma, conv_beta=conv_beta,
                predictor_dense=predictor_dense, target_dense=target_dense)


# ----------------------------------------------------------------------------
# Forward
# ----------------------------------------------------------------------------
def _rnd_forward_impl(x, params):
    N = x.shape[0]
    # Cast once to bf16 (GEMM operand dtype) so the k*k-duplicated im2col
    # patch slabs and inter-layer activations move half the HBM bytes.
    h = jnp.transpose(x.astype(jnp.bfloat16), (0, 2, 3, 1))   # NCHW -> NHWC

    # Shared conv stack: channels [0:Cb) = predictor, [Cb:2Cb) = target.
    # Conv bias is skipped (zero-init, cancelled by BN mean subtraction).
    for li, (k, s, p) in enumerate(_CONV_GEOM):
        patches, oh, ow = _im2col_nhwc(h, k, s, p)
        y = conv_bn_relu_pallas(patches, params["conv_w"][li],
                                params["conv_gamma"][li],
                                params["conv_beta"][li])
        h = y.reshape(N, oh, ow, y.shape[-1])

    cb = h.shape[-1] // 2

    def flatten_torch(z):                        # torch NCHW flatten order
        return jnp.transpose(z, (0, 3, 1, 2)).reshape(N, -1)

    pred_feat = flatten_torch(h[..., :cb])
    targ_feat = flatten_torch(h[..., cb:])

    # Predictor head: Linear+ReLU, Linear+ReLU, Linear.  Intermediates bf16,
    # final features f32.
    dps = params["predictor_dense"]
    pred_feat = linear_pallas(pred_feat, dps[0]["w"], dps[0]["b"],
                              relu=True, out_dtype=jnp.bfloat16)
    pred_feat = linear_pallas(pred_feat, dps[1]["w"], dps[1]["b"],
                              relu=True, out_dtype=jnp.bfloat16)
    pred_feat = linear_pallas(pred_feat, dps[2]["w"], dps[2]["b"],
                              relu=False, out_dtype=jnp.float32)

    tp = params["target_dense"][0]
    targ_feat = linear_pallas(targ_feat, tp["w"], tp["b"],
                              relu=False, out_dtype=jnp.float32)

    return pred_feat, targ_feat


rnd_forward = jax.jit(_rnd_forward_impl)


# ----------------------------------------------------------------------------
if __name__ == "__main__":
    # small shapes consistent with the module's conv stack:
    # (N=2, C=4, H=W=42) -> conv1: 10x10 -> conv2: 5x5 -> conv3: 5x5 -> flat 1600
    N, C, H, W = 2, 4, 42, 42
    key = jax.random.PRNGKey(0)
    kx, kp = jax.random.split(key)
    x = jax.random.normal(kx, (N, C, H, W), jnp.float32)

    params = make_rnd_params(kp, C, H, W)

    predict_feature, target_feature = rnd_forward(x, params)
    jax.block_until_ready((predict_feature, target_feature))

    assert predict_feature.shape == (N, 512), predict_feature.shape
    assert target_feature.shape == (N, 512), target_feature.shape
    assert predict_feature.dtype == jnp.float32
    assert target_feature.dtype == jnp.float32
    assert bool(jnp.all(jnp.isfinite(predict_feature)))
    assert bool(jnp.all(jnp.isfinite(target_feature)))
    # predictor and target branches must produce distinct features
    assert bool(jnp.any(jnp.abs(predict_feature - target_feature) > 1e-3))
    print("KERNEL_OK")
</pallas_src>

<mosaic_0001>
module attributes {stable_mosaic.version = 11 : i64} {
  func.func @conv_bn_relu_kernel(%arg0: i32, %arg1: memref<200x256xbf16, #tpu.memory_space<vmem>>, %arg2: memref<256x64xbf16, #tpu.memory_space<vmem>>, %arg3: memref<1x64xf32, #tpu.memory_space<vmem>>, %arg4: memref<1x64xf32, #tpu.memory_space<vmem>>, %arg5: memref<200x64xbf16, #tpu.memory_space<vmem>>) attributes {dimension_semantics = [#tpu.dimension_semantics<arbitrary>], iteration_bounds = array<i64: 1>, scalar_prefetch = 0 : i64, scratch_operands = 0 : i64, tpu.core_type = #tpu.core_type<tc>, window_params = [{pipeline_mode = #tpu.pipeline_mode<synchronous>, transform_indices = @transform_0, window_bounds = array<i64: 200, 256>}, {pipeline_mode = #tpu.pipeline_mode<synchronous>, transform_indices = @transform_1, window_bounds = array<i64: 256, 64>}, {pipeline_mode = #tpu.pipeline_mode<synchronous>, transform_indices = @transform_2, window_bounds = array<i64: 1, 64>}, {pipeline_mode = #tpu.pipeline_mode<synchronous>, transform_indices = @transform_3, window_bounds = array<i64: 1, 64>}, {pipeline_mode = #tpu.pipeline_mode<synchronous>, transform_indices = @transform_4, window_bounds = array<i64: 200, 64>}]} {
    %c0 = arith.constant 0 : index
    %c0_0 = arith.constant 0 : index
    %0 = vector.load %arg1[%c0, %c0_0] : memref<200x256xbf16, #tpu.memory_space<vmem>>, vector<200x256xbf16>
    %c0_1 = arith.constant 0 : index
    %c0_2 = arith.constant 0 : index
    %1 = vector.load %arg2[%c0_1, %c0_2] : memref<256x64xbf16, #tpu.memory_space<vmem>>, vector<256x64xbf16>
    %cst = arith.constant dense<0.000000e+00> : vector<200x64xf32>
    %2 = tpu.matmul %0, %1, %cst {dimension_numbers = #tpu.dot_dimension_numbers<[1], [0], [0], [1], [0, 0, 1, 1], [], []>} : vector<200x256xbf16>, vector<256x64xbf16>, vector<200x64xf32> -> vector<200x64xf32>
    %cst_3 = arith.constant dense<0.000000e+00> : vector<64xf32>
    %3 = vector.multi_reduction <add>, %2, %cst_3 [0] : vector<200x64xf32> to vector<64xf32>
    %4 = vector.shape_cast %3 : vector<64xf32> to vector<1x64xf32>
    %cst_4 = arith.constant 2.000000e+02 : f32
    %5 = vector.broadcast %cst_4 : f32 to vector<1x64xf32>
    %6 = arith.divf %4, %5 : vector<1x64xf32>
    %7 = vector.broadcast %6 : vector<1x64xf32> to vector<200x64xf32>
    %8 = arith.subf %2, %7 : vector<200x64xf32>
    %9 = arith.mulf %8, %8 : vector<200x64xf32>
    %cst_5 = arith.constant dense<0.000000e+00> : vector<64xf32>
    %10 = vector.multi_reduction <add>, %9, %cst_5 [0] : vector<200x64xf32> to vector<64xf32>
    %11 = vector.shape_cast %10 : vector<64xf32> to vector<1x64xf32>
    %cst_6 = arith.constant 2.000000e+02 : f32
    %12 = vector.broadcast %cst_6 : f32 to vector<1x64xf32>
    %13 = arith.divf %11, %12 : vector<1x64xf32>
    %14 = vector.broadcast %6 : vector<1x64xf32> to vector<200x64xf32>
    %15 = arith.subf %2, %14 : vector<200x64xf32>
    %cst_7 = arith.constant 9.99999974E-6 : f32
    %16 = vector.broadcast %cst_7 : f32 to vector<1x64xf32>
    %17 = arith.addf %13, %16 : vector<1x64xf32>
    %18 = math.rsqrt %17 : vector<1x64xf32>
    %19 = vector.broadcast %18 : vector<1x64xf32> to vector<200x64xf32>
    %20 = arith.mulf %15, %19 : vector<200x64xf32>
    %c0_8 = arith.constant 0 : index
    %c0_9 = arith.constant 0 : index
    %21 = vector.load %arg3[%c0_8, %c0_9] : memref<1x64xf32, #tpu.memory_space<vmem>>, vector<1x64xf32>
    %22 = vector.broadcast %21 : vector<1x64xf32> to vector<200x64xf32>
    %23 = arith.mulf %20, %22 : vector<200x64xf32>
    %c0_10 = arith.constant 0 : index
    %c0_11 = arith.constant 0 : index
    %24 = vector.load %arg4[%c0_10, %c0_11] : memref<1x64xf32, #tpu.memory_space<vmem>>, vector<1x64xf32>
    %25 = vector.broadcast %24 : vector<1x64xf32> to vector<200x64xf32>
    %26 = arith.addf %23, %25 : vector<200x64xf32>
    %cst_12 = arith.constant 0.000000e+00 : f32
    %27 = vector.broadcast %cst_12 : f32 to vector<200x64xf32>
    %28 = arith.maximumf %26, %27 : vector<200x64xf32>
    %29 = arith.truncf %28 : vector<200x64xf32> to vector<200x64xbf16>
    %c0_13 = arith.constant 0 : index
    %c0_14 = arith.constant 0 : index
    %30 = vector.load %arg5[%c0_13, %c0_14] : memref<200x64xbf16, #tpu.memory_space<vmem>>, vector<200x64xbf16>
    tpu.vector_store %arg5[%c0_13, %c0_14], %29 {strides = array<i32>} : memref<200x64xbf16, #tpu.memory_space<vmem>>, vector<200x64xbf16>,
    return
  }
  func.func @transform_0(%arg0: i32) -> (i32, i32) {
    %c0_i32 = arith.constant 0 : i32
    %c0_i32_0 = arith.constant 0 : i32
    %c0_i32_1 = arith.constant 0 : i32
    return %c0_i32, %c0_i32_0 : i32, i32
  }
  func.func @transform_1(%arg0: i32) -> (i32, i32) {
    %c0_i32 = arith.constant 0 : i32
    %c0_i32_0 = arith.constant 0 : i32
    %c0_i32_1 = arith.constant 0 : i32
    return %c0_i32, %c0_i32_0 : i32, i32
  }
  func.func @transform_2(%arg0: i32) -> (i32, i32) {
    %c0_i32 = arith.constant 0 : i32
    %c0_i32_0 = arith.constant 0 : i32
    %c0_i32_1 = arith.constant 0 : i32
    return %c0_i32, %c0_i32_0 : i32, i32
  }
  func.func @transform_3(%arg0: i32) -> (i32, i32) {
    %c0_i32 = arith.constant 0 : i32
    %c0_i32_0 = arith.constant 0 : i32
    %c0_i32_1 = arith.constant 0 : i32
    return %c0_i32, %c0_i32_0 : i32, i32
  }
  func.func @transform_4(%arg0: i32) -> (i32, i32) {
    %c0_i32 = arith.constant 0 : i32
    %c0_i32_0 = arith.constant 0 : i32
    %c0_i32_1 = arith.constant 0 : i32
    return %c0_i32, %c0_i32_0 : i32, i32
  }
}

module attributes {stable_mosaic.version = 11 : i64} {
  func.func @conv_bn_relu_kernel(%arg0: i32, %arg1: memref<50x1024xbf16, #tpu.memory_space<vmem>>, %arg2: memref<1024x128xbf16, #tpu.memory_space<vmem>>, %arg3: memref<1x128xf32, #tpu.memory_space<vmem>>, %arg4: memref<1x128xf32, #tpu.memory_space<vmem>>, %arg5: memref<50x128xbf16, #tpu.memory_space<vmem>>) attributes {dimension_semantics = [#tpu.dimension_semantics<arbitrary>], iteration_bounds = array<i64: 1>, scalar_prefetch = 0 : i64, scratch_operands = 0 : i64, tpu.core_type = #tpu.core_type<tc>, window_params = [{pipeline_mode = #tpu.pipeline_mode<synchronous>, transform_indices = @transform_0, window_bounds = array<i64: 50, 1024>}, {pipeline_mode = #tpu.pipeline_mode<synchronous>, transform_indices = @transform_1, window_bounds = array<i64: 1024, 128>}, {pipeline_mode = #tpu.pipeline_mode<synchronous>, transform_indices = @transform_2, window_bounds = array<i64: 1, 128>}, {pipeline_mode = #tpu.pipeline_mode<synchronous>, transform_indices = @transform_3, window_bounds = array<i64: 1, 128>}, {pipeline_mode = #tpu.pipeline_mode<synchronous>, transform_indices = @transform_4, window_bounds = array<i64: 50, 128>}]} {
    %c0 = arith.constant 0 : index
    %c0_0 = arith.constant 0 : index
    %0 = vector.load %arg1[%c0, %c0_0] : memref<50x1024xbf16, #tpu.memory_space<vmem>>, vector<50x1024xbf16>
    %c0_1 = arith.constant 0 : index
    %c0_2 = arith.constant 0 : index
    %1 = vector.load %arg2[%c0_1, %c0_2] : memref<1024x128xbf16, #tpu.memory_space<vmem>>, vector<1024x128xbf16>
    %cst = arith.constant dense<0.000000e+00> : vector<50x128xf32>
    %2 = tpu.matmul %0, %1, %cst {dimension_numbers = #tpu.dot_dimension_numbers<[1], [0], [0], [1], [0, 0, 1, 1], [], []>} : vector<50x1024xbf16>, vector<1024x128xbf16>, vector<50x128xf32> -> vector<50x128xf32>
    %cst_3 = arith.constant dense<0.000000e+00> : vector<128xf32>
    %3 = vector.multi_reduction <add>, %2, %cst_3 [0] : vector<50x128xf32> to vector<128xf32>
    %4 = vector.shape_cast %3 : vector<128xf32> to vector<1x128xf32>
    %cst_4 = arith.constant 5.000000e+01 : f32
    %5 = vector.broadcast %cst_4 : f32 to vector<1x128xf32>
    %6 = arith.divf %4, %5 : vector<1x128xf32>
    %7 = vector.broadcast %6 : vector<1x128xf32> to vector<50x128xf32>
    %8 = arith.subf %2, %7 : vector<50x128xf32>
    %9 = arith.mulf %8, %8 : vector<50x128xf32>
    %cst_5 = arith.constant dense<0.000000e+00> : vector<128xf32>
    %10 = vector.multi_reduction <add>, %9, %cst_5 [0] : vector<50x128xf32> to vector<128xf32>
    %11 = vector.shape_cast %10 : vector<128xf32> to vector<1x128xf32>
    %cst_6 = arith.constant 5.000000e+01 : f32
    %12 = vector.broadcast %cst_6 : f32 to vector<1x128xf32>
    %13 = arith.divf %11, %12 : vector<1x128xf32>
    %14 = vector.broadcast %6 : vector<1x128xf32> to vector<50x128xf32>
    %15 = arith.subf %2, %14 : vector<50x128xf32>
    %cst_7 = arith.constant 9.99999974E-6 : f32
    %16 = vector.broadcast %cst_7 : f32 to vector<1x128xf32>
    %17 = arith.addf %13, %16 : vector<1x128xf32>
    %18 = math.rsqrt %17 : vector<1x128xf32>
    %19 = vector.broadcast %18 : vector<1x128xf32> to vector<50x128xf32>
    %20 = arith.mulf %15, %19 : vector<50x128xf32>
    %c0_8 = arith.constant 0 : index
    %c0_9 = arith.constant 0 : index
    %21 = vector.load %arg3[%c0_8, %c0_9] : memref<1x128xf32, #tpu.memory_space<vmem>>, vector<1x128xf32>
    %22 = vector.broadcast %21 : vector<1x128xf32> to vector<50x128xf32>
    %23 = arith.mulf %20, %22 : vector<50x128xf32>
    %c0_10 = arith.constant 0 : index
    %c0_11 = arith.constant 0 : index
    %24 = vector.load %arg4[%c0_10, %c0_11] : memref<1x128xf32, #tpu.memory_space<vmem>>, vector<1x128xf32>
    %25 = vector.broadcast %24 : vector<1x128xf32> to vector<50x128xf32>
    %26 = arith.addf %23, %25 : vector<50x128xf32>
    %cst_12 = arith.constant 0.000000e+00 : f32
    %27 = vector.broadcast %cst_12 : f32 to vector<50x128xf32>
    %28 = arith.maximumf %26, %27 : vector<50x128xf32>
    %29 = arith.truncf %28 : vector<50x128xf32> to vector<50x128xbf16>
    %c0_13 = arith.constant 0 : index
    %c0_14 = arith.constant 0 : index
    %30 = vector.load %arg5[%c0_13, %c0_14] : memref<50x128xbf16, #tpu.memory_space<vmem>>, vector<50x128xbf16>
    tpu.vector_store %arg5[%c0_13, %c0_14], %29 {strides = array<i32>} : memref<50x128xbf16, #tpu.memory_space<vmem>>, vector<50x128xbf16>,
    return
  }
  func.func @transform_0(%arg0: i32) -> (i32, i32) {
    %c0_i32 = arith.constant 0 : i32
    %c0_i32_0 = arith.constant 0 : i32
    %c0_i32_1 = arith.constant 0 : i32
    return %c0_i32, %c0_i32_0 : i32, i32
  }
  func.func @transform_1(%arg0: i32) -> (i32, i32) {
    %c0_i32 = arith.constant 0 : i32
    %c0_i32_0 = arith.constant 0 : i32
    %c0_i32_1 = arith.constant 0 : i32
    return %c0_i32, %c0_i32_0 : i32, i32
  }
  func.func @transform_2(%arg0: i32) -> (i32, i32) {
    %c0_i32 = arith.constant 0 : i32
    %c0_i32_0 = arith.constant 0 : i32
    %c0_i32_1 = arith.constant 0 : i32
    return %c0_i32, %c0_i32_0 : i32, i32
  }
  func.func @transform_3(%arg0: i32) -> (i32, i32) {
    %c0_i32 = arith.constant 0 : i32
    %c0_i32_0 = arith.constant 0 : i32
    %c0_i32_1 = arith.constant 0 : i32
    return %c0_i32, %c0_i32_0 : i32, i32
  }
  func.func @transform_4(%arg0: i32) -> (i32, i32) {
    %c0_i32 = arith.constant 0 : i32
    %c0_i32_0 = arith.constant 0 : i32
    %c0_i32_1 = arith.constant 0 : i32
    return %c0_i32, %c0_i32_0 : i32, i32
  }
}

module attributes {stable_mosaic.version = 11 : i64} {
  func.func @conv_bn_relu_kernel(%arg0: i32, %arg1: memref<50x1152xbf16, #tpu.memory_space<vmem>>, %arg2: memref<1152x128xbf16, #tpu.memory_space<vmem>>, %arg3: memref<1x128xf32, #tpu.memory_space<vmem>>, %arg4: memref<1x128xf32, #tpu.memory_space<vmem>>, %arg5: memref<50x128xbf16, #tpu.memory_space<vmem>>) attributes {dimension_semantics = [#tpu.dimension_semantics<arbitrary>], iteration_bounds = array<i64: 1>, scalar_prefetch = 0 : i64, scratch_operands = 0 : i64, tpu.core_type = #tpu.core_type<tc>, window_params = [{pipeline_mode = #tpu.pipeline_mode<synchronous>, transform_indices = @transform_0, window_bounds = array<i64: 50, 1152>}, {pipeline_mode = #tpu.pipeline_mode<synchronous>, transform_indices = @transform_1, window_bounds = array<i64: 1152, 128>}, {pipeline_mode = #tpu.pipeline_mode<synchronous>, transform_indices = @transform_2, window_bounds = array<i64: 1, 128>}, {pipeline_mode = #tpu.pipeline_mode<synchronous>, transform_indices = @transform_3, window_bounds = array<i64: 1, 128>}, {pipeline_mode = #tpu.pipeline_mode<synchronous>, transform_indices = @transform_4, window_bounds = array<i64: 50, 128>}]} {
    %c0 = arith.constant 0 : index
    %c0_0 = arith.constant 0 : index
    %0 = vector.load %arg1[%c0, %c0_0] : memref<50x1152xbf16, #tpu.memory_space<vmem>>, vector<50x1152xbf16>
    %c0_1 = arith.constant 0 : index
    %c0_2 = arith.constant 0 : index
    %1 = vector.load %arg2[%c0_1, %c0_2] : memref<1152x128xbf16, #tpu.memory_space<vmem>>, vector<1152x128xbf16>
    %cst = arith.constant dense<0.000000e+00> : vector<50x128xf32>
    %2 = tpu.matmul %0, %1, %cst {dimension_numbers = #tpu.dot_dimension_numbers<[1], [0], [0], [1], [0, 0, 1, 1], [], []>} : vector<50x1152xbf16>, vector<1152x128xbf16>, vector<50x128xf32> -> vector<50x128xf32>
    %cst_3 = arith.constant dense<0.000000e+00> : vector<128xf32>
    %3 = vector.multi_reduction <add>, %2, %cst_3 [0] : vector<50x128xf32> to vector<128xf32>
    %4 = vector.shape_cast %3 : vector<128xf32> to vector<1x128xf32>
    %cst_4 = arith.constant 5.000000e+01 : f32
    %5 = vector.broadcast %cst_4 : f32 to vector<1x128xf32>
    %6 = arith.divf %4, %5 : vector<1x128xf32>
    %7 = vector.broadcast %6 : vector<1x128xf32> to vector<50x128xf32>
    %8 = arith.subf %2, %7 : vector<50x128xf32>
    %9 = arith.mulf %8, %8 : vector<50x128xf32>
    %cst_5 = arith.constant dense<0.000000e+00> : vector<128xf32>
    %10 = vector.multi_reduction <add>, %9, %cst_5 [0] : vector<50x128xf32> to vector<128xf32>
    %11 = vector.shape_cast %10 : vector<128xf32> to vector<1x128xf32>
    %cst_6 = arith.constant 5.000000e+01 : f32
    %12 = vector.broadcast %cst_6 : f32 to vector<1x128xf32>
    %13 = arith.divf %11, %12 : vector<1x128xf32>
    %14 = vector.broadcast %6 : vector<1x128xf32> to vector<50x128xf32>
    %15 = arith.subf %2, %14 : vector<50x128xf32>
    %cst_7 = arith.constant 9.99999974E-6 : f32
    %16 = vector.broadcast %cst_7 : f32 to vector<1x128xf32>
    %17 = arith.addf %13, %16 : vector<1x128xf32>
    %18 = math.rsqrt %17 : vector<1x128xf32>
    %19 = vector.broadcast %18 : vector<1x128xf32> to vector<50x128xf32>
    %20 = arith.mulf %15, %19 : vector<50x128xf32>
    %c0_8 = arith.constant 0 : index
    %c0_9 = arith.constant 0 : index
    %21 = vector.load %arg3[%c0_8, %c0_9] : memref<1x128xf32, #tpu.memory_space<vmem>>, vector<1x128xf32>
    %22 = vector.broadcast %21 : vector<1x128xf32> to vector<50x128xf32>
    %23 = arith.mulf %20, %22 : vector<50x128xf32>
    %c0_10 = arith.constant 0 : index
    %c0_11 = arith.constant 0 : index
    %24 = vector.load %arg4[%c0_10, %c0_11] : memref<1x128xf32, #tpu.memory_space<vmem>>, vector<1x128xf32>
    %25 = vector.broadcast %24 : vector<1x128xf32> to vector<50x128xf32>
    %26 = arith.addf %23, %25 : vector<50x128xf32>
    %cst_12 = arith.constant 0.000000e+00 : f32
    %27 = vector.broadcast %cst_12 : f32 to vector<50x128xf32>
    %28 = arith.maximumf %26, %27 : vector<50x128xf32>
    %29 = arith.truncf %28 : vector<50x128xf32> to vector<50x128xbf16>
    %c0_13 = arith.constant 0 : index
    %c0_14 = arith.constant 0 : index
    %30 = vector.load %arg5[%c0_13, %c0_14] : memref<50x128xbf16, #tpu.memory_space<vmem>>, vector<50x128xbf16>
    tpu.vector_store %arg5[%c0_13, %c0_14], %29 {strides = array<i32>} : memref<50x128xbf16, #tpu.memory_space<vmem>>, vector<50x128xbf16>,
    return
  }
  func.func @transform_0(%arg0: i32) -> (i32, i32) {
    %c0_i32 = arith.constant 0 : i32
    %c0_i32_0 = arith.constant 0 : i32
    %c0_i32_1 = arith.constant 0 : i32
    return %c0_i32, %c0_i32_0 : i32, i32
  }
  func.func @transform_1(%arg0: i32) -> (i32, i32) {
    %c0_i32 = arith.constant 0 : i32
    %c0_i32_0 = arith.constant 0 : i32
    %c0_i32_1 = arith.constant 0 : i32
    return %c0_i32, %c0_i32_0 : i32, i32
  }
  func.func @transform_2(%arg0: i32) -> (i32, i32) {
    %c0_i32 = arith.constant 0 : i32
    %c0_i32_0 = arith.constant 0 : i32
    %c0_i32_1 = arith.constant 0 : i32
    return %c0_i32, %c0_i32_0 : i32, i32
  }
  func.func @transform_3(%arg0: i32) -> (i32, i32) {
    %c0_i32 = arith.constant 0 : i32
    %c0_i32_0 = arith.constant 0 : i32
    %c0_i32_1 = arith.constant 0 : i32
    return %c0_i32, %c0_i32_0 : i32, i32
  }
  func.func @transform_4(%arg0: i32) -> (i32, i32) {
    %c0_i32 = arith.constant 0 : i32
    %c0_i32_0 = arith.constant 0 : i32
    %c0_i32_1 = arith.constant 0 : i32
    return %c0_i32, %c0_i32_0 : i32, i32
  }
}

module attributes {stable_mosaic.version = 11 : i64} {
  func.func @linear_kernel(%arg0: i32, %arg1: memref<2x1600xbf16, #tpu.memory_space<vmem>>, %arg2: memref<1600x256xbf16, #tpu.memory_space<vmem>>, %arg3: memref<1x256xf32, #tpu.memory_space<vmem>>, %arg4: memref<2x256xbf16, #tpu.memory_space<vmem>>) attributes {dimension_semantics = [#tpu.dimension_semantics<parallel>], iteration_bounds = array<i64: 2>, scalar_prefetch = 0 : i64, scratch_operands = 0 : i64, tpu.core_type = #tpu.core_type<tc>, window_params = [{pipeline_mode = #tpu.pipeline_mode<synchronous>, transform_indices = @transform_0, window_bounds = array<i64: 2, 1600>}, {transform_indices = @transform_1, window_bounds = array<i64: 1600, 256>}, {transform_indices = @transform_2, window_bounds = array<i64: 1, 256>}, {transform_indices = @transform_3, window_bounds = array<i64: 2, 256>}]} {
    %c0 = arith.constant 0 : index
    %c0_0 = arith.constant 0 : index
    %0 = vector.load %arg1[%c0, %c0_0] : memref<2x1600xbf16, #tpu.memory_space<vmem>>, vector<2x1600xbf16>
    %c0_1 = arith.constant 0 : index
    %c0_2 = arith.constant 0 : index
    %1 = vector.load %arg2[%c0_1, %c0_2] : memref<1600x256xbf16, #tpu.memory_space<vmem>>, vector<1600x256xbf16>
    %cst = arith.constant dense<0.000000e+00> : vector<2x256xf32>
    %2 = tpu.matmul %0, %1, %cst {dimension_numbers = #tpu.dot_dimension_numbers<[1], [0], [0], [1], [0, 0, 1, 1], [], []>} : vector<2x1600xbf16>, vector<1600x256xbf16>, vector<2x256xf32> -> vector<2x256xf32>
    %c0_3 = arith.constant 0 : index
    %c0_4 = arith.constant 0 : index
    %3 = vector.load %arg3[%c0_3, %c0_4] : memref<1x256xf32, #tpu.memory_space<vmem>>, vector<1x256xf32>
    %4 = vector.broadcast %3 : vector<1x256xf32> to vector<2x256xf32>
    %5 = arith.addf %2, %4 : vector<2x256xf32>
    %cst_5 = arith.constant 0.000000e+00 : f32
    %6 = vector.broadcast %cst_5 : f32 to vector<2x256xf32>
    %7 = arith.maximumf %5, %6 : vector<2x256xf32>
    %8 = arith.truncf %7 : vector<2x256xf32> to vector<2x256xbf16>
    %c0_6 = arith.constant 0 : index
    %c0_7 = arith.constant 0 : index
    %9 = vector.load %arg4[%c0_6, %c0_7] : memref<2x256xbf16, #tpu.memory_space<vmem>>, vector<2x256xbf16>
    tpu.vector_store %arg4[%c0_6, %c0_7], %8 {strides = array<i32>} : memref<2x256xbf16, #tpu.memory_space<vmem>>, vector<2x256xbf16>,
    return
  }
  func.func @transform_0(%arg0: i32) -> (i32, i32) {
    %c0_i32 = arith.constant 0 : i32
    %c0_i32_0 = arith.constant 0 : i32
    %c0_i32_1 = arith.constant 0 : i32
    return %c0_i32, %c0_i32_0 : i32, i32
  }
  func.func @transform_1(%arg0: i32) -> (i32, i32) {
    %c0_i32 = arith.constant 0 : i32
    %c0_i32_0 = arith.constant 0 : i32
    return %c0_i32, %arg0 : i32, i32
  }
  func.func @transform_2(%arg0: i32) -> (i32, i32) {
    %c0_i32 = arith.constant 0 : i32
    %c0_i32_0 = arith.constant 0 : i32
    return %c0_i32, %arg0 : i32, i32
  }
  func.func @transform_3(%arg0: i32) -> (i32, i32) {
    %c0_i32 = arith.constant 0 : i32
    %c0_i32_0 = arith.constant 0 : i32
    return %c0_i32, %arg0 : i32, i32
  }
}

module attributes {stable_mosaic.version = 11 : i64} {
  func.func @linear_kernel(%arg0: i32, %arg1: memref<2x512xbf16, #tpu.memory_space<vmem>>, %arg2: memref<512x256xbf16, #tpu.memory_space<vmem>>, %arg3: memref<1x256xf32, #tpu.memory_space<vmem>>, %arg4: memref<2x256xbf16, #tpu.memory_space<vmem>>) attributes {dimension_semantics = [#tpu.dimension_semantics<parallel>], iteration_bounds = array<i64: 2>, scalar_prefetch = 0 : i64, scratch_operands = 0 : i64, tpu.core_type = #tpu.core_type<tc>, window_params = [{pipeline_mode = #tpu.pipeline_mode<synchronous>, transform_indices = @transform_0, window_bounds = array<i64: 2, 512>}, {transform_indices = @transform_1, window_bounds = array<i64: 512, 256>}, {transform_indices = @transform_2, window_bounds = array<i64: 1, 256>}, {transform_indices = @transform_3, window_bounds = array<i64: 2, 256>}]} {
    %c0 = arith.constant 0 : index
    %c0_0 = arith.constant 0 : index
    %0 = vector.load %arg1[%c0, %c0_0] : memref<2x512xbf16, #tpu.memory_space<vmem>>, vector<2x512xbf16>
    %c0_1 = arith.constant 0 : index
    %c0_2 = arith.constant 0 : index
    %1 = vector.load %arg2[%c0_1, %c0_2] : memref<512x256xbf16, #tpu.memory_space<vmem>>, vector<512x256xbf16>
    %cst = arith.constant dense<0.000000e+00> : vector<2x256xf32>
    %2 = tpu.matmul %0, %1, %cst {dimension_numbers = #tpu.dot_dimension_numbers<[1], [0], [0], [1], [0, 0, 1, 1], [], []>} : vector<2x512xbf16>, vector<512x256xbf16>, vector<2x256xf32> -> vector<2x256xf32>
    %c0_3 = arith.constant 0 : index
    %c0_4 = arith.constant 0 : index
    %3 = vector.load %arg3[%c0_3, %c0_4] : memref<1x256xf32, #tpu.memory_space<vmem>>, vector<1x256xf32>
    %4 = vector.broadcast %3 : vector<1x256xf32> to vector<2x256xf32>
    %5 = arith.addf %2, %4 : vector<2x256xf32>
    %cst_5 = arith.constant 0.000000e+00 : f32
    %6 = vector.broadcast %cst_5 : f32 to vector<2x256xf32>
    %7 = arith.maximumf %5, %6 : vector<2x256xf32>
    %8 = arith.truncf %7 : vector<2x256xf32> to vector<2x256xbf16>
    %c0_6 = arith.constant 0 : index
    %c0_7 = arith.constant 0 : index
    %9 = vector.load %arg4[%c0_6, %c0_7] : memref<2x256xbf16, #tpu.memory_space<vmem>>, vector<2x256xbf16>
    tpu.vector_store %arg4[%c0_6, %c0_7], %8 {strides = array<i32>} : memref<2x256xbf16, #tpu.memory_space<vmem>>, vector<2x256xbf16>,
    return
  }
  func.func @transform_0(%arg0: i32) -> (i32, i32) {
    %c0_i32 = arith.constant 0 : i32
    %c0_i32_0 = arith.constant 0 : i32
    %c0_i32_1 = arith.constant 0 : i32
    return %c0_i32, %c0_i32_0 : i32, i32
  }
  func.func @transform_1(%arg0: i32) -> (i32, i32) {
    %c0_i32 = arith.constant 0 : i32
    %c0_i32_0 = arith.constant 0 : i32
    return %c0_i32, %arg0 : i32, i32
  }
  func.func @transform_2(%arg0: i32) -> (i32, i32) {
    %c0_i32 = arith.constant 0 : i32
    %c0_i32_0 = arith.constant 0 : i32
    return %c0_i32, %arg0 : i32, i32
  }
  func.func @transform_3(%arg0: i32) -> (i32, i32) {
    %c0_i32 = arith.constant 0 : i32
    %c0_i32_0 = arith.constant 0 : i32
    return %c0_i32, %arg0 : i32, i32
  }
}

module attributes {stable_mosaic.version = 11 : i64} {
  func.func @linear_kernel(%arg0: i32, %arg1: memref<2x512xbf16, #tpu.memory_space<vmem>>, %arg2: memref<512x256xbf16, #tpu.memory_space<vmem>>, %arg3: memref<1x256xf32, #tpu.memory_space<vmem>>, %arg4: memref<2x256xf32, #tpu.memory_space<vmem>>) attributes {dimension_semantics = [#tpu.dimension_semantics<parallel>], iteration_bounds = array<i64: 2>, scalar_prefetch = 0 : i64, scratch_operands = 0 : i64, tpu.core_type = #tpu.core_type<tc>, window_params = [{pipeline_mode = #tpu.pipeline_mode<synchronous>, transform_indices = @transform_0, window_bounds = array<i64: 2, 512>}, {transform_indices = @transform_1, window_bounds = array<i64: 512, 256>}, {transform_indices = @transform_2, window_bounds = array<i64: 1, 256>}, {transform_indices = @transform_3, window_bounds = array<i64: 2, 256>}]} {
    %c0 = arith.constant 0 : index
    %c0_0 = arith.constant 0 : index
    %0 = vector.load %arg1[%c0, %c0_0] : memref<2x512xbf16, #tpu.memory_space<vmem>>, vector<2x512xbf16>
    %c0_1 = arith.constant 0 : index
    %c0_2 = arith.constant 0 : index
    %1 = vector.load %arg2[%c0_1, %c0_2] : memref<512x256xbf16, #tpu.memory_space<vmem>>, vector<512x256xbf16>
    %cst = arith.constant dense<0.000000e+00> : vector<2x256xf32>
    %2 = tpu.matmul %0, %1, %cst {dimension_numbers = #tpu.dot_dimension_numbers<[1], [0], [0], [1], [0, 0, 1, 1], [], []>} : vector<2x512xbf16>, vector<512x256xbf16>, vector<2x256xf32> -> vector<2x256xf32>
    %c0_3 = arith.constant 0 : index
    %c0_4 = arith.constant 0 : index
    %3 = vector.load %arg3[%c0_3, %c0_4] : memref<1x256xf32, #tpu.memory_space<vmem>>, vector<1x256xf32>
    %4 = vector.broadcast %3 : vector<1x256xf32> to vector<2x256xf32>
    %5 = arith.addf %2, %4 : vector<2x256xf32>
    %c0_5 = arith.constant 0 : index
    %c0_6 = arith.constant 0 : index
    %6 = vector.load %arg4[%c0_5, %c0_6] : memref<2x256xf32, #tpu.memory_space<vmem>>, vector<2x256xf32>
    tpu.vector_store %arg4[%c0_5, %c0_6], %5 {strides = array<i32>} : memref<2x256xf32, #tpu.memory_space<vmem>>, vector<2x256xf32>,
    return
  }
  func.func @transform_0(%arg0: i32) -> (i32, i32) {
    %c0_i32 = arith.constant 0 : i32
    %c0_i32_0 = arith.constant 0 : i32
    %c0_i32_1 = arith.constant 0 : i32
    return %c0_i32, %c0_i32_0 : i32, i32
  }
  func.func @transform_1(%arg0: i32) -> (i32, i32) {
    %c0_i32 = arith.constant 0 : i32
    %c0_i32_0 = arith.constant 0 : i32
    return %c0_i32, %arg0 : i32, i32
  }
  func.func @transform_2(%arg0: i32) -> (i32, i32) {
    %c0_i32 = arith.constant 0 : i32
    %c0_i32_0 = arith.constant 0 : i32
    return %c0_i32, %arg0 : i32, i32
  }
  func.func @transform_3(%arg0: i32) -> (i32, i32) {
    %c0_i32 = arith.constant 0 : i32
    %c0_i32_0 = arith.constant 0 : i32
    return %c0_i32, %arg0 : i32, i32
  }
}

module attributes {stable_mosaic.version = 11 : i64} {
  func.func @linear_kernel(%arg0: i32, %arg1: memref<2x1600xbf16, #tpu.memory_space<vmem>>, %arg2: memref<1600x256xbf16, #tpu.memory_space<vmem>>, %arg3: memref<1x256xf32, #tpu.memory_space<vmem>>, %arg4: memref<2x256xf32, #tpu.memory_space<vmem>>) attributes {dimension_semantics = [#tpu.dimension_semantics<parallel>], iteration_bounds = array<i64: 2>, scalar_prefetch = 0 : i64, scratch_operands = 0 : i64, tpu.core_type = #tpu.core_type<tc>, window_params = [{pipeline_mode = #tpu.pipeline_mode<synchronous>, transform_indices = @transform_0, window_bounds = array<i64: 2, 1600>}, {transform_indices = @transform_1, window_bounds = array<i64: 1600, 256>}, {transform_indices = @transform_2, window_bounds = array<i64: 1, 256>}, {transform_indices = @transform_3, window_bounds = array<i64: 2, 256>}]} {
    %c0 = arith.constant 0 : index
    %c0_0 = arith.constant 0 : index
    %0 = vector.load %arg1[%c0, %c0_0] : memref<2x1600xbf16, #tpu.memory_space<vmem>>, vector<2x1600xbf16>
    %c0_1 = arith.constant 0 : index
    %c0_2 = arith.constant 0 : index
    %1 = vector.load %arg2[%c0_1, %c0_2] : memref<1600x256xbf16, #tpu.memory_space<vmem>>, vector<1600x256xbf16>
    %cst = arith.constant dense<0.000000e+00> : vector<2x256xf32>
    %2 = tpu.matmul %0, %1, %cst {dimension_numbers = #tpu.dot_dimension_numbers<[1], [0], [0], [1], [0, 0, 1, 1], [], []>} : vector<2x1600xbf16>, vector<1600x256xbf16>, vector<2x256xf32> -> vector<2x256xf32>
    %c0_3 = arith.constant 0 : index
    %c0_4 = arith.constant 0 : index
    %3 = vector.load %arg3[%c0_3, %c0_4] : memref<1x256xf32, #tpu.memory_space<vmem>>, vector<1x256xf32>
    %4 = vector.broadcast %3 : vector<1x256xf32> to vector<2x256xf32>
    %5 = arith.addf %2, %4 : vector<2x256xf32>
    %c0_5 = arith.constant 0 : index
    %c0_6 = arith.constant 0 : index
    %6 = vector.load %arg4[%c0_5, %c0_6] : memref<2x256xf32, #tpu.memory_space<vmem>>, vector<2x256xf32>
    tpu.vector_store %arg4[%c0_5, %c0_6], %5 {strides = array<i32>} : memref<2x256xf32, #tpu.memory_space<vmem>>, vector<2x256xf32>,
    return
  }
  func.func @transform_0(%arg0: i32) -> (i32, i32) {
    %c0_i32 = arith.constant 0 : i32
    %c0_i32_0 = arith.constant 0 : i32
    %c0_i32_1 = arith.constant 0 : i32
    return %c0_i32, %c0_i32_0 : i32, i32
  }
  func.func @transform_1(%arg0: i32) -> (i32, i32) {
    %c0_i32 = arith.constant 0 : i32
    %c0_i32_0 = arith.constant 0 : i32
    return %c0_i32, %arg0 : i32, i32
  }
  func.func @transform_2(%arg0: i32) -> (i32, i32) {
    %c0_i32 = arith.constant 0 : i32
    %c0_i32_0 = arith.constant 0 : i32
    return %c0_i32, %arg0 : i32, i32
  }
  func.func @transform_3(%arg0: i32) -> (i32, i32) {
    %c0_i32 = arith.constant 0 : i32
    %c0_i32_0 = arith.constant 0 : i32
    return %c0_i32, %arg0 : i32, i32
  }
}

</mosaic_0001>

<llo_original>
// kernel: _rnd_forward_impl.7
$region0: #{_rnd_forward_impl.7}
  #allocation0 [shape = 'u32[]', space=smem, size = 0x4, offset = 0x4, fixed_abs, tag = 'smem constant byte address 0x4 - core index']
  #allocation1 [shape = 'u32[144,128]{1,0:T(1,128)}', space=vmem, size = 0x12000, scoped, tag = 'internal scratch']
  %s0 = inlined_call_operand.vmem [shape: bf16[200,256], index: 0, kind: input, shape index: {}]
  %s1 = inlined_call_operand.vmem [shape: bf16[256,64], index: 1, kind: input, shape index: {}]
  %s2 = inlined_call_operand.vmem [shape: f32[1,64], index: 2, kind: input, shape index: {}]
  %s3 = inlined_call_operand.vmem [shape: f32[1,64], index: 3, kind: input, shape index: {}]
  %s4 = inlined_call_operand.vmem [shape: bf16[200,64], index: 4, kind: output, shape index: {}]
  %s5 = sld [smem:[#allocation0]]
  $region26: #{_rnd_forward_impl.7} parent=0
    _
  %s7 = ssub.s32 1, %s5
  %s8 = scalar_select 0, %s7, %s5
  // Predicated region
  $region2: #{_rnd_forward_impl.7} parent=0 // pred_check
    _
  $region3: #{_rnd_forward_impl.7} parent=0 // pred_check_branch
    %10 = sbr.rel (0) target = $region5
  $region4: #{_rnd_forward_impl.7} parent=0 // pred_region
    _
  $region5: #{_rnd_forward_impl.7} parent=0 // pred_fallthru
    _
  // Predicated region
  $region6: #{_rnd_forward_impl.7} parent=0 // pred_check
    _
  $region7: #{_rnd_forward_impl.7} parent=0 // pred_check_branch
    %12 = sbr.rel (0) target = $region9
  $region8: #{_rnd_forward_impl.7} parent=0 // pred_region
    _
  $region9: #{_rnd_forward_impl.7} parent=0 // pred_fallthru
    _
  // Predicated region
  $region10: #{_rnd_forward_impl.7} parent=0 // pred_check
    _
  $region11: #{_rnd_forward_impl.7} parent=0 // pred_check_branch
    %14 = sbr.rel (0) target = $region13
  $region12: #{_rnd_forward_impl.7} parent=0 // pred_region
    _
  $region13: #{_rnd_forward_impl.7} parent=0 // pred_fallthru
    _
  // Predicated region
  $region14: #{_rnd_forward_impl.7} parent=0 // pred_check
    _
  $region15: #{_rnd_forward_impl.7} parent=0 // pred_check_branch
    %16 = sbr.rel (0) target = $region17
  $region16: #{_rnd_forward_impl.7} parent=0 // pred_region
    _
  $region17: #{_rnd_forward_impl.7} parent=0 // pred_fallthru
    _
  %v18 = vld [vmem:[%s0] sm:$0xff]
  %v19 = vld [vmem:[%s0 + $0x8] sm:$0xff]
  %v20 = vld [vmem:[%s0 + $0x10] sm:$0xff]
  %v21 = vld [vmem:[%s0 + $0x18] sm:$0xff]
  %v22 = vld [vmem:[%s0 + $0x20] sm:$0xff]
  %v23 = vld [vmem:[%s0 + $0x28] sm:$0xff]
  %v24 = vld [vmem:[%s0 + $0x30] sm:$0xff]
  %v25 = vld [vmem:[%s0 + $0x38] sm:$0xff]
  %v26 = vld [vmem:[%s0 + $0x40] sm:$0xff]
  %v27 = vld [vmem:[%s0 + $0x48] sm:$0xff]
  %v28 = vld [vmem:[%s0 + $0x50] sm:$0xff]
  %v29 = vld [vmem:[%s0 + $0x58] sm:$0xff]
  %v30 = vld [vmem:[%s0 + $0x60] sm:$0xff]
  %v31 = vld [vmem:[%s0 + $0x68] sm:$0xff]
  %v32 = vld [vmem:[%s0 + $0x70] sm:$0xff]
  %v33 = vld [vmem:[%s0 + $0x78] sm:$0xff]
  %v34 = vld [vmem:[%s0 + $0x80] sm:$0xff]
  %v35 = vld [vmem:[%s0 + $0x88] sm:$0xff]
  %v36 = vld [vmem:[%s0 + $0x90] sm:$0xff]
  %v37 = vld [vmem:[%s0 + $0x98] sm:$0xff]
  %v38 = vld [vmem:[%s0 + $0xa0] sm:$0xff]
  %v39 = vld [vmem:[%s0 + $0xa8] sm:$0xff]
  %v40 = vld [vmem:[%s0 + $0xb0] sm:$0xff]
  %v41 = vld [vmem:[%s0 + $0xb8] sm:$0xff]
  %v42 = vld [vmem:[%s0 + $0xc0] sm:$0xff]
  %v43 = vld [vmem:[%s1] sm:$0xf]
  %v44 = vld [vmem:[%s1 + $0x4] sm:$0xf]
  %v45 = vld [vmem:[%s1 + $0x8] sm:$0xf]
  %v46 = vld [vmem:[%s1 + $0xc] sm:$0xf]
  %v47 = vld [vmem:[%s1 + $0x10] sm:$0xf]
  %v48 = vld [vmem:[%s1 + $0x14] sm:$0xf]
  %v49 = vld [vmem:[%s1 + $0x18] sm:$0xf]
  %v50 = vld [vmem:[%s1 + $0x1c] sm:$0xf]
  %v51 = vld [vmem:[%s1 + $0x20] sm:$0xf]
  %v52 = vld [vmem:[%s1 + $0x24] sm:$0xf]
  %v53 = vld [vmem:[%s1 + $0x28] sm:$0xf]
  %v54 = vld [vmem:[%s1 + $0x2c] sm:$0xf]
  %v55 = vld [vmem:[%s1 + $0x30] sm:$0xf]
  %v56 = vld [vmem:[%s1 + $0x34] sm:$0xf]
  %v57 = vld [vmem:[%s1 + $0x38] sm:$0xf]
  %v58 = vld [vmem:[%s1 + $0x3c] sm:$0xf]
  %v59 = vld [vmem:[%s1 + $0x40] sm:$0xf]
  %v60 = vld [vmem:[%s1 + $0x44] sm:$0xf]
  %v61 = vld [vmem:[%s1 + $0x48] sm:$0xf]
  %v62 = vld [vmem:[%s1 + $0x4c] sm:$0xf]
  %v63 = vld [vmem:[%s1 + $0x50] sm:$0xf]
  %v64 = vld [vmem:[%s1 + $0x54] sm:$0xf]
  %v65 = vld [vmem:[%s1 + $0x58] sm:$0xf]
  %v66 = vld [vmem:[%s1 + $0x5c] sm:$0xf]
  %v67 = vld [vmem:[%s1 + $0x60] sm:$0xf]
  %v68 = vld [vmem:[%s1 + $0x64] sm:$0xf]
  %v69 = vld [vmem:[%s1 + $0x68] sm:$0xf]
  %v70 = vld [vmem:[%s1 + $0x6c] sm:$0xf]
  %v71 = vld [vmem:[%s1 + $0x70] sm:$0xf]
  %v72 = vld [vmem:[%s1 + $0x74] sm:$0xf]
  %v73 = vld [vmem:[%s1 + $0x78] sm:$0xf]
  %v74 = vld [vmem:[%s1 + $0x7c] sm:$0xf]
  %v100 = vunpack.c.l.b16 %v18
  %v101 = vunpack.c.h.b16 %v18
  %v102 = vunpack.c.l.b16 %v19
  %v103 = vunpack.c.h.b16 %v19
  %v104 = vunpack.c.l.b16 %v20
  %v105 = vunpack.c.h.b16 %v20
  %v106 = vunpack.c.l.b16 %v21
  %v107 = vunpack.c.h.b16 %v21
  %v108 = vunpack.c.l.b16 %v22
  %v109 = vunpack.c.h.b16 %v22
  %v110 = vunpack.c.l.b16 %v23
  %v111 = vunpack.c.h.b16 %v23
  %v112 = vunpack.c.l.b16 %v24
  %v113 = vunpack.c.h.b16 %v24
  %v114 = vunpack.c.l.b16 %v25
  %v115 = vunpack.c.h.b16 %v25
  %v116 = vunpack.c.l.b16 %v26
  %v117 = vunpack.c.h.b16 %v26
  %v118 = vunpack.c.l.b16 %v27
  %v119 = vunpack.c.h.b16 %v27
  %v120 = vunpack.c.l.b16 %v28
  %v121 = vunpack.c.h.b16 %v28
  %v122 = vunpack.c.l.b16 %v29
  %v123 = vunpack.c.h.b16 %v29
  %v124 = vunpack.c.l.b16 %v30
  %v125 = vunpack.c.h.b16 %v30
  %v126 = vunpack.c.l.b16 %v31
  %v127 = vunpack.c.h.b16 %v31
  %v128 = vunpack.c.l.b16 %v32
  %v129 = vunpack.c.h.b16 %v32
  %v130 = vunpack.c.l.b16 %v33
  %v131 = vunpack.c.h.b16 %v33
  %v132 = vunpack.c.l.b16 %v34
  %v133 = vunpack.c.h.b16 %v34
  %v134 = vunpack.c.l.b16 %v35
  %v135 = vunpack.c.h.b16 %v35
  %v136 = vunpack.c.l.b16 %v36
  %v137 = vunpack.c.h.b16 %v36
  %v138 = vunpack.c.l.b16 %v37
  %v139 = vunpack.c.h.b16 %v37
  %v140 = vunpack.c.l.b16 %v38
  %v141 = vunpack.c.h.b16 %v38
  %v142 = vunpack.c.l.b16 %v39
  %v143 = vunpack.c.h.b16 %v39
  %v144 = vunpack.c.l.b16 %v40
  %v145 = vunpack.c.h.b16 %v40
  %v146 = vunpack.c.l.b16 %v41
  %v147 = vunpack.c.h.b16 %v41
  %v148 = vunpack.c.l.b16 %v42
  %v149 = vunpack.c.h.b16 %v42
  %v150 = vpack.c.b16 %v102, %v100
  %v151 = vpack.c.b16 %v103, %v101
  %v152 = vpack.c.b16 %v106, %v104
  %v153 = vpack.c.b16 %v107, %v105
  %v154 = vpack.c.b16 %v110, %v108
  %v155 = vpack.c.b16 %v111, %v109
  %v156 = vpack.c.b16 %v114, %v112
  %v157 = vpack.c.b16 %v115, %v113
  %v158 = vpack.c.b16 %v118, %v116
  %v159 = vpack.c.b16 %v119, %v117
  %v160 = vpack.c.b16 %v122, %v120
  %v161 = vpack.c.b16 %v123, %v121
  %v162 = vpack.c.b16 %v126, %v124
  %v163 = vpack.c.b16 %v127, %v125
  %v164 = vpack.c.b16 %v130, %v128
  %v165 = vpack.c.b16 %v131, %v129
  %v166 = vpack.c.b16 %v134, %v132
  %v167 = vpack.c.b16 %v135, %v133
  %v168 = vpack.c.b16 %v138, %v136
  %v169 = vpack.c.b16 %v139, %v137
  %v170 = vpack.c.b16 %v142, %v140
  %v171 = vpack.c.b16 %v143, %v141
  %v172 = vpack.c.b16 %v146, %v144
  %v173 = vpack.c.b16 %v147, %v145
  %v174 = vpack.c.b16 %v148, %v148
  %v175 = vpack.c.b16 %v149, %v149
  %v234 = vunpack.c.l.b16 %v43
  %v235 = vunpack.c.l.b16 %v44
  %v236 = vunpack.c.l.b16 %v45
  %v237 = vunpack.c.l.b16 %v46
  %v238 = vunpack.c.l.b16 %v47
  %v239 = vunpack.c.l.b16 %v48
  %v240 = vunpack.c.l.b16 %v49
  %v241 = vunpack.c.l.b16 %v50
  %v242 = vunpack.c.l.b16 %v51
  %v243 = vunpack.c.l.b16 %v52
  %v244 = vunpack.c.l.b16 %v53
  %v245 = vunpack.c.l.b16 %v54
  %v246 = vunpack.c.l.b16 %v55
  %v247 = vunpack.c.l.b16 %v56
  %v248 = vunpack.c.l.b16 %v57
  %v249 = vunpack.c.l.b16 %v58
  %v250 = vunpack.c.l.b16 %v59
  %v251 = vunpack.c.l.b16 %v60
  %v252 = vunpack.c.l.b16 %v61
  %v253 = vunpack.c.l.b16 %v62
  %v254 = vunpack.c.l.b16 %v63
  %v255 = vunpack.c.l.b16 %v64
  %v256 = vunpack.c.l.b16 %v65
  %v257 = vunpack.c.l.b16 %v66
  %v258 = vunpack.c.l.b16 %v67
  %v259 = vunpack.c.l.b16 %v68
  %v260 = vunpack.c.l.b16 %v69
  %v261 = vunpack.c.l.b16 %v70
  %v262 = vunpack.c.l.b16 %v71
  %v263 = vunpack.c.l.b16 %v72
  %v264 = vunpack.c.l.b16 %v73
  %v265 = vunpack.c.l.b16 %v74
  %v266 = vpack.c.b16 %v235, %v234
  %v267 = vpack.c.b16 %v237, %v236
  %v268 = vpack.c.b16 %v239, %v238
  %v269 = vpack.c.b16 %v241, %v240
  %v270 = vpack.c.b16 %v243, %v242
  %v271 = vpack.c.b16 %v245, %v244
  %v272 = vpack.c.b16 %v247, %v246
  %v273 = vpack.c.b16 %v249, %v248
  %v274 = vpack.c.b16 %v251, %v250
  %v275 = vpack.c.b16 %v253, %v252
  %v276 = vpack.c.b16 %v255, %v254
  %v277 = vpack.c.b16 %v257, %v256
  %v278 = vpack.c.b16 %v259, %v258
  %v279 = vpack.c.b16 %v261, %v260
  %v280 = vpack.c.b16 %v263, %v262
  %v281 = vpack.c.b16 %v265, %v264
  %298 = vmatprep.subr.bf16.mxu0 0
  %299 = vmatpush1.bf16.msra.mxu0 %v273
  %300 = vmatprep.subr.bf16.mxu0 0
  %301 = vmatpush1.bf16.msra.mxu0 %v272
  %302 = vmatprep.subr.bf16.mxu0 0
  %303 = vmatpush1.bf16.msra.mxu0 %v271
  %304 = vmatprep.subr.bf16.mxu0 0
  %305 = vmatpush1.bf16.msra.mxu0 %v270
  %306 = vmatprep.subr.bf16.mxu0 0
  %307 = vmatpush1.bf16.msra.mxu0 %v269
  %308 = vmatprep.subr.bf16.mxu0 0
  %309 = vmatpush1.bf16.msra.mxu0 %v268
  %310 = vmatprep.subr.bf16.mxu0 0
  %311 = vmatpush1.bf16.msra.mxu0 %v267
  %312 = vmatprep.subr.bf16.mxu0 0
  %313 = vmatpush1.bf16.msra.mxu0 %v266
  %314 = vmatprep.subr.bf16.mxu0 0
  %315 = vmatpush2.bf16.msra.mxu0 %v281
  %316 = vmatprep.subr.bf16.mxu0 0
  %317 = vmatpush2.bf16.msra.mxu0 %v280
  %318 = vmatprep.subr.bf16.mxu0 0
  %319 = vmatpush2.bf16.msra.mxu0 %v279
  %320 = vmatprep.subr.bf16.mxu0 0
  %321 = vmatpush2.bf16.msra.mxu0 %v278
  %322 = vmatprep.subr.bf16.mxu0 0
  %323 = vmatpush2.bf16.msra.mxu0 %v277
  %324 = vmatprep.subr.bf16.mxu0 0
  %325 = vmatpush2.bf16.msra.mxu0 %v276
  %326 = vmatprep.subr.bf16.mxu0 0
  %327 = vmatpush2.bf16.msra.mxu0 %v275
  %328 = vmatprep.subr.bf16.mxu0 0
  %329 = vmatpush2.bf16.msra.mxu0 %v274
  %330 = vmatprep.mubr.bf16.mxu0 %v151
  %331 = vmatmul.mubr.bf16.gmra.mxu0 %v150
  %v332 = vpop.f32.mrf.mxu0
  %v333 = vadd.f32 0.0, %v332
  %v334 = vpop.f32.mrf.mxu0
  %v335 = vpop.f32.mrf.mxu0
  %v336 = vadd.f32 0.0, %v335
  %v337 = vpop.f32.mrf.mxu0
  %338 = vmatprep.mubr.bf16.mxu0 %v153
  %339 = vmatmul.mubr.bf16.gmra.mxu0 %v152
  %v340 = vpop.f32.mrf.mxu0
  %v341 = vadd.f32 0.0, %v340
  %v342 = vpop.f32.mrf.mxu0
  %v343 = vpop.f32.mrf.mxu0
  %v344 = vadd.f32 0.0, %v343
  %v345 = vpop.f32.mrf.mxu0
  %346 = vmatprep.mubr.bf16.mxu0 %v155
  %347 = vmatmul.mubr.bf16.gmra.mxu0 %v154
  %v348 = vpop.f32.mrf.mxu0
  %v349 = vadd.f32 0.0, %v348
  %v350 = vpop.f32.mrf.mxu0
  %v351 = vpop.f32.mrf.mxu0
  %v352 = vadd.f32 0.0, %v351
  %v353 = vpop.f32.mrf.mxu0
  %354 = vmatprep.mubr.bf16.mxu0 %v157
  %355 = vmatmul.mubr.bf16.gmra.mxu0 %v156
  %v356 = vpop.f32.mrf.mxu0
  %v357 = vadd.f32 0.0, %v356
  %v358 = vpop.f32.mrf.mxu0
  %v359 = vpop.f32.mrf.mxu0
  %v360 = vadd.f32 0.0, %v359
  %v361 = vpop.f32.mrf.mxu0
  %362 = vmatprep.mubr.bf16.mxu0 %v159
  %363 = vmatmul.mubr.bf16.gmra.mxu0 %v158
  %v364 = vpop.f32.mrf.mxu0
  %v365 = vadd.f32 0.0, %v364
  %v366 = vpop.f32.mrf.mxu0
  %v367 = vpop.f32.mrf.mxu0
  %v368 = vadd.f32 0.0, %v367
  %v369 = vpop.f32.mrf.mxu0
  %370 = vmatprep.mubr.bf16.mxu0 %v161
  %371 = vmatmul.mubr.bf16.gmra.mxu0 %v160
  %v372 = vpop.f32.mrf.mxu0
  %v373 = vadd.f32 0.0, %v372
  %v374 = vpop.f32.mrf.mxu0
  %v375 = vpop.f32.mrf.mxu0
  %v376 = vadd.f32 0.0, %v375
  %v377 = vpop.f32.mrf.mxu0
  %378 = vmatprep.mubr.bf16.mxu0 %v163
  %379 = vmatmul.mubr.bf16.gmra.mxu0 %v162
  %v380 = vpop.f32.mrf.mxu0
  %v381 = vadd.f32 0.0, %v380
  %v382 = vpop.f32.mrf.mxu0
  %v383 = vpop.f32.mrf.mxu0
  %v384 = vadd.f32 0.0, %v383
  %v385 = vpop.f32.mrf.mxu0
  %386 = vmatprep.mubr.bf16.mxu0 %v165
  %387 = vmatmul.mubr.bf16.gmra.mxu0 %v164
  %v388 = vpop.f32.mrf.mxu0
  %v389 = vadd.f32 0.0, %v388
  %v390 = vpop.f32.mrf.mxu0
  %v391 = vpop.f32.mrf.mxu0
  %v392 = vadd.f32 0.0, %v391
  %v393 = vpop.f32.mrf.mxu0
  %394 = vmatprep.mubr.bf16.mxu0 %v167
  %395 = vmatmul.mubr.bf16.gmra.mxu0 %v166
  %v396 = vpop.f32.mrf.mxu0
  %v397 = vadd.f32 0.0, %v396
  %v398 = vpop.f32.mrf.mxu0
  %v399 = vpop.f32.mrf.mxu0
  %v400 = vadd.f32 0.0, %v399
  %v401 = vpop.f32.mrf.mxu0
  %402 = vmatprep.mubr.bf16.mxu0 %v169
  %403 = vmatmul.mubr.bf16.gmra.mxu0 %v168
  %v404 = vpop.f32.mrf.mxu0
  %v405 = vadd.f32 0.0, %v404
  %v406 = vpop.f32.mrf.mxu0
  %v407 = vpop.f32.mrf.mxu0
  %v408 = vadd.f32 0.0, %v407
  %v409 = vpop.f32.mrf.mxu0
  %410 = vmatprep.mubr.bf16.mxu0 %v171
  %411 = vmatmul.mubr.bf16.gmra.mxu0 %v170
  %v412 = vpop.f32.mrf.mxu0
  %v413 = vadd.f32 0.0, %v412
  %v414 = vpop.f32.mrf.mxu0
  %v415 = vpop.f32.mrf.mxu0
  %v416 = vadd.f32 0.0, %v415
  %v417 = vpop.f32.mrf.mxu0
  %418 = vmatprep.mubr.bf16.mxu0 %v173
  %419 = vmatmul.mubr.bf16.gmra.mxu0 %v172
  %v420 = vpop.f32.mrf.mxu0
  %v421 = vadd.f32 0.0, %v420
  %v422 = vpop.f32.mrf.mxu0
  %v423 = vpop.f32.mrf.mxu0
  %v424 = vadd.f32 0.0, %v423
  %v425 = vpop.f32.mrf.mxu0
  %426 = vmatprep.mubr.bf16.mxu0 %v175
  %427 = vmatmul.mubr.bf16.gmra.mxu0 %v174
  %v428 = vpop.f32.mrf.mxu0
  %v429 = vadd.f32 0.0, %v428
  %v430 = vpop.f32.mrf.mxu0
  %v431 = vpop.f32.mrf.mxu0
  %v432 = vpop.f32.mrf.mxu0
  %433 = vdwg.mxu0
  %vm434 = vcmask 523264
  %v435 = vsel %vm434, %v333, 0.0
  %v436 = vsel %vm434, %v336, 0.0
  %v437 = vadd.f32 %v435, %v436
  %v438 = vsel %vm434, %v341, 0.0
  %v439 = vadd.f32 %v437, %v438
  %v440 = vsel %vm434, %v344, 0.0
  %v441 = vadd.f32 %v439, %v440
  %v442 = vsel %vm434, %v349, 0.0
  %v443 = vadd.f32 %v441, %v442
  %v444 = vsel %vm434, %v352, 0.0
  %v445 = vadd.f32 %v443, %v444
  %v446 = vsel %vm434, %v357, 0.0
  %v447 = vadd.f32 %v445, %v446
  %v448 = vsel %vm434, %v360, 0.0
  %v449 = vadd.f32 %v447, %v448
  %v450 = vsel %vm434, %v365, 0.0
  %v451 = vadd.f32 %v449, %v450
  %v452 = vsel %vm434, %v368, 0.0
  %v453 = vadd.f32 %v451, %v452
  %v454 = vsel %vm434, %v373, 0.0
  %v455 = vadd.f32 %v453, %v454
  %v456 = vsel %vm434, %v376, 0.0
  %v457 = vadd.f32 %v455, %v456
  %v458 = vsel %vm434, %v381, 0.0
  %v459 = vadd.f32 %v457, %v458
  %v460 = vsel %vm434, %v384, 0.0
  %v461 = vadd.f32 %v459, %v460
  %v462 = vsel %vm434, %v389, 0.0
  %v463 = vadd.f32 %v461, %v462
  %v464 = vsel %vm434, %v392, 0.0
  %v465 = vadd.f32 %v463, %v464
  %v466 = vsel %vm434, %v397, 0.0
  %v467 = vadd.f32 %v465, %v466
  %v468 = vsel %vm434, %v400, 0.0
  %v469 = vadd.f32 %v467, %v468
  %v470 = vsel %vm434, %v405, 0.0
  %v471 = vadd.f32 %v469, %v470
  %v472 = vsel %vm434, %v408, 0.0
  %v473 = vadd.f32 %v471, %v472
  %v474 = vsel %vm434, %v413, 0.0
  %v475 = vadd.f32 %v473, %v474
  %v476 = vsel %vm434, %v416, 0.0
  %v477 = vadd.f32 %v475, %v476
  %v478 = vsel %vm434, %v421, 0.0
  %v479 = vadd.f32 %v477, %v478
  %v480 = vsel %vm434, %v424, 0.0
  %v481 = vadd.f32 %v479, %v480
  %v482 = vsel %vm434, %v429, 0.0
  %v483 = vadd.f32 %v481, %v482
  %v484 = vrot.slane %v483, 4
  %v485 = vadd.f32 %v483, %v484
  %v486 = vrot.slane %v485, 2
  %v487 = vadd.f32 %v485, %v486
  %v488 = vrot.slane %v487, 1
  %v489 = vadd.f32 %v487, %v488
  %v490 = vrcp.pop 200.0
  %v491 = vmul.f32 %v489, %v490
  %v492 = vsub.f32 %v333, %v491
  %v493 = vsub.f32 %v336, %v491
  %v494 = vsub.f32 %v341, %v491
  %v495 = vsub.f32 %v344, %v491
  %v496 = vsub.f32 %v349, %v491
  %v497 = vsub.f32 %v352, %v491
  %v498 = vsub.f32 %v357, %v491
  %v499 = vsub.f32 %v360, %v491
  %v500 = vsub.f32 %v365, %v491
  %v501 = vsub.f32 %v368, %v491
  %v502 = vsub.f32 %v373, %v491
  %v503 = vsub.f32 %v376, %v491
  %v504 = vsub.f32 %v381, %v491
  %v505 = vsub.f32 %v384, %v491
  %v506 = vsub.f32 %v389, %v491
  %v507 = vsub.f32 %v392, %v491
  %v508 = vsub.f32 %v397, %v491
  %v509 = vsub.f32 %v400, %v491
  %v510 = vsub.f32 %v405, %v491
  %v511 = vsub.f32 %v408, %v491
  %v512 = vsub.f32 %v413, %v491
  %v513 = vsub.f32 %v416, %v491
  %v514 = vsub.f32 %v421, %v491
  %v515 = vsub.f32 %v424, %v491
  %v516 = vsub.f32 %v429, %v491
  %v517 = vmul.f32 %v492, %v492
  %v518 = vmul.f32 %v493, %v493
  %v519 = vmul.f32 %v494, %v494
  %v520 = vmul.f32 %v495, %v495
  %v521 = vmul.f32 %v496, %v496
  %v522 = vmul.f32 %v497, %v497
  %v523 = vmul.f32 %v498, %v498
  %v524 = vmul.f32 %v499, %v499
  %v525 = vmul.f32 %v500, %v500
  %v526 = vmul.f32 %v501, %v501
  %v527 = vmul.f32 %v502, %v502
  %v528 = vmul.f32 %v503, %v503
  %v529 = vmul.f32 %v504, %v504
  %v530 = vmul.f32 %v505, %v505
  %v531 = vmul.f32 %v506, %v506
  %v532 = vmul.f32 %v507, %v507
  %v533 = vmul.f32 %v508, %v508
  %v534 = vmul.f32 %v509, %v509
  %v535 = vmul.f32 %v510, %v510
  %v536 = vmul.f32 %v511, %v511
  %v537 = vmul.f32 %v512, %v512
  %v538 = vmul.f32 %v513, %v513
  %v539 = vmul.f32 %v514, %v514
  %v540 = vmul.f32 %v515, %v515
  %v541 = vmul.f32 %v516, %v516
  %v542 = vsel %vm434, %v517, 0.0
  %v543 = vsel %vm434, %v518, 0.0
  %v544 = vadd.f32 %v542, %v543
  %v545 = vsel %vm434, %v519, 0.0
  %v546 = vadd.f32 %v544, %v545
  %v547 = vsel %vm434, %v520, 0.0
  %v548 = vadd.f32 %v546, %v547
  %v549 = vsel %vm434, %v521, 0.0
  %v550 = vadd.f32 %v548, %v549
  %v551 = vsel %vm434, %v522, 0.0
  %v552 = vadd.f32 %v550, %v551
  %v553 = vsel %vm434, %v523, 0.0
  %v554 = vadd.f32 %v552, %v553
  %v555 = vsel %vm434, %v524, 0.0
  %v556 = vadd.f32 %v554, %v555
  %v557 = vsel %vm434, %v525, 0.0
  %v558 = vadd.f32 %v556, %v557
  %v559 = vsel %vm434, %v526, 0.0
  %v560 = vadd.f32 %v558, %v559
  %v561 = vsel %vm434, %v527, 0.0
  %v562 = vadd.f32 %v560, %v561
  %v563 = vsel %vm434, %v528, 0.0
  %v564 = vadd.f32 %v562, %v563
  %v565 = vsel %vm434, %v529, 0.0
  %v566 = vadd.f32 %v564, %v565
  %v567 = vsel %vm434, %v530, 0.0
  %v568 = vadd.f32 %v566, %v567
  %v569 = vsel %vm434, %v531, 0.0
  %v570 = vadd.f32 %v568, %v569
  %v571 = vsel %vm434, %v532, 0.0
  %v572 = vadd.f32 %v570, %v571
  %v573 = vsel %vm434, %v533, 0.0
  %v574 = vadd.f32 %v572, %v573
  %v575 = vsel %vm434, %v534, 0.0
  %v576 = vadd.f32 %v574, %v575
  %v577 = vsel %vm434, %v535, 0.0
  %v578 = vadd.f32 %v576, %v577
  %v579 = vsel %vm434, %v536, 0.0
  %v580 = vadd.f32 %v578, %v579
  %v581 = vsel %vm434, %v537, 0.0
  %v582 = vadd.f32 %v580, %v581
  %v583 = vsel %vm434, %v538, 0.0
  %v584 = vadd.f32 %v582, %v583
  %v585 = vsel %vm434, %v539, 0.0
  %v586 = vadd.f32 %v584, %v585
  %v587 = vsel %vm434, %v540, 0.0
  %v588 = vadd.f32 %v586, %v587
  %v589 = vsel %vm434, %v541, 0.0
  %v590 = vadd.f32 %v588, %v589
  %v591 = vrot.slane %v590, 4
  %v592 = vadd.f32 %v590, %v591
  %v593 = vrot.slane %v592, 2
  %v594 = vadd.f32 %v592, %v593
  %v595 = vrot.slane %v594, 1
  %v596 = vadd.f32 %v594, %v595
  %v597 = vmul.f32 %v596, %v490
  %v598 = vadd.f32 %v597, 1e-05
  %v599 = vrsqrt.pop %v598
  %v600 = vmul.f32 %v492, %v599
  %v601 = vmul.f32 %v493, %v599
  %v602 = vmul.f32 %v494, %v599
  %v603 = vmul.f32 %v495, %v599
  %v604 = vmul.f32 %v496, %v599
  %v605 = vmul.f32 %v497, %v599
  %v606 = vmul.f32 %v498, %v599
  %v607 = vmul.f32 %v499, %v599
  %v608 = vmul.f32 %v500, %v599
  %v609 = vmul.f32 %v501, %v599
  %v610 = vmul.f32 %v502, %v599
  %v611 = vmul.f32 %v503, %v599
  %v612 = vmul.f32 %v504, %v599
  %v613 = vmul.f32 %v505, %v599
  %v614 = vmul.f32 %v506, %v599
  %v615 = vmul.f32 %v507, %v599
  %v616 = vmul.f32 %v508, %v599
  %v617 = vmul.f32 %v509, %v599
  %v618 = vmul.f32 %v510, %v599
  %v619 = vmul.f32 %v511, %v599
  %v620 = vmul.f32 %v512, %v599
  %v621 = vmul.f32 %v513, %v599
  %v622 = vmul.f32 %v514, %v599
  %v623 = vmul.f32 %v515, %v599
  %v624 = vmul.f32 %v516, %v599
  %v625 = vld [vmem:[%s2] sm:$0x1]
  %v627 = vlaneseq
  %v628 = vshrl.u32 %v627, 7
  %v629 = vsub.s32 0, %v628
  %v630 = vrot.slane %v625, %v629
  %v632 = vmul.f32 %v600, %v630
  %v633 = vmul.f32 %v601, %v630
  %v634 = vmul.f32 %v602, %v630
  %v635 = vmul.f32 %v603, %v630
  %v636 = vmul.f32 %v604, %v630
  %v637 = vmul.f32 %v605, %v630
  %v638 = vmul.f32 %v606, %v630
  %v639 = vmul.f32 %v607, %v630
  %v640 = vmul.f32 %v608, %v630
  %v641 = vmul.f32 %v609, %v630
  %v642 = vmul.f32 %v610, %v630
  %v643 = vmul.f32 %v611, %v630
  %v644 = vmul.f32 %v612, %v630
  %v645 = vmul.f32 %v613, %v630
  %v646 = vmul.f32 %v614, %v630
  %v647 = vmul.f32 %v615, %v630
  %v648 = vmul.f32 %v616, %v630
  %v649 = vmul.f32 %v617, %v630
  %v650 = vmul.f32 %v618, %v630
  %v651 = vmul.f32 %v619, %v630
  %v652 = vmul.f32 %v620, %v630
  %v653 = vmul.f32 %v621, %v630
  %v654 = vmul.f32 %v622, %v630
  %v655 = vmul.f32 %v623, %v630
  %v656 = vmul.f32 %v624, %v630
  %v657 = vld [vmem:[%s3] sm:$0x1]
  %v659 = vlaneseq
  %v660 = vshrl.u32 %v659, 7
  %v661 = vsub.s32 0, %v660
  %v662 = vrot.slane %v657, %v661
  %v664 = vadd.f32 %v632, %v662
  %v665 = vadd.f32 %v633, %v662
  %v666 = vadd.f32 %v634, %v662
  %v667 = vadd.f32 %v635, %v662
  %v668 = vadd.f32 %v636, %v662
  %v669 = vadd.f32 %v637, %v662
  %v670 = vadd.f32 %v638, %v662
  %v671 = vadd.f32 %v639, %v662
  %v672 = vadd.f32 %v640, %v662
  %v673 = vadd.f32 %v641, %v662
  %v674 = vadd.f32 %v642, %v662
  %v675 = vadd.f32 %v643, %v662
  %v676 = vadd.f32 %v644, %v662
  %v677 = vadd.f32 %v645, %v662
  %v678 = vadd.f32 %v646, %v662
  %v679 = vadd.f32 %v647, %v662
  %v680 = vadd.f32 %v648, %v662
  %v681 = vadd.f32 %v649, %v662
  %v682 = vadd.f32 %v650, %v662
  %v683 = vadd.f32 %v651, %v662
  %v684 = vadd.f32 %v652, %v662
  %v685 = vadd.f32 %v653, %v662
  %v686 = vadd.f32 %v654, %v662
  %v687 = vadd.f32 %v655, %v662
  %v688 = vadd.f32 %v656, %v662
  %v689 = vmax.f32 %v664, 0.0
  %v690 = vmax.f32 %v665, 0.0
  %v691 = vmax.f32 %v666, 0.0
  %v692 = vmax.f32 %v667, 0.0
  %v693 = vmax.f32 %v668, 0.0
  %v694 = vmax.f32 %v669, 0.0
  %v695 = vmax.f32 %v670, 0.0
  %v696 = vmax.f32 %v671, 0.0
  %v697 = vmax.f32 %v672, 0.0
  %v698 = vmax.f32 %v673, 0.0
  %v699 = vmax.f32 %v674, 0.0
  %v700 = vmax.f32 %v675, 0.0
  %v701 = vmax.f32 %v676, 0.0
  %v702 = vmax.f32 %v677, 0.0
  %v703 = vmax.f32 %v678, 0.0
  %v704 = vmax.f32 %v679, 0.0
  %v705 = vmax.f32 %v680, 0.0
  %v706 = vmax.f32 %v681, 0.0
  %v707 = vmax.f32 %v682, 0.0
  %v708 = vmax.f32 %v683, 0.0
  %v709 = vmax.f32 %v684, 0.0
  %v710 = vmax.f32 %v685, 0.0
  %v711 = vmax.f32 %v686, 0.0
  %v712 = vmax.f32 %v687, 0.0
  %v713 = vmax.f32 %v688, 0.0
  %v714 = vpack.c.bf16 %v690, %v689
  %v715 = vpack.c.bf16 %v692, %v691
  %v716 = vpack.c.bf16 %v694, %v693
  %v717 = vpack.c.bf16 %v696, %v695
  %v718 = vpack.c.bf16 %v698, %v697
  %v719 = vpack.c.bf16 %v700, %v699
  %v720 = vpack.c.bf16 %v702, %v701
  %v721 = vpack.c.bf16 %v704, %v703
  %v722 = vpack.c.bf16 %v706, %v705
  %v723 = vpack.c.bf16 %v708, %v707
  %v724 = vpack.c.bf16 %v710, %v709
  %v725 = vpack.c.bf16 %v712, %v711
  %v726 = vpack.c.bf16 %v713, %v713
  %v740 = vunpack.c.l.b16 %v714
  %v741 = vunpack.c.h.b16 %v714
  %v742 = vunpack.c.l.b16 %v715
  %v743 = vunpack.c.h.b16 %v715
  %v744 = vunpack.c.l.b16 %v716
  %v745 = vunpack.c.h.b16 %v716
  %v746 = vunpack.c.l.b16 %v717
  %v747 = vunpack.c.h.b16 %v717
  %v748 = vunpack.c.l.b16 %v718
  %v749 = vunpack.c.h.b16 %v718
  %v750 = vunpack.c.l.b16 %v719
  %v751 = vunpack.c.h.b16 %v719
  %v752 = vunpack.c.l.b16 %v720
  %v753 = vunpack.c.h.b16 %v720
  %v754 = vunpack.c.l.b16 %v721
  %v755 = vunpack.c.h.b16 %v721
  %v756 = vunpack.c.l.b16 %v722
  %v757 = vunpack.c.h.b16 %v722
  %v758 = vunpack.c.l.b16 %v723
  %v759 = vunpack.c.h.b16 %v723
  %v760 = vunpack.c.l.b16 %v724
  %v761 = vunpack.c.h.b16 %v724
  %v762 = vunpack.c.l.b16 %v725
  %v763 = vunpack.c.h.b16 %v725
  %v764 = vunpack.c.l.b16 %v726
  %v765 = vpack.c.b16 %v740, %v740
  %v766 = vpack.c.b16 %v741, %v741
  %v767 = vpack.c.b16 %v742, %v742
  %v768 = vpack.c.b16 %v743, %v743
  %v769 = vpack.c.b16 %v744, %v744
  %v770 = vpack.c.b16 %v745, %v745
  %v771 = vpack.c.b16 %v746, %v746
  %v772 = vpack.c.b16 %v747, %v747
  %v773 = vpack.c.b16 %v748, %v748
  %v774 = vpack.c.b16 %v749, %v749
  %v775 = vpack.c.b16 %v750, %v750
  %v776 = vpack.c.b16 %v751, %v751
  %v777 = vpack.c.b16 %v752, %v752
  %v778 = vpack.c.b16 %v753, %v753
  %v779 = vpack.c.b16 %v754, %v754
  %v780 = vpack.c.b16 %v755, %v755
  %v781 = vpack.c.b16 %v756, %v756
  %v782 = vpack.c.b16 %v757, %v757
  %v783 = vpack.c.b16 %v758, %v758
  %v784 = vpack.c.b16 %v759, %v759
  %v785 = vpack.c.b16 %v760, %v760
  %v786 = vpack.c.b16 %v761, %v761
  %v787 = vpack.c.b16 %v762, %v762
  %v788 = vpack.c.b16 %v763, %v763
  %v789 = vpack.c.b16 %v764, %v764
  %vm815 = vcmask 519168
  %816 = vst.msk [vmem:[%s4] sm:$0xf] %vm815, %v765
  %817 = vst.msk [vmem:[%s4 + $0x4] sm:$0xf] %vm815, %v766
  %818 = vst.msk [vmem:[%s4 + $0x8] sm:$0xf] %vm815, %v767
  %819 = vst.msk [vmem:[%s4 + $0xc] sm:$0xf] %vm815, %v768
  %820 = vst.msk [vmem:[%s4 + $0x10] sm:$0xf] %vm815, %v769
  %821 = vst.msk [vmem:[%s4 + $0x14] sm:$0xf] %vm815, %v770
  %822 = vst.msk [vmem:[%s4 + $0x18] sm:$0xf] %vm815, %v771
  %823 = vst.msk [vmem:[%s4 + $0x1c] sm:$0xf] %vm815, %v772
  %824 = vst.msk [vmem:[%s4 + $0x20] sm:$0xf] %vm815, %v773
  %825 = vst.msk [vmem:[%s4 + $0x24] sm:$0xf] %vm815, %v774
  %826 = vst.msk [vmem:[%s4 + $0x28] sm:$0xf] %vm815, %v775
  %827 = vst.msk [vmem:[%s4 + $0x2c] sm:$0xf] %vm815, %v776
  %828 = vst.msk [vmem:[%s4 + $0x30] sm:$0xf] %vm815, %v777
  %829 = vst.msk [vmem:[%s4 + $0x34] sm:$0xf] %vm815, %v778
  %830 = vst.msk [vmem:[%s4 + $0x38] sm:$0xf] %vm815, %v779
  %831 = vst.msk [vmem:[%s4 + $0x3c] sm:$0xf] %vm815, %v780
  %832 = vst.msk [vmem:[%s4 + $0x40] sm:$0xf] %vm815, %v781
  %833 = vst.msk [vmem:[%s4 + $0x44] sm:$0xf] %vm815, %v782
  %834 = vst.msk [vmem:[%s4 + $0x48] sm:$0xf] %vm815, %v783
  %835 = vst.msk [vmem:[%s4 + $0x4c] sm:$0xf] %vm815, %v784
  %836 = vst.msk [vmem:[%s4 + $0x50] sm:$0xf] %vm815, %v785
  %837 = vst.msk [vmem:[%s4 + $0x54] sm:$0xf] %vm815, %v786
  %838 = vst.msk [vmem:[%s4 + $0x58] sm:$0xf] %vm815, %v787
  %839 = vst.msk [vmem:[%s4 + $0x5c] sm:$0xf] %vm815, %v788
  %840 = vst.msk [vmem:[%s4 + $0x60] sm:$0xf] %vm815, %v789
  // Predicated region
  $region18: #{_rnd_forward_impl.7} parent=0 // pred_check
    _
  $region19: #{_rnd_forward_impl.7} parent=0 // pred_check_branch
    %842 = sbr.rel (0) target = $region21
  $region20: #{_rnd_forward_impl.7} parent=0 // pred_region
    _
  $region21: #{_rnd_forward_impl.7} parent=0 // pred_fallthru
    _
  // Predicated region
  $region22: #{_rnd_forward_impl.7} parent=0 // pred_check
    _
  $region23: #{_rnd_forward_impl.7} parent=0 // pred_check_branch
    %844 = sbr.rel (0) target = $region25
  $region24: #{_rnd_forward_impl.7} parent=0 // pred_region
    _
  $region25: #{_rnd_forward_impl.7} parent=0 // pred_fallthru
    _

// kernel: _rnd_forward_impl.8
$region0: #{_rnd_forward_impl.8}
  #allocation0 [shape = 'u32[]', space=smem, size = 0x4, offset = 0x4, fixed_abs, tag = 'smem constant byte address 0x4 - core index']
  #allocation1 [shape = 'u32[144,128]{1,0:T(1,128)}', space=vmem, size = 0x12000, scoped, tag = 'internal scratch']
  %s0 = inlined_call_operand.vmem [shape: bf16[50,1024], index: 0, kind: input, shape index: {}]
  %s1 = inlined_call_operand.vmem [shape: bf16[1024,128], index: 1, kind: input, shape index: {}]
  %s2 = inlined_call_operand.vmem [shape: f32[1,128], index: 2, kind: input, shape index: {}]
  %s3 = inlined_call_operand.vmem [shape: f32[1,128], index: 3, kind: input, shape index: {}]
  %s4 = inlined_call_operand.vmem [shape: bf16[50,128], index: 4, kind: output, shape index: {}]
  %s5 = sld [smem:[#allocation0]]
  $region26: #{_rnd_forward_impl.8} parent=0
    _
  %s7 = ssub.s32 1, %s5
  %s8 = scalar_select 0, %s7, %s5
  // Predicated region
  $region2: #{_rnd_forward_impl.8} parent=0 // pred_check
    _
  $region3: #{_rnd_forward_impl.8} parent=0 // pred_check_branch
    %10 = sbr.rel (0) target = $region5
  $region4: #{_rnd_forward_impl.8} parent=0 // pred_region
    _
  $region5: #{_rnd_forward_impl.8} parent=0 // pred_fallthru
    _
  // Predicated region
  $region6: #{_rnd_forward_impl.8} parent=0 // pred_check
    _
  $region7: #{_rnd_forward_impl.8} parent=0 // pred_check_branch
    %12 = sbr.rel (0) target = $region9
  $region8: #{_rnd_forward_impl.8} parent=0 // pred_region
    _
  $region9: #{_rnd_forward_impl.8} parent=0 // pred_fallthru
    _
  // Predicated region
  $region10: #{_rnd_forward_impl.8} parent=0 // pred_check
    _
  $region11: #{_rnd_forward_impl.8} parent=0 // pred_check_branch
    %14 = sbr.rel (0) target = $region13
  $region12: #{_rnd_forward_impl.8} parent=0 // pred_region
    _
  $region13: #{_rnd_forward_impl.8} parent=0 // pred_fallthru
    _
  // Predicated region
  $region14: #{_rnd_forward_impl.8} parent=0 // pred_check
    _
  $region15: #{_rnd_forward_impl.8} parent=0 // pred_check_branch
    %16 = sbr.rel (0) target = $region17
  $region16: #{_rnd_forward_impl.8} parent=0 // pred_region
    _
  $region17: #{_rnd_forward_impl.8} parent=0 // pred_fallthru
    _
  %v18 = vld [vmem:[%s0] sm:$0xff]
  %v19 = vld [vmem:[%s0 + $0x8] sm:$0xff]
  %v20 = vld [vmem:[%s0 + $0x10] sm:$0xff]
  %v21 = vld [vmem:[%s0 + $0x18] sm:$0xff]
  %v22 = vld [vmem:[%s0 + $0x20] sm:$0xff]
  %v23 = vld [vmem:[%s0 + $0x28] sm:$0xff]
  %v24 = vld [vmem:[%s0 + $0x30] sm:$0xff]
  %v25 = vld [vmem:[%s0 + $0x38] sm:$0xff]
  %v26 = vld [vmem:[%s0 + $0x40] sm:$0xff]
  %v27 = vld [vmem:[%s0 + $0x48] sm:$0xff]
  %v28 = vld [vmem:[%s0 + $0x50] sm:$0xff]
  %v29 = vld [vmem:[%s0 + $0x58] sm:$0xff]
  %v30 = vld [vmem:[%s0 + $0x60] sm:$0xff]
  %v31 = vld [vmem:[%s0 + $0x68] sm:$0xff]
  %v32 = vld [vmem:[%s0 + $0x70] sm:$0xff]
  %v33 = vld [vmem:[%s0 + $0x78] sm:$0xff]
  %v34 = vld [vmem:[%s0 + $0x80] sm:$0xff]
  %v35 = vld [vmem:[%s0 + $0x88] sm:$0xff]
  %v36 = vld [vmem:[%s0 + $0x90] sm:$0xff]
  %v37 = vld [vmem:[%s0 + $0x98] sm:$0xff]
  %v38 = vld [vmem:[%s0 + $0xa0] sm:$0xff]
  %v39 = vld [vmem:[%s0 + $0xa8] sm:$0xff]
  %v40 = vld [vmem:[%s0 + $0xb0] sm:$0xff]
  %v41 = vld [vmem:[%s0 + $0xb8] sm:$0xff]
  %v42 = vld [vmem:[%s0 + $0xc0] sm:$0x11]
  %v43 = vld [vmem:[%s0 + $0xc8] sm:$0x11]
  %v44 = vld [vmem:[%s0 + $0xd0] sm:$0x11]
  %v45 = vld [vmem:[%s0 + $0xd8] sm:$0x11]
  %v46 = vld [vmem:[%s1] sm:$0xf]
  %v47 = vld [vmem:[%s1 + $0x4] sm:$0xf]
  %v48 = vld [vmem:[%s1 + $0x8] sm:$0xf]
  %v49 = vld [vmem:[%s1 + $0xc] sm:$0xf]
  %v50 = vld [vmem:[%s1 + $0x10] sm:$0xf]
  %v51 = vld [vmem:[%s1 + $0x14] sm:$0xf]
  %v52 = vld [vmem:[%s1 + $0x18] sm:$0xf]
  %v53 = vld [vmem:[%s1 + $0x1c] sm:$0xf]
  %v54 = vld [vmem:[%s1 + $0x20] sm:$0xf]
  %v55 = vld [vmem:[%s1 + $0x24] sm:$0xf]
  %v56 = vld [vmem:[%s1 + $0x28] sm:$0xf]
  %v57 = vld [vmem:[%s1 + $0x2c] sm:$0xf]
  %v58 = vld [vmem:[%s1 + $0x30] sm:$0xf]
  %v59 = vld [vmem:[%s1 + $0x34] sm:$0xf]
  %v60 = vld [vmem:[%s1 + $0x38] sm:$0xf]
  %v61 = vld [vmem:[%s1 + $0x3c] sm:$0xf]
  %v62 = vld [vmem:[%s1 + $0x40] sm:$0xf]
  %v63 = vld [vmem:[%s1 + $0x44] sm:$0xf]
  %v64 = vld [vmem:[%s1 + $0x48] sm:$0xf]
  %v65 = vld [vmem:[%s1 + $0x4c] sm:$0xf]
  %v66 = vld [vmem:[%s1 + $0x50] sm:$0xf]
  %v67 = vld [vmem:[%s1 + $0x54] sm:$0xf]
  %v68 = vld [vmem:[%s1 + $0x58] sm:$0xf]
  %v69 = vld [vmem:[%s1 + $0x5c] sm:$0xf]
  %v70 = vld [vmem:[%s1 + $0x60] sm:$0xf]
  %v71 = vld [vmem:[%s1 + $0x64] sm:$0xf]
  %v72 = vld [vmem:[%s1 + $0x68] sm:$0xf]
  %v73 = vld [vmem:[%s1 + $0x6c] sm:$0xf]
  %v74 = vld [vmem:[%s1 + $0x70] sm:$0xf]
  %v75 = vld [vmem:[%s1 + $0x74] sm:$0xf]
  %v76 = vld [vmem:[%s1 + $0x78] sm:$0xf]
  %v77 = vld [vmem:[%s1 + $0x7c] sm:$0xf]
  %v78 = vld [vmem:[%s1 + $0x80] sm:$0xf]
  %v79 = vld [vmem:[%s1 + $0x84] sm:$0xf]
  %v80 = vld [vmem:[%s1 + $0x88] sm:$0xf]
  %v81 = vld [vmem:[%s1 + $0x8c] sm:$0xf]
  %v82 = vld [vmem:[%s1 + $0x90] sm:$0xf]
  %v83 = vld [vmem:[%s1 + $0x94] sm:$0xf]
  %v84 = vld [vmem:[%s1 + $0x98] sm:$0xf]
  %v85 = vld [vmem:[%s1 + $0x9c] sm:$0xf]
  %v86 = vld [vmem:[%s1 + $0xa0] sm:$0xf]
  %v87 = vld [vmem:[%s1 + $0xa4] sm:$0xf]
  %v88 = vld [vmem:[%s1 + $0xa8] sm:$0xf]
  %v89 = vld [vmem:[%s1 + $0xac] sm:$0xf]
  %v90 = vld [vmem:[%s1 + $0xb0] sm:$0xf]
  %v91 = vld [vmem:[%s1 + $0xb4] sm:$0xf]
  %v92 = vld [vmem:[%s1 + $0xb8] sm:$0xf]
  %v93 = vld [vmem:[%s1 + $0xbc] sm:$0xf]
  %v94 = vld [vmem:[%s1 + $0xc0] sm:$0xf]
  %v95 = vld [vmem:[%s1 + $0xc4] sm:$0xf]
  %v96 = vld [vmem:[%s1 + $0xc8] sm:$0xf]
  %v97 = vld [vmem:[%s1 + $0xcc] sm:$0xf]
  %v98 = vld [vmem:[%s1 + $0xd0] sm:$0xf]
  %v99 = vld [vmem:[%s1 + $0xd4] sm:$0xf]
  %v100 = vld [vmem:[%s1 + $0xd8] sm:$0xf]
  %v101 = vld [vmem:[%s1 + $0xdc] sm:$0xf]
  %v102 = vld [vmem:[%s1 + $0xe0] sm:$0xf]
  %v103 = vld [vmem:[%s1 + $0xe4] sm:$0xf]
  %v104 = vld [vmem:[%s1 + $0xe8] sm:$0xf]
  %v105 = vld [vmem:[%s1 + $0xec] sm:$0xf]
  %v106 = vld [vmem:[%s1 + $0xf0] sm:$0xf]
  %v107 = vld [vmem:[%s1 + $0xf4] sm:$0xf]
  %v108 = vld [vmem:[%s1 + $0xf8] sm:$0xf]
  %v109 = vld [vmem:[%s1 + $0xfc] sm:$0xf]
  %v110 = vld [vmem:[%s1 + $0x100] sm:$0xf]
  %v111 = vld [vmem:[%s1 + $0x104] sm:$0xf]
  %v112 = vld [vmem:[%s1 + $0x108] sm:$0xf]
  %v113 = vld [vmem:[%s1 + $0x10c] sm:$0xf]
  %v114 = vld [vmem:[%s1 + $0x110] sm:$0xf]
  %v115 = vld [vmem:[%s1 + $0x114] sm:$0xf]
  %v116 = vld [vmem:[%s1 + $0x118] sm:$0xf]
  %v117 = vld [vmem:[%s1 + $0x11c] sm:$0xf]
  %v118 = vld [vmem:[%s1 + $0x120] sm:$0xf]
  %v119 = vld [vmem:[%s1 + $0x124] sm:$0xf]
  %v120 = vld [vmem:[%s1 + $0x128] sm:$0xf]
  %v121 = vld [vmem:[%s1 + $0x12c] sm:$0xf]
  %v122 = vld [vmem:[%s1 + $0x130] sm:$0xf]
  %v123 = vld [vmem:[%s1 + $0x134] sm:$0xf]
  %v124 = vld [vmem:[%s1 + $0x138] sm:$0xf]
  %v125 = vld [vmem:[%s1 + $0x13c] sm:$0xf]
  %v126 = vld [vmem:[%s1 + $0x140] sm:$0xf]
  %v127 = vld [vmem:[%s1 + $0x144] sm:$0xf]
  %v128 = vld [vmem:[%s1 + $0x148] sm:$0xf]
  %v129 = vld [vmem:[%s1 + $0x14c] sm:$0xf]
  %v130 = vld [vmem:[%s1 + $0x150] sm:$0xf]
  %v131 = vld [vmem:[%s1 + $0x154] sm:$0xf]
  %v132 = vld [vmem:[%s1 + $0x158] sm:$0xf]
  %v133 = vld [vmem:[%s1 + $0x15c] sm:$0xf]
  %v134 = vld [vmem:[%s1 + $0x160] sm:$0xf]
  %v135 = vld [vmem:[%s1 + $0x164] sm:$0xf]
  %v136 = vld [vmem:[%s1 + $0x168] sm:$0xf]
  %v137 = vld [vmem:[%s1 + $0x16c] sm:$0xf]
  %v138 = vld [vmem:[%s1 + $0x170] sm:$0xf]
  %v139 = vld [vmem:[%s1 + $0x174] sm:$0xf]
  %v140 = vld [vmem:[%s1 + $0x178] sm:$0xf]
  %v141 = vld [vmem:[%s1 + $0x17c] sm:$0xf]
  %v142 = vld [vmem:[%s1 + $0x180] sm:$0xf]
  %v143 = vld [vmem:[%s1 + $0x184] sm:$0xf]
  %v144 = vld [vmem:[%s1 + $0x188] sm:$0xf]
  %v145 = vld [vmem:[%s1 + $0x18c] sm:$0xf]
  %v146 = vld [vmem:[%s1 + $0x190] sm:$0xf]
  %v147 = vld [vmem:[%s1 + $0x194] sm:$0xf]
  %v148 = vld [vmem:[%s1 + $0x198] sm:$0xf]
  %v149 = vld [vmem:[%s1 + $0x19c] sm:$0xf]
  %v150 = vld [vmem:[%s1 + $0x1a0] sm:$0xf]
  %v151 = vld [vmem:[%s1 + $0x1a4] sm:$0xf]
  %v152 = vld [vmem:[%s1 + $0x1a8] sm:$0xf]
  %v153 = vld [vmem:[%s1 + $0x1ac] sm:$0xf]
  %v154 = vld [vmem:[%s1 + $0x1b0] sm:$0xf]
  %v155 = vld [vmem:[%s1 + $0x1b4] sm:$0xf]
  %v156 = vld [vmem:[%s1 + $0x1b8] sm:$0xf]
  %v157 = vld [vmem:[%s1 + $0x1bc] sm:$0xf]
  %v158 = vld [vmem:[%s1 + $0x1c0] sm:$0xf]
  %v159 = vld [vmem:[%s1 + $0x1c4] sm:$0xf]
  %v160 = vld [vmem:[%s1 + $0x1c8] sm:$0xf]
  %v161 = vld [vmem:[%s1 + $0x1cc] sm:$0xf]
  %v162 = vld [vmem:[%s1 + $0x1d0] sm:$0xf]
  %v163 = vld [vmem:[%s1 + $0x1d4] sm:$0xf]
  %v164 = vld [vmem:[%s1 + $0x1d8] sm:$0xf]
  %v165 = vld [vmem:[%s1 + $0x1dc] sm:$0xf]
  %v166 = vld [vmem:[%s1 + $0x1e0] sm:$0xf]
  %v167 = vld [vmem:[%s1 + $0x1e4] sm:$0xf]
  %v168 = vld [vmem:[%s1 + $0x1e8] sm:$0xf]
  %v169 = vld [vmem:[%s1 + $0x1ec] sm:$0xf]
  %v170 = vld [vmem:[%s1 + $0x1f0] sm:$0xf]
  %v171 = vld [vmem:[%s1 + $0x1f4] sm:$0xf]
  %v172 = vld [vmem:[%s1 + $0x1f8] sm:$0xf]
  %v173 = vld [vmem:[%s1 + $0x1fc] sm:$0xf]
  %v202 = vunpack.c.l.b16 %v18
  %v203 = vunpack.c.h.b16 %v18
  %v204 = vunpack.c.l.b16 %v19
  %v205 = vunpack.c.h.b16 %v19
  %v206 = vunpack.c.l.b16 %v20
  %v207 = vunpack.c.h.b16 %v20
  %v208 = vunpack.c.l.b16 %v21
  %v209 = vunpack.c.h.b16 %v21
  %v210 = vunpack.c.l.b16 %v22
  %v211 = vunpack.c.h.b16 %v22
  %v212 = vunpack.c.l.b16 %v23
  %v213 = vunpack.c.h.b16 %v23
  %v214 = vunpack.c.l.b16 %v24
  %v215 = vunpack.c.h.b16 %v24
  %v216 = vunpack.c.l.b16 %v25
  %v217 = vunpack.c.h.b16 %v25
  %v218 = vunpack.c.l.b16 %v26
  %v219 = vunpack.c.h.b16 %v26
  %v220 = vunpack.c.l.b16 %v27
  %v221 = vunpack.c.h.b16 %v27
  %v222 = vunpack.c.l.b16 %v28
  %v223 = vunpack.c.h.b16 %v28
  %v224 = vunpack.c.l.b16 %v29
  %v225 = vunpack.c.h.b16 %v29
  %v226 = vunpack.c.l.b16 %v30
  %v227 = vunpack.c.h.b16 %v30
  %v228 = vunpack.c.l.b16 %v31
  %v229 = vunpack.c.h.b16 %v31
  %v230 = vunpack.c.l.b16 %v32
  %v231 = vunpack.c.h.b16 %v32
  %v232 = vunpack.c.l.b16 %v33
  %v233 = vunpack.c.h.b16 %v33
  %v234 = vunpack.c.l.b16 %v34
  %v235 = vunpack.c.h.b16 %v34
  %v236 = vunpack.c.l.b16 %v35
  %v237 = vunpack.c.h.b16 %v35
  %v238 = vunpack.c.l.b16 %v36
  %v239 = vunpack.c.h.b16 %v36
  %v240 = vunpack.c.l.b16 %v37
  %v241 = vunpack.c.h.b16 %v37
  %v242 = vunpack.c.l.b16 %v38
  %v243 = vunpack.c.h.b16 %v38
  %v244 = vunpack.c.l.b16 %v39
  %v245 = vunpack.c.h.b16 %v39
  %v246 = vunpack.c.l.b16 %v40
  %v247 = vunpack.c.h.b16 %v40
  %v248 = vunpack.c.l.b16 %v41
  %v249 = vunpack.c.h.b16 %v41
  %v250 = vunpack.c.l.b16 %v42
  %v251 = vunpack.c.h.b16 %v42
  %v252 = vunpack.c.l.b16 %v43
  %v253 = vunpack.c.h.b16 %v43
  %v254 = vunpack.c.l.b16 %v44
  %v255 = vunpack.c.h.b16 %v44
  %v256 = vunpack.c.l.b16 %v45
  %v257 = vunpack.c.h.b16 %v45
  %v258 = vpack.c.b16 %v210, %v202
  %v259 = vpack.c.b16 %v211, %v203
  %v260 = vpack.c.b16 %v212, %v204
  %v261 = vpack.c.b16 %v213, %v205
  %v262 = vpack.c.b16 %v214, %v206
  %v263 = vpack.c.b16 %v215, %v207
  %v264 = vpack.c.b16 %v216, %v208
  %v265 = vpack.c.b16 %v217, %v209
  %v266 = vpack.c.b16 %v226, %v218
  %v267 = vpack.c.b16 %v227, %v219
  %v268 = vpack.c.b16 %v228, %v220
  %v269 = vpack.c.b16 %v229, %v221
  %v270 = vpack.c.b16 %v230, %v222
  %v271 = vpack.c.b16 %v231, %v223
  %v272 = vpack.c.b16 %v232, %v224
  %v273 = vpack.c.b16 %v233, %v225
  %v274 = vpack.c.b16 %v242, %v234
  %v275 = vpack.c.b16 %v243, %v235
  %v276 = vpack.c.b16 %v244, %v236
  %v277 = vpack.c.b16 %v245, %v237
  %v278 = vpack.c.b16 %v246, %v238
  %v279 = vpack.c.b16 %v247, %v239
  %v280 = vpack.c.b16 %v248, %v240
  %v281 = vpack.c.b16 %v249, %v241
  %v282 = vpack.c.b16 %v250, %v250
  %v283 = vpack.c.b16 %v251, %v251
  %v284 = vpack.c.b16 %v252, %v252
  %v285 = vpack.c.b16 %v253, %v253
  %v286 = vpack.c.b16 %v254, %v254
  %v287 = vpack.c.b16 %v255, %v255
  %v288 = vpack.c.b16 %v256, %v256
  %v289 = vpack.c.b16 %v257, %v257
  %v450 = vunpack.c.l.b16 %v46
  %v451 = vunpack.c.l.b16 %v47
  %v452 = vunpack.c.l.b16 %v48
  %v453 = vunpack.c.l.b16 %v49
  %v454 = vunpack.c.l.b16 %v50
  %v455 = vunpack.c.l.b16 %v51
  %v456 = vunpack.c.l.b16 %v52
  %v457 = vunpack.c.l.b16 %v53
  %v458 = vunpack.c.l.b16 %v54
  %v459 = vunpack.c.l.b16 %v55
  %v460 = vunpack.c.l.b16 %v56
  %v461 = vunpack.c.l.b16 %v57
  %v462 = vunpack.c.l.b16 %v58
  %v463 = vunpack.c.l.b16 %v59
  %v464 = vunpack.c.l.b16 %v60
  %v465 = vunpack.c.l.b16 %v61
  %v466 = vunpack.c.l.b16 %v62
  %v467 = vunpack.c.l.b16 %v63
  %v468 = vunpack.c.l.b16 %v64
  %v469 = vunpack.c.l.b16 %v65
  %v470 = vunpack.c.l.b16 %v66
  %v471 = vunpack.c.l.b16 %v67
  %v472 = vunpack.c.l.b16 %v68
  %v473 = vunpack.c.l.b16 %v69
  %v474 = vunpack.c.l.b16 %v70
  %v475 = vunpack.c.l.b16 %v71
  %v476 = vunpack.c.l.b16 %v72
  %v477 = vunpack.c.l.b16 %v73
  %v478 = vunpack.c.l.b16 %v74
  %v479 = vunpack.c.l.b16 %v75
  %v480 = vunpack.c.l.b16 %v76
  %v481 = vunpack.c.l.b16 %v77
  %v482 = vunpack.c.l.b16 %v78
  %v483 = vunpack.c.l.b16 %v79
  %v484 = vunpack.c.l.b16 %v80
  %v485 = vunpack.c.l.b16 %v81
  %v486 = vunpack.c.l.b16 %v82
  %v487 = vunpack.c.l.b16 %v83
  %v488 = vunpack.c.l.b16 %v84
  %v489 = vunpack.c.l.b16 %v85
  %v490 = vunpack.c.l.b16 %v86
  %v491 = vunpack.c.l.b16 %v87
  %v492 = vunpack.c.l.b16 %v88
  %v493 = vunpack.c.l.b16 %v89
  %v494 = vunpack.c.l.b16 %v90
  %v495 = vunpack.c.l.b16 %v91
  %v496 = vunpack.c.l.b16 %v92
  %v497 = vunpack.c.l.b16 %v93
  %v498 = vunpack.c.l.b16 %v94
  %v499 = vunpack.c.l.b16 %v95
  %v500 = vunpack.c.l.b16 %v96
  %v501 = vunpack.c.l.b16 %v97
  %v502 = vunpack.c.l.b16 %v98
  %v503 = vunpack.c.l.b16 %v99
  %v504 = vunpack.c.l.b16 %v100
  %v505 = vunpack.c.l.b16 %v101
  %v506 = vunpack.c.l.b16 %v102
  %v507 = vunpack.c.l.b16 %v103
  %v508 = vunpack.c.l.b16 %v104
  %v509 = vunpack.c.l.b16 %v105
  %v510 = vunpack.c.l.b16 %v106
  %v511 = vunpack.c.l.b16 %v107
  %v512 = vunpack.c.l.b16 %v108
  %v513 = vunpack.c.l.b16 %v109
  %v514 = vunpack.c.l.b16 %v110
  %v515 = vunpack.c.l.b16 %v111
  %v516 = vunpack.c.l.b16 %v112
  %v517 = vunpack.c.l.b16 %v113
  %v518 = vunpack.c.l.b16 %v114
  %v519 = vunpack.c.l.b16 %v115
  %v520 = vunpack.c.l.b16 %v116
  %v521 = vunpack.c.l.b16 %v117
  %v522 = vunpack.c.l.b16 %v118
  %v523 = vunpack.c.l.b16 %v119
  %v524 = vunpack.c.l.b16 %v120
  %v525 = vunpack.c.l.b16 %v121
  %v526 = vunpack.c.l.b16 %v122
  %v527 = vunpack.c.l.b16 %v123
  %v528 = vunpack.c.l.b16 %v124
  %v529 = vunpack.c.l.b16 %v125
  %v530 = vunpack.c.l.b16 %v126
  %v531 = vunpack.c.l.b16 %v127
  %v532 = vunpack.c.l.b16 %v128
  %v533 = vunpack.c.l.b16 %v129
  %v534 = vunpack.c.l.b16 %v130
  %v535 = vunpack.c.l.b16 %v131
  %v536 = vunpack.c.l.b16 %v132
  %v537 = vunpack.c.l.b16 %v133
  %v538 = vunpack.c.l.b16 %v134
  %v539 = vunpack.c.l.b16 %v135
  %v540 = vunpack.c.l.b16 %v136
  %v541 = vunpack.c.l.b16 %v137
  %v542 = vunpack.c.l.b16 %v138
  %v543 = vunpack.c.l.b16 %v139
  %v544 = vunpack.c.l.b16 %v140
  %v545 = vunpack.c.l.b16 %v141
  %v546 = vunpack.c.l.b16 %v142
  %v547 = vunpack.c.l.b16 %v143
  %v548 = vunpack.c.l.b16 %v144
  %v549 = vunpack.c.l.b16 %v145
  %v550 = vunpack.c.l.b16 %v146
  %v551 = vunpack.c.l.b16 %v147
  %v552 = vunpack.c.l.b16 %v148
  %v553 = vunpack.c.l.b16 %v149
  %v554 = vunpack.c.l.b16 %v150
  %v555 = vunpack.c.l.b16 %v151
  %v556 = vunpack.c.l.b16 %v152
  %v557 = vunpack.c.l.b16 %v153
  %v558 = vunpack.c.l.b16 %v154
  %v559 = vunpack.c.l.b16 %v155
  %v560 = vunpack.c.l.b16 %v156
  %v561 = vunpack.c.l.b16 %v157
  %v562 = vunpack.c.l.b16 %v158
  %v563 = vunpack.c.l.b16 %v159
  %v564 = vunpack.c.l.b16 %v160
  %v565 = vunpack.c.l.b16 %v161
  %v566 = vunpack.c.l.b16 %v162
  %v567 = vunpack.c.l.b16 %v163
  %v568 = vunpack.c.l.b16 %v164
  %v569 = vunpack.c.l.b16 %v165
  %v570 = vunpack.c.l.b16 %v166
  %v571 = vunpack.c.l.b16 %v167
  %v572 = vunpack.c.l.b16 %v168
  %v573 = vunpack.c.l.b16 %v169
  %v574 = vunpack.c.l.b16 %v170
  %v575 = vunpack.c.l.b16 %v171
  %v576 = vunpack.c.l.b16 %v172
  %v577 = vunpack.c.l.b16 %v173
  %v578 = vpack.c.b16 %v451, %v450
  %v579 = vpack.c.b16 %v453, %v452
  %v580 = vpack.c.b16 %v455, %v454
  %v581 = vpack.c.b16 %v457, %v456
  %v582 = vpack.c.b16 %v459, %v458
  %v583 = vpack.c.b16 %v461, %v460
  %v584 = vpack.c.b16 %v463, %v462
  %v585 = vpack.c.b16 %v465, %v464
  %v586 = vpack.c.b16 %v467, %v466
  %v587 = vpack.c.b16 %v469, %v468
  %v588 = vpack.c.b16 %v471, %v470
  %v589 = vpack.c.b16 %v473, %v472
  %v590 = vpack.c.b16 %v475, %v474
  %v591 = vpack.c.b16 %v477, %v476
  %v592 = vpack.c.b16 %v479, %v478
  %v593 = vpack.c.b16 %v481, %v480
  %v594 = vpack.c.b16 %v483, %v482
  %v595 = vpack.c.b16 %v485, %v484
  %v596 = vpack.c.b16 %v487, %v486
  %v597 = vpack.c.b16 %v489, %v488
  %v598 = vpack.c.b16 %v491, %v490
  %v599 = vpack.c.b16 %v493, %v492
  %v600 = vpack.c.b16 %v495, %v494
  %v601 = vpack.c.b16 %v497, %v496
  %v602 = vpack.c.b16 %v499, %v498
  %v603 = vpack.c.b16 %v501, %v500
  %v604 = vpack.c.b16 %v503, %v502
  %v605 = vpack.c.b16 %v505, %v504
  %v606 = vpack.c.b16 %v507, %v506
  %v607 = vpack.c.b16 %v509, %v508
  %v608 = vpack.c.b16 %v511, %v510
  %v609 = vpack.c.b16 %v513, %v512
  %v610 = vpack.c.b16 %v515, %v514
  %v611 = vpack.c.b16 %v517, %v516
  %v612 = vpack.c.b16 %v519, %v518
  %v613 = vpack.c.b16 %v521, %v520
  %v614 = vpack.c.b16 %v523, %v522
  %v615 = vpack.c.b16 %v525, %v524
  %v616 = vpack.c.b16 %v527, %v526
  %v617 = vpack.c.b16 %v529, %v528
  %v618 = vpack.c.b16 %v531, %v530
  %v619 = vpack.c.b16 %v533, %v532
  %v620 = vpack.c.b16 %v535, %v534
  %v621 = vpack.c.b16 %v537, %v536
  %v622 = vpack.c.b16 %v539, %v538
  %v623 = vpack.c.b16 %v541, %v540
  %v624 = vpack.c.b16 %v543, %v542
  %v625 = vpack.c.b16 %v545, %v544
  %v626 = vpack.c.b16 %v547, %v546
  %v627 = vpack.c.b16 %v549, %v548
  %v628 = vpack.c.b16 %v551, %v550
  %v629 = vpack.c.b16 %v553, %v552
  %v630 = vpack.c.b16 %v555, %v554
  %v631 = vpack.c.b16 %v557, %v556
  %v632 = vpack.c.b16 %v559, %v558
  %v633 = vpack.c.b16 %v561, %v560
  %v634 = vpack.c.b16 %v563, %v562
  %v635 = vpack.c.b16 %v565, %v564
  %v636 = vpack.c.b16 %v567, %v566
  %v637 = vpack.c.b16 %v569, %v568
  %v638 = vpack.c.b16 %v571, %v570
  %v639 = vpack.c.b16 %v573, %v572
  %v640 = vpack.c.b16 %v575, %v574
  %v641 = vpack.c.b16 %v577, %v576
  %706 = vmatprep.subr.bf16.mxu0 0
  %707 = vmatpush1.bf16.msra.mxu0 %v585
  %708 = vmatprep.subr.bf16.mxu0 0
  %709 = vmatpush1.bf16.msra.mxu0 %v584
  %710 = vmatprep.subr.bf16.mxu0 0
  %711 = vmatpush1.bf16.msra.mxu0 %v583
  %712 = vmatprep.subr.bf16.mxu0 0
  %713 = vmatpush1.bf16.msra.mxu0 %v582
  %714 = vmatprep.subr.bf16.mxu0 0
  %715 = vmatpush1.bf16.msra.mxu0 %v581
  %716 = vmatprep.subr.bf16.mxu0 0
  %717 = vmatpush1.bf16.msra.mxu0 %v580
  %718 = vmatprep.subr.bf16.mxu0 0
  %719 = vmatpush1.bf16.msra.mxu0 %v579
  %720 = vmatprep.subr.bf16.mxu0 0
  %721 = vmatpush1.bf16.msra.mxu0 %v578
  %722 = vmatprep.subr.bf16.mxu0 0
  %723 = vmatpush2.bf16.msra.mxu0 %v593
  %724 = vmatprep.subr.bf16.mxu0 0
  %725 = vmatpush2.bf16.msra.mxu0 %v592
  %726 = vmatprep.subr.bf16.mxu0 0
  %727 = vmatpush2.bf16.msra.mxu0 %v591
  %728 = vmatprep.subr.bf16.mxu0 0
  %729 = vmatpush2.bf16.msra.mxu0 %v590
  %730 = vmatprep.subr.bf16.mxu0 0
  %731 = vmatpush2.bf16.msra.mxu0 %v589
  %732 = vmatprep.subr.bf16.mxu0 0
  %733 = vmatpush2.bf16.msra.mxu0 %v588
  %734 = vmatprep.subr.bf16.mxu0 0
  %735 = vmatpush2.bf16.msra.mxu0 %v587
  %736 = vmatprep.subr.bf16.mxu0 0
  %737 = vmatpush2.bf16.msra.mxu0 %v586
  %738 = vmatprep.mubr.bf16.mxu0 %v259
  %739 = vmatmul.mubr.bf16.gmra.mxu0 %v258
  %v740 = vpop.f32.mrf.mxu0
  %v741 = vadd.f32 0.0, %v740
  %v742 = vpop.f32.mrf.mxu0
  %v743 = vpop.f32.mrf.mxu0
  %v744 = vadd.f32 0.0, %v743
  %v745 = vpop.f32.mrf.mxu0
  %746 = vmatprep.mubr.bf16.mxu0 %v267
  %747 = vmatmul.mubr.bf16.gmra.mxu0 %v266
  %v748 = vpop.f32.mrf.mxu0
  %v749 = vadd.f32 0.0, %v748
  %v750 = vpop.f32.mrf.mxu0
  %v751 = vpop.f32.mrf.mxu0
  %v752 = vadd.f32 0.0, %v751
  %v753 = vpop.f32.mrf.mxu0
  %754 = vmatprep.mubr.bf16.mxu0 %v275
  %755 = vmatmul.mubr.bf16.gmra.mxu0 %v274
  %v756 = vpop.f32.mrf.mxu0
  %v757 = vadd.f32 0.0, %v756
  %v758 = vpop.f32.mrf.mxu0
  %v759 = vpop.f32.mrf.mxu0
  %v760 = vadd.f32 0.0, %v759
  %v761 = vpop.f32.mrf.mxu0
  %762 = vmatprep.mubr.bf16.mxu0 %v283
  %763 = vmatmul.mubr.bf16.gmra.mxu0 %v282
  %v764 = vpop.f32.mrf.mxu0
  %v765 = vadd.f32 0.0, %v764
  %v766 = vpop.f32.mrf.mxu0
  %v767 = vpop.f32.mrf.mxu0
  %v768 = vpop.f32.mrf.mxu0
  %769 = vdwg.mxu0
  %770 = vmatprep.subr.bf16.mxu0 0
  %771 = vmatpush1.bf16.msra.mxu0 %v601
  %772 = vmatprep.subr.bf16.mxu0 0
  %773 = vmatpush1.bf16.msra.mxu0 %v600
  %774 = vmatprep.subr.bf16.mxu0 0
  %775 = vmatpush1.bf16.msra.mxu0 %v599
  %776 = vmatprep.subr.bf16.mxu0 0
  %777 = vmatpush1.bf16.msra.mxu0 %v598
  %778 = vmatprep.subr.bf16.mxu0 0
  %779 = vmatpush1.bf16.msra.mxu0 %v597
  %780 = vmatprep.subr.bf16.mxu0 0
  %781 = vmatpush1.bf16.msra.mxu0 %v596
  %782 = vmatprep.subr.bf16.mxu0 0
  %783 = vmatpush1.bf16.msra.mxu0 %v595
  %784 = vmatprep.subr.bf16.mxu0 0
  %785 = vmatpush1.bf16.msra.mxu0 %v594
  %786 = vmatprep.subr.bf16.mxu0 0
  %787 = vmatpush2.bf16.msra.mxu0 %v609
  %788 = vmatprep.subr.bf16.mxu0 0
  %789 = vmatpush2.bf16.msra.mxu0 %v608
  %790 = vmatprep.subr.bf16.mxu0 0
  %791 = vmatpush2.bf16.msra.mxu0 %v607
  %792 = vmatprep.subr.bf16.mxu0 0
  %793 = vmatpush2.bf16.msra.mxu0 %v606
  %794 = vmatprep.subr.bf16.mxu0 0
  %795 = vmatpush2.bf16.msra.mxu0 %v605
  %796 = vmatprep.subr.bf16.mxu0 0
  %797 = vmatpush2.bf16.msra.mxu0 %v604
  %798 = vmatprep.subr.bf16.mxu0 0
  %799 = vmatpush2.bf16.msra.mxu0 %v603
  %800 = vmatprep.subr.bf16.mxu0 0
  %801 = vmatpush2.bf16.msra.mxu0 %v602
  %802 = vmatprep.mubr.bf16.mxu0 %v261
  %803 = vmatmul.mubr.bf16.gmra.mxu0 %v260
  %v804 = vpop.f32.mrf.mxu0
  %v805 = vadd.f32 %v741, %v804
  %v806 = vpop.f32.mrf.mxu0
  %v807 = vpop.f32.mrf.mxu0
  %v808 = vadd.f32 %v744, %v807
  %v809 = vpop.f32.mrf.mxu0
  %810 = vmatprep.mubr.bf16.mxu0 %v269
  %811 = vmatmul.mubr.bf16.gmra.mxu0 %v268
  %v812 = vpop.f32.mrf.mxu0
  %v813 = vadd.f32 %v749, %v812
  %v814 = vpop.f32.mrf.mxu0
  %v815 = vpop.f32.mrf.mxu0
  %v816 = vadd.f32 %v752, %v815
  %v817 = vpop.f32.mrf.mxu0
  %818 = vmatprep.mubr.bf16.mxu0 %v277
  %819 = vmatmul.mubr.bf16.gmra.mxu0 %v276
  %v820 = vpop.f32.mrf.mxu0
  %v821 = vadd.f32 %v757, %v820
  %v822 = vpop.f32.mrf.mxu0
  %v823 = vpop.f32.mrf.mxu0
  %v824 = vadd.f32 %v760, %v823
  %v825 = vpop.f32.mrf.mxu0
  %826 = vmatprep.mubr.bf16.mxu0 %v285
  %827 = vmatmul.mubr.bf16.gmra.mxu0 %v284
  %v828 = vpop.f32.mrf.mxu0
  %v829 = vadd.f32 %v765, %v828
  %v830 = vpop.f32.mrf.mxu0
  %v831 = vpop.f32.mrf.mxu0
  %v832 = vpop.f32.mrf.mxu0
  %833 = vdwg.mxu0
  %834 = vmatprep.subr.bf16.mxu0 0
  %835 = vmatpush1.bf16.msra.mxu0 %v617
  %836 = vmatprep.subr.bf16.mxu0 0
  %837 = vmatpush1.bf16.msra.mxu0 %v616
  %838 = vmatprep.subr.bf16.mxu0 0
  %839 = vmatpush1.bf16.msra.mxu0 %v615
  %840 = vmatprep.subr.bf16.mxu0 0
  %841 = vmatpush1.bf16.msra.mxu0 %v614
  %842 = vmatprep.subr.bf16.mxu0 0
  %843 = vmatpush1.bf16.msra.mxu0 %v613
  %844 = vmatprep.subr.bf16.mxu0 0
  %845 = vmatpush1.bf16.msra.mxu0 %v612
  %846 = vmatprep.subr.bf16.mxu0 0
  %847 = vmatpush1.bf16.msra.mxu0 %v611
  %848 = vmatprep.subr.bf16.mxu0 0
  %849 = vmatpush1.bf16.msra.mxu0 %v610
  %850 = vmatprep.subr.bf16.mxu0 0
  %851 = vmatpush2.bf16.msra.mxu0 %v625
  %852 = vmatprep.subr.bf16.mxu0 0
  %853 = vmatpush2.bf16.msra.mxu0 %v624
  %854 = vmatprep.subr.bf16.mxu0 0
  %855 = vmatpush2.bf16.msra.mxu0 %v623
  %856 = vmatprep.subr.bf16.mxu0 0
  %857 = vmatpush2.bf16.msra.mxu0 %v622
  %858 = vmatprep.subr.bf16.mxu0 0
  %859 = vmatpush2.bf16.msra.mxu0 %v621
  %860 = vmatprep.subr.bf16.mxu0 0
  %861 = vmatpush2.bf16.msra.mxu0 %v620
  %862 = vmatprep.subr.bf16.mxu0 0
  %863 = vmatpush2.bf16.msra.mxu0 %v619
  %864 = vmatprep.subr.bf16.mxu0 0
  %865 = vmatpush2.bf16.msra.mxu0 %v618
  %866 = vmatprep.mubr.bf16.mxu0 %v263
  %867 = vmatmul.mubr.bf16.gmra.mxu0 %v262
  %v868 = vpop.f32.mrf.mxu0
  %v869 = vadd.f32 %v805, %v868
  %v870 = vpop.f32.mrf.mxu0
  %v871 = vpop.f32.mrf.mxu0
  %v872 = vadd.f32 %v808, %v871
  %v873 = vpop.f32.mrf.mxu0
  %874 = vmatprep.mubr.bf16.mxu0 %v271
  %875 = vmatmul.mubr.bf16.gmra.mxu0 %v270
  %v876 = vpop.f32.mrf.mxu0
  %v877 = vadd.f32 %v813, %v876
  %v878 = vpop.f32.mrf.mxu0
  %v879 = vpop.f32.mrf.mxu0
  %v880 = vadd.f32 %v816, %v879
  %v881 = vpop.f32.mrf.mxu0
  %882 = vmatprep.mubr.bf16.mxu0 %v279
  %883 = vmatmul.mubr.bf16.gmra.mxu0 %v278
  %v884 = vpop.f32.mrf.mxu0
  %v885 = vadd.f32 %v821, %v884
  %v886 = vpop.f32.mrf.mxu0
  %v887 = vpop.f32.mrf.mxu0
  %v888 = vadd.f32 %v824, %v887
  %v889 = vpop.f32.mrf.mxu0
  %890 = vmatprep.mubr.bf16.mxu0 %v287
  %891 = vmatmul.mubr.bf16.gmra.mxu0 %v286
  %v892 = vpop.f32.mrf.mxu0
  %v893 = vadd.f32 %v829, %v892
  %v894 = vpop.f32.mrf.mxu0
  %v895 = vpop.f32.mrf.mxu0
  %v896 = vpop.f32.mrf.mxu0
  %897 = vdwg.mxu0
  %898 = vmatprep.subr.bf16.mxu0 0
  %899 = vmatpush1.bf16.msra.mxu0 %v633
  %900 = vmatprep.subr.bf16.mxu0 0
  %901 = vmatpush1.bf16.msra.mxu0 %v632
  %902 = vmatprep.subr.bf16.mxu0 0
  %903 = vmatpush1.bf16.msra.mxu0 %v631
  %904 = vmatprep.subr.bf16.mxu0 0
  %905 = vmatpush1.bf16.msra.mxu0 %v630
  %906 = vmatprep.subr.bf16.mxu0 0
  %907 = vmatpush1.bf16.msra.mxu0 %v629
  %908 = vmatprep.subr.bf16.mxu0 0
  %909 = vmatpush1.bf16.msra.mxu0 %v628
  %910 = vmatprep.subr.bf16.mxu0 0
  %911 = vmatpush1.bf16.msra.mxu0 %v627
  %912 = vmatprep.subr.bf16.mxu0 0
  %913 = vmatpush1.bf16.msra.mxu0 %v626
  %914 = vmatprep.subr.bf16.mxu0 0
  %915 = vmatpush2.bf16.msra.mxu0 %v641
  %916 = vmatprep.subr.bf16.mxu0 0
  %917 = vmatpush2.bf16.msra.mxu0 %v640
  %918 = vmatprep.subr.bf16.mxu0 0
  %919 = vmatpush2.bf16.msra.mxu0 %v639
  %920 = vmatprep.subr.bf16.mxu0 0
  %921 = vmatpush2.bf16.msra.mxu0 %v638
  %922 = vmatprep.subr.bf16.mxu0 0
  %923 = vmatpush2.bf16.msra.mxu0 %v637
  %924 = vmatprep.subr.bf16.mxu0 0
  %925 = vmatpush2.bf16.msra.mxu0 %v636
  %926 = vmatprep.subr.bf16.mxu0 0
  %927 = vmatpush2.bf16.msra.mxu0 %v635
  %928 = vmatprep.subr.bf16.mxu0 0
  %929 = vmatpush2.bf16.msra.mxu0 %v634
  %930 = vmatprep.mubr.bf16.mxu0 %v265
  %931 = vmatmul.mubr.bf16.gmra.mxu0 %v264
  %v932 = vpop.f32.mrf.mxu0
  %v933 = vadd.f32 %v869, %v932
  %v934 = vpop.f32.mrf.mxu0
  %v935 = vpop.f32.mrf.mxu0
  %v936 = vadd.f32 %v872, %v935
  %v937 = vpop.f32.mrf.mxu0
  %938 = vmatprep.mubr.bf16.mxu0 %v273
  %939 = vmatmul.mubr.bf16.gmra.mxu0 %v272
  %v940 = vpop.f32.mrf.mxu0
  %v941 = vadd.f32 %v877, %v940
  %v942 = vpop.f32.mrf.mxu0
  %v943 = vpop.f32.mrf.mxu0
  %v944 = vadd.f32 %v880, %v943
  %v945 = vpop.f32.mrf.mxu0
  %946 = vmatprep.mubr.bf16.mxu0 %v281
  %947 = vmatmul.mubr.bf16.gmra.mxu0 %v280
  %v948 = vpop.f32.mrf.mxu0
  %v949 = vadd.f32 %v885, %v948
  %v950 = vpop.f32.mrf.mxu0
  %v951 = vpop.f32.mrf.mxu0
  %v952 = vadd.f32 %v888, %v951
  %v953 = vpop.f32.mrf.mxu0
  %954 = vmatprep.mubr.bf16.mxu0 %v289
  %955 = vmatmul.mubr.bf16.gmra.mxu0 %v288
  %v956 = vpop.f32.mrf.mxu0
  %v957 = vadd.f32 %v893, %v956
  %v958 = vpop.f32.mrf.mxu0
  %v959 = vpop.f32.mrf.mxu0
  %v960 = vpop.f32.mrf.mxu0
  %961 = vdwg.mxu0
  %v962 = vadd.f32 %v933, %v936
  %v963 = vadd.f32 %v962, %v941
  %v964 = vadd.f32 %v963, %v944
  %v965 = vadd.f32 %v964, %v949
  %v966 = vadd.f32 %v965, %v952
  %vm967 = vcmask 1041408
  %v968 = vsel %vm967, %v957, 0.0
  %v969 = vadd.f32 %v966, %v968
  %v970 = vrot.slane %v969, 4
  %v971 = vadd.f32 %v969, %v970
  %v972 = vrot.slane %v971, 2
  %v973 = vadd.f32 %v971, %v972
  %v974 = vrot.slane %v973, 1
  %v975 = vadd.f32 %v973, %v974
  %v976 = vrcp.pop 50.0
  %v977 = vmul.f32 %v975, %v976
  %v978 = vsub.f32 %v933, %v977
  %v979 = vsub.f32 %v936, %v977
  %v980 = vsub.f32 %v941, %v977
  %v981 = vsub.f32 %v944, %v977
  %v982 = vsub.f32 %v949, %v977
  %v983 = vsub.f32 %v952, %v977
  %v984 = vsub.f32 %v957, %v977
  %v985 = vmul.f32 %v978, %v978
  %v986 = vmul.f32 %v979, %v979
  %v987 = vmul.f32 %v980, %v980
  %v988 = vmul.f32 %v981, %v981
  %v989 = vmul.f32 %v982, %v982
  %v990 = vmul.f32 %v983, %v983
  %v991 = vmul.f32 %v984, %v984
  %v992 = vadd.f32 %v985, %v986
  %v993 = vadd.f32 %v992, %v987
  %v994 = vadd.f32 %v993, %v988
  %v995 = vadd.f32 %v994, %v989
  %v996 = vadd.f32 %v995, %v990
  %v997 = vsel %vm967, %v991, 0.0
  %v998 = vadd.f32 %v996, %v997
  %v999 = vrot.slane %v998, 4
  %v1000 = vadd.f32 %v998, %v999
  %v1001 = vrot.slane %v1000, 2
  %v1002 = vadd.f32 %v1000, %v1001
  %v1003 = vrot.slane %v1002, 1
  %v1004 = vadd.f32 %v1002, %v1003
  %v1005 = vmul.f32 %v1004, %v976
  %v1006 = vadd.f32 %v1005, 1e-05
  %v1007 = vrsqrt.pop %v1006
  %v1008 = vmul.f32 %v978, %v1007
  %v1009 = vmul.f32 %v979, %v1007
  %v1010 = vmul.f32 %v980, %v1007
  %v1011 = vmul.f32 %v981, %v1007
  %v1012 = vmul.f32 %v982, %v1007
  %v1013 = vmul.f32 %v983, %v1007
  %v1014 = vmul.f32 %v984, %v1007
  %v1015 = vld [vmem:[%s2] sm:$0x1]
  %v1017 = vlaneseq
  %v1018 = vshrl.u32 %v1017, 7
  %v1019 = vsub.s32 0, %v1018
  %v1020 = vrot.slane %v1015, %v1019
  %v1022 = vmul.f32 %v1008, %v1020
  %v1023 = vmul.f32 %v1009, %v1020
  %v1024 = vmul.f32 %v1010, %v1020
  %v1025 = vmul.f32 %v1011, %v1020
  %v1026 = vmul.f32 %v1012, %v1020
  %v1027 = vmul.f32 %v1013, %v1020
  %v1028 = vmul.f32 %v1014, %v1020
  %v1029 = vld [vmem:[%s3] sm:$0x1]
  %v1031 = vlaneseq
  %v1032 = vshrl.u32 %v1031, 7
  %v1033 = vsub.s32 0, %v1032
  %v1034 = vrot.slane %v1029, %v1033
  %v1036 = vadd.f32 %v1022, %v1034
  %v1037 = vadd.f32 %v1023, %v1034
  %v1038 = vadd.f32 %v1024, %v1034
  %v1039 = vadd.f32 %v1025, %v1034
  %v1040 = vadd.f32 %v1026, %v1034
  %v1041 = vadd.f32 %v1027, %v1034
  %v1042 = vadd.f32 %v1028, %v1034
  %v1043 = vmax.f32 %v1036, 0.0
  %v1044 = vmax.f32 %v1037, 0.0
  %v1045 = vmax.f32 %v1038, 0.0
  %v1046 = vmax.f32 %v1039, 0.0
  %v1047 = vmax.f32 %v1040, 0.0
  %v1048 = vmax.f32 %v1041, 0.0
  %v1049 = vmax.f32 %v1042, 0.0
  %v1050 = vpack.c.bf16 %v1044, %v1043
  %v1051 = vpack.c.bf16 %v1046, %v1045
  %v1052 = vpack.c.bf16 %v1048, %v1047
  %v1053 = vpack.c.bf16 %v1049, %v1049
  %v1058 = vunpack.c.l.b16 %v1050
  %v1059 = vunpack.c.h.b16 %v1050
  %v1060 = vunpack.c.l.b16 %v1051
  %v1061 = vunpack.c.h.b16 %v1051
  %v1062 = vunpack.c.l.b16 %v1052
  %v1063 = vunpack.c.h.b16 %v1052
  %v1064 = vunpack.c.l.b16 %v1053
  %v1065 = vpack.c.b16 %v1058, %v1058
  %v1066 = vpack.c.b16 %v1059, %v1059
  %v1067 = vpack.c.b16 %v1060, %v1060
  %v1068 = vpack.c.b16 %v1061, %v1061
  %v1069 = vpack.c.b16 %v1062, %v1062
  %v1070 = vpack.c.b16 %v1063, %v1063
  %v1071 = vpack.c.b16 %v1064, %v1064
  %1079 = vst [vmem:[%s4] sm:$0xf] %v1065
  %1080 = vst [vmem:[%s4 + $0x4] sm:$0xf] %v1066
  %1081 = vst [vmem:[%s4 + $0x8] sm:$0xf] %v1067
  %1082 = vst [vmem:[%s4 + $0xc] sm:$0xf] %v1068
  %1083 = vst [vmem:[%s4 + $0x10] sm:$0xf] %v1069
  %1084 = vst [vmem:[%s4 + $0x14] sm:$0xf] %v1070
  %1085 = vst [vmem:[%s4 + $0x18] sm:$0x1] %v1071
  // Predicated region
  $region18: #{_rnd_forward_impl.8} parent=0 // pred_check
    _
  $region19: #{_rnd_forward_impl.8} parent=0 // pred_check_branch
    %1087 = sbr.rel (0) target = $region21
  $region20: #{_rnd_forward_impl.8} parent=0 // pred_region
    _
  $region21: #{_rnd_forward_impl.8} parent=0 // pred_fallthru
    _
  // Predicated region
  $region22: #{_rnd_forward_impl.8} parent=0 // pred_check
    _
  $region23: #{_rnd_forward_impl.8} parent=0 // pred_check_branch
    %1089 = sbr.rel (0) target = $region25
  $region24: #{_rnd_forward_impl.8} parent=0 // pred_region
    _
  $region25: #{_rnd_forward_impl.8} parent=0 // pred_fallthru
    _

// kernel: _rnd_forward_impl.9
$region0: #{_rnd_forward_impl.9}
  #allocation0 [shape = 'u32[]', space=smem, size = 0x4, offset = 0x4, fixed_abs, tag = 'smem constant byte address 0x4 - core index']
  #allocation1 [shape = 'u32[144,128]{1,0:T(1,128)}', space=vmem, size = 0x12000, scoped, tag = 'internal scratch']
  %s0 = inlined_call_operand.vmem [shape: bf16[50,1152], index: 0, kind: input, shape index: {}]
  %s1 = inlined_call_operand.vmem [shape: bf16[1152,128], index: 1, kind: input, shape index: {}]
  %s2 = inlined_call_operand.vmem [shape: f32[1,128], index: 2, kind: input, shape index: {}]
  %s3 = inlined_call_operand.vmem [shape: f32[1,128], index: 3, kind: input, shape index: {}]
  %s4 = inlined_call_operand.vmem [shape: bf16[50,128], index: 4, kind: output, shape index: {}]
  %s5 = sld [smem:[#allocation0]]
  $region26: #{_rnd_forward_impl.9} parent=0
    _
  %s7 = ssub.s32 1, %s5
  %s8 = scalar_select 0, %s7, %s5
  // Predicated region
  $region2: #{_rnd_forward_impl.9} parent=0 // pred_check
    _
  $region3: #{_rnd_forward_impl.9} parent=0 // pred_check_branch
    %10 = sbr.rel (0) target = $region5
  $region4: #{_rnd_forward_impl.9} parent=0 // pred_region
    _
  $region5: #{_rnd_forward_impl.9} parent=0 // pred_fallthru
    _
  // Predicated region
  $region6: #{_rnd_forward_impl.9} parent=0 // pred_check
    _
  $region7: #{_rnd_forward_impl.9} parent=0 // pred_check_branch
    %12 = sbr.rel (0) target = $region9
  $region8: #{_rnd_forward_impl.9} parent=0 // pred_region
    _
  $region9: #{_rnd_forward_impl.9} parent=0 // pred_fallthru
    _
  // Predicated region
  $region10: #{_rnd_forward_impl.9} parent=0 // pred_check
    _
  $region11: #{_rnd_forward_impl.9} parent=0 // pred_check_branch
    %14 = sbr.rel (0) target = $region13
  $region12: #{_rnd_forward_impl.9} parent=0 // pred_region
    _
  $region13: #{_rnd_forward_impl.9} parent=0 // pred_fallthru
    _
  // Predicated region
  $region14: #{_rnd_forward_impl.9} parent=0 // pred_check
    _
  $region15: #{_rnd_forward_impl.9} parent=0 // pred_check_branch
    %16 = sbr.rel (0) target = $region17
  $region16: #{_rnd_forward_impl.9} parent=0 // pred_region
    _
  $region17: #{_rnd_forward_impl.9} parent=0 // pred_fallthru
    _
  %v18 = vld [vmem:[%s0] sm:$0xff]
  %v19 = vld [vmem:[%s0 + $0x8] sm:$0xff]
  %v20 = vld [vmem:[%s0 + $0x10] sm:$0xff]
  %v21 = vld [vmem:[%s0 + $0x18] sm:$0xff]
  %v22 = vld [vmem:[%s0 + $0x20] sm:$0xf]
  %v23 = vld [vmem:[%s0 + $0x24] sm:$0xff]
  %v24 = vld [vmem:[%s0 + $0x2c] sm:$0xff]
  %v25 = vld [vmem:[%s0 + $0x34] sm:$0xff]
  %v26 = vld [vmem:[%s0 + $0x3c] sm:$0xff]
  %v27 = vld [vmem:[%s0 + $0x44] sm:$0xf]
  %v28 = vld [vmem:[%s0 + $0x48] sm:$0xff]
  %v29 = vld [vmem:[%s0 + $0x50] sm:$0xff]
  %v30 = vld [vmem:[%s0 + $0x58] sm:$0xff]
  %v31 = vld [vmem:[%s0 + $0x60] sm:$0xff]
  %v32 = vld [vmem:[%s0 + $0x68] sm:$0xf]
  %v33 = vld [vmem:[%s0 + $0x6c] sm:$0xff]
  %v34 = vld [vmem:[%s0 + $0x74] sm:$0xff]
  %v35 = vld [vmem:[%s0 + $0x7c] sm:$0xff]
  %v36 = vld [vmem:[%s0 + $0x84] sm:$0xff]
  %v37 = vld [vmem:[%s0 + $0x8c] sm:$0xf]
  %v38 = vld [vmem:[%s0 + $0x90] sm:$0xff]
  %v39 = vld [vmem:[%s0 + $0x98] sm:$0xff]
  %v40 = vld [vmem:[%s0 + $0xa0] sm:$0xff]
  %v41 = vld [vmem:[%s0 + $0xa8] sm:$0xff]
  %v42 = vld [vmem:[%s0 + $0xb0] sm:$0xf]
  %v43 = vld [vmem:[%s0 + $0xb4] sm:$0xff]
  %v44 = vld [vmem:[%s0 + $0xbc] sm:$0xff]
  %v45 = vld [vmem:[%s0 + $0xc4] sm:$0xff]
  %v46 = vld [vmem:[%s0 + $0xcc] sm:$0xff]
  %v47 = vld [vmem:[%s0 + $0xd4] sm:$0xf]
  %v48 = vld [vmem:[%s0 + $0xd8] sm:$0x11]
  %v49 = vld [vmem:[%s0 + $0xe0] sm:$0x11]
  %v50 = vld [vmem:[%s0 + $0xe8] sm:$0x11]
  %v51 = vld [vmem:[%s0 + $0xf0] sm:$0x11]
  %v52 = vld [vmem:[%s0 + $0xf8] sm:$0x1]
  %v53 = vld [vmem:[%s1] sm:$0xf]
  %v54 = vld [vmem:[%s1 + $0x4] sm:$0xf]
  %v55 = vld [vmem:[%s1 + $0x8] sm:$0xf]
  %v56 = vld [vmem:[%s1 + $0xc] sm:$0xf]
  %v57 = vld [vmem:[%s1 + $0x10] sm:$0xf]
  %v58 = vld [vmem:[%s1 + $0x14] sm:$0xf]
  %v59 = vld [vmem:[%s1 + $0x18] sm:$0xf]
  %v60 = vld [vmem:[%s1 + $0x1c] sm:$0xf]
  %v61 = vld [vmem:[%s1 + $0x20] sm:$0xf]
  %v62 = vld [vmem:[%s1 + $0x24] sm:$0xf]
  %v63 = vld [vmem:[%s1 + $0x28] sm:$0xf]
  %v64 = vld [vmem:[%s1 + $0x2c] sm:$0xf]
  %v65 = vld [vmem:[%s1 + $0x30] sm:$0xf]
  %v66 = vld [vmem:[%s1 + $0x34] sm:$0xf]
  %v67 = vld [vmem:[%s1 + $0x38] sm:$0xf]
  %v68 = vld [vmem:[%s1 + $0x3c] sm:$0xf]
  %v69 = vld [vmem:[%s1 + $0x40] sm:$0xf]
  %v70 = vld [vmem:[%s1 + $0x44] sm:$0xf]
  %v71 = vld [vmem:[%s1 + $0x48] sm:$0xf]
  %v72 = vld [vmem:[%s1 + $0x4c] sm:$0xf]
  %v73 = vld [vmem:[%s1 + $0x50] sm:$0xf]
  %v74 = vld [vmem:[%s1 + $0x54] sm:$0xf]
  %v75 = vld [vmem:[%s1 + $0x58] sm:$0xf]
  %v76 = vld [vmem:[%s1 + $0x5c] sm:$0xf]
  %v77 = vld [vmem:[%s1 + $0x60] sm:$0xf]
  %v78 = vld [vmem:[%s1 + $0x64] sm:$0xf]
  %v79 = vld [vmem:[%s1 + $0x68] sm:$0xf]
  %v80 = vld [vmem:[%s1 + $0x6c] sm:$0xf]
  %v81 = vld [vmem:[%s1 + $0x70] sm:$0xf]
  %v82 = vld [vmem:[%s1 + $0x74] sm:$0xf]
  %v83 = vld [vmem:[%s1 + $0x78] sm:$0xf]
  %v84 = vld [vmem:[%s1 + $0x7c] sm:$0xf]
  %v85 = vld [vmem:[%s1 + $0x80] sm:$0xf]
  %v86 = vld [vmem:[%s1 + $0x84] sm:$0xf]
  %v87 = vld [vmem:[%s1 + $0x88] sm:$0xf]
  %v88 = vld [vmem:[%s1 + $0x8c] sm:$0xf]
  %v89 = vld [vmem:[%s1 + $0x90] sm:$0xf]
  %v90 = vld [vmem:[%s1 + $0x94] sm:$0xf]
  %v91 = vld [vmem:[%s1 + $0x98] sm:$0xf]
  %v92 = vld [vmem:[%s1 + $0x9c] sm:$0xf]
  %v93 = vld [vmem:[%s1 + $0xa0] sm:$0xf]
  %v94 = vld [vmem:[%s1 + $0xa4] sm:$0xf]
  %v95 = vld [vmem:[%s1 + $0xa8] sm:$0xf]
  %v96 = vld [vmem:[%s1 + $0xac] sm:$0xf]
  %v97 = vld [vmem:[%s1 + $0xb0] sm:$0xf]
  %v98 = vld [vmem:[%s1 + $0xb4] sm:$0xf]
  %v99 = vld [vmem:[%s1 + $0xb8] sm:$0xf]
  %v100 = vld [vmem:[%s1 + $0xbc] sm:$0xf]
  %v101 = vld [vmem:[%s1 + $0xc0] sm:$0xf]
  %v102 = vld [vmem:[%s1 + $0xc4] sm:$0xf]
  %v103 = vld [vmem:[%s1 + $0xc8] sm:$0xf]
  %v104 = vld [vmem:[%s1 + $0xcc] sm:$0xf]
  %v105 = vld [vmem:[%s1 + $0xd0] sm:$0xf]
  %v106 = vld [vmem:[%s1 + $0xd4] sm:$0xf]
  %v107 = vld [vmem:[%s1 + $0xd8] sm:$0xf]
  %v108 = vld [vmem:[%s1 + $0xdc] sm:$0xf]
  %v109 = vld [vmem:[%s1 + $0xe0] sm:$0xf]
  %v110 = vld [vmem:[%s1 + $0xe4] sm:$0xf]
  %v111 = vld [vmem:[%s1 + $0xe8] sm:$0xf]
  %v112 = vld [vmem:[%s1 + $0xec] sm:$0xf]
  %v113 = vld [vmem:[%s1 + $0xf0] sm:$0xf]
  %v114 = vld [vmem:[%s1 + $0xf4] sm:$0xf]
  %v115 = vld [vmem:[%s1 + $0xf8] sm:$0xf]
  %v116 = vld [vmem:[%s1 + $0xfc] sm:$0xf]
  %v117 = vld [vmem:[%s1 + $0x100] sm:$0xf]
  %v118 = vld [vmem:[%s1 + $0x104] sm:$0xf]
  %v119 = vld [vmem:[%s1 + $0x108] sm:$0xf]
  %v120 = vld [vmem:[%s1 + $0x10c] sm:$0xf]
  %v121 = vld [vmem:[%s1 + $0x110] sm:$0xf]
  %v122 = vld [vmem:[%s1 + $0x114] sm:$0xf]
  %v123 = vld [vmem:[%s1 + $0x118] sm:$0xf]
  %v124 = vld [vmem:[%s1 + $0x11c] sm:$0xf]
  %v125 = vld [vmem:[%s1 + $0x120] sm:$0xf]
  %v126 = vld [vmem:[%s1 + $0x124] sm:$0xf]
  %v127 = vld [vmem:[%s1 + $0x128] sm:$0xf]
  %v128 = vld [vmem:[%s1 + $0x12c] sm:$0xf]
  %v129 = vld [vmem:[%s1 + $0x130] sm:$0xf]
  %v130 = vld [vmem:[%s1 + $0x134] sm:$0xf]
  %v131 = vld [vmem:[%s1 + $0x138] sm:$0xf]
  %v132 = vld [vmem:[%s1 + $0x13c] sm:$0xf]
  %v133 = vld [vmem:[%s1 + $0x140] sm:$0xf]
  %v134 = vld [vmem:[%s1 + $0x144] sm:$0xf]
  %v135 = vld [vmem:[%s1 + $0x148] sm:$0xf]
  %v136 = vld [vmem:[%s1 + $0x14c] sm:$0xf]
  %v137 = vld [vmem:[%s1 + $0x150] sm:$0xf]
  %v138 = vld [vmem:[%s1 + $0x154] sm:$0xf]
  %v139 = vld [vmem:[%s1 + $0x158] sm:$0xf]
  %v140 = vld [vmem:[%s1 + $0x15c] sm:$0xf]
  %v141 = vld [vmem:[%s1 + $0x160] sm:$0xf]
  %v142 = vld [vmem:[%s1 + $0x164] sm:$0xf]
  %v143 = vld [vmem:[%s1 + $0x168] sm:$0xf]
  %v144 = vld [vmem:[%s1 + $0x16c] sm:$0xf]
  %v145 = vld [vmem:[%s1 + $0x170] sm:$0xf]
  %v146 = vld [vmem:[%s1 + $0x174] sm:$0xf]
  %v147 = vld [vmem:[%s1 + $0x178] sm:$0xf]
  %v148 = vld [vmem:[%s1 + $0x17c] sm:$0xf]
  %v149 = vld [vmem:[%s1 + $0x180] sm:$0xf]
  %v150 = vld [vmem:[%s1 + $0x184] sm:$0xf]
  %v151 = vld [vmem:[%s1 + $0x188] sm:$0xf]
  %v152 = vld [vmem:[%s1 + $0x18c] sm:$0xf]
  %v153 = vld [vmem:[%s1 + $0x190] sm:$0xf]
  %v154 = vld [vmem:[%s1 + $0x194] sm:$0xf]
  %v155 = vld [vmem:[%s1 + $0x198] sm:$0xf]
  %v156 = vld [vmem:[%s1 + $0x19c] sm:$0xf]
  %v157 = vld [vmem:[%s1 + $0x1a0] sm:$0xf]
  %v158 = vld [vmem:[%s1 + $0x1a4] sm:$0xf]
  %v159 = vld [vmem:[%s1 + $0x1a8] sm:$0xf]
  %v160 = vld [vmem:[%s1 + $0x1ac] sm:$0xf]
  %v161 = vld [vmem:[%s1 + $0x1b0] sm:$0xf]
  %v162 = vld [vmem:[%s1 + $0x1b4] sm:$0xf]
  %v163 = vld [vmem:[%s1 + $0x1b8] sm:$0xf]
  %v164 = vld [vmem:[%s1 + $0x1bc] sm:$0xf]
  %v165 = vld [vmem:[%s1 + $0x1c0] sm:$0xf]
  %v166 = vld [vmem:[%s1 + $0x1c4] sm:$0xf]
  %v167 = vld [vmem:[%s1 + $0x1c8] sm:$0xf]
  %v168 = vld [vmem:[%s1 + $0x1cc] sm:$0xf]
  %v169 = vld [vmem:[%s1 + $0x1d0] sm:$0xf]
  %v170 = vld [vmem:[%s1 + $0x1d4] sm:$0xf]
  %v171 = vld [vmem:[%s1 + $0x1d8] sm:$0xf]
  %v172 = vld [vmem:[%s1 + $0x1dc] sm:$0xf]
  %v173 = vld [vmem:[%s1 + $0x1e0] sm:$0xf]
  %v174 = vld [vmem:[%s1 + $0x1e4] sm:$0xf]
  %v175 = vld [vmem:[%s1 + $0x1e8] sm:$0xf]
  %v176 = vld [vmem:[%s1 + $0x1ec] sm:$0xf]
  %v177 = vld [vmem:[%s1 + $0x1f0] sm:$0xf]
  %v178 = vld [vmem:[%s1 + $0x1f4] sm:$0xf]
  %v179 = vld [vmem:[%s1 + $0x1f8] sm:$0xf]
  %v180 = vld [vmem:[%s1 + $0x1fc] sm:$0xf]
  %v181 = vld [vmem:[%s1 + $0x200] sm:$0xf]
  %v182 = vld [vmem:[%s1 + $0x204] sm:$0xf]
  %v183 = vld [vmem:[%s1 + $0x208] sm:$0xf]
  %v184 = vld [vmem:[%s1 + $0x20c] sm:$0xf]
  %v185 = vld [vmem:[%s1 + $0x210] sm:$0xf]
  %v186 = vld [vmem:[%s1 + $0x214] sm:$0xf]
  %v187 = vld [vmem:[%s1 + $0x218] sm:$0xf]
  %v188 = vld [vmem:[%s1 + $0x21c] sm:$0xf]
  %v189 = vld [vmem:[%s1 + $0x220] sm:$0xf]
  %v190 = vld [vmem:[%s1 + $0x224] sm:$0xf]
  %v191 = vld [vmem:[%s1 + $0x228] sm:$0xf]
  %v192 = vld [vmem:[%s1 + $0x22c] sm:$0xf]
  %v193 = vld [vmem:[%s1 + $0x230] sm:$0xf]
  %v194 = vld [vmem:[%s1 + $0x234] sm:$0xf]
  %v195 = vld [vmem:[%s1 + $0x238] sm:$0xf]
  %v196 = vld [vmem:[%s1 + $0x23c] sm:$0xf]
  %v232 = vunpack.c.l.b16 %v18
  %v233 = vunpack.c.h.b16 %v18
  %v234 = vunpack.c.l.b16 %v19
  %v235 = vunpack.c.h.b16 %v19
  %v236 = vunpack.c.l.b16 %v20
  %v237 = vunpack.c.h.b16 %v20
  %v238 = vunpack.c.l.b16 %v21
  %v239 = vunpack.c.h.b16 %v21
  %v240 = vunpack.c.l.b16 %v22
  %v241 = vunpack.c.l.b16 %v23
  %v242 = vunpack.c.h.b16 %v23
  %v243 = vunpack.c.l.b16 %v24
  %v244 = vunpack.c.h.b16 %v24
  %v245 = vunpack.c.l.b16 %v25
  %v246 = vunpack.c.h.b16 %v25
  %v247 = vunpack.c.l.b16 %v26
  %v248 = vunpack.c.h.b16 %v26
  %v249 = vunpack.c.l.b16 %v27
  %v250 = vunpack.c.l.b16 %v28
  %v251 = vunpack.c.h.b16 %v28
  %v252 = vunpack.c.l.b16 %v29
  %v253 = vunpack.c.h.b16 %v29
  %v254 = vunpack.c.l.b16 %v30
  %v255 = vunpack.c.h.b16 %v30
  %v256 = vunpack.c.l.b16 %v31
  %v257 = vunpack.c.h.b16 %v31
  %v258 = vunpack.c.l.b16 %v32
  %v259 = vunpack.c.l.b16 %v33
  %v260 = vunpack.c.h.b16 %v33
  %v261 = vunpack.c.l.b16 %v34
  %v262 = vunpack.c.h.b16 %v34
  %v263 = vunpack.c.l.b16 %v35
  %v264 = vunpack.c.h.b16 %v35
  %v265 = vunpack.c.l.b16 %v36
  %v266 = vunpack.c.h.b16 %v36
  %v267 = vunpack.c.l.b16 %v37
  %v268 = vunpack.c.l.b16 %v38
  %v269 = vunpack.c.h.b16 %v38
  %v270 = vunpack.c.l.b16 %v39
  %v271 = vunpack.c.h.b16 %v39
  %v272 = vunpack.c.l.b16 %v40
  %v273 = vunpack.c.h.b16 %v40
  %v274 = vunpack.c.l.b16 %v41
  %v275 = vunpack.c.h.b16 %v41
  %v276 = vunpack.c.l.b16 %v42
  %v277 = vunpack.c.l.b16 %v43
  %v278 = vunpack.c.h.b16 %v43
  %v279 = vunpack.c.l.b16 %v44
  %v280 = vunpack.c.h.b16 %v44
  %v281 = vunpack.c.l.b16 %v45
  %v282 = vunpack.c.h.b16 %v45
  %v283 = vunpack.c.l.b16 %v46
  %v284 = vunpack.c.h.b16 %v46
  %v285 = vunpack.c.l.b16 %v47
  %v286 = vunpack.c.l.b16 %v48
  %v287 = vunpack.c.h.b16 %v48
  %v288 = vunpack.c.l.b16 %v49
  %v289 = vunpack.c.h.b16 %v49
  %v290 = vunpack.c.l.b16 %v50
  %v291 = vunpack.c.h.b16 %v50
  %v292 = vunpack.c.l.b16 %v51
  %v293 = vunpack.c.h.b16 %v51
  %v294 = vunpack.c.l.b16 %v52
  %v295 = vpack.c.b16 %v241, %v232
  %v296 = vpack.c.b16 %v242, %v233
  %v297 = vpack.c.b16 %v243, %v234
  %v298 = vpack.c.b16 %v244, %v235
  %v299 = vpack.c.b16 %v245, %v236
  %v300 = vpack.c.b16 %v246, %v237
  %v301 = vpack.c.b16 %v247, %v238
  %v302 = vpack.c.b16 %v248, %v239
  %v303 = vpack.c.b16 %v249, %v240
  %v304 = vpack.c.b16 %v259, %v250
  %v305 = vpack.c.b16 %v260, %v251
  %v306 = vpack.c.b16 %v261, %v252
  %v307 = vpack.c.b16 %v262, %v253
  %v308 = vpack.c.b16 %v263, %v254
  %v309 = vpack.c.b16 %v264, %v255
  %v310 = vpack.c.b16 %v265, %v256
  %v311 = vpack.c.b16 %v266, %v257
  %v312 = vpack.c.b16 %v267, %v258
  %v313 = vpack.c.b16 %v277, %v268
  %v314 = vpack.c.b16 %v278, %v269
  %v315 = vpack.c.b16 %v279, %v270
  %v316 = vpack.c.b16 %v280, %v271
  %v317 = vpack.c.b16 %v281, %v272
  %v318 = vpack.c.b16 %v282, %v273
  %v319 = vpack.c.b16 %v283, %v274
  %v320 = vpack.c.b16 %v284, %v275
  %v321 = vpack.c.b16 %v285, %v276
  %v322 = vpack.c.b16 %v286, %v286
  %v323 = vpack.c.b16 %v287, %v287
  %v324 = vpack.c.b16 %v288, %v288
  %v325 = vpack.c.b16 %v289, %v289
  %v326 = vpack.c.b16 %v290, %v290
  %v327 = vpack.c.b16 %v291, %v291
  %v328 = vpack.c.b16 %v292, %v292
  %v329 = vpack.c.b16 %v293, %v293
  %v330 = vpack.c.b16 %v294, %v294
  %v511 = vunpack.c.l.b16 %v53
  %v512 = vunpack.c.l.b16 %v54
  %v513 = vunpack.c.l.b16 %v55
  %v514 = vunpack.c.l.b16 %v56
  %v515 = vunpack.c.l.b16 %v57
  %v516 = vunpack.c.l.b16 %v58
  %v517 = vunpack.c.l.b16 %v59
  %v518 = vunpack.c.l.b16 %v60
  %v519 = vunpack.c.l.b16 %v61
  %v520 = vunpack.c.l.b16 %v62
  %v521 = vunpack.c.l.b16 %v63
  %v522 = vunpack.c.l.b16 %v64
  %v523 = vunpack.c.l.b16 %v65
  %v524 = vunpack.c.l.b16 %v66
  %v525 = vunpack.c.l.b16 %v67
  %v526 = vunpack.c.l.b16 %v68
  %v527 = vunpack.c.l.b16 %v69
  %v528 = vunpack.c.l.b16 %v70
  %v529 = vunpack.c.l.b16 %v71
  %v530 = vunpack.c.l.b16 %v72
  %v531 = vunpack.c.l.b16 %v73
  %v532 = vunpack.c.l.b16 %v74
  %v533 = vunpack.c.l.b16 %v75
  %v534 = vunpack.c.l.b16 %v76
  %v535 = vunpack.c.l.b16 %v77
  %v536 = vunpack.c.l.b16 %v78
  %v537 = vunpack.c.l.b16 %v79
  %v538 = vunpack.c.l.b16 %v80
  %v539 = vunpack.c.l.b16 %v81
  %v540 = vunpack.c.l.b16 %v82
  %v541 = vunpack.c.l.b16 %v83
  %v542 = vunpack.c.l.b16 %v84
  %v543 = vunpack.c.l.b16 %v85
  %v544 = vunpack.c.l.b16 %v86
  %v545 = vunpack.c.l.b16 %v87
  %v546 = vunpack.c.l.b16 %v88
  %v547 = vunpack.c.l.b16 %v89
  %v548 = vunpack.c.l.b16 %v90
  %v549 = vunpack.c.l.b16 %v91
  %v550 = vunpack.c.l.b16 %v92
  %v551 = vunpack.c.l.b16 %v93
  %v552 = vunpack.c.l.b16 %v94
  %v553 = vunpack.c.l.b16 %v95
  %v554 = vunpack.c.l.b16 %v96
  %v555 = vunpack.c.l.b16 %v97
  %v556 = vunpack.c.l.b16 %v98
  %v557 = vunpack.c.l.b16 %v99
  %v558 = vunpack.c.l.b16 %v100
  %v559 = vunpack.c.l.b16 %v101
  %v560 = vunpack.c.l.b16 %v102
  %v561 = vunpack.c.l.b16 %v103
  %v562 = vunpack.c.l.b16 %v104
  %v563 = vunpack.c.l.b16 %v105
  %v564 = vunpack.c.l.b16 %v106
  %v565 = vunpack.c.l.b16 %v107
  %v566 = vunpack.c.l.b16 %v108
  %v567 = vunpack.c.l.b16 %v109
  %v568 = vunpack.c.l.b16 %v110
  %v569 = vunpack.c.l.b16 %v111
  %v570 = vunpack.c.l.b16 %v112
  %v571 = vunpack.c.l.b16 %v113
  %v572 = vunpack.c.l.b16 %v114
  %v573 = vunpack.c.l.b16 %v115
  %v574 = vunpack.c.l.b16 %v116
  %v575 = vunpack.c.l.b16 %v117
  %v576 = vunpack.c.l.b16 %v118
  %v577 = vunpack.c.l.b16 %v119
  %v578 = vunpack.c.l.b16 %v120
  %v579 = vunpack.c.l.b16 %v121
  %v580 = vunpack.c.l.b16 %v122
  %v581 = vunpack.c.l.b16 %v123
  %v582 = vunpack.c.l.b16 %v124
  %v583 = vunpack.c.l.b16 %v125
  %v584 = vunpack.c.l.b16 %v126
  %v585 = vunpack.c.l.b16 %v127
  %v586 = vunpack.c.l.b16 %v128
  %v587 = vunpack.c.l.b16 %v129
  %v588 = vunpack.c.l.b16 %v130
  %v589 = vunpack.c.l.b16 %v131
  %v590 = vunpack.c.l.b16 %v132
  %v591 = vunpack.c.l.b16 %v133
  %v592 = vunpack.c.l.b16 %v134
  %v593 = vunpack.c.l.b16 %v135
  %v594 = vunpack.c.l.b16 %v136
  %v595 = vunpack.c.l.b16 %v137
  %v596 = vunpack.c.l.b16 %v138
  %v597 = vunpack.c.l.b16 %v139
  %v598 = vunpack.c.l.b16 %v140
  %v599 = vunpack.c.l.b16 %v141
  %v600 = vunpack.c.l.b16 %v142
  %v601 = vunpack.c.l.b16 %v143
  %v602 = vunpack.c.l.b16 %v144
  %v603 = vunpack.c.l.b16 %v145
  %v604 = vunpack.c.l.b16 %v146
  %v605 = vunpack.c.l.b16 %v147
  %v606 = vunpack.c.l.b16 %v148
  %v607 = vunpack.c.l.b16 %v149
  %v608 = vunpack.c.l.b16 %v150
  %v609 = vunpack.c.l.b16 %v151
  %v610 = vunpack.c.l.b16 %v152
  %v611 = vunpack.c.l.b16 %v153
  %v612 = vunpack.c.l.b16 %v154
  %v613 = vunpack.c.l.b16 %v155
  %v614 = vunpack.c.l.b16 %v156
  %v615 = vunpack.c.l.b16 %v157
  %v616 = vunpack.c.l.b16 %v158
  %v617 = vunpack.c.l.b16 %v159
  %v618 = vunpack.c.l.b16 %v160
  %v619 = vunpack.c.l.b16 %v161
  %v620 = vunpack.c.l.b16 %v162
  %v621 = vunpack.c.l.b16 %v163
  %v622 = vunpack.c.l.b16 %v164
  %v623 = vunpack.c.l.b16 %v165
  %v624 = vunpack.c.l.b16 %v166
  %v625 = vunpack.c.l.b16 %v167
  %v626 = vunpack.c.l.b16 %v168
  %v627 = vunpack.c.l.b16 %v169
  %v628 = vunpack.c.l.b16 %v170
  %v629 = vunpack.c.l.b16 %v171
  %v630 = vunpack.c.l.b16 %v172
  %v631 = vunpack.c.l.b16 %v173
  %v632 = vunpack.c.l.b16 %v174
  %v633 = vunpack.c.l.b16 %v175
  %v634 = vunpack.c.l.b16 %v176
  %v635 = vunpack.c.l.b16 %v177
  %v636 = vunpack.c.l.b16 %v178
  %v637 = vunpack.c.l.b16 %v179
  %v638 = vunpack.c.l.b16 %v180
  %v639 = vunpack.c.l.b16 %v181
  %v640 = vunpack.c.l.b16 %v182
  %v641 = vunpack.c.l.b16 %v183
  %v642 = vunpack.c.l.b16 %v184
  %v643 = vunpack.c.l.b16 %v185
  %v644 = vunpack.c.l.b16 %v186
  %v645 = vunpack.c.l.b16 %v187
  %v646 = vunpack.c.l.b16 %v188
  %v647 = vunpack.c.l.b16 %v189
  %v648 = vunpack.c.l.b16 %v190
  %v649 = vunpack.c.l.b16 %v191
  %v650 = vunpack.c.l.b16 %v192
  %v651 = vunpack.c.l.b16 %v193
  %v652 = vunpack.c.l.b16 %v194
  %v653 = vunpack.c.l.b16 %v195
  %v654 = vunpack.c.l.b16 %v196
  %v655 = vpack.c.b16 %v512, %v511
  %v656 = vpack.c.b16 %v514, %v513
  %v657 = vpack.c.b16 %v516, %v515
  %v658 = vpack.c.b16 %v518, %v517
  %v659 = vpack.c.b16 %v520, %v519
  %v660 = vpack.c.b16 %v522, %v521
  %v661 = vpack.c.b16 %v524, %v523
  %v662 = vpack.c.b16 %v526, %v525
  %v663 = vpack.c.b16 %v528, %v527
  %v664 = vpack.c.b16 %v530, %v529
  %v665 = vpack.c.b16 %v532, %v531
  %v666 = vpack.c.b16 %v534, %v533
  %v667 = vpack.c.b16 %v536, %v535
  %v668 = vpack.c.b16 %v538, %v537
  %v669 = vpack.c.b16 %v540, %v539
  %v670 = vpack.c.b16 %v542, %v541
  %v671 = vpack.c.b16 %v544, %v543
  %v672 = vpack.c.b16 %v546, %v545
  %v673 = vpack.c.b16 %v548, %v547
  %v674 = vpack.c.b16 %v550, %v549
  %v675 = vpack.c.b16 %v552, %v551
  %v676 = vpack.c.b16 %v554, %v553
  %v677 = vpack.c.b16 %v556, %v555
  %v678 = vpack.c.b16 %v558, %v557
  %v679 = vpack.c.b16 %v560, %v559
  %v680 = vpack.c.b16 %v562, %v561
  %v681 = vpack.c.b16 %v564, %v563
  %v682 = vpack.c.b16 %v566, %v565
  %v683 = vpack.c.b16 %v568, %v567
  %v684 = vpack.c.b16 %v570, %v569
  %v685 = vpack.c.b16 %v572, %v571
  %v686 = vpack.c.b16 %v574, %v573
  %v687 = vpack.c.b16 %v576, %v575
  %v688 = vpack.c.b16 %v578, %v577
  %v689 = vpack.c.b16 %v580, %v579
  %v690 = vpack.c.b16 %v582, %v581
  %v691 = vpack.c.b16 %v584, %v583
  %v692 = vpack.c.b16 %v586, %v585
  %v693 = vpack.c.b16 %v588, %v587
  %v694 = vpack.c.b16 %v590, %v589
  %v695 = vpack.c.b16 %v592, %v591
  %v696 = vpack.c.b16 %v594, %v593
  %v697 = vpack.c.b16 %v596, %v595
  %v698 = vpack.c.b16 %v598, %v597
  %v699 = vpack.c.b16 %v600, %v599
  %v700 = vpack.c.b16 %v602, %v601
  %v701 = vpack.c.b16 %v604, %v603
  %v702 = vpack.c.b16 %v606, %v605
  %v703 = vpack.c.b16 %v608, %v607
  %v704 = vpack.c.b16 %v610, %v609
  %v705 = vpack.c.b16 %v612, %v611
  %v706 = vpack.c.b16 %v614, %v613
  %v707 = vpack.c.b16 %v616, %v615
  %v708 = vpack.c.b16 %v618, %v617
  %v709 = vpack.c.b16 %v620, %v619
  %v710 = vpack.c.b16 %v622, %v621
  %v711 = vpack.c.b16 %v624, %v623
  %v712 = vpack.c.b16 %v626, %v625
  %v713 = vpack.c.b16 %v628, %v627
  %v714 = vpack.c.b16 %v630, %v629
  %v715 = vpack.c.b16 %v632, %v631
  %v716 = vpack.c.b16 %v634, %v633
  %v717 = vpack.c.b16 %v636, %v635
  %v718 = vpack.c.b16 %v638, %v637
  %v719 = vpack.c.b16 %v640, %v639
  %v720 = vpack.c.b16 %v642, %v641
  %v721 = vpack.c.b16 %v644, %v643
  %v722 = vpack.c.b16 %v646, %v645
  %v723 = vpack.c.b16 %v648, %v647
  %v724 = vpack.c.b16 %v650, %v649
  %v725 = vpack.c.b16 %v652, %v651
  %v726 = vpack.c.b16 %v654, %v653
  %799 = vmatprep.subr.bf16.mxu0 0
  %800 = vmatpush1.bf16.msra.mxu0 %v662
  %801 = vmatprep.subr.bf16.mxu0 0
  %802 = vmatpush1.bf16.msra.mxu0 %v661
  %803 = vmatprep.subr.bf16.mxu0 0
  %804 = vmatpush1.bf16.msra.mxu0 %v660
  %805 = vmatprep.subr.bf16.mxu0 0
  %806 = vmatpush1.bf16.msra.mxu0 %v659
  %807 = vmatprep.subr.bf16.mxu0 0
  %808 = vmatpush1.bf16.msra.mxu0 %v658
  %809 = vmatprep.subr.bf16.mxu0 0
  %810 = vmatpush1.bf16.msra.mxu0 %v657
  %811 = vmatprep.subr.bf16.mxu0 0
  %812 = vmatpush1.bf16.msra.mxu0 %v656
  %813 = vmatprep.subr.bf16.mxu0 0
  %814 = vmatpush1.bf16.msra.mxu0 %v655
  %815 = vmatprep.subr.bf16.mxu0 0
  %816 = vmatpush2.bf16.msra.mxu0 %v670
  %817 = vmatprep.subr.bf16.mxu0 0
  %818 = vmatpush2.bf16.msra.mxu0 %v669
  %819 = vmatprep.subr.bf16.mxu0 0
  %820 = vmatpush2.bf16.msra.mxu0 %v668
  %821 = vmatprep.subr.bf16.mxu0 0
  %822 = vmatpush2.bf16.msra.mxu0 %v667
  %823 = vmatprep.subr.bf16.mxu0 0
  %824 = vmatpush2.bf16.msra.mxu0 %v666
  %825 = vmatprep.subr.bf16.mxu0 0
  %826 = vmatpush2.bf16.msra.mxu0 %v665
  %827 = vmatprep.subr.bf16.mxu0 0
  %828 = vmatpush2.bf16.msra.mxu0 %v664
  %829 = vmatprep.subr.bf16.mxu0 0
  %830 = vmatpush2.bf16.msra.mxu0 %v663
  %831 = vmatprep.mubr.bf16.mxu0 %v296
  %832 = vmatmul.mubr.bf16.gmra.mxu0 %v295
  %v833 = vpop.f32.mrf.mxu0
  %v834 = vadd.f32 0.0, %v833
  %v835 = vpop.f32.mrf.mxu0
  %v836 = vpop.f32.mrf.mxu0
  %v837 = vadd.f32 0.0, %v836
  %v838 = vpop.f32.mrf.mxu0
  %839 = vmatprep.mubr.bf16.mxu0 %v305
  %840 = vmatmul.mubr.bf16.gmra.mxu0 %v304
  %v841 = vpop.f32.mrf.mxu0
  %v842 = vadd.f32 0.0, %v841
  %v843 = vpop.f32.mrf.mxu0
  %v844 = vpop.f32.mrf.mxu0
  %v845 = vadd.f32 0.0, %v844
  %v846 = vpop.f32.mrf.mxu0
  %847 = vmatprep.mubr.bf16.mxu0 %v314
  %848 = vmatmul.mubr.bf16.gmra.mxu0 %v313
  %v849 = vpop.f32.mrf.mxu0
  %v850 = vadd.f32 0.0, %v849
  %v851 = vpop.f32.mrf.mxu0
  %v852 = vpop.f32.mrf.mxu0
  %v853 = vadd.f32 0.0, %v852
  %v854 = vpop.f32.mrf.mxu0
  %855 = vmatprep.mubr.bf16.mxu0 %v323
  %856 = vmatmul.mubr.bf16.gmra.mxu0 %v322
  %v857 = vpop.f32.mrf.mxu0
  %v858 = vadd.f32 0.0, %v857
  %v859 = vpop.f32.mrf.mxu0
  %v860 = vpop.f32.mrf.mxu0
  %v861 = vpop.f32.mrf.mxu0
  %862 = vdwg.mxu0
  %863 = vmatprep.subr.bf16.mxu0 0
  %864 = vmatpush1.bf16.msra.mxu0 %v678
  %865 = vmatprep.subr.bf16.mxu0 0
  %866 = vmatpush1.bf16.msra.mxu0 %v677
  %867 = vmatprep.subr.bf16.mxu0 0
  %868 = vmatpush1.bf16.msra.mxu0 %v676
  %869 = vmatprep.subr.bf16.mxu0 0
  %870 = vmatpush1.bf16.msra.mxu0 %v675
  %871 = vmatprep.subr.bf16.mxu0 0
  %872 = vmatpush1.bf16.msra.mxu0 %v674
  %873 = vmatprep.subr.bf16.mxu0 0
  %874 = vmatpush1.bf16.msra.mxu0 %v673
  %875 = vmatprep.subr.bf16.mxu0 0
  %876 = vmatpush1.bf16.msra.mxu0 %v672
  %877 = vmatprep.subr.bf16.mxu0 0
  %878 = vmatpush1.bf16.msra.mxu0 %v671
  %879 = vmatprep.subr.bf16.mxu0 0
  %880 = vmatpush2.bf16.msra.mxu0 %v686
  %881 = vmatprep.subr.bf16.mxu0 0
  %882 = vmatpush2.bf16.msra.mxu0 %v685
  %883 = vmatprep.subr.bf16.mxu0 0
  %884 = vmatpush2.bf16.msra.mxu0 %v684
  %885 = vmatprep.subr.bf16.mxu0 0
  %886 = vmatpush2.bf16.msra.mxu0 %v683
  %887 = vmatprep.subr.bf16.mxu0 0
  %888 = vmatpush2.bf16.msra.mxu0 %v682
  %889 = vmatprep.subr.bf16.mxu0 0
  %890 = vmatpush2.bf16.msra.mxu0 %v681
  %891 = vmatprep.subr.bf16.mxu0 0
  %892 = vmatpush2.bf16.msra.mxu0 %v680
  %893 = vmatprep.subr.bf16.mxu0 0
  %894 = vmatpush2.bf16.msra.mxu0 %v679
  %895 = vmatprep.mubr.bf16.mxu0 %v298
  %896 = vmatmul.mubr.bf16.gmra.mxu0 %v297
  %v897 = vpop.f32.mrf.mxu0
  %v898 = vadd.f32 %v834, %v897
  %v899 = vpop.f32.mrf.mxu0
  %v900 = vpop.f32.mrf.mxu0
  %v901 = vadd.f32 %v837, %v900
  %v902 = vpop.f32.mrf.mxu0
  %903 = vmatprep.mubr.bf16.mxu0 %v307
  %904 = vmatmul.mubr.bf16.gmra.mxu0 %v306
  %v905 = vpop.f32.mrf.mxu0
  %v906 = vadd.f32 %v842, %v905
  %v907 = vpop.f32.mrf.mxu0
  %v908 = vpop.f32.mrf.mxu0
  %v909 = vadd.f32 %v845, %v908
  %v910 = vpop.f32.mrf.mxu0
  %911 = vmatprep.mubr.bf16.mxu0 %v316
  %912 = vmatmul.mubr.bf16.gmra.mxu0 %v315
  %v913 = vpop.f32.mrf.mxu0
  %v914 = vadd.f32 %v850, %v913
  %v915 = vpop.f32.mrf.mxu0
  %v916 = vpop.f32.mrf.mxu0
  %v917 = vadd.f32 %v853, %v916
  %v918 = vpop.f32.mrf.mxu0
  %919 = vmatprep.mubr.bf16.mxu0 %v325
  %920 = vmatmul.mubr.bf16.gmra.mxu0 %v324
  %v921 = vpop.f32.mrf.mxu0
  %v922 = vadd.f32 %v858, %v921
  %v923 = vpop.f32.mrf.mxu0
  %v924 = vpop.f32.mrf.mxu0
  %v925 = vpop.f32.mrf.mxu0
  %926 = vdwg.mxu0
  %927 = vmatprep.subr.bf16.mxu0 0
  %928 = vmatpush1.bf16.msra.mxu0 %v694
  %929 = vmatprep.subr.bf16.mxu0 0
  %930 = vmatpush1.bf16.msra.mxu0 %v693
  %931 = vmatprep.subr.bf16.mxu0 0
  %932 = vmatpush1.bf16.msra.mxu0 %v692
  %933 = vmatprep.subr.bf16.mxu0 0
  %934 = vmatpush1.bf16.msra.mxu0 %v691
  %935 = vmatprep.subr.bf16.mxu0 0
  %936 = vmatpush1.bf16.msra.mxu0 %v690
  %937 = vmatprep.subr.bf16.mxu0 0
  %938 = vmatpush1.bf16.msra.mxu0 %v689
  %939 = vmatprep.subr.bf16.mxu0 0
  %940 = vmatpush1.bf16.msra.mxu0 %v688
  %941 = vmatprep.subr.bf16.mxu0 0
  %942 = vmatpush1.bf16.msra.mxu0 %v687
  %943 = vmatprep.subr.bf16.mxu0 0
  %944 = vmatpush2.bf16.msra.mxu0 %v702
  %945 = vmatprep.subr.bf16.mxu0 0
  %946 = vmatpush2.bf16.msra.mxu0 %v701
  %947 = vmatprep.subr.bf16.mxu0 0
  %948 = vmatpush2.bf16.msra.mxu0 %v700
  %949 = vmatprep.subr.bf16.mxu0 0
  %950 = vmatpush2.bf16.msra.mxu0 %v699
  %951 = vmatprep.subr.bf16.mxu0 0
  %952 = vmatpush2.bf16.msra.mxu0 %v698
  %953 = vmatprep.subr.bf16.mxu0 0
  %954 = vmatpush2.bf16.msra.mxu0 %v697
  %955 = vmatprep.subr.bf16.mxu0 0
  %956 = vmatpush2.bf16.msra.mxu0 %v696
  %957 = vmatprep.subr.bf16.mxu0 0
  %958 = vmatpush2.bf16.msra.mxu0 %v695
  %959 = vmatprep.mubr.bf16.mxu0 %v300
  %960 = vmatmul.mubr.bf16.gmra.mxu0 %v299
  %v961 = vpop.f32.mrf.mxu0
  %v962 = vadd.f32 %v898, %v961
  %v963 = vpop.f32.mrf.mxu0
  %v964 = vpop.f32.mrf.mxu0
  %v965 = vadd.f32 %v901, %v964
  %v966 = vpop.f32.mrf.mxu0
  %967 = vmatprep.mubr.bf16.mxu0 %v309
  %968 = vmatmul.mubr.bf16.gmra.mxu0 %v308
  %v969 = vpop.f32.mrf.mxu0
  %v970 = vadd.f32 %v906, %v969
  %v971 = vpop.f32.mrf.mxu0
  %v972 = vpop.f32.mrf.mxu0
  %v973 = vadd.f32 %v909, %v972
  %v974 = vpop.f32.mrf.mxu0
  %975 = vmatprep.mubr.bf16.mxu0 %v318
  %976 = vmatmul.mubr.bf16.gmra.mxu0 %v317
  %v977 = vpop.f32.mrf.mxu0
  %v978 = vadd.f32 %v914, %v977
  %v979 = vpop.f32.mrf.mxu0
  %v980 = vpop.f32.mrf.mxu0
  %v981 = vadd.f32 %v917, %v980
  %v982 = vpop.f32.mrf.mxu0
  %983 = vmatprep.mubr.bf16.mxu0 %v327
  %984 = vmatmul.mubr.bf16.gmra.mxu0 %v326
  %v985 = vpop.f32.mrf.mxu0
  %v986 = vadd.f32 %v922, %v985
  %v987 = vpop.f32.mrf.mxu0
  %v988 = vpop.f32.mrf.mxu0
  %v989 = vpop.f32.mrf.mxu0
  %990 = vdwg.mxu0
  %991 = vmatprep.subr.bf16.mxu0 0
  %992 = vmatpush1.bf16.msra.mxu0 %v710
  %993 = vmatprep.subr.bf16.mxu0 0
  %994 = vmatpush1.bf16.msra.mxu0 %v709
  %995 = vmatprep.subr.bf16.mxu0 0
  %996 = vmatpush1.bf16.msra.mxu0 %v708
  %997 = vmatprep.subr.bf16.mxu0 0
  %998 = vmatpush1.bf16.msra.mxu0 %v707
  %999 = vmatprep.subr.bf16.mxu0 0
  %1000 = vmatpush1.bf16.msra.mxu0 %v706
  %1001 = vmatprep.subr.bf16.mxu0 0
  %1002 = vmatpush1.bf16.msra.mxu0 %v705
  %1003 = vmatprep.subr.bf16.mxu0 0
  %1004 = vmatpush1.bf16.msra.mxu0 %v704
  %1005 = vmatprep.subr.bf16.mxu0 0
  %1006 = vmatpush1.bf16.msra.mxu0 %v703
  %1007 = vmatprep.subr.bf16.mxu0 0
  %1008 = vmatpush2.bf16.msra.mxu0 %v718
  %1009 = vmatprep.subr.bf16.mxu0 0
  %1010 = vmatpush2.bf16.msra.mxu0 %v717
  %1011 = vmatprep.subr.bf16.mxu0 0
  %1012 = vmatpush2.bf16.msra.mxu0 %v716
  %1013 = vmatprep.subr.bf16.mxu0 0
  %1014 = vmatpush2.bf16.msra.mxu0 %v715
  %1015 = vmatprep.subr.bf16.mxu0 0
  %1016 = vmatpush2.bf16.msra.mxu0 %v714
  %1017 = vmatprep.subr.bf16.mxu0 0
  %1018 = vmatpush2.bf16.msra.mxu0 %v713
  %1019 = vmatprep.subr.bf16.mxu0 0
  %1020 = vmatpush2.bf16.msra.mxu0 %v712
  %1021 = vmatprep.subr.bf16.mxu0 0
  %1022 = vmatpush2.bf16.msra.mxu0 %v711
  %1023 = vmatprep.mubr.bf16.mxu0 %v302
  %1024 = vmatmul.mubr.bf16.gmra.mxu0 %v301
  %v1025 = vpop.f32.mrf.mxu0
  %v1026 = vadd.f32 %v962, %v1025
  %v1027 = vpop.f32.mrf.mxu0
  %v1028 = vpop.f32.mrf.mxu0
  %v1029 = vadd.f32 %v965, %v1028
  %v1030 = vpop.f32.mrf.mxu0
  %1031 = vmatprep.mubr.bf16.mxu0 %v311
  %1032 = vmatmul.mubr.bf16.gmra.mxu0 %v310
  %v1033 = vpop.f32.mrf.mxu0
  %v1034 = vadd.f32 %v970, %v1033
  %v1035 = vpop.f32.mrf.mxu0
  %v1036 = vpop.f32.mrf.mxu0
  %v1037 = vadd.f32 %v973, %v1036
  %v1038 = vpop.f32.mrf.mxu0
  %1039 = vmatprep.mubr.bf16.mxu0 %v320
  %1040 = vmatmul.mubr.bf16.gmra.mxu0 %v319
  %v1041 = vpop.f32.mrf.mxu0
  %v1042 = vadd.f32 %v978, %v1041
  %v1043 = vpop.f32.mrf.mxu0
  %v1044 = vpop.f32.mrf.mxu0
  %v1045 = vadd.f32 %v981, %v1044
  %v1046 = vpop.f32.mrf.mxu0
  %1047 = vmatprep.mubr.bf16.mxu0 %v329
  %1048 = vmatmul.mubr.bf16.gmra.mxu0 %v328
  %v1049 = vpop.f32.mrf.mxu0
  %v1050 = vadd.f32 %v986, %v1049
  %v1051 = vpop.f32.mrf.mxu0
  %v1052 = vpop.f32.mrf.mxu0
  %v1053 = vpop.f32.mrf.mxu0
  %1054 = vdwg.mxu0
  %1055 = vmatprep.subr.bf16.mxu0 0
  %1056 = vmatpush1.bf16.msra.mxu0 %v726
  %1057 = vmatprep.subr.bf16.mxu0 0
  %1058 = vmatpush1.bf16.msra.mxu0 %v725
  %1059 = vmatprep.subr.bf16.mxu0 0
  %1060 = vmatpush1.bf16.msra.mxu0 %v724
  %1061 = vmatprep.subr.bf16.mxu0 0
  %1062 = vmatpush1.bf16.msra.mxu0 %v723
  %1063 = vmatprep.subr.bf16.mxu0 0
  %1064 = vmatpush1.bf16.msra.mxu0 %v722
  %1065 = vmatprep.subr.bf16.mxu0 0
  %1066 = vmatpush1.bf16.msra.mxu0 %v721
  %1067 = vmatprep.subr.bf16.mxu0 0
  %1068 = vmatpush1.bf16.msra.mxu0 %v720
  %1069 = vmatprep.subr.bf16.mxu0 0
  %1070 = vmatpush1.bf16.msra.mxu0 %v719
  %1071 = vmatprep.subr.bf16.mxu0 0
  %1072 = vmatpush2.bf16.msra.mxu0 0
  %1073 = vmatprep.subr.bf16.mxu0 0
  %1074 = vmatpush2.bf16.msra.mxu0 0
  %1075 = vmatprep.subr.bf16.mxu0 0
  %1076 = vmatpush2.bf16.msra.mxu0 0
  %1077 = vmatprep.subr.bf16.mxu0 0
  %1078 = vmatpush2.bf16.msra.mxu0 0
  %1079 = vmatprep.subr.bf16.mxu0 0
  %1080 = vmatpush2.bf16.msra.mxu0 0
  %1081 = vmatprep.subr.bf16.mxu0 0
  %1082 = vmatpush2.bf16.msra.mxu0 0
  %1083 = vmatprep.subr.bf16.mxu0 0
  %1084 = vmatpush2.bf16.msra.mxu0 0
  %1085 = vmatprep.subr.bf16.mxu0 0
  %1086 = vmatpush2.bf16.msra.mxu0 0
  %1087 = vmatprep.mubr.bf16.mxu0 0
  %1088 = vmatmul.mubr.bf16.gmra.mxu0 %v303
  %v1089 = vpop.f32.mrf.mxu0
  %v1090 = vadd.f32 %v1026, %v1089
  %v1091 = vpop.f32.mrf.mxu0
  %v1092 = vpop.f32.mrf.mxu0
  %v1093 = vadd.f32 %v1029, %v1092
  %v1094 = vpop.f32.mrf.mxu0
  %1095 = vmatprep.mubr.bf16.mxu0 0
  %1096 = vmatmul.mubr.bf16.gmra.mxu0 %v312
  %v1097 = vpop.f32.mrf.mxu0
  %v1098 = vadd.f32 %v1034, %v1097
  %v1099 = vpop.f32.mrf.mxu0
  %v1100 = vpop.f32.mrf.mxu0
  %v1101 = vadd.f32 %v1037, %v1100
  %v1102 = vpop.f32.mrf.mxu0
  %1103 = vmatprep.mubr.bf16.mxu0 0
  %1104 = vmatmul.mubr.bf16.gmra.mxu0 %v321
  %v1105 = vpop.f32.mrf.mxu0
  %v1106 = vadd.f32 %v1042, %v1105
  %v1107 = vpop.f32.mrf.mxu0
  %v1108 = vpop.f32.mrf.mxu0
  %v1109 = vadd.f32 %v1045, %v1108
  %v1110 = vpop.f32.mrf.mxu0
  %1111 = vmatprep.mubr.bf16.mxu0 0
  %1112 = vmatmul.mubr.bf16.gmra.mxu0 %v330
  %v1113 = vpop.f32.mrf.mxu0
  %v1114 = vadd.f32 %v1050, %v1113
  %v1115 = vpop.f32.mrf.mxu0
  %v1116 = vpop.f32.mrf.mxu0
  %v1117 = vpop.f32.mrf.mxu0
  %1118 = vdwg.mxu0
  %v1119 = vadd.f32 %v1090, %v1093
  %v1120 = vadd.f32 %v1119, %v1098
  %v1121 = vadd.f32 %v1120, %v1101
  %v1122 = vadd.f32 %v1121, %v1106
  %v1123 = vadd.f32 %v1122, %v1109
  %vm1124 = vcmask 1041408
  %v1125 = vsel %vm1124, %v1114, 0.0
  %v1126 = vadd.f32 %v1123, %v1125
  %v1127 = vrot.slane %v1126, 4
  %v1128 = vadd.f32 %v1126, %v1127
  %v1129 = vrot.slane %v1128, 2
  %v1130 = vadd.f32 %v1128, %v1129
  %v1131 = vrot.slane %v1130, 1
  %v1132 = vadd.f32 %v1130, %v1131
  %v1133 = vrcp.pop 50.0
  %v1134 = vmul.f32 %v1132, %v1133
  %v1135 = vsub.f32 %v1090, %v1134
  %v1136 = vsub.f32 %v1093, %v1134
  %v1137 = vsub.f32 %v1098, %v1134
  %v1138 = vsub.f32 %v1101, %v1134
  %v1139 = vsub.f32 %v1106, %v1134
  %v1140 = vsub.f32 %v1109, %v1134
  %v1141 = vsub.f32 %v1114, %v1134
  %v1142 = vmul.f32 %v1135, %v1135
  %v1143 = vmul.f32 %v1136, %v1136
  %v1144 = vmul.f32 %v1137, %v1137
  %v1145 = vmul.f32 %v1138, %v1138
  %v1146 = vmul.f32 %v1139, %v1139
  %v1147 = vmul.f32 %v1140, %v1140
  %v1148 = vmul.f32 %v1141, %v1141
  %v1149 = vadd.f32 %v1142, %v1143
  %v1150 = vadd.f32 %v1149, %v1144
  %v1151 = vadd.f32 %v1150, %v1145
  %v1152 = vadd.f32 %v1151, %v1146
  %v1153 = vadd.f32 %v1152, %v1147
  %v1154 = vsel %vm1124, %v1148, 0.0
  %v1155 = vadd.f32 %v1153, %v1154
  %v1156 = vrot.slane %v1155, 4
  %v1157 = vadd.f32 %v1155, %v1156
  %v1158 = vrot.slane %v1157, 2
  %v1159 = vadd.f32 %v1157, %v1158
  %v1160 = vrot.slane %v1159, 1
  %v1161 = vadd.f32 %v1159, %v1160
  %v1162 = vmul.f32 %v1161, %v1133
  %v1163 = vadd.f32 %v1162, 1e-05
  %v1164 = vrsqrt.pop %v1163
  %v1165 = vmul.f32 %v1135, %v1164
  %v1166 = vmul.f32 %v1136, %v1164
  %v1167 = vmul.f32 %v1137, %v1164
  %v1168 = vmul.f32 %v1138, %v1164
  %v1169 = vmul.f32 %v1139, %v1164
  %v1170 = vmul.f32 %v1140, %v1164
  %v1171 = vmul.f32 %v1141, %v1164
  %v1172 = vld [vmem:[%s2] sm:$0x1]
  %v1174 = vlaneseq
  %v1175 = vshrl.u32 %v1174, 7
  %v1176 = vsub.s32 0, %v1175
  %v1177 = vrot.slane %v1172, %v1176
  %v1179 = vmul.f32 %v1165, %v1177
  %v1180 = vmul.f32 %v1166, %v1177
  %v1181 = vmul.f32 %v1167, %v1177
  %v1182 = vmul.f32 %v1168, %v1177
  %v1183 = vmul.f32 %v1169, %v1177
  %v1184 = vmul.f32 %v1170, %v1177
  %v1185 = vmul.f32 %v1171, %v1177
  %v1186 = vld [vmem:[%s3] sm:$0x1]
  %v1188 = vlaneseq
  %v1189 = vshrl.u32 %v1188, 7
  %v1190 = vsub.s32 0, %v1189
  %v1191 = vrot.slane %v1186, %v1190
  %v1193 = vadd.f32 %v1179, %v1191
  %v1194 = vadd.f32 %v1180, %v1191
  %v1195 = vadd.f32 %v1181, %v1191
  %v1196 = vadd.f32 %v1182, %v1191
  %v1197 = vadd.f32 %v1183, %v1191
  %v1198 = vadd.f32 %v1184, %v1191
  %v1199 = vadd.f32 %v1185, %v1191
  %v1200 = vmax.f32 %v1193, 0.0
  %v1201 = vmax.f32 %v1194, 0.0
  %v1202 = vmax.f32 %v1195, 0.0
  %v1203 = vmax.f32 %v1196, 0.0
  %v1204 = vmax.f32 %v1197, 0.0
  %v1205 = vmax.f32 %v1198, 0.0
  %v1206 = vmax.f32 %v1199, 0.0
  %v1207 = vpack.c.bf16 %v1201, %v1200
  %v1208 = vpack.c.bf16 %v1203, %v1202
  %v1209 = vpack.c.bf16 %v1205, %v1204
  %v1210 = vpack.c.bf16 %v1206, %v1206
  %v1215 = vunpack.c.l.b16 %v1207
  %v1216 = vunpack.c.h.b16 %v1207
  %v1217 = vunpack.c.l.b16 %v1208
  %v1218 = vunpack.c.h.b16 %v1208
  %v1219 = vunpack.c.l.b16 %v1209
  %v1220 = vunpack.c.h.b16 %v1209
  %v1221 = vunpack.c.l.b16 %v1210
  %v1222 = vpack.c.b16 %v1215, %v1215
  %v1223 = vpack.c.b16 %v1216, %v1216
  %v1224 = vpack.c.b16 %v1217, %v1217
  %v1225 = vpack.c.b16 %v1218, %v1218
  %v1226 = vpack.c.b16 %v1219, %v1219
  %v1227 = vpack.c.b16 %v1220, %v1220
  %v1228 = vpack.c.b16 %v1221, %v1221
  %1236 = vst [vmem:[%s4] sm:$0xf] %v1222
  %1237 = vst [vmem:[%s4 + $0x4] sm:$0xf] %v1223
  %1238 = vst [vmem:[%s4 + $0x8] sm:$0xf] %v1224
  %1239 = vst [vmem:[%s4 + $0xc] sm:$0xf] %v1225
  %1240 = vst [vmem:[%s4 + $0x10] sm:$0xf] %v1226
  %1241 = vst [vmem:[%s4 + $0x14] sm:$0xf] %v1227
  %1242 = vst [vmem:[%s4 + $0x18] sm:$0x1] %v1228
  // Predicated region
  $region18: #{_rnd_forward_impl.9} parent=0 // pred_check
    _
  $region19: #{_rnd_forward_impl.9} parent=0 // pred_check_branch
    %1244 = sbr.rel (0) target = $region21
  $region20: #{_rnd_forward_impl.9} parent=0 // pred_region
    _
  $region21: #{_rnd_forward_impl.9} parent=0 // pred_fallthru
    _
  // Predicated region
  $region22: #{_rnd_forward_impl.9} parent=0 // pred_check
    _
  $region23: #{_rnd_forward_impl.9} parent=0 // pred_check_branch
    %1246 = sbr.rel (0) target = $region25
  $region24: #{_rnd_forward_impl.9} parent=0 // pred_region
    _
  $region25: #{_rnd_forward_impl.9} parent=0 // pred_fallthru
    _

// kernel: _rnd_forward_impl.10
$region0: #{_rnd_forward_impl.10}
  #allocation0 [shape = 'u32[]', space=smem, size = 0x4, offset = 0x4, fixed_abs, tag = 'smem constant byte address 0x4 - core index']
  #allocation1 [shape = 'u32[144,128]{1,0:T(1,128)}', space=vmem, size = 0x12000, scoped, tag = 'internal scratch']
  %s0 = inlined_call_operand.vmem [shape: bf16[2,1600], index: 0, kind: input, shape index: {}]
  %s1 = inlined_call_operand.vmem [shape: bf16[1600,512], index: 1, kind: input, shape index: {}]
  %s2 = inlined_call_operand.vmem [shape: f32[1,512], index: 2, kind: input, shape index: {}]
  %s3 = inlined_call_operand.vmem [shape: bf16[2,512], index: 3, kind: output, shape index: {}]
  %s4 = sld [smem:[#allocation0]]
  $region83: #{_rnd_forward_impl.10} parent=0
    _
  %s6 = ssub.s32 1, %s4
  %s7 = scalar_select 0, %s6, %s4
  $region1: #{_rnd_forward_impl.10} parent=0
    #allocation2 [shape = 'u8[1638400]{0}', space=vmem, size = 0x190000, scoped, tag = 'input window, operand 1']
    loop: start=0, step=1, limit=4
    $region2: #{_rnd_forward_impl.10} parent=1 // loop_pre_header
      _
    $region3: #{_rnd_forward_impl.10} parent=1 // loop_header
      %s9 = sphi 0, %s13
      %p10 = scmp.ge.s32.totalorder %s9, 4
      %s17 = sphi 0, %s17
      %s19 = sphi 0, %s17
      %s20 = sphi 0, %s19
      %s34 = sphi 0, %s20
      %s40 = sphi 0, %s42
      %s43 = sphi 0, %s40
      %s44 = sphi 0, %s43
      %s60 = sphi 0, %s44
      %s66 = sphi 0, %s68
      %s69 = sphi 0, %s66
      %s70 = sphi 0, %s69
      %s86 = sphi 0, %s70
      %s92 = sphi 0, %s94
      %s95 = sphi 0, %s92
      %s96 = sphi 0, %s95
      %s112 = sphi 0, %s96
    $region4: #{_rnd_forward_impl.10} parent=1 // loop_header_branch
      %12 = sbr.rel (%p10) target = $region8
    $region5: #{_rnd_forward_impl.10} parent=1 // loop_body
      %s14 = ssub.s32 %s9, 1
      %s15 = ssub.s32 %s9, 2
      %s16 = sadd.s32 %s9, 1
      %s18 = sadd.s32 %s17, 1
      %p21 = scmp.eq.s32.totalorder %s9, 1
      %p22 = scmp.ne.s32.totalorder %s17, %s19
      %p23 = scmp.eq.s32.totalorder %s9, 0
      %p24 = por %p22, %p23
      %p25 = scmp.ne.s32.totalorder %s17, %s19
      %p26 = scmp.eq.s32.totalorder %s14, 1
      %p27 = por %p25, %p26
      %p28 = scmp.ne.s32.totalorder %s19, %s20
      %p29 = scmp.eq.s32.totalorder %s14, 0
      %p30 = por %p28, %p29
      %p31 = scmp.ne.s32.totalorder %s19, %s20
      %p32 = scmp.eq.s32.totalorder %s15, 1
      %p33 = por %p31, %p32
      %p35 = scmp.ne.s32.totalorder %s20, %s34
      %p36 = scmp.eq.s32.totalorder %s15, 0
      %p37 = por %p35, %p36
      %s38 = ssub.s32 %s9, %s16
      %p39 = scmp.eq.s32.totalorder %s38, 0
      %s41 = sadd.s32 %s40, 1
      %s42 = scalar_select %p39, %s40, %s41
      %p45 = pneg %p39
      %p46 = scmp.eq.s32.totalorder %s9, 1
      %p47 = por %p45, %p46
      %p48 = scmp.ne.s32.totalorder %s40, %s43
      %p49 = scmp.eq.s32.totalorder %s9, 0
      %p50 = por %p48, %p49
      %p51 = scmp.ne.s32.totalorder %s40, %s43
      %p52 = scmp.eq.s32.totalorder %s14, 1
      %p53 = por %p51, %p52
      %p54 = scmp.ne.s32.totalorder %s43, %s44
      %p55 = scmp.eq.s32.totalorder %s14, 0
      %p56 = por %p54, %p55
      %p57 = scmp.ne.s32.totalorder %s43, %s44
      %p58 = scmp.eq.s32.totalorder %s15, 1
      %p59 = por %p57, %p58
      %p61 = scmp.ne.s32.totalorder %s44, %s60
      %p62 = scmp.eq.s32.totalorder %s15, 0
      %p63 = por %p61, %p62
      %s64 = ssub.s32 %s9, %s16
      %p65 = scmp.eq.s32.totalorder %s64, 0
      %s67 = sadd.s32 %s66, 1
      %s68 = scalar_select %p65, %s66, %s67
      %p71 = pneg %p65
      %p72 = scmp.eq.s32.totalorder %s9, 1
      %p73 = por %p71, %p72
      %p74 = scmp.ne.s32.totalorder %s66, %s69
      %p75 = scmp.eq.s32.totalorder %s9, 0
      %p76 = por %p74, %p75
      %p77 = scmp.ne.s32.totalorder %s66, %s69
      %p78 = scmp.eq.s32.totalorder %s14, 1
      %p79 = por %p77, %p78
      %p80 = scmp.ne.s32.totalorder %s69, %s70
      %p81 = scmp.eq.s32.totalorder %s14, 0
      %p82 = por %p80, %p81
      %p83 = scmp.ne.s32.totalorder %s69, %s70
      %p84 = scmp.eq.s32.totalorder %s15, 1
      %p85 = por %p83, %p84
      %p87 = scmp.ne.s32.totalorder %s70, %s86
      %p88 = scmp.eq.s32.totalorder %s15, 0
      %p89 = por %p87, %p88
      %s90 = ssub.s32 %s9, %s16
      %p91 = scmp.eq.s32.totalorder %s90, 0
      %s93 = sadd.s32 %s92, 1
      %s94 = scalar_select %p91, %s92, %s93
      %p97 = pneg %p91
      %p98 = scmp.eq.s32.totalorder %s9, 1
      %p99 = por %p97, %p98
      %p100 = scmp.ne.s32.totalorder %s92, %s95
      %p101 = scmp.eq.s32.totalorder %s9, 0
      %p102 = por %p100, %p101
      %p103 = scmp.ne.s32.totalorder %s92, %s95
      %p104 = scmp.eq.s32.totalorder %s14, 1
      %p105 = por %p103, %p104
      %p106 = scmp.ne.s32.totalorder %s95, %s96
      %p107 = scmp.eq.s32.totalorder %s14, 0
      %p108 = por %p106, %p107
      %p109 = scmp.ne.s32.totalorder %s95, %s96
      %p110 = scmp.eq.s32.totalorder %s15, 1
      %p111 = por %p109, %p110
      %p113 = scmp.ne.s32.totalorder %s96, %s112
      %p114 = scmp.eq.s32.totalorder %s15, 0
      %p115 = por %p113, %p114
      %p116 = scmp.le.s32.totalorder 1, %s9
      %p117 = scmp.lt.s32.totalorder %s9, 3
      %p118 = pnand %p116, %p117
      %p119 = pneg %p118
      // Predicated region
      $region9: #{_rnd_forward_impl.10} parent=5 // pred_check
        _
      $region10: #{_rnd_forward_impl.10} parent=5 // pred_check_branch
        %121 = sbr.rel (%p118) target = $region12
      $region11: #{_rnd_forward_impl.10} parent=5 // pred_region
        %s122 = ssub.s32 %s9, 1
        // Predicated region
        $region13: #{_rnd_forward_impl.10} parent=11 // pred_check
          %p123 = pneg %p30
        $region14: #{_rnd_forward_impl.10} parent=11 // pred_check_branch
          %125 = sbr.rel (%p123) target = $region16
        $region15: #{_rnd_forward_impl.10} parent=11 // pred_region
          _
        $region16: #{_rnd_forward_impl.10} parent=11 // pred_fallthru
          _
      $region12: #{_rnd_forward_impl.10} parent=5 // pred_fallthru
        _
      %p126 = scmp.lt.s32.totalorder %s9, 2
      // Predicated region
      $region17: #{_rnd_forward_impl.10} parent=5 // pred_check
        %p127 = pneg %p126
      $region18: #{_rnd_forward_impl.10} parent=5 // pred_check_branch
        %129 = sbr.rel (%p127) target = $region20
      $region19: #{_rnd_forward_impl.10} parent=5 // pred_region
        // Predicated region
        $region21: #{_rnd_forward_impl.10} parent=19 // pred_check
          %p130 = pneg %p50
        $region22: #{_rnd_forward_impl.10} parent=19 // pred_check_branch
          %132 = sbr.rel (%p130) target = $region24
        $region23: #{_rnd_forward_impl.10} parent=19 // pred_region
          %s133 = sand.u32 %s40, 1
          %s134 = sand.u32 %s40, 1
          %s135 = smul.addr %s134, 1600
          %s136 = scalar_lea.vmem [#allocation2], %s135
          %s137 = smul.u32 2, %s9
          %s138 = smul.addr %s137, 4
          %s139 = scalar_lea.vmem %s1, %s138
          // Predicated region
          $region25: #{_rnd_forward_impl.10} parent=23 // pred_check
            _
          $region26: #{_rnd_forward_impl.10} parent=23 // pred_check_branch
            %141 = sbr.rel (0) target = $region28
          $region27: #{_rnd_forward_impl.10} parent=23 // pred_region
            // Predicated region
            $region29: #{_rnd_forward_impl.10} parent=27 // pred_check
              _
            $region30: #{_rnd_forward_impl.10} parent=27 // pred_check_branch
              %143 = sbr.rel (0) target = $region32
            $region31: #{_rnd_forward_impl.10} parent=27 // pred_region
              // Predicated region
              $region44: #{_rnd_forward_impl.10} parent=31 // pred_check
                _
              $region45: #{_rnd_forward_impl.10} parent=31 // pred_check_branch
                %557 = sbr.rel (0) target = $region47
              $region46: #{_rnd_forward_impl.10} parent=31 // pred_region
                loop: start=0, step=1, limit=1
                $region48: #{_rnd_forward_impl.10} parent=46 // loop_pre_header
                  _
                $region49: #{_rnd_forward_impl.10} parent=46 // loop_header
                  %s559 = sphi 0, %s563
                  %p560 = scmp.ge.s32.totalorder %s559, 1
                  %s564 = sphi %s139, %s139
                  %s565 = sphi %s136, %s136
                $region50: #{_rnd_forward_impl.10} parent=46 // loop_header_branch
                  %562 = sbr.rel (%p560) target = $region54
                $region51: #{_rnd_forward_impl.10} parent=46 // loop_body
                  %v566 = vld [vmem:[%s564] sm:$0xff]
                  %567 = vst [vmem:[%s565] sm:$0xff] %v566
                  %v568 = vld [vmem:[%s564 + $0x10] sm:$0xff]
                  %569 = vst [vmem:[%s565 + $0x8] sm:$0xff] %v568
                  %v570 = vld [vmem:[%s564 + $0x20] sm:$0xff]
                  %571 = vst [vmem:[%s565 + $0x10] sm:$0xff] %v570
                  %v572 = vld [vmem:[%s564 + $0x30] sm:$0xff]
                  %573 = vst [vmem:[%s565 + $0x18] sm:$0xff] %v572
                  %v574 = vld [vmem:[%s564 + $0x40] sm:$0xff]
                  %575 = vst [vmem:[%s565 + $0x20] sm:$0xff] %v574
                  %v576 = vld [vmem:[%s564 + $0x50] sm:$0xff]
                  %577 = vst [vmem:[%s565 + $0x28] sm:$0xff] %v576
                  %v578 = vld [vmem:[%s564 + $0x60] sm:$0xff]
                  %579 = vst [vmem:[%s565 + $0x30] sm:$0xff] %v578
                  %v580 = vld [vmem:[%s564 + $0x70] sm:$0xff]
                  %581 = vst [vmem:[%s565 + $0x38] sm:$0xff] %v580
                  %v582 = vld [vmem:[%s564 + $0x80] sm:$0xff]
                  %583 = vst [vmem:[%s565 + $0x40] sm:$0xff] %v582
                  %v584 = vld [vmem:[%s564 + $0x90] sm:$0xff]
                  %585 = vst [vmem:[%s565 + $0x48] sm:$0xff] %v584
                  %v586 = vld [vmem:[%s564 + $0xa0] sm:$0xff]
                  %587 = vst [vmem:[%s565 + $0x50] sm:$0xff] %v586
                  %v588 = vld [vmem:[%s564 + $0xb0] sm:$0xff]
                  %589 = vst [vmem:[%s565 + $0x58] sm:$0xff] %v588
                  %v590 = vld [vmem:[%s564 + $0xc0] sm:$0xff]
                  %591 = vst [vmem:[%s565 + $0x60] sm:$0xff] %v590
                  %v592 = vld [vmem:[%s564 + $0xd0] sm:$0xff]
                  %593 = vst [vmem:[%s565 + $0x68] sm:$0xff] %v592
                  %v594 = vld [vmem:[%s564 + $0xe0] sm:$0xff]
                  %595 = vst [vmem:[%s565 + $0x70] sm:$0xff] %v594
                  %v596 = vld [vmem:[%s564 + $0xf0] sm:$0xff]
                  %597 = vst [vmem:[%s565 + $0x78] sm:$0xff] %v596
                  %v598 = vld [vmem:[%s564 + $0x100] sm:$0xff]
                  %599 = vst [vmem:[%s565 + $0x80] sm:$0xff] %v598
                  %v600 = vld [vmem:[%s564 + $0x110] sm:$0xff]
                  %601 = vst [vmem:[%s565 + $0x88] sm:$0xff] %v600
                  %v602 = vld [vmem:[%s564 + $0x120] sm:$0xff]
                  %603 = vst [vmem:[%s565 + $0x90] sm:$0xff] %v602
                  %v604 = vld [vmem:[%s564 + $0x130] sm:$0xff]
                  %605 = vst [vmem:[%s565 + $0x98] sm:$0xff] %v604
                  %v606 = vld [vmem:[%s564 + $0x140] sm:$0xff]
                  %607 = vst [vmem:[%s565 + $0xa0] sm:$0xff] %v606
                  %v608 = vld [vmem:[%s564 + $0x150] sm:$0xff]
                  %609 = vst [vmem:[%s565 + $0xa8] sm:$0xff] %v608
                  %v610 = vld [vmem:[%s564 + $0x160] sm:$0xff]
                  %611 = vst [vmem:[%s565 + $0xb0] sm:$0xff] %v610
                  %v612 = vld [vmem:[%s564 + $0x170] sm:$0xff]
                  %613 = vst [vmem:[%s565 + $0xb8] sm:$0xff] %v612
                  %v614 = vld [vmem:[%s564 + $0x180] sm:$0xff]
                  %615 = vst [vmem:[%s565 + $0xc0] sm:$0xff] %v614
                  %v616 = vld [vmem:[%s564 + $0x190] sm:$0xff]
                  %617 = vst [vmem:[%s565 + $0xc8] sm:$0xff] %v616
                  %v618 = vld [vmem:[%s564 + $0x1a0] sm:$0xff]
                  %619 = vst [vmem:[%s565 + $0xd0] sm:$0xff] %v618
                  %v620 = vld [vmem:[%s564 + $0x1b0] sm:$0xff]
                  %621 = vst [vmem:[%s565 + $0xd8] sm:$0xff] %v620
                  %v622 = vld [vmem:[%s564 + $0x1c0] sm:$0xff]
                  %623 = vst [vmem:[%s565 + $0xe0] sm:$0xff] %v622
                  %v624 = vld [vmem:[%s564 + $0x1d0] sm:$0xff]
                  %625 = vst [vmem:[%s565 + $0xe8] sm:$0xff] %v624
                  %v626 = vld [vmem:[%s564 + $0x1e0] sm:$0xff]
                  %627 = vst [vmem:[%s565 + $0xf0] sm:$0xff] %v626
                  %v628 = vld [vmem:[%s564 + $0x1f0] sm:$0xff]
                  %629 = vst [vmem:[%s565 + $0xf8] sm:$0xff] %v628
                  %v630 = vld [vmem:[%s564 + $0x200] sm:$0xff]
                  %631 = vst [vmem:[%s565 + $0x100] sm:$0xff] %v630
                  %v632 = vld [vmem:[%s564 + $0x210] sm:$0xff]
                  %633 = vst [vmem:[%s565 + $0x108] sm:$0xff] %v632
                  %v634 = vld [vmem:[%s564 + $0x220] sm:$0xff]
                  %635 = vst [vmem:[%s565 + $0x110] sm:$0xff] %v634
                  %v636 = vld [vmem:[%s564 + $0x230] sm:$0xff]
                  %637 = vst [vmem:[%s565 + $0x118] sm:$0xff] %v636
                  %v638 = vld [vmem:[%s564 + $0x240] sm:$0xff]
                  %639 = vst [vmem:[%s565 + $0x120] sm:$0xff] %v638
                  %v640 = vld [vmem:[%s564 + $0x250] sm:$0xff]
                  %641 = vst [vmem:[%s565 + $0x128] sm:$0xff] %v640
                  %v642 = vld [vmem:[%s564 + $0x260] sm:$0xff]
                  %643 = vst [vmem:[%s565 + $0x130] sm:$0xff] %v642
                  %v644 = vld [vmem:[%s564 + $0x270] sm:$0xff]
                  %645 = vst [vmem:[%s565 + $0x138] sm:$0xff] %v644
                  %v646 = vld [vmem:[%s564 + $0x280] sm:$0xff]
                  %647 = vst [vmem:[%s565 + $0x140] sm:$0xff] %v646
                  %v648 = vld [vmem:[%s564 + $0x290] sm:$0xff]
                  %649 = vst [vmem:[%s565 + $0x148] sm:$0xff] %v648
                  %v650 = vld [vmem:[%s564 + $0x2a0] sm:$0xff]
                  %651 = vst [vmem:[%s565 + $0x150] sm:$0xff] %v650
                  %v652 = vld [vmem:[%s564 + $0x2b0] sm:$0xff]
                  %653 = vst [vmem:[%s565 + $0x158] sm:$0xff] %v652
                  %v654 = vld [vmem:[%s564 + $0x2c0] sm:$0xff]
                  %655 = vst [vmem:[%s565 + $0x160] sm:$0xff] %v654
                  %v656 = vld [vmem:[%s564 + $0x2d0] sm:$0xff]
                  %657 = vst [vmem:[%s565 + $0x168] sm:$0xff] %v656
                  %v658 = vld [vmem:[%s564 + $0x2e0] sm:$0xff]
                  %659 = vst [vmem:[%s565 + $0x170] sm:$0xff] %v658
                  %v660 = vld [vmem:[%s564 + $0x2f0] sm:$0xff]
                  %661 = vst [vmem:[%s565 + $0x178] sm:$0xff] %v660
                  %v662 = vld [vmem:[%s564 + $0x300] sm:$0xff]
                  %663 = vst [vmem:[%s565 + $0x180] sm:$0xff] %v662
                  %v664 = vld [vmem:[%s564 + $0x310] sm:$0xff]
                  %665 = vst [vmem:[%s565 + $0x188] sm:$0xff] %v664
                  %v666 = vld [vmem:[%s564 + $0x320] sm:$0xff]
                  %667 = vst [vmem:[%s565 + $0x190] sm:$0xff] %v666
                  %v668 = vld [vmem:[%s564 + $0x330] sm:$0xff]
                  %669 = vst [vmem:[%s565 + $0x198] sm:$0xff] %v668
                  %v670 = vld [vmem:[%s564 + $0x340] sm:$0xff]
                  %671 = vst [vmem:[%s565 + $0x1a0] sm:$0xff] %v670
                  %v672 = vld [vmem:[%s564 + $0x350] sm:$0xff]
                  %673 = vst [vmem:[%s565 + $0x1a8] sm:$0xff] %v672
                  %v674 = vld [vmem:[%s564 + $0x360] sm:$0xff]
                  %675 = vst [vmem:[%s565 + $0x1b0] sm:$0xff] %v674
                  %v676 = vld [vmem:[%s564 + $0x370] sm:$0xff]
                  %677 = vst [vmem:[%s565 + $0x1b8] sm:$0xff] %v676
                  %v678 = vld [vmem:[%s564 + $0x380] sm:$0xff]
                  %679 = vst [vmem:[%s565 + $0x1c0] sm:$0xff] %v678
                  %v680 = vld [vmem:[%s564 + $0x390] sm:$0xff]
                  %681 = vst [vmem:[%s565 + $0x1c8] sm:$0xff] %v680
                  %v682 = vld [vmem:[%s564 + $0x3a0] sm:$0xff]
                  %683 = vst [vmem:[%s565 + $0x1d0] sm:$0xff] %v682
                  %v684 = vld [vmem:[%s564 + $0x3b0] sm:$0xff]
                  %685 = vst [vmem:[%s565 + $0x1d8] sm:$0xff] %v684
                  %v686 = vld [vmem:[%s564 + $0x3c0] sm:$0xff]
                  %687 = vst [vmem:[%s565 + $0x1e0] sm:$0xff] %v686
                  %v688 = vld [vmem:[%s564 + $0x3d0] sm:$0xff]
                  %689 = vst [vmem:[%s565 + $0x1e8] sm:$0xff] %v688
                  %v690 = vld [vmem:[%s564 + $0x3e0] sm:$0xff]
                  %691 = vst [vmem:[%s565 + $0x1f0] sm:$0xff] %v690
                  %v692 = vld [vmem:[%s564 + $0x3f0] sm:$0xff]
                  %693 = vst [vmem:[%s565 + $0x1f8] sm:$0xff] %v692
                  %v694 = vld [vmem:[%s564 + $0x400] sm:$0xff]
                  %695 = vst [vmem:[%s565 + $0x200] sm:$0xff] %v694
                  %v696 = vld [vmem:[%s564 + $0x410] sm:$0xff]
                  %697 = vst [vmem:[%s565 + $0x208] sm:$0xff] %v696
                  %v698 = vld [vmem:[%s564 + $0x420] sm:$0xff]
                  %699 = vst [vmem:[%s565 + $0x210] sm:$0xff] %v698
                  %v700 = vld [vmem:[%s564 + $0x430] sm:$0xff]
                  %701 = vst [vmem:[%s565 + $0x218] sm:$0xff] %v700
                  %v702 = vld [vmem:[%s564 + $0x440] sm:$0xff]
                  %703 = vst [vmem:[%s565 + $0x220] sm:$0xff] %v702
                  %v704 = vld [vmem:[%s564 + $0x450] sm:$0xff]
                  %705 = vst [vmem:[%s565 + $0x228] sm:$0xff] %v704
                  %v706 = vld [vmem:[%s564 + $0x460] sm:$0xff]
                  %707 = vst [vmem:[%s565 + $0x230] sm:$0xff] %v706
                  %v708 = vld [vmem:[%s564 + $0x470] sm:$0xff]
                  %709 = vst [vmem:[%s565 + $0x238] sm:$0xff] %v708
                  %v710 = vld [vmem:[%s564 + $0x480] sm:$0xff]
                  %711 = vst [vmem:[%s565 + $0x240] sm:$0xff] %v710
                  %v712 = vld [vmem:[%s564 + $0x490] sm:$0xff]
                  %713 = vst [vmem:[%s565 + $0x248] sm:$0xff] %v712
                  %v714 = vld [vmem:[%s564 + $0x4a0] sm:$0xff]
                  %715 = vst [vmem:[%s565 + $0x250] sm:$0xff] %v714
                  %v716 = vld [vmem:[%s564 + $0x4b0] sm:$0xff]
                  %717 = vst [vmem:[%s565 + $0x258] sm:$0xff] %v716
                  %v718 = vld [vmem:[%s564 + $0x4c0] sm:$0xff]
                  %719 = vst [vmem:[%s565 + $0x260] sm:$0xff] %v718
                  %v720 = vld [vmem:[%s564 + $0x4d0] sm:$0xff]
                  %721 = vst [vmem:[%s565 + $0x268] sm:$0xff] %v720
                  %v722 = vld [vmem:[%s564 + $0x4e0] sm:$0xff]
                  %723 = vst [vmem:[%s565 + $0x270] sm:$0xff] %v722
                  %v724 = vld [vmem:[%s564 + $0x4f0] sm:$0xff]
                  %725 = vst [vmem:[%s565 + $0x278] sm:$0xff] %v724
                  %v726 = vld [vmem:[%s564 + $0x500] sm:$0xff]
                  %727 = vst [vmem:[%s565 + $0x280] sm:$0xff] %v726
                  %v728 = vld [vmem:[%s564 + $0x510] sm:$0xff]
                  %729 = vst [vmem:[%s565 + $0x288] sm:$0xff] %v728
                  %v730 = vld [vmem:[%s564 + $0x520] sm:$0xff]
                  %731 = vst [vmem:[%s565 + $0x290] sm:$0xff] %v730
                  %v732 = vld [vmem:[%s564 + $0x530] sm:$0xff]
                  %733 = vst [vmem:[%s565 + $0x298] sm:$0xff] %v732
                  %v734 = vld [vmem:[%s564 + $0x540] sm:$0xff]
                  %735 = vst [vmem:[%s565 + $0x2a0] sm:$0xff] %v734
                  %v736 = vld [vmem:[%s564 + $0x550] sm:$0xff]
                  %737 = vst [vmem:[%s565 + $0x2a8] sm:$0xff] %v736
                  %v738 = vld [vmem:[%s564 + $0x560] sm:$0xff]
                  %739 = vst [vmem:[%s565 + $0x2b0] sm:$0xff] %v738
                  %v740 = vld [vmem:[%s564 + $0x570] sm:$0xff]
                  %741 = vst [vmem:[%s565 + $0x2b8] sm:$0xff] %v740
                  %v742 = vld [vmem:[%s564 + $0x580] sm:$0xff]
                  %743 = vst [vmem:[%s565 + $0x2c0] sm:$0xff] %v742
                  %v744 = vld [vmem:[%s564 + $0x590] sm:$0xff]
                  %745 = vst [vmem:[%s565 + $0x2c8] sm:$0xff] %v744
                  %v746 = vld [vmem:[%s564 + $0x5a0] sm:$0xff]
                  %747 = vst [vmem:[%s565 + $0x2d0] sm:$0xff] %v746
                  %v748 = vld [vmem:[%s564 + $0x5b0] sm:$0xff]
                  %749 = vst [vmem:[%s565 + $0x2d8] sm:$0xff] %v748
                  %v750 = vld [vmem:[%s564 + $0x5c0] sm:$0xff]
                  %751 = vst [vmem:[%s565 + $0x2e0] sm:$0xff] %v750
                  %v752 = vld [vmem:[%s564 + $0x5d0] sm:$0xff]
                  %753 = vst [vmem:[%s565 + $0x2e8] sm:$0xff] %v752
                  %v754 = vld [vmem:[%s564 + $0x5e0] sm:$0xff]
                  %755 = vst [vmem:[%s565 + $0x2f0] sm:$0xff] %v754
                  %v756 = vld [vmem:[%s564 + $0x5f0] sm:$0xff]
                  %757 = vst [vmem:[%s565 + $0x2f8] sm:$0xff] %v756
                  %v758 = vld [vmem:[%s564 + $0x600] sm:$0xff]
                  %759 = vst [vmem:[%s565 + $0x300] sm:$0xff] %v758
                  %v760 = vld [vmem:[%s564 + $0x610] sm:$0xff]
                  %761 = vst [vmem:[%s565 + $0x308] sm:$0xff] %v760
                  %v762 = vld [vmem:[%s564 + $0x620] sm:$0xff]
                  %763 = vst [vmem:[%s565 + $0x310] sm:$0xff] %v762
                  %v764 = vld [vmem:[%s564 + $0x630] sm:$0xff]
                  %765 = vst [vmem:[%s565 + $0x318] sm:$0xff] %v764
                  %v766 = vld [vmem:[%s564 + $0x640] sm:$0xff]
                  %767 = vst [vmem:[%s565 + $0x320] sm:$0xff] %v766
                  %v768 = vld [vmem:[%s564 + $0x650] sm:$0xff]
                  %769 = vst [vmem:[%s565 + $0x328] sm:$0xff] %v768
                  %v770 = vld [vmem:[%s564 + $0x660] sm:$0xff]
                  %771 = vst [vmem:[%s565 + $0x330] sm:$0xff] %v770
                  %v772 = vld [vmem:[%s564 + $0x670] sm:$0xff]
                  %773 = vst [vmem:[%s565 + $0x338] sm:$0xff] %v772
                  %v774 = vld [vmem:[%s564 + $0x680] sm:$0xff]
                  %775 = vst [vmem:[%s565 + $0x340] sm:$0xff] %v774
                  %v776 = vld [vmem:[%s564 + $0x690] sm:$0xff]
                  %777 = vst [vmem:[%s565 + $0x348] sm:$0xff] %v776
                  %v778 = vld [vmem:[%s564 + $0x6a0] sm:$0xff]
                  %779 = vst [vmem:[%s565 + $0x350] sm:$0xff] %v778
                  %v780 = vld [vmem:[%s564 + $0x6b0] sm:$0xff]
                  %781 = vst [vmem:[%s565 + $0x358] sm:$0xff] %v780
                  %v782 = vld [vmem:[%s564 + $0x6c0] sm:$0xff]
                  %783 = vst [vmem:[%s565 + $0x360] sm:$0xff] %v782
                  %v784 = vld [vmem:[%s564 + $0x6d0] sm:$0xff]
                  %785 = vst [vmem:[%s565 + $0x368] sm:$0xff] %v784
                  %v786 = vld [vmem:[%s564 + $0x6e0] sm:$0xff]
                  %787 = vst [vmem:[%s565 + $0x370] sm:$0xff] %v786
                  %v788 = vld [vmem:[%s564 + $0x6f0] sm:$0xff]
                  %789 = vst [vmem:[%s565 + $0x378] sm:$0xff] %v788
                  %v790 = vld [vmem:[%s564 + $0x700] sm:$0xff]
                  %791 = vst [vmem:[%s565 + $0x380] sm:$0xff] %v790
                  %v792 = vld [vmem:[%s564 + $0x710] sm:$0xff]
                  %793 = vst [vmem:[%s565 + $0x388] sm:$0xff] %v792
                  %v794 = vld [vmem:[%s564 + $0x720] sm:$0xff]
                  %795 = vst [vmem:[%s565 + $0x390] sm:$0xff] %v794
                  %v796 = vld [vmem:[%s564 + $0x730] sm:$0xff]
                  %797 = vst [vmem:[%s565 + $0x398] sm:$0xff] %v796
                  %v798 = vld [vmem:[%s564 + $0x740] sm:$0xff]
                  %799 = vst [vmem:[%s565 + $0x3a0] sm:$0xff] %v798
                  %v800 = vld [vmem:[%s564 + $0x750] sm:$0xff]
                  %801 = vst [vmem:[%s565 + $0x3a8] sm:$0xff] %v800
                  %v802 = vld [vmem:[%s564 + $0x760] sm:$0xff]
                  %803 = vst [vmem:[%s565 + $0x3b0] sm:$0xff] %v802
                  %v804 = vld [vmem:[%s564 + $0x770] sm:$0xff]
                  %805 = vst [vmem:[%s565 + $0x3b8] sm:$0xff] %v804
                  %v806 = vld [vmem:[%s564 + $0x780] sm:$0xff]
                  %807 = vst [vmem:[%s565 + $0x3c0] sm:$0xff] %v806
                  %v808 = vld [vmem:[%s564 + $0x790] sm:$0xff]
                  %809 = vst [vmem:[%s565 + $0x3c8] sm:$0xff] %v808
                  %v810 = vld [vmem:[%s564 + $0x7a0] sm:$0xff]
                  %811 = vst [vmem:[%s565 + $0x3d0] sm:$0xff] %v810
                  %v812 = vld [vmem:[%s564 + $0x7b0] sm:$0xff]
                  %813 = vst [vmem:[%s565 + $0x3d8] sm:$0xff] %v812
                  %v814 = vld [vmem:[%s564 + $0x7c0] sm:$0xff]
                  %815 = vst [vmem:[%s565 + $0x3e0] sm:$0xff] %v814
                  %v816 = vld [vmem:[%s564 + $0x7d0] sm:$0xff]
                  %817 = vst [vmem:[%s565 + $0x3e8] sm:$0xff] %v816
                  %v818 = vld [vmem:[%s564 + $0x7e0] sm:$0xff]
                  %819 = vst [vmem:[%s565 + $0x3f0] sm:$0xff] %v818
                  %v820 = vld [vmem:[%s564 + $0x7f0] sm:$0xff]
                  %821 = vst [vmem:[%s565 + $0x3f8] sm:$0xff] %v820
                  %v822 = vld [vmem:[%s564 + $0x800] sm:$0xff]
                  %823 = vst [vmem:[%s565 + $0x400] sm:$0xff] %v822
                  %v824 = vld [vmem:[%s564 + $0x810] sm:$0xff]
                  %825 = vst [vmem:[%s565 + $0x408] sm:$0xff] %v824
                  %v826 = vld [vmem:[%s564 + $0x820] sm:$0xff]
                  %827 = vst [vmem:[%s565 + $0x410] sm:$0xff] %v826
                  %v828 = vld [vmem:[%s564 + $0x830] sm:$0xff]
                  %829 = vst [vmem:[%s565 + $0x418] sm:$0xff] %v828
                  %v830 = vld [vmem:[%s564 + $0x840] sm:$0xff]
                  %831 = vst [vmem:[%s565 + $0x420] sm:$0xff] %v830
                  %v832 = vld [vmem:[%s564 + $0x850] sm:$0xff]
                  %833 = vst [vmem:[%s565 + $0x428] sm:$0xff] %v832
                  %v834 = vld [vmem:[%s564 + $0x860] sm:$0xff]
                  %835 = vst [vmem:[%s565 + $0x430] sm:$0xff] %v834
                  %v836 = vld [vmem:[%s564 + $0x870] sm:$0xff]
                  %837 = vst [vmem:[%s565 + $0x438] sm:$0xff] %v836
                  %v838 = vld [vmem:[%s564 + $0x880] sm:$0xff]
                  %839 = vst [vmem:[%s565 + $0x440] sm:$0xff] %v838
                  %v840 = vld [vmem:[%s564 + $0x890] sm:$0xff]
                  %841 = vst [vmem:[%s565 + $0x448] sm:$0xff] %v840
                  %v842 = vld [vmem:[%s564 + $0x8a0] sm:$0xff]
                  %843 = vst [vmem:[%s565 + $0x450] sm:$0xff] %v842
                  %v844 = vld [vmem:[%s564 + $0x8b0] sm:$0xff]
                  %845 = vst [vmem:[%s565 + $0x458] sm:$0xff] %v844
                  %v846 = vld [vmem:[%s564 + $0x8c0] sm:$0xff]
                  %847 = vst [vmem:[%s565 + $0x460] sm:$0xff] %v846
                  %v848 = vld [vmem:[%s564 + $0x8d0] sm:$0xff]
                  %849 = vst [vmem:[%s565 + $0x468] sm:$0xff] %v848
                  %v850 = vld [vmem:[%s564 + $0x8e0] sm:$0xff]
                  %851 = vst [vmem:[%s565 + $0x470] sm:$0xff] %v850
                  %v852 = vld [vmem:[%s564 + $0x8f0] sm:$0xff]
                  %853 = vst [vmem:[%s565 + $0x478] sm:$0xff] %v852
                  %v854 = vld [vmem:[%s564 + $0x900] sm:$0xff]
                  %855 = vst [vmem:[%s565 + $0x480] sm:$0xff] %v854
                  %v856 = vld [vmem:[%s564 + $0x910] sm:$0xff]
                  %857 = vst [vmem:[%s565 + $0x488] sm:$0xff] %v856
                  %v858 = vld [vmem:[%s564 + $0x920] sm:$0xff]
                  %859 = vst [vmem:[%s565 + $0x490] sm:$0xff] %v858
                  %v860 = vld [vmem:[%s564 + $0x930] sm:$0xff]
                  %861 = vst [vmem:[%s565 + $0x498] sm:$0xff] %v860
                  %v862 = vld [vmem:[%s564 + $0x940] sm:$0xff]
                  %863 = vst [vmem:[%s565 + $0x4a0] sm:$0xff] %v862
                  %v864 = vld [vmem:[%s564 + $0x950] sm:$0xff]
                  %865 = vst [vmem:[%s565 + $0x4a8] sm:$0xff] %v864
                  %v866 = vld [vmem:[%s564 + $0x960] sm:$0xff]
                  %867 = vst [vmem:[%s565 + $0x4b0] sm:$0xff] %v866
                  %v868 = vld [vmem:[%s564 + $0x970] sm:$0xff]
                  %869 = vst [vmem:[%s565 + $0x4b8] sm:$0xff] %v868
                  %v870 = vld [vmem:[%s564 + $0x980] sm:$0xff]
                  %871 = vst [vmem:[%s565 + $0x4c0] sm:$0xff] %v870
                  %v872 = vld [vmem:[%s564 + $0x990] sm:$0xff]
                  %873 = vst [vmem:[%s565 + $0x4c8] sm:$0xff] %v872
                  %v874 = vld [vmem:[%s564 + $0x9a0] sm:$0xff]
                  %875 = vst [vmem:[%s565 + $0x4d0] sm:$0xff] %v874
                  %v876 = vld [vmem:[%s564 + $0x9b0] sm:$0xff]
                  %877 = vst [vmem:[%s565 + $0x4d8] sm:$0xff] %v876
                  %v878 = vld [vmem:[%s564 + $0x9c0] sm:$0xff]
                  %879 = vst [vmem:[%s565 + $0x4e0] sm:$0xff] %v878
                  %v880 = vld [vmem:[%s564 + $0x9d0] sm:$0xff]
                  %881 = vst [vmem:[%s565 + $0x4e8] sm:$0xff] %v880
                  %v882 = vld [vmem:[%s564 + $0x9e0] sm:$0xff]
                  %883 = vst [vmem:[%s565 + $0x4f0] sm:$0xff] %v882
                  %v884 = vld [vmem:[%s564 + $0x9f0] sm:$0xff]
                  %885 = vst [vmem:[%s565 + $0x4f8] sm:$0xff] %v884
                  %v886 = vld [vmem:[%s564 + $0xa00] sm:$0xff]
                  %887 = vst [vmem:[%s565 + $0x500] sm:$0xff] %v886
                  %v888 = vld [vmem:[%s564 + $0xa10] sm:$0xff]
                  %889 = vst [vmem:[%s565 + $0x508] sm:$0xff] %v888
                  %v890 = vld [vmem:[%s564 + $0xa20] sm:$0xff]
                  %891 = vst [vmem:[%s565 + $0x510] sm:$0xff] %v890
                  %v892 = vld [vmem:[%s564 + $0xa30] sm:$0xff]
                  %893 = vst [vmem:[%s565 + $0x518] sm:$0xff] %v892
                  %v894 = vld [vmem:[%s564 + $0xa40] sm:$0xff]
                  %895 = vst [vmem:[%s565 + $0x520] sm:$0xff] %v894
                  %v896 = vld [vmem:[%s564 + $0xa50] sm:$0xff]
                  %897 = vst [vmem:[%s565 + $0x528] sm:$0xff] %v896
                  %v898 = vld [vmem:[%s564 + $0xa60] sm:$0xff]
                  %899 = vst [vmem:[%s565 + $0x530] sm:$0xff] %v898
                  %v900 = vld [vmem:[%s564 + $0xa70] sm:$0xff]
                  %901 = vst [vmem:[%s565 + $0x538] sm:$0xff] %v900
                  %v902 = vld [vmem:[%s564 + $0xa80] sm:$0xff]
                  %903 = vst [vmem:[%s565 + $0x540] sm:$0xff] %v902
                  %v904 = vld [vmem:[%s564 + $0xa90] sm:$0xff]
                  %905 = vst [vmem:[%s565 + $0x548] sm:$0xff] %v904
                  %v906 = vld [vmem:[%s564 + $0xaa0] sm:$0xff]
                  %907 = vst [vmem:[%s565 + $0x550] sm:$0xff] %v906
                  %v908 = vld [vmem:[%s564 + $0xab0] sm:$0xff]
                  %909 = vst [vmem:[%s565 + $0x558] sm:$0xff] %v908
                  %v910 = vld [vmem:[%s564 + $0xac0] sm:$0xff]
                  %911 = vst [vmem:[%s565 + $0x560] sm:$0xff] %v910
                  %v912 = vld [vmem:[%s564 + $0xad0] sm:$0xff]
                  %913 = vst [vmem:[%s565 + $0x568] sm:$0xff] %v912
                  %v914 = vld [vmem:[%s564 + $0xae0] sm:$0xff]
                  %915 = vst [vmem:[%s565 + $0x570] sm:$0xff] %v914
                  %v916 = vld [vmem:[%s564 + $0xaf0] sm:$0xff]
                  %917 = vst [vmem:[%s565 + $0x578] sm:$0xff] %v916
                  %v918 = vld [vmem:[%s564 + $0xb00] sm:$0xff]
                  %919 = vst [vmem:[%s565 + $0x580] sm:$0xff] %v918
                  %v920 = vld [vmem:[%s564 + $0xb10] sm:$0xff]
                  %921 = vst [vmem:[%s565 + $0x588] sm:$0xff] %v920
                  %v922 = vld [vmem:[%s564 + $0xb20] sm:$0xff]
                  %923 = vst [vmem:[%s565 + $0x590] sm:$0xff] %v922
                  %v924 = vld [vmem:[%s564 + $0xb30] sm:$0xff]
                  %925 = vst [vmem:[%s565 + $0x598] sm:$0xff] %v924
                  %v926 = vld [vmem:[%s564 + $0xb40] sm:$0xff]
                  %927 = vst [vmem:[%s565 + $0x5a0] sm:$0xff] %v926
                  %v928 = vld [vmem:[%s564 + $0xb50] sm:$0xff]
                  %929 = vst [vmem:[%s565 + $0x5a8] sm:$0xff] %v928
                  %v930 = vld [vmem:[%s564 + $0xb60] sm:$0xff]
                  %931 = vst [vmem:[%s565 + $0x5b0] sm:$0xff] %v930
                  %v932 = vld [vmem:[%s564 + $0xb70] sm:$0xff]
                  %933 = vst [vmem:[%s565 + $0x5b8] sm:$0xff] %v932
                  %v934 = vld [vmem:[%s564 + $0xb80] sm:$0xff]
                  %935 = vst [vmem:[%s565 + $0x5c0] sm:$0xff] %v934
                  %v936 = vld [vmem:[%s564 + $0xb90] sm:$0xff]
                  %937 = vst [vmem:[%s565 + $0x5c8] sm:$0xff] %v936
                  %v938 = vld [vmem:[%s564 + $0xba0] sm:$0xff]
                  %939 = vst [vmem:[%s565 + $0x5d0] sm:$0xff] %v938
                  %v940 = vld [vmem:[%s564 + $0xbb0] sm:$0xff]
                  %941 = vst [vmem:[%s565 + $0x5d8] sm:$0xff] %v940
                  %v942 = vld [vmem:[%s564 + $0xbc0] sm:$0xff]
                  %943 = vst [vmem:[%s565 + $0x5e0] sm:$0xff] %v942
                  %v944 = vld [vmem:[%s564 + $0xbd0] sm:$0xff]
                  %945 = vst [vmem:[%s565 + $0x5e8] sm:$0xff] %v944
                  %v946 = vld [vmem:[%s564 + $0xbe0] sm:$0xff]
                  %947 = vst [vmem:[%s565 + $0x5f0] sm:$0xff] %v946
                  %v948 = vld [vmem:[%s564 + $0xbf0] sm:$0xff]
                  %949 = vst [vmem:[%s565 + $0x5f8] sm:$0xff] %v948
                  %v950 = vld [vmem:[%s564 + $0xc00] sm:$0xff]
                  %951 = vst [vmem:[%s565 + $0x600] sm:$0xff] %v950
                  %v952 = vld [vmem:[%s564 + $0xc10] sm:$0xff]
                  %953 = vst [vmem:[%s565 + $0x608] sm:$0xff] %v952
                  %v954 = vld [vmem:[%s564 + $0xc20] sm:$0xff]
                  %955 = vst [vmem:[%s565 + $0x610] sm:$0xff] %v954
                  %v956 = vld [vmem:[%s564 + $0xc30] sm:$0xff]
                  %957 = vst [vmem:[%s565 + $0x618] sm:$0xff] %v956
                  %v958 = vld [vmem:[%s564 + $0xc40] sm:$0xff]
                  %959 = vst [vmem:[%s565 + $0x620] sm:$0xff] %v958
                  %v960 = vld [vmem:[%s564 + $0xc50] sm:$0xff]
                  %961 = vst [vmem:[%s565 + $0x628] sm:$0xff] %v960
                  %v962 = vld [vmem:[%s564 + $0xc60] sm:$0xff]
                  %963 = vst [vmem:[%s565 + $0x630] sm:$0xff] %v962
                  %v964 = vld [vmem:[%s564 + $0xc70] sm:$0xff]
                  %965 = vst [vmem:[%s565 + $0x638] sm:$0xff] %v964
                $region52: #{_rnd_forward_impl.10} parent=46 // loop_footer
                  %s563 = sadd.s32 1, %s559
                $region53: #{_rnd_forward_impl.10} parent=46 // loop_footer_branch
                  %558 = sbr.rel target = $region49
                $region54: #{_rnd_forward_impl.10} parent=46 // loop_exit
                  _
              $region47: #{_rnd_forward_impl.10} parent=31 // pred_fallthru
                _
              // Predicated region
              $region55: #{_rnd_forward_impl.10} parent=31 // pred_check
                _
              $region56: #{_rnd_forward_impl.10} parent=31 // pred_check_branch
                %967 = sbr.rel target = $region58
              $region57: #{_rnd_forward_impl.10} parent=31 // pred_region
                _
              $region58: #{_rnd_forward_impl.10} parent=31 // pred_fallthru
                _
            $region32: #{_rnd_forward_impl.10} parent=27 // pred_fallthru
              _
            // Predicated region
            $region33: #{_rnd_forward_impl.10} parent=27 // pred_check
              _
            $region34: #{_rnd_forward_impl.10} parent=27 // pred_check_branch
              %145 = sbr.rel target = $region36
            $region35: #{_rnd_forward_impl.10} parent=27 // pred_region
              %s147 = ssub.s32 256, 1
              loop: start=0, step=1, limit=1
              $region37: #{_rnd_forward_impl.10} parent=35 // loop_pre_header
                _
              $region38: #{_rnd_forward_impl.10} parent=35 // loop_header
                %s149 = sphi 0, %s153
                %p150 = scmp.ge.s32.totalorder %s149, 1
                %s154 = sphi %s139, %s139
                %s155 = sphi %s136, %s136
              $region39: #{_rnd_forward_impl.10} parent=35 // loop_header_branch
                %152 = sbr.rel (%p150) target = $region43
              $region40: #{_rnd_forward_impl.10} parent=35 // loop_body
                %v156 = vld [vmem:[%s154] sm:%s147]
                %157 = vst [vmem:[%s155] sm:%s147] %v156
                %v158 = vld [vmem:[%s154 + $0x10] sm:%s147]
                %159 = vst [vmem:[%s155 + $0x8] sm:%s147] %v158
                %v160 = vld [vmem:[%s154 + $0x20] sm:%s147]
                %161 = vst [vmem:[%s155 + $0x10] sm:%s147] %v160
                %v162 = vld [vmem:[%s154 + $0x30] sm:%s147]
                %163 = vst [vmem:[%s155 + $0x18] sm:%s147] %v162
                %v164 = vld [vmem:[%s154 + $0x40] sm:%s147]
                %165 = vst [vmem:[%s155 + $0x20] sm:%s147] %v164
                %v166 = vld [vmem:[%s154 + $0x50] sm:%s147]
                %167 = vst [vmem:[%s155 + $0x28] sm:%s147] %v166
                %v168 = vld [vmem:[%s154 + $0x60] sm:%s147]
                %169 = vst [vmem:[%s155 + $0x30] sm:%s147] %v168
                %v170 = vld [vmem:[%s154 + $0x70] sm:%s147]
                %171 = vst [vmem:[%s155 + $0x38] sm:%s147] %v170
                %v172 = vld [vmem:[%s154 + $0x80] sm:%s147]
                %173 = vst [vmem:[%s155 + $0x40] sm:%s147] %v172
                %v174 = vld [vmem:[%s154 + $0x90] sm:%s147]
                %175 = vst [vmem:[%s155 + $0x48] sm:%s147] %v174
                %v176 = vld [vmem:[%s154 + $0xa0] sm:%s147]
                %177 = vst [vmem:[%s155 + $0x50] sm:%s147] %v176
                %v178 = vld [vmem:[%s154 + $0xb0] sm:%s147]
                %179 = vst [vmem:[%s155 + $0x58] sm:%s147] %v178
                %v180 = vld [vmem:[%s154 + $0xc0] sm:%s147]
                %181 = vst [vmem:[%s155 + $0x60] sm:%s147] %v180
                %v182 = vld [vmem:[%s154 + $0xd0] sm:%s147]
                %183 = vst [vmem:[%s155 + $0x68] sm:%s147] %v182
                %v184 = vld [vmem:[%s154 + $0xe0] sm:%s147]
                %185 = vst [vmem:[%s155 + $0x70] sm:%s147] %v184
                %v186 = vld [vmem:[%s154 + $0xf0] sm:%s147]
                %187 = vst [vmem:[%s155 + $0x78] sm:%s147] %v186
                %v188 = vld [vmem:[%s154 + $0x100] sm:%s147]
                %189 = vst [vmem:[%s155 + $0x80] sm:%s147] %v188
                %v190 = vld [vmem:[%s154 + $0x110] sm:%s147]
                %191 = vst [vmem:[%s155 + $0x88] sm:%s147] %v190
                %v192 = vld [vmem:[%s154 + $0x120] sm:%s147]
                %193 = vst [vmem:[%s155 + $0x90] sm:%s147] %v192
                %v194 = vld [vmem:[%s154 + $0x130] sm:%s147]
                %195 = vst [vmem:[%s155 + $0x98] sm:%s147] %v194
                %v196 = vld [vmem:[%s154 + $0x140] sm:%s147]
                %197 = vst [vmem:[%s155 + $0xa0] sm:%s147] %v196
                %v198 = vld [vmem:[%s154 + $0x150] sm:%s147]
                %199 = vst [vmem:[%s155 + $0xa8] sm:%s147] %v198
                %v200 = vld [vmem:[%s154 + $0x160] sm:%s147]
                %201 = vst [vmem:[%s155 + $0xb0] sm:%s147] %v200
                %v202 = vld [vmem:[%s154 + $0x170] sm:%s147]
                %203 = vst [vmem:[%s155 + $0xb8] sm:%s147] %v202
                %v204 = vld [vmem:[%s154 + $0x180] sm:%s147]
                %205 = vst [vmem:[%s155 + $0xc0] sm:%s147] %v204
                %v206 = vld [vmem:[%s154 + $0x190] sm:%s147]
                %207 = vst [vmem:[%s155 + $0xc8] sm:%s147] %v206
                %v208 = vld [vmem:[%s154 + $0x1a0] sm:%s147]
                %209 = vst [vmem:[%s155 + $0xd0] sm:%s147] %v208
                %v210 = vld [vmem:[%s154 + $0x1b0] sm:%s147]
                %211 = vst [vmem:[%s155 + $0xd8] sm:%s147] %v210
                %v212 = vld [vmem:[%s154 + $0x1c0] sm:%s147]
                %213 = vst [vmem:[%s155 + $0xe0] sm:%s147] %v212
                %v214 = vld [vmem:[%s154 + $0x1d0] sm:%s147]
                %215 = vst [vmem:[%s155 + $0xe8] sm:%s147] %v214
                %v216 = vld [vmem:[%s154 + $0x1e0] sm:%s147]
                %217 = vst [vmem:[%s155 + $0xf0] sm:%s147] %v216
                %v218 = vld [vmem:[%s154 + $0x1f0] sm:%s147]
                %219 = vst [vmem:[%s155 + $0xf8] sm:%s147] %v218
                %v220 = vld [vmem:[%s154 + $0x200] sm:%s147]
                %221 = vst [vmem:[%s155 + $0x100] sm:%s147] %v220
                %v222 = vld [vmem:[%s154 + $0x210] sm:%s147]
                %223 = vst [vmem:[%s155 + $0x108] sm:%s147] %v222
                %v224 = vld [vmem:[%s154 + $0x220] sm:%s147]
                %225 = vst [vmem:[%s155 + $0x110] sm:%s147] %v224
                %v226 = vld [vmem:[%s154 + $0x230] sm:%s147]
                %227 = vst [vmem:[%s155 + $0x118] sm:%s147] %v226
                %v228 = vld [vmem:[%s154 + $0x240] sm:%s147]
                %229 = vst [vmem:[%s155 + $0x120] sm:%s147] %v228
                %v230 = vld [vmem:[%s154 + $0x250] sm:%s147]
                %231 = vst [vmem:[%s155 + $0x128] sm:%s147] %v230
                %v232 = vld [vmem:[%s154 + $0x260] sm:%s147]
                %233 = vst [vmem:[%s155 + $0x130] sm:%s147] %v232
                %v234 = vld [vmem:[%s154 + $0x270] sm:%s147]
                %235 = vst [vmem:[%s155 + $0x138] sm:%s147] %v234
                %v236 = vld [vmem:[%s154 + $0x280] sm:%s147]
                %237 = vst [vmem:[%s155 + $0x140] sm:%s147] %v236
                %v238 = vld [vmem:[%s154 + $0x290] sm:%s147]
                %239 = vst [vmem:[%s155 + $0x148] sm:%s147] %v238
                %v240 = vld [vmem:[%s154 + $0x2a0] sm:%s147]
                %241 = vst [vmem:[%s155 + $0x150] sm:%s147] %v240
                %v242 = vld [vmem:[%s154 + $0x2b0] sm:%s147]
                %243 = vst [vmem:[%s155 + $0x158] sm:%s147] %v242
                %v244 = vld [vmem:[%s154 + $0x2c0] sm:%s147]
                %245 = vst [vmem:[%s155 + $0x160] sm:%s147] %v244
                %v246 = vld [vmem:[%s154 + $0x2d0] sm:%s147]
                %247 = vst [vmem:[%s155 + $0x168] sm:%s147] %v246
                %v248 = vld [vmem:[%s154 + $0x2e0] sm:%s147]
                %249 = vst [vmem:[%s155 + $0x170] sm:%s147] %v248
                %v250 = vld [vmem:[%s154 + $0x2f0] sm:%s147]
                %251 = vst [vmem:[%s155 + $0x178] sm:%s147] %v250
                %v252 = vld [vmem:[%s154 + $0x300] sm:%s147]
                %253 = vst [vmem:[%s155 + $0x180] sm:%s147] %v252
                %v254 = vld [vmem:[%s154 + $0x310] sm:%s147]
                %255 = vst [vmem:[%s155 + $0x188] sm:%s147] %v254
                %v256 = vld [vmem:[%s154 + $0x320] sm:%s147]
                %257 = vst [vmem:[%s155 + $0x190] sm:%s147] %v256
                %v258 = vld [vmem:[%s154 + $0x330] sm:%s147]
                %259 = vst [vmem:[%s155 + $0x198] sm:%s147] %v258
                %v260 = vld [vmem:[%s154 + $0x340] sm:%s147]
                %261 = vst [vmem:[%s155 + $0x1a0] sm:%s147] %v260
                %v262 = vld [vmem:[%s154 + $0x350] sm:%s147]
                %263 = vst [vmem:[%s155 + $0x1a8] sm:%s147] %v262
                %v264 = vld [vmem:[%s154 + $0x360] sm:%s147]
                %265 = vst [vmem:[%s155 + $0x1b0] sm:%s147] %v264
                %v266 = vld [vmem:[%s154 + $0x370] sm:%s147]
                %267 = vst [vmem:[%s155 + $0x1b8] sm:%s147] %v266
                %v268 = vld [vmem:[%s154 + $0x380] sm:%s147]
                %269 = vst [vmem:[%s155 + $0x1c0] sm:%s147] %v268
                %v270 = vld [vmem:[%s154 + $0x390] sm:%s147]
                %271 = vst [vmem:[%s155 + $0x1c8] sm:%s147] %v270
                %v272 = vld [vmem:[%s154 + $0x3a0] sm:%s147]
                %273 = vst [vmem:[%s155 + $0x1d0] sm:%s147] %v272
                %v274 = vld [vmem:[%s154 + $0x3b0] sm:%s147]
                %275 = vst [vmem:[%s155 + $0x1d8] sm:%s147] %v274
                %v276 = vld [vmem:[%s154 + $0x3c0] sm:%s147]
                %277 = vst [vmem:[%s155 + $0x1e0] sm:%s147] %v276
                %v278 = vld [vmem:[%s154 + $0x3d0] sm:%s147]
                %279 = vst [vmem:[%s155 + $0x1e8] sm:%s147] %v278
                %v280 = vld [vmem:[%s154 + $0x3e0] sm:%s147]
                %281 = vst [vmem:[%s155 + $0x1f0] sm:%s147] %v280
                %v282 = vld [vmem:[%s154 + $0x3f0] sm:%s147]
                %283 = vst [vmem:[%s155 + $0x1f8] sm:%s147] %v282
                %v284 = vld [vmem:[%s154 + $0x400] sm:%s147]
                %285 = vst [vmem:[%s155 + $0x200] sm:%s147] %v284
                %v286 = vld [vmem:[%s154 + $0x410] sm:%s147]
                %287 = vst [vmem:[%s155 + $0x208] sm:%s147] %v286
                %v288 = vld [vmem:[%s154 + $0x420] sm:%s147]
                %289 = vst [vmem:[%s155 + $0x210] sm:%s147] %v288
                %v290 = vld [vmem:[%s154 + $0x430] sm:%s147]
                %291 = vst [vmem:[%s155 + $0x218] sm:%s147] %v290
                %v292 = vld [vmem:[%s154 + $0x440] sm:%s147]
                %293 = vst [vmem:[%s155 + $0x220] sm:%s147] %v292
                %v294 = vld [vmem:[%s154 + $0x450] sm:%s147]
                %295 = vst [vmem:[%s155 + $0x228] sm:%s147] %v294
                %v296 = vld [vmem:[%s154 + $0x460] sm:%s147]
                %297 = vst [vmem:[%s155 + $0x230] sm:%s147] %v296
                %v298 = vld [vmem:[%s154 + $0x470] sm:%s147]
                %299 = vst [vmem:[%s155 + $0x238] sm:%s147] %v298
                %v300 = vld [vmem:[%s154 + $0x480] sm:%s147]
                %301 = vst [vmem:[%s155 + $0x240] sm:%s147] %v300
                %v302 = vld [vmem:[%s154 + $0x490] sm:%s147]
                %303 = vst [vmem:[%s155 + $0x248] sm:%s147] %v302
                %v304 = vld [vmem:[%s154 + $0x4a0] sm:%s147]
                %305 = vst [vmem:[%s155 + $0x250] sm:%s147] %v304
                %v306 = vld [vmem:[%s154 + $0x4b0] sm:%s147]
                %307 = vst [vmem:[%s155 + $0x258] sm:%s147] %v306
                %v308 = vld [vmem:[%s154 + $0x4c0] sm:%s147]
                %309 = vst [vmem:[%s155 + $0x260] sm:%s147] %v308
                %v310 = vld [vmem:[%s154 + $0x4d0] sm:%s147]
                %311 = vst [vmem:[%s155 + $0x268] sm:%s147] %v310
                %v312 = vld [vmem:[%s154 + $0x4e0] sm:%s147]
                %313 = vst [vmem:[%s155 + $0x270] sm:%s147] %v312
                %v314 = vld [vmem:[%s154 + $0x4f0] sm:%s147]
                %315 = vst [vmem:[%s155 + $0x278] sm:%s147] %v314
                %v316 = vld [vmem:[%s154 + $0x500] sm:%s147]
                %317 = vst [vmem:[%s155 + $0x280] sm:%s147] %v316
                %v318 = vld [vmem:[%s154 + $0x510] sm:%s147]
                %319 = vst [vmem:[%s155 + $0x288] sm:%s147] %v318
                %v320 = vld [vmem:[%s154 + $0x520] sm:%s147]
                %321 = vst [vmem:[%s155 + $0x290] sm:%s147] %v320
                %v322 = vld [vmem:[%s154 + $0x530] sm:%s147]
                %323 = vst [vmem:[%s155 + $0x298] sm:%s147] %v322
                %v324 = vld [vmem:[%s154 + $0x540] sm:%s147]
                %325 = vst [vmem:[%s155 + $0x2a0] sm:%s147] %v324
                %v326 = vld [vmem:[%s154 + $0x550] sm:%s147]
                %327 = vst [vmem:[%s155 + $0x2a8] sm:%s147] %v326
                %v328 = vld [vmem:[%s154 + $0x560] sm:%s147]
                %329 = vst [vmem:[%s155 + $0x2b0] sm:%s147] %v328
                %v330 = vld [vmem:[%s154 + $0x570] sm:%s147]
                %331 = vst [vmem:[%s155 + $0x2b8] sm:%s147] %v330
                %v332 = vld [vmem:[%s154 + $0x580] sm:%s147]
                %333 = vst [vmem:[%s155 + $0x2c0] sm:%s147] %v332
                %v334 = vld [vmem:[%s154 + $0x590] sm:%s147]
                %335 = vst [vmem:[%s155 + $0x2c8] sm:%s147] %v334
                %v336 = vld [vmem:[%s154 + $0x5a0] sm:%s147]
                %337 = vst [vmem:[%s155 + $0x2d0] sm:%s147] %v336
                %v338 = vld [vmem:[%s154 + $0x5b0] sm:%s147]
                %339 = vst [vmem:[%s155 + $0x2d8] sm:%s147] %v338
                %v340 = vld [vmem:[%s154 + $0x5c0] sm:%s147]
                %341 = vst [vmem:[%s155 + $0x2e0] sm:%s147] %v340
                %v342 = vld [vmem:[%s154 + $0x5d0] sm:%s147]
                %343 = vst [vmem:[%s155 + $0x2e8] sm:%s147] %v342
                %v344 = vld [vmem:[%s154 + $0x5e0] sm:%s147]
                %345 = vst [vmem:[%s155 + $0x2f0] sm:%s147] %v344
                %v346 = vld [vmem:[%s154 + $0x5f0] sm:%s147]
                %347 = vst [vmem:[%s155 + $0x2f8] sm:%s147] %v346
                %v348 = vld [vmem:[%s154 + $0x600] sm:%s147]
                %349 = vst [vmem:[%s155 + $0x300] sm:%s147] %v348
                %v350 = vld [vmem:[%s154 + $0x610] sm:%s147]
                %351 = vst [vmem:[%s155 + $0x308] sm:%s147] %v350
                %v352 = vld [vmem:[%s154 + $0x620] sm:%s147]
                %353 = vst [vmem:[%s155 + $0x310] sm:%s147] %v352
                %v354 = vld [vmem:[%s154 + $0x630] sm:%s147]
                %355 = vst [vmem:[%s155 + $0x318] sm:%s147] %v354
                %v356 = vld [vmem:[%s154 + $0x640] sm:%s147]
                %357 = vst [vmem:[%s155 + $0x320] sm:%s147] %v356
                %v358 = vld [vmem:[%s154 + $0x650] sm:%s147]
                %359 = vst [vmem:[%s155 + $0x328] sm:%s147] %v358
                %v360 = vld [vmem:[%s154 + $0x660] sm:%s147]
                %361 = vst [vmem:[%s155 + $0x330] sm:%s147] %v360
                %v362 = vld [vmem:[%s154 + $0x670] sm:%s147]
                %363 = vst [vmem:[%s155 + $0x338] sm:%s147] %v362
                %v364 = vld [vmem:[%s154 + $0x680] sm:%s147]
                %365 = vst [vmem:[%s155 + $0x340] sm:%s147] %v364
                %v366 = vld [vmem:[%s154 + $0x690] sm:%s147]
                %367 = vst [vmem:[%s155 + $0x348] sm:%s147] %v366
                %v368 = vld [vmem:[%s154 + $0x6a0] sm:%s147]
                %369 = vst [vmem:[%s155 + $0x350] sm:%s147] %v368
                %v370 = vld [vmem:[%s154 + $0x6b0] sm:%s147]
                %371 = vst [vmem:[%s155 + $0x358] sm:%s147] %v370
                %v372 = vld [vmem:[%s154 + $0x6c0] sm:%s147]
                %373 = vst [vmem:[%s155 + $0x360] sm:%s147] %v372
                %v374 = vld [vmem:[%s154 + $0x6d0] sm:%s147]
                %375 = vst [vmem:[%s155 + $0x368] sm:%s147] %v374
                %v376 = vld [vmem:[%s154 + $0x6e0] sm:%s147]
                %377 = vst [vmem:[%s155 + $0x370] sm:%s147] %v376
                %v378 = vld [vmem:[%s154 + $0x6f0] sm:%s147]
                %379 = vst [vmem:[%s155 + $0x378] sm:%s147] %v378
                %v380 = vld [vmem:[%s154 + $0x700] sm:%s147]
                %381 = vst [vmem:[%s155 + $0x380] sm:%s147] %v380
                %v382 = vld [vmem:[%s154 + $0x710] sm:%s147]
                %383 = vst [vmem:[%s155 + $0x388] sm:%s147] %v382
                %v384 = vld [vmem:[%s154 + $0x720] sm:%s147]
                %385 = vst [vmem:[%s155 + $0x390] sm:%s147] %v384
                %v386 = vld [vmem:[%s154 + $0x730] sm:%s147]
                %387 = vst [vmem:[%s155 + $0x398] sm:%s147] %v386
                %v388 = vld [vmem:[%s154 + $0x740] sm:%s147]
                %389 = vst [vmem:[%s155 + $0x3a0] sm:%s147] %v388
                %v390 = vld [vmem:[%s154 + $0x750] sm:%s147]
                %391 = vst [vmem:[%s155 + $0x3a8] sm:%s147] %v390
                %v392 = vld [vmem:[%s154 + $0x760] sm:%s147]
                %393 = vst [vmem:[%s155 + $0x3b0] sm:%s147] %v392
                %v394 = vld [vmem:[%s154 + $0x770] sm:%s147]
                %395 = vst [vmem:[%s155 + $0x3b8] sm:%s147] %v394
                %v396 = vld [vmem:[%s154 + $0x780] sm:%s147]
                %397 = vst [vmem:[%s155 + $0x3c0] sm:%s147] %v396
                %v398 = vld [vmem:[%s154 + $0x790] sm:%s147]
                %399 = vst [vmem:[%s155 + $0x3c8] sm:%s147] %v398
                %v400 = vld [vmem:[%s154 + $0x7a0] sm:%s147]
                %401 = vst [vmem:[%s155 + $0x3d0] sm:%s147] %v400
                %v402 = vld [vmem:[%s154 + $0x7b0] sm:%s147]
                %403 = vst [vmem:[%s155 + $0x3d8] sm:%s147] %v402
                %v404 = vld [vmem:[%s154 + $0x7c0] sm:%s147]
                %405 = vst [vmem:[%s155 + $0x3e0] sm:%s147] %v404
                %v406 = vld [vmem:[%s154 + $0x7d0] sm:%s147]
                %407 = vst [vmem:[%s155 + $0x3e8] sm:%s147] %v406
                %v408 = vld [vmem:[%s154 + $0x7e0] sm:%s147]
                %409 = vst [vmem:[%s155 + $0x3f0] sm:%s147] %v408
                %v410 = vld [vmem:[%s154 + $0x7f0] sm:%s147]
                %411 = vst [vmem:[%s155 + $0x3f8] sm:%s147] %v410
                %v412 = vld [vmem:[%s154 + $0x800] sm:%s147]
                %413 = vst [vmem:[%s155 + $0x400] sm:%s147] %v412
                %v414 = vld [vmem:[%s154 + $0x810] sm:%s147]
                %415 = vst [vmem:[%s155 + $0x408] sm:%s147] %v414
                %v416 = vld [vmem:[%s154 + $0x820] sm:%s147]
                %417 = vst [vmem:[%s155 + $0x410] sm:%s147] %v416
                %v418 = vld [vmem:[%s154 + $0x830] sm:%s147]
                %419 = vst [vmem:[%s155 + $0x418] sm:%s147] %v418
                %v420 = vld [vmem:[%s154 + $0x840] sm:%s147]
                %421 = vst [vmem:[%s155 + $0x420] sm:%s147] %v420
                %v422 = vld [vmem:[%s154 + $0x850] sm:%s147]
                %423 = vst [vmem:[%s155 + $0x428] sm:%s147] %v422
                %v424 = vld [vmem:[%s154 + $0x860] sm:%s147]
                %425 = vst [vmem:[%s155 + $0x430] sm:%s147] %v424
                %v426 = vld [vmem:[%s154 + $0x870] sm:%s147]
                %427 = vst [vmem:[%s155 + $0x438] sm:%s147] %v426
                %v428 = vld [vmem:[%s154 + $0x880] sm:%s147]
                %429 = vst [vmem:[%s155 + $0x440] sm:%s147] %v428
                %v430 = vld [vmem:[%s154 + $0x890] sm:%s147]
                %431 = vst [vmem:[%s155 + $0x448] sm:%s147] %v430
                %v432 = vld [vmem:[%s154 + $0x8a0] sm:%s147]
                %433 = vst [vmem:[%s155 + $0x450] sm:%s147] %v432
                %v434 = vld [vmem:[%s154 + $0x8b0] sm:%s147]
                %435 = vst [vmem:[%s155 + $0x458] sm:%s147] %v434
                %v436 = vld [vmem:[%s154 + $0x8c0] sm:%s147]
                %437 = vst [vmem:[%s155 + $0x460] sm:%s147] %v436
                %v438 = vld [vmem:[%s154 + $0x8d0] sm:%s147]
                %439 = vst [vmem:[%s155 + $0x468] sm:%s147] %v438
                %v440 = vld [vmem:[%s154 + $0x8e0] sm:%s147]
                %441 = vst [vmem:[%s155 + $0x470] sm:%s147] %v440
                %v442 = vld [vmem:[%s154 + $0x8f0] sm:%s147]
                %443 = vst [vmem:[%s155 + $0x478] sm:%s147] %v442
                %v444 = vld [vmem:[%s154 + $0x900] sm:%s147]
                %445 = vst [vmem:[%s155 + $0x480] sm:%s147] %v444
                %v446 = vld [vmem:[%s154 + $0x910] sm:%s147]
                %447 = vst [vmem:[%s155 + $0x488] sm:%s147] %v446
                %v448 = vld [vmem:[%s154 + $0x920] sm:%s147]
                %449 = vst [vmem:[%s155 + $0x490] sm:%s147] %v448
                %v450 = vld [vmem:[%s154 + $0x930] sm:%s147]
                %451 = vst [vmem:[%s155 + $0x498] sm:%s147] %v450
                %v452 = vld [vmem:[%s154 + $0x940] sm:%s147]
                %453 = vst [vmem:[%s155 + $0x4a0] sm:%s147] %v452
                %v454 = vld [vmem:[%s154 + $0x950] sm:%s147]
                %455 = vst [vmem:[%s155 + $0x4a8] sm:%s147] %v454
                %v456 = vld [vmem:[%s154 + $0x960] sm:%s147]
                %457 = vst [vmem:[%s155 + $0x4b0] sm:%s147] %v456
                %v458 = vld [vmem:[%s154 + $0x970] sm:%s147]
                %459 = vst [vmem:[%s155 + $0x4b8] sm:%s147] %v458
                %v460 = vld [vmem:[%s154 + $0x980] sm:%s147]
                %461 = vst [vmem:[%s155 + $0x4c0] sm:%s147] %v460
                %v462 = vld [vmem:[%s154 + $0x990] sm:%s147]
                %463 = vst [vmem:[%s155 + $0x4c8] sm:%s147] %v462
                %v464 = vld [vmem:[%s154 + $0x9a0] sm:%s147]
                %465 = vst [vmem:[%s155 + $0x4d0] sm:%s147] %v464
                %v466 = vld [vmem:[%s154 + $0x9b0] sm:%s147]
                %467 = vst [vmem:[%s155 + $0x4d8] sm:%s147] %v466
                %v468 = vld [vmem:[%s154 + $0x9c0] sm:%s147]
                %469 = vst [vmem:[%s155 + $0x4e0] sm:%s147] %v468
                %v470 = vld [vmem:[%s154 + $0x9d0] sm:%s147]
                %471 = vst [vmem:[%s155 + $0x4e8] sm:%s147] %v470
                %v472 = vld [vmem:[%s154 + $0x9e0] sm:%s147]
                %473 = vst [vmem:[%s155 + $0x4f0] sm:%s147] %v472
                %v474 = vld [vmem:[%s154 + $0x9f0] sm:%s147]
                %475 = vst [vmem:[%s155 + $0x4f8] sm:%s147] %v474
                %v476 = vld [vmem:[%s154 + $0xa00] sm:%s147]
                %477 = vst [vmem:[%s155 + $0x500] sm:%s147] %v476
                %v478 = vld [vmem:[%s154 + $0xa10] sm:%s147]
                %479 = vst [vmem:[%s155 + $0x508] sm:%s147] %v478
                %v480 = vld [vmem:[%s154 + $0xa20] sm:%s147]
                %481 = vst [vmem:[%s155 + $0x510] sm:%s147] %v480
                %v482 = vld [vmem:[%s154 + $0xa30] sm:%s147]
                %483 = vst [vmem:[%s155 + $0x518] sm:%s147] %v482
                %v484 = vld [vmem:[%s154 + $0xa40] sm:%s147]
                %485 = vst [vmem:[%s155 + $0x520] sm:%s147] %v484
                %v486 = vld [vmem:[%s154 + $0xa50] sm:%s147]
                %487 = vst [vmem:[%s155 + $0x528] sm:%s147] %v486
                %v488 = vld [vmem:[%s154 + $0xa60] sm:%s147]
                %489 = vst [vmem:[%s155 + $0x530] sm:%s147] %v488
                %v490 = vld [vmem:[%s154 + $0xa70] sm:%s147]
                %491 = vst [vmem:[%s155 + $0x538] sm:%s147] %v490
                %v492 = vld [vmem:[%s154 + $0xa80] sm:%s147]
                %493 = vst [vmem:[%s155 + $0x540] sm:%s147] %v492
                %v494 = vld [vmem:[%s154 + $0xa90] sm:%s147]
                %495 = vst [vmem:[%s155 + $0x548] sm:%s147] %v494
                %v496 = vld [vmem:[%s154 + $0xaa0] sm:%s147]
                %497 = vst [vmem:[%s155 + $0x550] sm:%s147] %v496
                %v498 = vld [vmem:[%s154 + $0xab0] sm:%s147]
                %499 = vst [vmem:[%s155 + $0x558] sm:%s147] %v498
                %v500 = vld [vmem:[%s154 + $0xac0] sm:%s147]
                %501 = vst [vmem:[%s155 + $0x560] sm:%s147] %v500
                %v502 = vld [vmem:[%s154 + $0xad0] sm:%s147]
                %503 = vst [vmem:[%s155 + $0x568] sm:%s147] %v502
                %v504 = vld [vmem:[%s154 + $0xae0] sm:%s147]
                %505 = vst [vmem:[%s155 + $0x570] sm:%s147] %v504
                %v506 = vld [vmem:[%s154 + $0xaf0] sm:%s147]
                %507 = vst [vmem:[%s155 + $0x578] sm:%s147] %v506
                %v508 = vld [vmem:[%s154 + $0xb00] sm:%s147]
                %509 = vst [vmem:[%s155 + $0x580] sm:%s147] %v508
                %v510 = vld [vmem:[%s154 + $0xb10] sm:%s147]
                %511 = vst [vmem:[%s155 + $0x588] sm:%s147] %v510
                %v512 = vld [vmem:[%s154 + $0xb20] sm:%s147]
                %513 = vst [vmem:[%s155 + $0x590] sm:%s147] %v512
                %v514 = vld [vmem:[%s154 + $0xb30] sm:%s147]
                %515 = vst [vmem:[%s155 + $0x598] sm:%s147] %v514
                %v516 = vld [vmem:[%s154 + $0xb40] sm:%s147]
                %517 = vst [vmem:[%s155 + $0x5a0] sm:%s147] %v516
                %v518 = vld [vmem:[%s154 + $0xb50] sm:%s147]
                %519 = vst [vmem:[%s155 + $0x5a8] sm:%s147] %v518
                %v520 = vld [vmem:[%s154 + $0xb60] sm:%s147]
                %521 = vst [vmem:[%s155 + $0x5b0] sm:%s147] %v520
                %v522 = vld [vmem:[%s154 + $0xb70] sm:%s147]
                %523 = vst [vmem:[%s155 + $0x5b8] sm:%s147] %v522
                %v524 = vld [vmem:[%s154 + $0xb80] sm:%s147]
                %525 = vst [vmem:[%s155 + $0x5c0] sm:%s147] %v524
                %v526 = vld [vmem:[%s154 + $0xb90] sm:%s147]
                %527 = vst [vmem:[%s155 + $0x5c8] sm:%s147] %v526
                %v528 = vld [vmem:[%s154 + $0xba0] sm:%s147]
                %529 = vst [vmem:[%s155 + $0x5d0] sm:%s147] %v528
                %v530 = vld [vmem:[%s154 + $0xbb0] sm:%s147]
                %531 = vst [vmem:[%s155 + $0x5d8] sm:%s147] %v530
                %v532 = vld [vmem:[%s154 + $0xbc0] sm:%s147]
                %533 = vst [vmem:[%s155 + $0x5e0] sm:%s147] %v532
                %v534 = vld [vmem:[%s154 + $0xbd0] sm:%s147]
                %535 = vst [vmem:[%s155 + $0x5e8] sm:%s147] %v534
                %v536 = vld [vmem:[%s154 + $0xbe0] sm:%s147]
                %537 = vst [vmem:[%s155 + $0x5f0] sm:%s147] %v536
                %v538 = vld [vmem:[%s154 + $0xbf0] sm:%s147]
                %539 = vst [vmem:[%s155 + $0x5f8] sm:%s147] %v538
                %v540 = vld [vmem:[%s154 + $0xc00] sm:%s147]
                %541 = vst [vmem:[%s155 + $0x600] sm:%s147] %v540
                %v542 = vld [vmem:[%s154 + $0xc10] sm:%s147]
                %543 = vst [vmem:[%s155 + $0x608] sm:%s147] %v542
                %v544 = vld [vmem:[%s154 + $0xc20] sm:%s147]
                %545 = vst [vmem:[%s155 + $0x610] sm:%s147] %v544
                %v546 = vld [vmem:[%s154 + $0xc30] sm:%s147]
                %547 = vst [vmem:[%s155 + $0x618] sm:%s147] %v546
                %v548 = vld [vmem:[%s154 + $0xc40] sm:%s147]
                %549 = vst [vmem:[%s155 + $0x620] sm:%s147] %v548
                %v550 = vld [vmem:[%s154 + $0xc50] sm:%s147]
                %551 = vst [vmem:[%s155 + $0x628] sm:%s147] %v550
                %v552 = vld [vmem:[%s154 + $0xc60] sm:%s147]
                %553 = vst [vmem:[%s155 + $0x630] sm:%s147] %v552
                %v554 = vld [vmem:[%s154 + $0xc70] sm:%s147]
                %555 = vst [vmem:[%s155 + $0x638] sm:%s147] %v554
              $region41: #{_rnd_forward_impl.10} parent=35 // loop_footer
                %s153 = sadd.s32 1, %s149
              $region42: #{_rnd_forward_impl.10} parent=35 // loop_footer_branch
                %148 = sbr.rel target = $region38
              $region43: #{_rnd_forward_impl.10} parent=35 // loop_exit
                _
            $region36: #{_rnd_forward_impl.10} parent=27 // pred_fallthru
              _
          $region28: #{_rnd_forward_impl.10} parent=23 // pred_fallthru
            _
          %968 = vnop
        $region24: #{_rnd_forward_impl.10} parent=19 // pred_fallthru
          _
        // Predicated region
        $region59: #{_rnd_forward_impl.10} parent=19 // pred_check
          %p969 = pneg %p76
        $region60: #{_rnd_forward_impl.10} parent=19 // pred_check_branch
          %971 = sbr.rel (%p969) target = $region62
        $region61: #{_rnd_forward_impl.10} parent=19 // pred_region
          %s972 = smul.u32 2, %s9
          %p973 = scmp.lt.s32.totalorder %s972, 3
          %s974 = scalar_select %p973, %s972, 3
          %s975 = scalar_lea.vmem %s2, %s974
          %s976 = smul.u32 2, %s9
        $region62: #{_rnd_forward_impl.10} parent=19 // pred_fallthru
          _
      $region20: #{_rnd_forward_impl.10} parent=5 // pred_fallthru
        _
      %p977 = scmp.le.s32.totalorder 1, %s9
      %p978 = scmp.lt.s32.totalorder %s9, 3
      %p979 = pnand %p977, %p978
      %p980 = pneg %p979
      // Predicated region
      $region63: #{_rnd_forward_impl.10} parent=5 // pred_check
        _
      $region64: #{_rnd_forward_impl.10} parent=5 // pred_check_branch
        %982 = sbr.rel (%p979) target = $region66
      $region65: #{_rnd_forward_impl.10} parent=5 // pred_region
        %s983 = ssub.s32 %s9, 1
        %s984 = sand.u32 %s43, 1
        %s985 = sand.u32 %s43, 1
        %s986 = smul.addr %s985, 1600
        %s987 = scalar_lea.vmem [#allocation2], %s986
        // Predicated region
        $region67: #{_rnd_forward_impl.10} parent=65 // pred_check
          %p988 = pneg %p56
        $region68: #{_rnd_forward_impl.10} parent=65 // pred_check_branch
          %990 = sbr.rel (%p988) target = $region70
        $region69: #{_rnd_forward_impl.10} parent=65 // pred_region
          _
        $region70: #{_rnd_forward_impl.10} parent=65 // pred_fallthru
          _
        %p991 = pneg %p30
        %p992 = pneg %p27
        %s993 = sand.u32 %s43, 1
        %s994 = sand.u32 %s43, 1
        %s995 = smul.addr %s994, 1600
        %s996 = scalar_lea.vmem [#allocation2], %s995
        %p997 = pneg %p56
        %p998 = pneg %p53
        %s999 = smul.u32 2, %s14
        %p1000 = scmp.lt.s32.totalorder %s999, 3
        %s1001 = scalar_select %p1000, %s999, 3
        %s1002 = scalar_lea.vmem %s2, %s1001
        %p1003 = pneg %p82
        %p1004 = pneg %p79
        %p1005 = pneg %p108
        %p1006 = pneg %p105
        %s1007 = smul.u32 2, %s14
        %p1008 = scmp.lt.s32.totalorder %s1007, 3
        %s1009 = scalar_select %p1008, %s1007, 3
        %s1010 = scalar_lea.vmem %s3, %s1009
        %s1011 = smul.u32 2, %s14
        %s1012 = smul.u32 2, %s14
        %p1013 = scmp.lt.s32.totalorder %s1012, 3
        %s1014 = scalar_select %p1013, %s1012, 3
        %s1015 = scalar_lea.vmem %s2, %s1014
        %s1016 = smul.u32 2, %s14
        %s1017 = smul.u32 2, %s14
        %p1018 = scmp.lt.s32.totalorder %s1017, 3
        %s1019 = scalar_select %p1018, %s1017, 3
        %s1020 = scalar_lea.vmem %s3, %s1019
        %s1021 = smul.u32 2, %s14
        %v1023 = vld [vmem:[%s0] sm:$0xff]
        %v1024 = vld [vmem:[%s0 + $0x8] sm:$0x1f]
        %v1025 = vld [vmem:[%s987] sm:$0xff]
        %v1026 = vld [vmem:[%s987 + $0x8] sm:$0xff]
        %v1027 = vld [vmem:[%s987 + $0x10] sm:$0xff]
        %v1028 = vld [vmem:[%s987 + $0x18] sm:$0xff]
        %v1029 = vld [vmem:[%s987 + $0x20] sm:$0xff]
        %v1030 = vld [vmem:[%s987 + $0x28] sm:$0xff]
        %v1031 = vld [vmem:[%s987 + $0x30] sm:$0xff]
        %v1032 = vld [vmem:[%s987 + $0x38] sm:$0xff]
        %v1033 = vld [vmem:[%s987 + $0x40] sm:$0xff]
        %v1034 = vld [vmem:[%s987 + $0x48] sm:$0xff]
        %v1035 = vld [vmem:[%s987 + $0x50] sm:$0xff]
        %v1036 = vld [vmem:[%s987 + $0x58] sm:$0xff]
        %v1037 = vld [vmem:[%s987 + $0x60] sm:$0xff]
        %v1038 = vld [vmem:[%s987 + $0x68] sm:$0xff]
        %v1039 = vld [vmem:[%s987 + $0x70] sm:$0xff]
        %v1040 = vld [vmem:[%s987 + $0x78] sm:$0xff]
        %v1041 = vld [vmem:[%s987 + $0x80] sm:$0xff]
        %v1042 = vld [vmem:[%s987 + $0x88] sm:$0xff]
        %v1043 = vld [vmem:[%s987 + $0x90] sm:$0xff]
        %v1044 = vld [vmem:[%s987 + $0x98] sm:$0xff]
        %v1045 = vld [vmem:[%s987 + $0xa0] sm:$0xff]
        %v1046 = vld [vmem:[%s987 + $0xa8] sm:$0xff]
        %v1047 = vld [vmem:[%s987 + $0xb0] sm:$0xff]
        %v1048 = vld [vmem:[%s987 + $0xb8] sm:$0xff]
        %v1049 = vld [vmem:[%s987 + $0xc0] sm:$0xff]
        %v1050 = vld [vmem:[%s987 + $0xc8] sm:$0xff]
        %v1051 = vld [vmem:[%s987 + $0xd0] sm:$0xff]
        %v1052 = vld [vmem:[%s987 + $0xd8] sm:$0xff]
        %v1053 = vld [vmem:[%s987 + $0xe0] sm:$0xff]
        %v1054 = vld [vmem:[%s987 + $0xe8] sm:$0xff]
        %v1055 = vld [vmem:[%s987 + $0xf0] sm:$0xff]
        %v1056 = vld [vmem:[%s987 + $0xf8] sm:$0xff]
        %v1057 = vld [vmem:[%s987 + $0x100] sm:$0xff]
        %v1058 = vld [vmem:[%s987 + $0x108] sm:$0xff]
        %v1059 = vld [vmem:[%s987 + $0x110] sm:$0xff]
        %v1060 = vld [vmem:[%s987 + $0x118] sm:$0xff]
        %v1061 = vld [vmem:[%s987 + $0x120] sm:$0xff]
        %v1062 = vld [vmem:[%s987 + $0x128] sm:$0xff]
        %v1063 = vld [vmem:[%s987 + $0x130] sm:$0xff]
        %v1064 = vld [vmem:[%s987 + $0x138] sm:$0xff]
        %v1065 = vld [vmem:[%s987 + $0x140] sm:$0xff]
        %v1066 = vld [vmem:[%s987 + $0x148] sm:$0xff]
        %v1067 = vld [vmem:[%s987 + $0x150] sm:$0xff]
        %v1068 = vld [vmem:[%s987 + $0x158] sm:$0xff]
        %v1069 = vld [vmem:[%s987 + $0x160] sm:$0xff]
        %v1070 = vld [vmem:[%s987 + $0x168] sm:$0xff]
        %v1071 = vld [vmem:[%s987 + $0x170] sm:$0xff]
        %v1072 = vld [vmem:[%s987 + $0x178] sm:$0xff]
        %v1073 = vld [vmem:[%s987 + $0x180] sm:$0xff]
        %v1074 = vld [vmem:[%s987 + $0x188] sm:$0xff]
        %v1075 = vld [vmem:[%s987 + $0x190] sm:$0xff]
        %v1076 = vld [vmem:[%s987 + $0x198] sm:$0xff]
        %v1077 = vld [vmem:[%s987 + $0x1a0] sm:$0xff]
        %v1078 = vld [vmem:[%s987 + $0x1a8] sm:$0xff]
        %v1079 = vld [vmem:[%s987 + $0x1b0] sm:$0xff]
        %v1080 = vld [vmem:[%s987 + $0x1b8] sm:$0xff]
        %v1081 = vld [vmem:[%s987 + $0x1c0] sm:$0xff]
        %v1082 = vld [vmem:[%s987 + $0x1c8] sm:$0xff]
        %v1083 = vld [vmem:[%s987 + $0x1d0] sm:$0xff]
        %v1084 = vld [vmem:[%s987 + $0x1d8] sm:$0xff]
        %v1085 = vld [vmem:[%s987 + $0x1e0] sm:$0xff]
        %v1086 = vld [vmem:[%s987 + $0x1e8] sm:$0xff]
        %v1087 = vld [vmem:[%s987 + $0x1f0] sm:$0xff]
        %v1088 = vld [vmem:[%s987 + $0x1f8] sm:$0xff]
        %v1089 = vld [vmem:[%s987 + $0x200] sm:$0xff]
        %v1090 = vld [vmem:[%s987 + $0x208] sm:$0xff]
        %v1091 = vld [vmem:[%s987 + $0x210] sm:$0xff]
        %v1092 = vld [vmem:[%s987 + $0x218] sm:$0xff]
        %v1093 = vld [vmem:[%s987 + $0x220] sm:$0xff]
        %v1094 = vld [vmem:[%s987 + $0x228] sm:$0xff]
        %v1095 = vld [vmem:[%s987 + $0x230] sm:$0xff]
        %v1096 = vld [vmem:[%s987 + $0x238] sm:$0xff]
        %v1097 = vld [vmem:[%s987 + $0x240] sm:$0xff]
        %v1098 = vld [vmem:[%s987 + $0x248] sm:$0xff]
        %v1099 = vld [vmem:[%s987 + $0x250] sm:$0xff]
        %v1100 = vld [vmem:[%s987 + $0x258] sm:$0xff]
        %v1101 = vld [vmem:[%s987 + $0x260] sm:$0xff]
        %v1102 = vld [vmem:[%s987 + $0x268] sm:$0xff]
        %v1103 = vld [vmem:[%s987 + $0x270] sm:$0xff]
        %v1104 = vld [vmem:[%s987 + $0x278] sm:$0xff]
        %v1105 = vld [vmem:[%s987 + $0x280] sm:$0xff]
        %v1106 = vld [vmem:[%s987 + $0x288] sm:$0xff]
        %v1107 = vld [vmem:[%s987 + $0x290] sm:$0xff]
        %v1108 = vld [vmem:[%s987 + $0x298] sm:$0xff]
        %v1109 = vld [vmem:[%s987 + $0x2a0] sm:$0xff]
        %v1110 = vld [vmem:[%s987 + $0x2a8] sm:$0xff]
        %v1111 = vld [vmem:[%s987 + $0x2b0] sm:$0xff]
        %v1112 = vld [vmem:[%s987 + $0x2b8] sm:$0xff]
        %v1113 = vld [vmem:[%s987 + $0x2c0] sm:$0xff]
        %v1114 = vld [vmem:[%s987 + $0x2c8] sm:$0xff]
        %v1115 = vld [vmem:[%s987 + $0x2d0] sm:$0xff]
        %v1116 = vld [vmem:[%s987 + $0x2d8] sm:$0xff]
        %v1117 = vld [vmem:[%s987 + $0x2e0] sm:$0xff]
        %v1118 = vld [vmem:[%s987 + $0x2e8] sm:$0xff]
        %v1119 = vld [vmem:[%s987 + $0x2f0] sm:$0xff]
        %v1120 = vld [vmem:[%s987 + $0x2f8] sm:$0xff]
        %v1121 = vld [vmem:[%s987 + $0x300] sm:$0xff]
        %v1122 = vld [vmem:[%s987 + $0x308] sm:$0xff]
        %v1123 = vld [vmem:[%s987 + $0x310] sm:$0xff]
        %v1124 = vld [vmem:[%s987 + $0x318] sm:$0xff]
        %v1125 = vld [vmem:[%s987 + $0x320] sm:$0xff]
        %v1126 = vld [vmem:[%s987 + $0x328] sm:$0xff]
        %v1127 = vld [vmem:[%s987 + $0x330] sm:$0xff]
        %v1128 = vld [vmem:[%s987 + $0x338] sm:$0xff]
        %v1129 = vld [vmem:[%s987 + $0x340] sm:$0xff]
        %v1130 = vld [vmem:[%s987 + $0x348] sm:$0xff]
        %v1131 = vld [vmem:[%s987 + $0x350] sm:$0xff]
        %v1132 = vld [vmem:[%s987 + $0x358] sm:$0xff]
        %v1133 = vld [vmem:[%s987 + $0x360] sm:$0xff]
        %v1134 = vld [vmem:[%s987 + $0x368] sm:$0xff]
        %v1135 = vld [vmem:[%s987 + $0x370] sm:$0xff]
        %v1136 = vld [vmem:[%s987 + $0x378] sm:$0xff]
        %v1137 = vld [vmem:[%s987 + $0x380] sm:$0xff]
        %v1138 = vld [vmem:[%s987 + $0x388] sm:$0xff]
        %v1139 = vld [vmem:[%s987 + $0x390] sm:$0xff]
        %v1140 = vld [vmem:[%s987 + $0x398] sm:$0xff]
        %v1141 = vld [vmem:[%s987 + $0x3a0] sm:$0xff]
        %v1142 = vld [vmem:[%s987 + $0x3a8] sm:$0xff]
        %v1143 = vld [vmem:[%s987 + $0x3b0] sm:$0xff]
        %v1144 = vld [vmem:[%s987 + $0x3b8] sm:$0xff]
        %v1145 = vld [vmem:[%s987 + $0x3c0] sm:$0xff]
        %v1146 = vld [vmem:[%s987 + $0x3c8] sm:$0xff]
        %v1147 = vld [vmem:[%s987 + $0x3d0] sm:$0xff]
        %v1148 = vld [vmem:[%s987 + $0x3d8] sm:$0xff]
        %v1149 = vld [vmem:[%s987 + $0x3e0] sm:$0xff]
        %v1150 = vld [vmem:[%s987 + $0x3e8] sm:$0xff]
        %v1151 = vld [vmem:[%s987 + $0x3f0] sm:$0xff]
        %v1152 = vld [vmem:[%s987 + $0x3f8] sm:$0xff]
        %v1153 = vld [vmem:[%s987 + $0x400] sm:$0xff]
        %v1154 = vld [vmem:[%s987 + $0x408] sm:$0xff]
        %v1155 = vld [vmem:[%s987 + $0x410] sm:$0xff]
        %v1156 = vld [vmem:[%s987 + $0x418] sm:$0xff]
        %v1157 = vld [vmem:[%s987 + $0x420] sm:$0xff]
        %v1158 = vld [vmem:[%s987 + $0x428] sm:$0xff]
        %v1159 = vld [vmem:[%s987 + $0x430] sm:$0xff]
        %v1160 = vld [vmem:[%s987 + $0x438] sm:$0xff]
        %v1161 = vld [vmem:[%s987 + $0x440] sm:$0xff]
        %v1162 = vld [vmem:[%s987 + $0x448] sm:$0xff]
        %v1163 = vld [vmem:[%s987 + $0x450] sm:$0xff]
        %v1164 = vld [vmem:[%s987 + $0x458] sm:$0xff]
        %v1165 = vld [vmem:[%s987 + $0x460] sm:$0xff]
        %v1166 = vld [vmem:[%s987 + $0x468] sm:$0xff]
        %v1167 = vld [vmem:[%s987 + $0x470] sm:$0xff]
        %v1168 = vld [vmem:[%s987 + $0x478] sm:$0xff]
        %v1169 = vld [vmem:[%s987 + $0x480] sm:$0xff]
        %v1170 = vld [vmem:[%s987 + $0x488] sm:$0xff]
        %v1171 = vld [vmem:[%s987 + $0x490] sm:$0xff]
        %v1172 = vld [vmem:[%s987 + $0x498] sm:$0xff]
        %v1173 = vld [vmem:[%s987 + $0x4a0] sm:$0xff]
        %v1174 = vld [vmem:[%s987 + $0x4a8] sm:$0xff]
        %v1175 = vld [vmem:[%s987 + $0x4b0] sm:$0xff]
        %v1176 = vld [vmem:[%s987 + $0x4b8] sm:$0xff]
        %v1177 = vld [vmem:[%s987 + $0x4c0] sm:$0xff]
        %v1178 = vld [vmem:[%s987 + $0x4c8] sm:$0xff]
        %v1179 = vld [vmem:[%s987 + $0x4d0] sm:$0xff]
        %v1180 = vld [vmem:[%s987 + $0x4d8] sm:$0xff]
        %v1181 = vld [vmem:[%s987 + $0x4e0] sm:$0xff]
        %v1182 = vld [vmem:[%s987 + $0x4e8] sm:$0xff]
        %v1183 = vld [vmem:[%s987 + $0x4f0] sm:$0xff]
        %v1184 = vld [vmem:[%s987 + $0x4f8] sm:$0xff]
        %v1185 = vld [vmem:[%s987 + $0x500] sm:$0xff]
        %v1186 = vld [vmem:[%s987 + $0x508] sm:$0xff]
        %v1187 = vld [vmem:[%s987 + $0x510] sm:$0xff]
        %v1188 = vld [vmem:[%s987 + $0x518] sm:$0xff]
        %v1189 = vld [vmem:[%s987 + $0x520] sm:$0xff]
        %v1190 = vld [vmem:[%s987 + $0x528] sm:$0xff]
        %v1191 = vld [vmem:[%s987 + $0x530] sm:$0xff]
        %v1192 = vld [vmem:[%s987 + $0x538] sm:$0xff]
        %v1193 = vld [vmem:[%s987 + $0x540] sm:$0xff]
        %v1194 = vld [vmem:[%s987 + $0x548] sm:$0xff]
        %v1195 = vld [vmem:[%s987 + $0x550] sm:$0xff]
        %v1196 = vld [vmem:[%s987 + $0x558] sm:$0xff]
        %v1197 = vld [vmem:[%s987 + $0x560] sm:$0xff]
        %v1198 = vld [vmem:[%s987 + $0x568] sm:$0xff]
        %v1199 = vld [vmem:[%s987 + $0x570] sm:$0xff]
        %v1200 = vld [vmem:[%s987 + $0x578] sm:$0xff]
        %v1201 = vld [vmem:[%s987 + $0x580] sm:$0xff]
        %v1202 = vld [vmem:[%s987 + $0x588] sm:$0xff]
        %v1203 = vld [vmem:[%s987 + $0x590] sm:$0xff]
        %v1204 = vld [vmem:[%s987 + $0x598] sm:$0xff]
        %v1205 = vld [vmem:[%s987 + $0x5a0] sm:$0xff]
        %v1206 = vld [vmem:[%s987 + $0x5a8] sm:$0xff]
        %v1207 = vld [vmem:[%s987 + $0x5b0] sm:$0xff]
        %v1208 = vld [vmem:[%s987 + $0x5b8] sm:$0xff]
        %v1209 = vld [vmem:[%s987 + $0x5c0] sm:$0xff]
        %v1210 = vld [vmem:[%s987 + $0x5c8] sm:$0xff]
        %v1211 = vld [vmem:[%s987 + $0x5d0] sm:$0xff]
        %v1212 = vld [vmem:[%s987 + $0x5d8] sm:$0xff]
        %v1213 = vld [vmem:[%s987 + $0x5e0] sm:$0xff]
        %v1214 = vld [vmem:[%s987 + $0x5e8] sm:$0xff]
        %v1215 = vld [vmem:[%s987 + $0x5f0] sm:$0xff]
        %v1216 = vld [vmem:[%s987 + $0x5f8] sm:$0xff]
        %v1217 = vld [vmem:[%s987 + $0x600] sm:$0xff]
        %v1218 = vld [vmem:[%s987 + $0x608] sm:$0xff]
        %v1219 = vld [vmem:[%s987 + $0x610] sm:$0xff]
        %v1220 = vld [vmem:[%s987 + $0x618] sm:$0xff]
        %v1221 = vld [vmem:[%s987 + $0x620] sm:$0xff]
        %v1222 = vld [vmem:[%s987 + $0x628] sm:$0xff]
        %v1223 = vld [vmem:[%s987 + $0x630] sm:$0xff]
        %v1224 = vld [vmem:[%s987 + $0x638] sm:$0xff]
        %v1225 = vld [vmem:[%s1015] sm:$0x3]
        %v1227 = vlaneseq
        %v1228 = vshrl.u32 %v1227, 7
        %v1229 = vsub.s32 0, %v1228
        %v1230 = vrot.slane %v1225, %v1229
        %v1231 = vlaneseq
        %v1232 = vshrl.u32 %v1231, 7
        %v1233 = vsub.s32 1, %v1232
        %v1234 = vrot.slane %v1225, %v1233
        %v1239 = vcombine.high %v1023, %v1023
        %v1241 = vunpack.c.l.s4 1966171168
        %v1242 = vunpack.c.0.s8 %v1241
        %v1243 = vlaneseq
        %v1244 = vshrl.u32 %v1243, 7
        %v1245 = vsub.s32 %v1242, %v1244
        %v1246 = vrot.slane %v1023, %v1245
        %v1248 = vunpack.c.l.s4 1966171168
        %v1249 = vunpack.c.0.s8 %v1248
        %v1250 = vlaneseq
        %v1251 = vshrl.u32 %v1250, 7
        %v1252 = vsub.s32 %v1249, %v1251
        %v1253 = vrot.slane %v1239, %v1252
        %v1254 = vcombine.high %v1246, %v1246
        %v1255 = vcombine.high %v1253, %v1253
        %v1257 = vunpack.c.l.s4 1966171168
        %v1258 = vunpack.c.0.s8 %v1257
        %v1259 = vlaneseq
        %v1260 = vshrl.u32 %v1259, 7
        %v1261 = vsub.s32 %v1258, %v1260
        %v1262 = vrot.slane %v1246, %v1261
        %v1264 = vunpack.c.l.s4 1966171168
        %v1265 = vunpack.c.0.s8 %v1264
        %v1266 = vlaneseq
        %v1267 = vshrl.u32 %v1266, 7
        %v1268 = vsub.s32 %v1265, %v1267
        %v1269 = vrot.slane %v1253, %v1268
        %v1271 = vunpack.c.l.s4 1966171168
        %v1272 = vunpack.c.0.s8 %v1271
        %v1273 = vlaneseq
        %v1274 = vshrl.u32 %v1273, 7
        %v1275 = vsub.s32 %v1272, %v1274
        %v1276 = vrot.slane %v1254, %v1275
        %v1278 = vunpack.c.l.s4 1966171168
        %v1279 = vunpack.c.0.s8 %v1278
        %v1280 = vlaneseq
        %v1281 = vshrl.u32 %v1280, 7
        %v1282 = vsub.s32 %v1279, %v1281
        %v1283 = vrot.slane %v1255, %v1282
        %v1284 = vcombine.high %v1262, %v1262
        %v1285 = vcombine.high %v1269, %v1269
        %v1286 = vcombine.high %v1276, %v1276
        %v1287 = vcombine.high %v1283, %v1283
        %v1288 = vcombine.high %v1024, %v1024
        %v1290 = vunpack.c.l.s4 1966171168
        %v1291 = vunpack.c.0.s8 %v1290
        %v1292 = vlaneseq
        %v1293 = vshrl.u32 %v1292, 7
        %v1294 = vsub.s32 %v1291, %v1293
        %v1295 = vrot.slane %v1024, %v1294
        %v1297 = vunpack.c.l.s4 1966171168
        %v1298 = vunpack.c.0.s8 %v1297
        %v1299 = vlaneseq
        %v1300 = vshrl.u32 %v1299, 7
        %v1301 = vsub.s32 %v1298, %v1300
        %v1302 = vrot.slane %v1288, %v1301
        %v1303 = vcombine.high %v1295, %v1295
        %v1305 = vunpack.c.l.s4 1966171168
        %v1306 = vunpack.c.0.s8 %v1305
        %v1307 = vlaneseq
        %v1308 = vshrl.u32 %v1307, 7
        %v1309 = vsub.s32 %v1306, %v1308
        %v1310 = vrot.slane %v1295, %v1309
        %v1312 = vunpack.c.l.s4 1966171168
        %v1313 = vunpack.c.0.s8 %v1312
        %v1314 = vlaneseq
        %v1315 = vshrl.u32 %v1314, 7
        %v1316 = vsub.s32 %v1313, %v1315
        %v1317 = vrot.slane %v1302, %v1316
        %v1319 = vunpack.c.l.s4 1966171168
        %v1320 = vunpack.c.0.s8 %v1319
        %v1321 = vlaneseq
        %v1322 = vshrl.u32 %v1321, 7
        %v1323 = vsub.s32 %v1320, %v1322
        %v1324 = vrot.slane %v1303, %v1323
        %v1325 = vcombine.high %v1310, %v1310
        %v1326 = vcombine.high %v1324, %v1324
        %v1539 = vunpack.c.l.b16 %v1025
        %v1540 = vunpack.c.h.b16 %v1025
        %v1541 = vunpack.c.l.b16 %v1026
        %v1542 = vunpack.c.h.b16 %v1026
        %v1543 = vunpack.c.l.b16 %v1027
        %v1544 = vunpack.c.h.b16 %v1027
        %v1545 = vunpack.c.l.b16 %v1028
        %v1546 = vunpack.c.h.b16 %v1028
        %v1547 = vunpack.c.l.b16 %v1029
        %v1548 = vunpack.c.h.b16 %v1029
        %v1549 = vunpack.c.l.b16 %v1030
        %v1550 = vunpack.c.h.b16 %v1030
        %v1551 = vunpack.c.l.b16 %v1031
        %v1552 = vunpack.c.h.b16 %v1031
        %v1553 = vunpack.c.l.b16 %v1032
        %v1554 = vunpack.c.h.b16 %v1032
        %v1555 = vunpack.c.l.b16 %v1033
        %v1556 = vunpack.c.h.b16 %v1033
        %v1557 = vunpack.c.l.b16 %v1034
        %v1558 = vunpack.c.h.b16 %v1034
        %v1559 = vunpack.c.l.b16 %v1035
        %v1560 = vunpack.c.h.b16 %v1035
        %v1561 = vunpack.c.l.b16 %v1036
        %v1562 = vunpack.c.h.b16 %v1036
        %v1563 = vunpack.c.l.b16 %v1037
        %v1564 = vunpack.c.h.b16 %v1037
        %v1565 = vunpack.c.l.b16 %v1038
        %v1566 = vunpack.c.h.b16 %v1038
        %v1567 = vunpack.c.l.b16 %v1039
        %v1568 = vunpack.c.h.b16 %v1039
        %v1569 = vunpack.c.l.b16 %v1040
        %v1570 = vunpack.c.h.b16 %v1040
        %v1571 = vunpack.c.l.b16 %v1041
        %v1572 = vunpack.c.h.b16 %v1041
        %v1573 = vunpack.c.l.b16 %v1042
        %v1574 = vunpack.c.h.b16 %v1042
        %v1575 = vunpack.c.l.b16 %v1043
        %v1576 = vunpack.c.h.b16 %v1043
        %v1577 = vunpack.c.l.b16 %v1044
        %v1578 = vunpack.c.h.b16 %v1044
        %v1579 = vunpack.c.l.b16 %v1045
        %v1580 = vunpack.c.h.b16 %v1045
        %v1581 = vunpack.c.l.b16 %v1046
        %v1582 = vunpack.c.h.b16 %v1046
        %v1583 = vunpack.c.l.b16 %v1047
        %v1584 = vunpack.c.h.b16 %v1047
        %v1585 = vunpack.c.l.b16 %v1048
        %v1586 = vunpack.c.h.b16 %v1048
        %v1587 = vunpack.c.l.b16 %v1049
        %v1588 = vunpack.c.h.b16 %v1049
        %v1589 = vunpack.c.l.b16 %v1050
        %v1590 = vunpack.c.h.b16 %v1050
        %v1591 = vunpack.c.l.b16 %v1051
        %v1592 = vunpack.c.h.b16 %v1051
        %v1593 = vunpack.c.l.b16 %v1052
        %v1594 = vunpack.c.h.b16 %v1052
        %v1595 = vunpack.c.l.b16 %v1053
        %v1596 = vunpack.c.h.b16 %v1053
        %v1597 = vunpack.c.l.b16 %v1054
        %v1598 = vunpack.c.h.b16 %v1054
        %v1599 = vunpack.c.l.b16 %v1055
        %v1600 = vunpack.c.h.b16 %v1055
        %v1601 = vunpack.c.l.b16 %v1056
        %v1602 = vunpack.c.h.b16 %v1056
        %v1603 = vunpack.c.l.b16 %v1057
        %v1604 = vunpack.c.h.b16 %v1057
        %v1605 = vunpack.c.l.b16 %v1058
        %v1606 = vunpack.c.h.b16 %v1058
        %v1607 = vunpack.c.l.b16 %v1059
        %v1608 = vunpack.c.h.b16 %v1059
        %v1609 = vunpack.c.l.b16 %v1060
        %v1610 = vunpack.c.h.b16 %v1060
        %v1611 = vunpack.c.l.b16 %v1061
        %v1612 = vunpack.c.h.b16 %v1061
        %v1613 = vunpack.c.l.b16 %v1062
        %v1614 = vunpack.c.h.b16 %v1062
        %v1615 = vunpack.c.l.b16 %v1063
        %v1616 = vunpack.c.h.b16 %v1063
        %v1617 = vunpack.c.l.b16 %v1064
        %v1618 = vunpack.c.h.b16 %v1064
        %v1619 = vunpack.c.l.b16 %v1065
        %v1620 = vunpack.c.h.b16 %v1065
        %v1621 = vunpack.c.l.b16 %v1066
        %v1622 = vunpack.c.h.b16 %v1066
        %v1623 = vunpack.c.l.b16 %v1067
        %v1624 = vunpack.c.h.b16 %v1067
        %v1625 = vunpack.c.l.b16 %v1068
        %v1626 = vunpack.c.h.b16 %v1068
        %v1627 = vunpack.c.l.b16 %v1069
        %v1628 = vunpack.c.h.b16 %v1069
        %v1629 = vunpack.c.l.b16 %v1070
        %v1630 = vunpack.c.h.b16 %v1070
        %v1631 = vunpack.c.l.b16 %v1071
        %v1632 = vunpack.c.h.b16 %v1071
        %v1633 = vunpack.c.l.b16 %v1072
        %v1634 = vunpack.c.h.b16 %v1072
        %v1635 = vunpack.c.l.b16 %v1073
        %v1636 = vunpack.c.h.b16 %v1073
        %v1637 = vunpack.c.l.b16 %v1074
        %v1638 = vunpack.c.h.b16 %v1074
        %v1639 = vunpack.c.l.b16 %v1075
        %v1640 = vunpack.c.h.b16 %v1075
        %v1641 = vunpack.c.l.b16 %v1076
        %v1642 = vunpack.c.h.b16 %v1076
        %v1643 = vunpack.c.l.b16 %v1077
        %v1644 = vunpack.c.h.b16 %v1077
        %v1645 = vunpack.c.l.b16 %v1078
        %v1646 = vunpack.c.h.b16 %v1078
        %v1647 = vunpack.c.l.b16 %v1079
        %v1648 = vunpack.c.h.b16 %v1079
        %v1649 = vunpack.c.l.b16 %v1080
        %v1650 = vunpack.c.h.b16 %v1080
        %v1651 = vunpack.c.l.b16 %v1081
        %v1652 = vunpack.c.h.b16 %v1081
        %v1653 = vunpack.c.l.b16 %v1082
        %v1654 = vunpack.c.h.b16 %v1082
        %v1655 = vunpack.c.l.b16 %v1083
        %v1656 = vunpack.c.h.b16 %v1083
        %v1657 = vunpack.c.l.b16 %v1084
        %v1658 = vunpack.c.h.b16 %v1084
        %v1659 = vunpack.c.l.b16 %v1085
        %v1660 = vunpack.c.h.b16 %v1085
        %v1661 = vunpack.c.l.b16 %v1086
        %v1662 = vunpack.c.h.b16 %v1086
        %v1663 = vunpack.c.l.b16 %v1087
        %v1664 = vunpack.c.h.b16 %v1087
        %v1665 = vunpack.c.l.b16 %v1088
        %v1666 = vunpack.c.h.b16 %v1088
        %v1667 = vunpack.c.l.b16 %v1089
        %v1668 = vunpack.c.h.b16 %v1089
        %v1669 = vunpack.c.l.b16 %v1090
        %v1670 = vunpack.c.h.b16 %v1090
        %v1671 = vunpack.c.l.b16 %v1091
        %v1672 = vunpack.c.h.b16 %v1091
        %v1673 = vunpack.c.l.b16 %v1092
        %v1674 = vunpack.c.h.b16 %v1092
        %v1675 = vunpack.c.l.b16 %v1093
        %v1676 = vunpack.c.h.b16 %v1093
        %v1677 = vunpack.c.l.b16 %v1094
        %v1678 = vunpack.c.h.b16 %v1094
        %v1679 = vunpack.c.l.b16 %v1095
        %v1680 = vunpack.c.h.b16 %v1095
        %v1681 = vunpack.c.l.b16 %v1096
        %v1682 = vunpack.c.h.b16 %v1096
        %v1683 = vunpack.c.l.b16 %v1097
        %v1684 = vunpack.c.h.b16 %v1097
        %v1685 = vunpack.c.l.b16 %v1098
        %v1686 = vunpack.c.h.b16 %v1098
        %v1687 = vunpack.c.l.b16 %v1099
        %v1688 = vunpack.c.h.b16 %v1099
        %v1689 = vunpack.c.l.b16 %v1100
        %v1690 = vunpack.c.h.b16 %v1100
        %v1691 = vunpack.c.l.b16 %v1101
        %v1692 = vunpack.c.h.b16 %v1101
        %v1693 = vunpack.c.l.b16 %v1102
        %v1694 = vunpack.c.h.b16 %v1102
        %v1695 = vunpack.c.l.b16 %v1103
        %v1696 = vunpack.c.h.b16 %v1103
        %v1697 = vunpack.c.l.b16 %v1104
        %v1698 = vunpack.c.h.b16 %v1104
        %v1699 = vunpack.c.l.b16 %v1105
        %v1700 = vunpack.c.h.b16 %v1105
        %v1701 = vunpack.c.l.b16 %v1106
        %v1702 = vunpack.c.h.b16 %v1106
        %v1703 = vunpack.c.l.b16 %v1107
        %v1704 = vunpack.c.h.b16 %v1107
        %v1705 = vunpack.c.l.b16 %v1108
        %v1706 = vunpack.c.h.b16 %v1108
        %v1707 = vunpack.c.l.b16 %v1109
        %v1708 = vunpack.c.h.b16 %v1109
        %v1709 = vunpack.c.l.b16 %v1110
        %v1710 = vunpack.c.h.b16 %v1110
        %v1711 = vunpack.c.l.b16 %v1111
        %v1712 = vunpack.c.h.b16 %v1111
        %v1713 = vunpack.c.l.b16 %v1112
        %v1714 = vunpack.c.h.b16 %v1112
        %v1715 = vunpack.c.l.b16 %v1113
        %v1716 = vunpack.c.h.b16 %v1113
        %v1717 = vunpack.c.l.b16 %v1114
        %v1718 = vunpack.c.h.b16 %v1114
        %v1719 = vunpack.c.l.b16 %v1115
        %v1720 = vunpack.c.h.b16 %v1115
        %v1721 = vunpack.c.l.b16 %v1116
        %v1722 = vunpack.c.h.b16 %v1116
        %v1723 = vunpack.c.l.b16 %v1117
        %v1724 = vunpack.c.h.b16 %v1117
        %v1725 = vunpack.c.l.b16 %v1118
        %v1726 = vunpack.c.h.b16 %v1118
        %v1727 = vunpack.c.l.b16 %v1119
        %v1728 = vunpack.c.h.b16 %v1119
        %v1729 = vunpack.c.l.b16 %v1120
        %v1730 = vunpack.c.h.b16 %v1120
        %v1731 = vunpack.c.l.b16 %v1121
        %v1732 = vunpack.c.h.b16 %v1121
        %v1733 = vunpack.c.l.b16 %v1122
        %v1734 = vunpack.c.h.b16 %v1122
        %v1735 = vunpack.c.l.b16 %v1123
        %v1736 = vunpack.c.h.b16 %v1123
        %v1737 = vunpack.c.l.b16 %v1124
        %v1738 = vunpack.c.h.b16 %v1124
        %v1739 = vunpack.c.l.b16 %v1125
        %v1740 = vunpack.c.h.b16 %v1125
        %v1741 = vunpack.c.l.b16 %v1126
        %v1742 = vunpack.c.h.b16 %v1126
        %v1743 = vunpack.c.l.b16 %v1127
        %v1744 = vunpack.c.h.b16 %v1127
        %v1745 = vunpack.c.l.b16 %v1128
        %v1746 = vunpack.c.h.b16 %v1128
        %v1747 = vunpack.c.l.b16 %v1129
        %v1748 = vunpack.c.h.b16 %v1129
        %v1749 = vunpack.c.l.b16 %v1130
        %v1750 = vunpack.c.h.b16 %v1130
        %v1751 = vunpack.c.l.b16 %v1131
        %v1752 = vunpack.c.h.b16 %v1131
        %v1753 = vunpack.c.l.b16 %v1132
        %v1754 = vunpack.c.h.b16 %v1132
        %v1755 = vunpack.c.l.b16 %v1133
        %v1756 = vunpack.c.h.b16 %v1133
        %v1757 = vunpack.c.l.b16 %v1134
        %v1758 = vunpack.c.h.b16 %v1134
        %v1759 = vunpack.c.l.b16 %v1135
        %v1760 = vunpack.c.h.b16 %v1135
        %v1761 = vunpack.c.l.b16 %v1136
        %v1762 = vunpack.c.h.b16 %v1136
        %v1763 = vunpack.c.l.b16 %v1137
        %v1764 = vunpack.c.h.b16 %v1137
        %v1765 = vunpack.c.l.b16 %v1138
        %v1766 = vunpack.c.h.b16 %v1138
        %v1767 = vunpack.c.l.b16 %v1139
        %v1768 = vunpack.c.h.b16 %v1139
        %v1769 = vunpack.c.l.b16 %v1140
        %v1770 = vunpack.c.h.b16 %v1140
        %v1771 = vunpack.c.l.b16 %v1141
        %v1772 = vunpack.c.h.b16 %v1141
        %v1773 = vunpack.c.l.b16 %v1142
        %v1774 = vunpack.c.h.b16 %v1142
        %v1775 = vunpack.c.l.b16 %v1143
        %v1776 = vunpack.c.h.b16 %v1143
        %v1777 = vunpack.c.l.b16 %v1144
        %v1778 = vunpack.c.h.b16 %v1144
        %v1779 = vunpack.c.l.b16 %v1145
        %v1780 = vunpack.c.h.b16 %v1145
        %v1781 = vunpack.c.l.b16 %v1146
        %v1782 = vunpack.c.h.b16 %v1146
        %v1783 = vunpack.c.l.b16 %v1147
        %v1784 = vunpack.c.h.b16 %v1147
        %v1785 = vunpack.c.l.b16 %v1148
        %v1786 = vunpack.c.h.b16 %v1148
        %v1787 = vunpack.c.l.b16 %v1149
        %v1788 = vunpack.c.h.b16 %v1149
        %v1789 = vunpack.c.l.b16 %v1150
        %v1790 = vunpack.c.h.b16 %v1150
        %v1791 = vunpack.c.l.b16 %v1151
        %v1792 = vunpack.c.h.b16 %v1151
        %v1793 = vunpack.c.l.b16 %v1152
        %v1794 = vunpack.c.h.b16 %v1152
        %v1795 = vunpack.c.l.b16 %v1153
        %v1796 = vunpack.c.h.b16 %v1153
        %v1797 = vunpack.c.l.b16 %v1154
        %v1798 = vunpack.c.h.b16 %v1154
        %v1799 = vunpack.c.l.b16 %v1155
        %v1800 = vunpack.c.h.b16 %v1155
        %v1801 = vunpack.c.l.b16 %v1156
        %v1802 = vunpack.c.h.b16 %v1156
        %v1803 = vunpack.c.l.b16 %v1157
        %v1804 = vunpack.c.h.b16 %v1157
        %v1805 = vunpack.c.l.b16 %v1158
        %v1806 = vunpack.c.h.b16 %v1158
        %v1807 = vunpack.c.l.b16 %v1159
        %v1808 = vunpack.c.h.b16 %v1159
        %v1809 = vunpack.c.l.b16 %v1160
        %v1810 = vunpack.c.h.b16 %v1160
        %v1811 = vunpack.c.l.b16 %v1161
        %v1812 = vunpack.c.h.b16 %v1161
        %v1813 = vunpack.c.l.b16 %v1162
        %v1814 = vunpack.c.h.b16 %v1162
        %v1815 = vunpack.c.l.b16 %v1163
        %v1816 = vunpack.c.h.b16 %v1163
        %v1817 = vunpack.c.l.b16 %v1164
        %v1818 = vunpack.c.h.b16 %v1164
        %v1819 = vunpack.c.l.b16 %v1165
        %v1820 = vunpack.c.h.b16 %v1165
        %v1821 = vunpack.c.l.b16 %v1166
        %v1822 = vunpack.c.h.b16 %v1166
        %v1823 = vunpack.c.l.b16 %v1167
        %v1824 = vunpack.c.h.b16 %v1167
        %v1825 = vunpack.c.l.b16 %v1168
        %v1826 = vunpack.c.h.b16 %v1168
        %v1827 = vunpack.c.l.b16 %v1169
        %v1828 = vunpack.c.h.b16 %v1169
        %v1829 = vunpack.c.l.b16 %v1170
        %v1830 = vunpack.c.h.b16 %v1170
        %v1831 = vunpack.c.l.b16 %v1171
        %v1832 = vunpack.c.h.b16 %v1171
        %v1833 = vunpack.c.l.b16 %v1172
        %v1834 = vunpack.c.h.b16 %v1172
        %v1835 = vunpack.c.l.b16 %v1173
        %v1836 = vunpack.c.h.b16 %v1173
        %v1837 = vunpack.c.l.b16 %v1174
        %v1838 = vunpack.c.h.b16 %v1174
        %v1839 = vunpack.c.l.b16 %v1175
        %v1840 = vunpack.c.h.b16 %v1175
        %v1841 = vunpack.c.l.b16 %v1176
        %v1842 = vunpack.c.h.b16 %v1176
        %v1843 = vunpack.c.l.b16 %v1177
        %v1844 = vunpack.c.h.b16 %v1177
        %v1845 = vunpack.c.l.b16 %v1178
        %v1846 = vunpack.c.h.b16 %v1178
        %v1847 = vunpack.c.l.b16 %v1179
        %v1848 = vunpack.c.h.b16 %v1179
        %v1849 = vunpack.c.l.b16 %v1180
        %v1850 = vunpack.c.h.b16 %v1180
        %v1851 = vunpack.c.l.b16 %v1181
        %v1852 = vunpack.c.h.b16 %v1181
        %v1853 = vunpack.c.l.b16 %v1182
        %v1854 = vunpack.c.h.b16 %v1182
        %v1855 = vunpack.c.l.b16 %v1183
        %v1856 = vunpack.c.h.b16 %v1183
        %v1857 = vunpack.c.l.b16 %v1184
        %v1858 = vunpack.c.h.b16 %v1184
        %v1859 = vunpack.c.l.b16 %v1185
        %v1860 = vunpack.c.h.b16 %v1185
        %v1861 = vunpack.c.l.b16 %v1186
        %v1862 = vunpack.c.h.b16 %v1186
        %v1863 = vunpack.c.l.b16 %v1187
        %v1864 = vunpack.c.h.b16 %v1187
        %v1865 = vunpack.c.l.b16 %v1188
        %v1866 = vunpack.c.h.b16 %v1188
        %v1867 = vunpack.c.l.b16 %v1189
        %v1868 = vunpack.c.h.b16 %v1189
        %v1869 = vunpack.c.l.b16 %v1190
        %v1870 = vunpack.c.h.b16 %v1190
        %v1871 = vunpack.c.l.b16 %v1191
        %v1872 = vunpack.c.h.b16 %v1191
        %v1873 = vunpack.c.l.b16 %v1192
        %v1874 = vunpack.c.h.b16 %v1192
        %v1875 = vunpack.c.l.b16 %v1193
        %v1876 = vunpack.c.h.b16 %v1193
        %v1877 = vunpack.c.l.b16 %v1194
        %v1878 = vunpack.c.h.b16 %v1194
        %v1879 = vunpack.c.l.b16 %v1195
        %v1880 = vunpack.c.h.b16 %v1195
        %v1881 = vunpack.c.l.b16 %v1196
        %v1882 = vunpack.c.h.b16 %v1196
        %v1883 = vunpack.c.l.b16 %v1197
        %v1884 = vunpack.c.h.b16 %v1197
        %v1885 = vunpack.c.l.b16 %v1198
        %v1886 = vunpack.c.h.b16 %v1198
        %v1887 = vunpack.c.l.b16 %v1199
        %v1888 = vunpack.c.h.b16 %v1199
        %v1889 = vunpack.c.l.b16 %v1200
        %v1890 = vunpack.c.h.b16 %v1200
        %v1891 = vunpack.c.l.b16 %v1201
        %v1892 = vunpack.c.h.b16 %v1201
        %v1893 = vunpack.c.l.b16 %v1202
        %v1894 = vunpack.c.h.b16 %v1202
        %v1895 = vunpack.c.l.b16 %v1203
        %v1896 = vunpack.c.h.b16 %v1203
        %v1897 = vunpack.c.l.b16 %v1204
        %v1898 = vunpack.c.h.b16 %v1204
        %v1899 = vunpack.c.l.b16 %v1205
        %v1900 = vunpack.c.h.b16 %v1205
        %v1901 = vunpack.c.l.b16 %v1206
        %v1902 = vunpack.c.h.b16 %v1206
        %v1903 = vunpack.c.l.b16 %v1207
        %v1904 = vunpack.c.h.b16 %v1207
        %v1905 = vunpack.c.l.b16 %v1208
        %v1906 = vunpack.c.h.b16 %v1208
        %v1907 = vunpack.c.l.b16 %v1209
        %v1908 = vunpack.c.h.b16 %v1209
        %v1909 = vunpack.c.l.b16 %v1210
        %v1910 = vunpack.c.h.b16 %v1210
        %v1911 = vunpack.c.l.b16 %v1211
        %v1912 = vunpack.c.h.b16 %v1211
        %v1913 = vunpack.c.l.b16 %v1212
        %v1914 = vunpack.c.h.b16 %v1212
        %v1915 = vunpack.c.l.b16 %v1213
        %v1916 = vunpack.c.h.b16 %v1213
        %v1917 = vunpack.c.l.b16 %v1214
        %v1918 = vunpack.c.h.b16 %v1214
        %v1919 = vunpack.c.l.b16 %v1215
        %v1920 = vunpack.c.h.b16 %v1215
        %v1921 = vunpack.c.l.b16 %v1216
        %v1922 = vunpack.c.h.b16 %v1216
        %v1923 = vunpack.c.l.b16 %v1217
        %v1924 = vunpack.c.h.b16 %v1217
        %v1925 = vunpack.c.l.b16 %v1218
        %v1926 = vunpack.c.h.b16 %v1218
        %v1927 = vunpack.c.l.b16 %v1219
        %v1928 = vunpack.c.h.b16 %v1219
        %v1929 = vunpack.c.l.b16 %v1220
        %v1930 = vunpack.c.h.b16 %v1220
        %v1931 = vunpack.c.l.b16 %v1221
        %v1932 = vunpack.c.h.b16 %v1221
        %v1933 = vunpack.c.l.b16 %v1222
        %v1934 = vunpack.c.h.b16 %v1222
        %v1935 = vunpack.c.l.b16 %v1223
        %v1936 = vunpack.c.h.b16 %v1223
        %v1937 = vunpack.c.l.b16 %v1224
        %v1938 = vunpack.c.h.b16 %v1224
        %v1939 = vpack.c.b16 %v1541, %v1539
        %v1940 = vpack.c.b16 %v1542, %v1540
        %v1941 = vpack.c.b16 %v1545, %v1543
        %v1942 = vpack.c.b16 %v1546, %v1544
        %v1943 = vpack.c.b16 %v1549, %v1547
        %v1944 = vpack.c.b16 %v1550, %v1548
        %v1945 = vpack.c.b16 %v1553, %v1551
        %v1946 = vpack.c.b16 %v1554, %v1552
        %v1947 = vpack.c.b16 %v1557, %v1555
        %v1948 = vpack.c.b16 %v1558, %v1556
        %v1949 = vpack.c.b16 %v1561, %v1559
        %v1950 = vpack.c.b16 %v1562, %v1560
        %v1951 = vpack.c.b16 %v1565, %v1563
        %v1952 = vpack.c.b16 %v1566, %v1564
        %v1953 = vpack.c.b16 %v1569, %v1567
        %v1954 = vpack.c.b16 %v1570, %v1568
        %v1955 = vpack.c.b16 %v1573, %v1571
        %v1956 = vpack.c.b16 %v1574, %v1572
        %v1957 = vpack.c.b16 %v1577, %v1575
        %v1958 = vpack.c.b16 %v1578, %v1576
        %v1959 = vpack.c.b16 %v1581, %v1579
        %v1960 = vpack.c.b16 %v1582, %v1580
        %v1961 = vpack.c.b16 %v1585, %v1583
        %v1962 = vpack.c.b16 %v1586, %v1584
        %v1963 = vpack.c.b16 %v1589, %v1587
        %v1964 = vpack.c.b16 %v1590, %v1588
        %v1965 = vpack.c.b16 %v1593, %v1591
        %v1966 = vpack.c.b16 %v1594, %v1592
        %v1967 = vpack.c.b16 %v1597, %v1595
        %v1968 = vpack.c.b16 %v1598, %v1596
        %v1969 = vpack.c.b16 %v1601, %v1599
        %v1970 = vpack.c.b16 %v1602, %v1600
        %v1971 = vpack.c.b16 %v1605, %v1603
        %v1972 = vpack.c.b16 %v1606, %v1604
        %v1973 = vpack.c.b16 %v1609, %v1607
        %v1974 = vpack.c.b16 %v1610, %v1608
        %v1975 = vpack.c.b16 %v1613, %v1611
        %v1976 = vpack.c.b16 %v1614, %v1612
        %v1977 = vpack.c.b16 %v1617, %v1615
        %v1978 = vpack.c.b16 %v1618, %v1616
        %v1979 = vpack.c.b16 %v1621, %v1619
        %v1980 = vpack.c.b16 %v1622, %v1620
        %v1981 = vpack.c.b16 %v1625, %v1623
        %v1982 = vpack.c.b16 %v1626, %v1624
        %v1983 = vpack.c.b16 %v1629, %v1627
        %v1984 = vpack.c.b16 %v1630, %v1628
        %v1985 = vpack.c.b16 %v1633, %v1631
        %v1986 = vpack.c.b16 %v1634, %v1632
        %v1987 = vpack.c.b16 %v1637, %v1635
        %v1988 = vpack.c.b16 %v1638, %v1636
        %v1989 = vpack.c.b16 %v1641, %v1639
        %v1990 = vpack.c.b16 %v1642, %v1640
        %v1991 = vpack.c.b16 %v1645, %v1643
        %v1992 = vpack.c.b16 %v1646, %v1644
        %v1993 = vpack.c.b16 %v1649, %v1647
        %v1994 = vpack.c.b16 %v1650, %v1648
        %v1995 = vpack.c.b16 %v1653, %v1651
        %v1996 = vpack.c.b16 %v1654, %v1652
        %v1997 = vpack.c.b16 %v1657, %v1655
        %v1998 = vpack.c.b16 %v1658, %v1656
        %v1999 = vpack.c.b16 %v1661, %v1659
        %v2000 = vpack.c.b16 %v1662, %v1660
        %v2001 = vpack.c.b16 %v1665, %v1663
        %v2002 = vpack.c.b16 %v1666, %v1664
        %v2003 = vpack.c.b16 %v1669, %v1667
        %v2004 = vpack.c.b16 %v1670, %v1668
        %v2005 = vpack.c.b16 %v1673, %v1671
        %v2006 = vpack.c.b16 %v1674, %v1672
        %v2007 = vpack.c.b16 %v1677, %v1675
        %v2008 = vpack.c.b16 %v1678, %v1676
        %v2009 = vpack.c.b16 %v1681, %v1679
        %v2010 = vpack.c.b16 %v1682, %v1680
        %v2011 = vpack.c.b16 %v1685, %v1683
        %v2012 = vpack.c.b16 %v1686, %v1684
        %v2013 = vpack.c.b16 %v1689, %v1687
        %v2014 = vpack.c.b16 %v1690, %v1688
        %v2015 = vpack.c.b16 %v1693, %v1691
        %v2016 = vpack.c.b16 %v1694, %v1692
        %v2017 = vpack.c.b16 %v1697, %v1695
        %v2018 = vpack.c.b16 %v1698, %v1696
        %v2019 = vpack.c.b16 %v1701, %v1699
        %v2020 = vpack.c.b16 %v1702, %v1700
        %v2021 = vpack.c.b16 %v1705, %v1703
        %v2022 = vpack.c.b16 %v1706, %v1704
        %v2023 = vpack.c.b16 %v1709, %v1707
        %v2024 = vpack.c.b16 %v1710, %v1708
        %v2025 = vpack.c.b16 %v1713, %v1711
        %v2026 = vpack.c.b16 %v1714, %v1712
        %v2027 = vpack.c.b16 %v1717, %v1715
        %v2028 = vpack.c.b16 %v1718, %v1716
        %v2029 = vpack.c.b16 %v1721, %v1719
        %v2030 = vpack.c.b16 %v1722, %v1720
        %v2031 = vpack.c.b16 %v1725, %v1723
        %v2032 = vpack.c.b16 %v1726, %v1724
        %v2033 = vpack.c.b16 %v1729, %v1727
        %v2034 = vpack.c.b16 %v1730, %v1728
        %v2035 = vpack.c.b16 %v1733, %v1731
        %v2036 = vpack.c.b16 %v1734, %v1732
        %v2037 = vpack.c.b16 %v1737, %v1735
        %v2038 = vpack.c.b16 %v1738, %v1736
        %v2039 = vpack.c.b16 %v1741, %v1739
        %v2040 = vpack.c.b16 %v1742, %v1740
        %v2041 = vpack.c.b16 %v1745, %v1743
        %v2042 = vpack.c.b16 %v1746, %v1744
        %v2043 = vpack.c.b16 %v1749, %v1747
        %v2044 = vpack.c.b16 %v1750, %v1748
        %v2045 = vpack.c.b16 %v1753, %v1751
        %v2046 = vpack.c.b16 %v1754, %v1752
        %v2047 = vpack.c.b16 %v1757, %v1755
        %v2048 = vpack.c.b16 %v1758, %v1756
        %v2049 = vpack.c.b16 %v1761, %v1759
        %v2050 = vpack.c.b16 %v1762, %v1760
        %v2051 = vpack.c.b16 %v1765, %v1763
        %v2052 = vpack.c.b16 %v1766, %v1764
        %v2053 = vpack.c.b16 %v1769, %v1767
        %v2054 = vpack.c.b16 %v1770, %v1768
        %v2055 = vpack.c.b16 %v1773, %v1771
        %v2056 = vpack.c.b16 %v1774, %v1772
        %v2057 = vpack.c.b16 %v1777, %v1775
        %v2058 = vpack.c.b16 %v1778, %v1776
        %v2059 = vpack.c.b16 %v1781, %v1779
        %v2060 = vpack.c.b16 %v1782, %v1780
        %v2061 = vpack.c.b16 %v1785, %v1783
        %v2062 = vpack.c.b16 %v1786, %v1784
        %v2063 = vpack.c.b16 %v1789, %v1787
        %v2064 = vpack.c.b16 %v1790, %v1788
        %v2065 = vpack.c.b16 %v1793, %v1791
        %v2066 = vpack.c.b16 %v1794, %v1792
        %v2067 = vpack.c.b16 %v1797, %v1795
        %v2068 = vpack.c.b16 %v1798, %v1796
        %v2069 = vpack.c.b16 %v1801, %v1799
        %v2070 = vpack.c.b16 %v1802, %v1800
        %v2071 = vpack.c.b16 %v1805, %v1803
        %v2072 = vpack.c.b16 %v1806, %v1804
        %v2073 = vpack.c.b16 %v1809, %v1807
        %v2074 = vpack.c.b16 %v1810, %v1808
        %v2075 = vpack.c.b16 %v1813, %v1811
        %v2076 = vpack.c.b16 %v1814, %v1812
        %v2077 = vpack.c.b16 %v1817, %v1815
        %v2078 = vpack.c.b16 %v1818, %v1816
        %v2079 = vpack.c.b16 %v1821, %v1819
        %v2080 = vpack.c.b16 %v1822, %v1820
        %v2081 = vpack.c.b16 %v1825, %v1823
        %v2082 = vpack.c.b16 %v1826, %v1824
        %v2083 = vpack.c.b16 %v1829, %v1827
        %v2084 = vpack.c.b16 %v1830, %v1828
        %v2085 = vpack.c.b16 %v1833, %v1831
        %v2086 = vpack.c.b16 %v1834, %v1832
        %v2087 = vpack.c.b16 %v1837, %v1835
        %v2088 = vpack.c.b16 %v1838, %v1836
        %v2089 = vpack.c.b16 %v1841, %v1839
        %v2090 = vpack.c.b16 %v1842, %v1840
        %v2091 = vpack.c.b16 %v1845, %v1843
        %v2092 = vpack.c.b16 %v1846, %v1844
        %v2093 = vpack.c.b16 %v1849, %v1847
        %v2094 = vpack.c.b16 %v1850, %v1848
        %v2095 = vpack.c.b16 %v1853, %v1851
        %v2096 = vpack.c.b16 %v1854, %v1852
        %v2097 = vpack.c.b16 %v1857, %v1855
        %v2098 = vpack.c.b16 %v1858, %v1856
        %v2099 = vpack.c.b16 %v1861, %v1859
        %v2100 = vpack.c.b16 %v1862, %v1860
        %v2101 = vpack.c.b16 %v1865, %v1863
        %v2102 = vpack.c.b16 %v1866, %v1864
        %v2103 = vpack.c.b16 %v1869, %v1867
        %v2104 = vpack.c.b16 %v1870, %v1868
        %v2105 = vpack.c.b16 %v1873, %v1871
        %v2106 = vpack.c.b16 %v1874, %v1872
        %v2107 = vpack.c.b16 %v1877, %v1875
        %v2108 = vpack.c.b16 %v1878, %v1876
        %v2109 = vpack.c.b16 %v1881, %v1879
        %v2110 = vpack.c.b16 %v1882, %v1880
        %v2111 = vpack.c.b16 %v1885, %v1883
        %v2112 = vpack.c.b16 %v1886, %v1884
        %v2113 = vpack.c.b16 %v1889, %v1887
        %v2114 = vpack.c.b16 %v1890, %v1888
        %v2115 = vpack.c.b16 %v1893, %v1891
        %v2116 = vpack.c.b16 %v1894, %v1892
        %v2117 = vpack.c.b16 %v1897, %v1895
        %v2118 = vpack.c.b16 %v1898, %v1896
        %v2119 = vpack.c.b16 %v1901, %v1899
        %v2120 = vpack.c.b16 %v1902, %v1900
        %v2121 = vpack.c.b16 %v1905, %v1903
        %v2122 = vpack.c.b16 %v1906, %v1904
        %v2123 = vpack.c.b16 %v1909, %v1907
        %v2124 = vpack.c.b16 %v1910, %v1908
        %v2125 = vpack.c.b16 %v1913, %v1911
        %v2126 = vpack.c.b16 %v1914, %v1912
        %v2127 = vpack.c.b16 %v1917, %v1915
        %v2128 = vpack.c.b16 %v1918, %v1916
        %v2129 = vpack.c.b16 %v1921, %v1919
        %v2130 = vpack.c.b16 %v1922, %v1920
        %v2131 = vpack.c.b16 %v1925, %v1923
        %v2132 = vpack.c.b16 %v1926, %v1924
        %v2133 = vpack.c.b16 %v1929, %v1927
        %v2134 = vpack.c.b16 %v1930, %v1928
        %v2135 = vpack.c.b16 %v1933, %v1931
        %v2136 = vpack.c.b16 %v1934, %v1932
        %v2137 = vpack.c.b16 %v1937, %v1935
        %v2138 = vpack.c.b16 %v1938, %v1936
        %vm2339 = vcmask 523264
        %v2341 = vsel %vm2339, %v1317, 0
        %2343 = vmatprep.subr.bf16.mxu0 %v1954
        %2344 = vmatpush1.bf16.msra.mxu0 %v1953
        %2345 = vmatprep.subr.bf16.mxu0 %v1952
        %2346 = vmatpush1.bf16.msra.mxu0 %v1951
        %2347 = vmatprep.subr.bf16.mxu0 %v1950
        %2348 = vmatpush1.bf16.msra.mxu0 %v1949
        %2349 = vmatprep.subr.bf16.mxu0 %v1948
        %2350 = vmatpush1.bf16.msra.mxu0 %v1947
        %2351 = vmatprep.subr.bf16.mxu0 %v1946
        %2352 = vmatpush1.bf16.msra.mxu0 %v1945
        %2353 = vmatprep.subr.bf16.mxu0 %v1944
        %2354 = vmatpush1.bf16.msra.mxu0 %v1943
        %2355 = vmatprep.subr.bf16.mxu0 %v1942
        %2356 = vmatpush1.bf16.msra.mxu0 %v1941
        %2357 = vmatprep.subr.bf16.mxu0 %v1940
        %2358 = vmatpush1.bf16.msra.mxu0 %v1939
        %2359 = vmatprep.subr.bf16.mxu0 %v1970
        %2360 = vmatpush2.bf16.msra.mxu0 %v1969
        %2361 = vmatprep.subr.bf16.mxu0 %v1968
        %2362 = vmatpush2.bf16.msra.mxu0 %v1967
        %2363 = vmatprep.subr.bf16.mxu0 %v1966
        %2364 = vmatpush2.bf16.msra.mxu0 %v1965
        %2365 = vmatprep.subr.bf16.mxu0 %v1964
        %2366 = vmatpush2.bf16.msra.mxu0 %v1963
        %2367 = vmatprep.subr.bf16.mxu0 %v1962
        %2368 = vmatpush2.bf16.msra.mxu0 %v1961
        %2369 = vmatprep.subr.bf16.mxu0 %v1960
        %2370 = vmatpush2.bf16.msra.mxu0 %v1959
        %2371 = vmatprep.subr.bf16.mxu0 %v1958
        %2372 = vmatpush2.bf16.msra.mxu0 %v1957
        %2373 = vmatprep.subr.bf16.mxu0 %v1956
        %2374 = vmatpush2.bf16.msra.mxu0 %v1955
        %2375 = vmatprep.mubr.bf16.mxu0 %v1276
        %2376 = vmatmul.mubr.bf16.gmra.mxu0 %v1262
        %v2377 = vpop.f32.mrf.mxu0
        %v2378 = vadd.f32 %v1230, %v2377
        %v2379 = vpop.f32.mrf.mxu0
        %v2380 = vadd.f32 %v1234, %v2379
        %v2381 = vpop.f32.mrf.mxu0
        %v2382 = vpop.f32.mrf.mxu0
        %2383 = vdwg.mxu0
        %2384 = vmatprep.subr.bf16.mxu0 %v1986
        %2385 = vmatpush1.bf16.msra.mxu0 %v1985
        %2386 = vmatprep.subr.bf16.mxu0 %v1984
        %2387 = vmatpush1.bf16.msra.mxu0 %v1983
        %2388 = vmatprep.subr.bf16.mxu0 %v1982
        %2389 = vmatpush1.bf16.msra.mxu0 %v1981
        %2390 = vmatprep.subr.bf16.mxu0 %v1980
        %2391 = vmatpush1.bf16.msra.mxu0 %v1979
        %2392 = vmatprep.subr.bf16.mxu0 %v1978
        %2393 = vmatpush1.bf16.msra.mxu0 %v1977
        %2394 = vmatprep.subr.bf16.mxu0 %v1976
        %2395 = vmatpush1.bf16.msra.mxu0 %v1975
        %2396 = vmatprep.subr.bf16.mxu0 %v1974
        %2397 = vmatpush1.bf16.msra.mxu0 %v1973
        %2398 = vmatprep.subr.bf16.mxu0 %v1972
        %2399 = vmatpush1.bf16.msra.mxu0 %v1971
        %2400 = vmatprep.subr.bf16.mxu0 %v2002
        %2401 = vmatpush2.bf16.msra.mxu0 %v2001
        %2402 = vmatprep.subr.bf16.mxu0 %v2000
        %2403 = vmatpush2.bf16.msra.mxu0 %v1999
        %2404 = vmatprep.subr.bf16.mxu0 %v1998
        %2405 = vmatpush2.bf16.msra.mxu0 %v1997
        %2406 = vmatprep.subr.bf16.mxu0 %v1996
        %2407 = vmatpush2.bf16.msra.mxu0 %v1995
        %2408 = vmatprep.subr.bf16.mxu0 %v1994
        %2409 = vmatpush2.bf16.msra.mxu0 %v1993
        %2410 = vmatprep.subr.bf16.mxu0 %v1992
        %2411 = vmatpush2.bf16.msra.mxu0 %v1991
        %2412 = vmatprep.subr.bf16.mxu0 %v1990
        %2413 = vmatpush2.bf16.msra.mxu0 %v1989
        %2414 = vmatprep.subr.bf16.mxu0 %v1988
        %2415 = vmatpush2.bf16.msra.mxu0 %v1987
        %2416 = vmatprep.mubr.bf16.mxu0 %v1286
        %2417 = vmatmul.mubr.bf16.gmra.mxu0 %v1284
        %v2418 = vpop.f32.mrf.mxu0
        %v2419 = vadd.f32 %v2378, %v2418
        %v2420 = vpop.f32.mrf.mxu0
        %v2421 = vadd.f32 %v2380, %v2420
        %v2422 = vpop.f32.mrf.mxu0
        %v2423 = vpop.f32.mrf.mxu0
        %2424 = vdwg.mxu0
        %2425 = vmatprep.subr.bf16.mxu0 %v2018
        %2426 = vmatpush1.bf16.msra.mxu0 %v2017
        %2427 = vmatprep.subr.bf16.mxu0 %v2016
        %2428 = vmatpush1.bf16.msra.mxu0 %v2015
        %2429 = vmatprep.subr.bf16.mxu0 %v2014
        %2430 = vmatpush1.bf16.msra.mxu0 %v2013
        %2431 = vmatprep.subr.bf16.mxu0 %v2012
        %2432 = vmatpush1.bf16.msra.mxu0 %v2011
        %2433 = vmatprep.subr.bf16.mxu0 %v2010
        %2434 = vmatpush1.bf16.msra.mxu0 %v2009
        %2435 = vmatprep.subr.bf16.mxu0 %v2008
        %2436 = vmatpush1.bf16.msra.mxu0 %v2007
        %2437 = vmatprep.subr.bf16.mxu0 %v2006
        %2438 = vmatpush1.bf16.msra.mxu0 %v2005
        %2439 = vmatprep.subr.bf16.mxu0 %v2004
        %2440 = vmatpush1.bf16.msra.mxu0 %v2003
        %2441 = vmatprep.subr.bf16.mxu0 %v2034
        %2442 = vmatpush2.bf16.msra.mxu0 %v2033
        %2443 = vmatprep.subr.bf16.mxu0 %v2032
        %2444 = vmatpush2.bf16.msra.mxu0 %v2031
        %2445 = vmatprep.subr.bf16.mxu0 %v2030
        %2446 = vmatpush2.bf16.msra.mxu0 %v2029
        %2447 = vmatprep.subr.bf16.mxu0 %v2028
        %2448 = vmatpush2.bf16.msra.mxu0 %v2027
        %2449 = vmatprep.subr.bf16.mxu0 %v2026
        %2450 = vmatpush2.bf16.msra.mxu0 %v2025
        %2451 = vmatprep.subr.bf16.mxu0 %v2024
        %2452 = vmatpush2.bf16.msra.mxu0 %v2023
        %2453 = vmatprep.subr.bf16.mxu0 %v2022
        %2454 = vmatpush2.bf16.msra.mxu0 %v2021
        %2455 = vmatprep.subr.bf16.mxu0 %v2020
        %2456 = vmatpush2.bf16.msra.mxu0 %v2019
        %2457 = vmatprep.mubr.bf16.mxu0 %v1283
        %2458 = vmatmul.mubr.bf16.gmra.mxu0 %v1269
        %v2459 = vpop.f32.mrf.mxu0
        %v2460 = vadd.f32 %v2419, %v2459
        %v2461 = vpop.f32.mrf.mxu0
        %v2462 = vadd.f32 %v2421, %v2461
        %v2463 = vpop.f32.mrf.mxu0
        %v2464 = vpop.f32.mrf.mxu0
        %2465 = vdwg.mxu0
        %2466 = vmatprep.subr.bf16.mxu0 %v2050
        %2467 = vmatpush1.bf16.msra.mxu0 %v2049
        %2468 = vmatprep.subr.bf16.mxu0 %v2048
        %2469 = vmatpush1.bf16.msra.mxu0 %v2047
        %2470 = vmatprep.subr.bf16.mxu0 %v2046
        %2471 = vmatpush1.bf16.msra.mxu0 %v2045
        %2472 = vmatprep.subr.bf16.mxu0 %v2044
        %2473 = vmatpush1.bf16.msra.mxu0 %v2043
        %2474 = vmatprep.subr.bf16.mxu0 %v2042
        %2475 = vmatpush1.bf16.msra.mxu0 %v2041
        %2476 = vmatprep.subr.bf16.mxu0 %v2040
        %2477 = vmatpush1.bf16.msra.mxu0 %v2039
        %2478 = vmatprep.subr.bf16.mxu0 %v2038
        %2479 = vmatpush1.bf16.msra.mxu0 %v2037
        %2480 = vmatprep.subr.bf16.mxu0 %v2036
        %2481 = vmatpush1.bf16.msra.mxu0 %v2035
        %2482 = vmatprep.subr.bf16.mxu0 %v2066
        %2483 = vmatpush2.bf16.msra.mxu0 %v2065
        %2484 = vmatprep.subr.bf16.mxu0 %v2064
        %2485 = vmatpush2.bf16.msra.mxu0 %v2063
        %2486 = vmatprep.subr.bf16.mxu0 %v2062
        %2487 = vmatpush2.bf16.msra.mxu0 %v2061
        %2488 = vmatprep.subr.bf16.mxu0 %v2060
        %2489 = vmatpush2.bf16.msra.mxu0 %v2059
        %2490 = vmatprep.subr.bf16.mxu0 %v2058
        %2491 = vmatpush2.bf16.msra.mxu0 %v2057
        %2492 = vmatprep.subr.bf16.mxu0 %v2056
        %2493 = vmatpush2.bf16.msra.mxu0 %v2055
        %2494 = vmatprep.subr.bf16.mxu0 %v2054
        %2495 = vmatpush2.bf16.msra.mxu0 %v2053
        %2496 = vmatprep.subr.bf16.mxu0 %v2052
        %2497 = vmatpush2.bf16.msra.mxu0 %v2051
        %2498 = vmatprep.mubr.bf16.mxu0 %v1287
        %2499 = vmatmul.mubr.bf16.gmra.mxu0 %v1285
        %v2500 = vpop.f32.mrf.mxu0
        %v2501 = vadd.f32 %v2460, %v2500
        %v2502 = vpop.f32.mrf.mxu0
        %v2503 = vadd.f32 %v2462, %v2502
        %v2504 = vpop.f32.mrf.mxu0
        %v2505 = vpop.f32.mrf.mxu0
        %2506 = vdwg.mxu0
        %2507 = vmatprep.subr.bf16.mxu0 %v2082
        %2508 = vmatpush1.bf16.msra.mxu0 %v2081
        %2509 = vmatprep.subr.bf16.mxu0 %v2080
        %2510 = vmatpush1.bf16.msra.mxu0 %v2079
        %2511 = vmatprep.subr.bf16.mxu0 %v2078
        %2512 = vmatpush1.bf16.msra.mxu0 %v2077
        %2513 = vmatprep.subr.bf16.mxu0 %v2076
        %2514 = vmatpush1.bf16.msra.mxu0 %v2075
        %2515 = vmatprep.subr.bf16.mxu0 %v2074
        %2516 = vmatpush1.bf16.msra.mxu0 %v2073
        %2517 = vmatprep.subr.bf16.mxu0 %v2072
        %2518 = vmatpush1.bf16.msra.mxu0 %v2071
        %2519 = vmatprep.subr.bf16.mxu0 %v2070
        %2520 = vmatpush1.bf16.msra.mxu0 %v2069
        %2521 = vmatprep.subr.bf16.mxu0 %v2068
        %2522 = vmatpush1.bf16.msra.mxu0 %v2067
        %2523 = vmatprep.subr.bf16.mxu0 %v2098
        %2524 = vmatpush2.bf16.msra.mxu0 %v2097
        %2525 = vmatprep.subr.bf16.mxu0 %v2096
        %2526 = vmatpush2.bf16.msra.mxu0 %v2095
        %2527 = vmatprep.subr.bf16.mxu0 %v2094
        %2528 = vmatpush2.bf16.msra.mxu0 %v2093
        %2529 = vmatprep.subr.bf16.mxu0 %v2092
        %2530 = vmatpush2.bf16.msra.mxu0 %v2091
        %2531 = vmatprep.subr.bf16.mxu0 %v2090
        %2532 = vmatpush2.bf16.msra.mxu0 %v2089
        %2533 = vmatprep.subr.bf16.mxu0 %v2088
        %2534 = vmatpush2.bf16.msra.mxu0 %v2087
        %2535 = vmatprep.subr.bf16.mxu0 %v2086
        %2536 = vmatpush2.bf16.msra.mxu0 %v2085
        %2537 = vmatprep.subr.bf16.mxu0 %v2084
        %2538 = vmatpush2.bf16.msra.mxu0 %v2083
        %2539 = vmatprep.mubr.bf16.mxu0 %v1324
        %2540 = vmatmul.mubr.bf16.gmra.mxu0 %v1310
        %v2541 = vpop.f32.mrf.mxu0
        %v2542 = vadd.f32 %v2501, %v2541
        %v2543 = vpop.f32.mrf.mxu0
        %v2544 = vadd.f32 %v2503, %v2543
        %v2545 = vpop.f32.mrf.mxu0
        %v2546 = vpop.f32.mrf.mxu0
        %2547 = vdwg.mxu0
        %2548 = vmatprep.subr.bf16.mxu0 %v2114
        %2549 = vmatpush1.bf16.msra.mxu0 %v2113
        %2550 = vmatprep.subr.bf16.mxu0 %v2112
        %2551 = vmatpush1.bf16.msra.mxu0 %v2111
        %2552 = vmatprep.subr.bf16.mxu0 %v2110
        %2553 = vmatpush1.bf16.msra.mxu0 %v2109
        %2554 = vmatprep.subr.bf16.mxu0 %v2108
        %2555 = vmatpush1.bf16.msra.mxu0 %v2107
        %2556 = vmatprep.subr.bf16.mxu0 %v2106
        %2557 = vmatpush1.bf16.msra.mxu0 %v2105
        %2558 = vmatprep.subr.bf16.mxu0 %v2104
        %2559 = vmatpush1.bf16.msra.mxu0 %v2103
        %2560 = vmatprep.subr.bf16.mxu0 %v2102
        %2561 = vmatpush1.bf16.msra.mxu0 %v2101
        %2562 = vmatprep.subr.bf16.mxu0 %v2100
        %2563 = vmatpush1.bf16.msra.mxu0 %v2099
        %2564 = vmatprep.subr.bf16.mxu0 %v2130
        %2565 = vmatpush2.bf16.msra.mxu0 %v2129
        %2566 = vmatprep.subr.bf16.mxu0 %v2128
        %2567 = vmatpush2.bf16.msra.mxu0 %v2127
        %2568 = vmatprep.subr.bf16.mxu0 %v2126
        %2569 = vmatpush2.bf16.msra.mxu0 %v2125
        %2570 = vmatprep.subr.bf16.mxu0 %v2124
        %2571 = vmatpush2.bf16.msra.mxu0 %v2123
        %2572 = vmatprep.subr.bf16.mxu0 %v2122
        %2573 = vmatpush2.bf16.msra.mxu0 %v2121
        %2574 = vmatprep.subr.bf16.mxu0 %v2120
        %2575 = vmatpush2.bf16.msra.mxu0 %v2119
        %2576 = vmatprep.subr.bf16.mxu0 %v2118
        %2577 = vmatpush2.bf16.msra.mxu0 %v2117
        %2578 = vmatprep.subr.bf16.mxu0 %v2116
        %2579 = vmatpush2.bf16.msra.mxu0 %v2115
        %2580 = vmatprep.mubr.bf16.mxu0 %v1326
        %2581 = vmatmul.mubr.bf16.gmra.mxu0 %v1325
        %v2582 = vpop.f32.mrf.mxu0
        %v2583 = vadd.f32 %v2542, %v2582
        %v2584 = vpop.f32.mrf.mxu0
        %v2585 = vadd.f32 %v2544, %v2584
        %v2586 = vpop.f32.mrf.mxu0
        %v2587 = vpop.f32.mrf.mxu0
        %2588 = vdwg.mxu0
        %2589 = vmatprep.subr.bf16.mxu0 0
        %2590 = vmatpush1.bf16.msra.mxu0 0
        %2591 = vmatprep.subr.bf16.mxu0 0
        %2592 = vmatpush1.bf16.msra.mxu0 0
        %2593 = vmatprep.subr.bf16.mxu0 0
        %2594 = vmatpush1.bf16.msra.mxu0 0
        %2595 = vmatprep.subr.bf16.mxu0 0
        %2596 = vmatpush1.bf16.msra.mxu0 0
        %2597 = vmatprep.subr.bf16.mxu0 %v2138
        %2598 = vmatpush1.bf16.msra.mxu0 %v2137
        %2599 = vmatprep.subr.bf16.mxu0 %v2136
        %2600 = vmatpush1.bf16.msra.mxu0 %v2135
        %2601 = vmatprep.subr.bf16.mxu0 %v2134
        %2602 = vmatpush1.bf16.msra.mxu0 %v2133
        %2603 = vmatprep.subr.bf16.mxu0 %v2132
        %2604 = vmatpush1.bf16.msra.mxu0 %v2131
        %2605 = vmatprep.subr.bf16.mxu0 0
        %2606 = vmatpush2.bf16.msra.mxu0 0
        %2607 = vmatprep.subr.bf16.mxu0 0
        %2608 = vmatpush2.bf16.msra.mxu0 0
        %2609 = vmatprep.subr.bf16.mxu0 0
        %2610 = vmatpush2.bf16.msra.mxu0 0
        %2611 = vmatprep.subr.bf16.mxu0 0
        %2612 = vmatpush2.bf16.msra.mxu0 0
        %2613 = vmatprep.subr.bf16.mxu0 0
        %2614 = vmatpush2.bf16.msra.mxu0 0
        %2615 = vmatprep.subr.bf16.mxu0 0
        %2616 = vmatpush2.bf16.msra.mxu0 0
        %2617 = vmatprep.subr.bf16.mxu0 0
        %2618 = vmatpush2.bf16.msra.mxu0 0
        %2619 = vmatprep.subr.bf16.mxu0 0
        %2620 = vmatpush2.bf16.msra.mxu0 0
        %2621 = vmatprep.mubr.bf16.mxu0 0
        %2622 = vmatmul.mubr.bf16.gmra.mxu0 %v2341
        %v2623 = vpop.f32.mrf.mxu0
        %v2624 = vadd.f32 %v2583, %v2623
        %v2625 = vpop.f32.mrf.mxu0
        %v2626 = vadd.f32 %v2585, %v2625
        %v2627 = vpop.f32.mrf.mxu0
        %v2628 = vpop.f32.mrf.mxu0
        %2629 = vdwg.mxu0
        %v2630 = vmax.f32 %v2624, 0.0
        %v2631 = vmax.f32 %v2626, 0.0
        %v2632 = vpack.c.bf16 %v2630, %v2630
        %v2633 = vpack.c.bf16 %v2631, %v2631
        %v2636 = vcombine.low %v2632, %v2633
        %v2638 = vunpack.c.l.s4 1966171168
        %v2639 = vunpack.c.0.s8 %v2638
        %v2640 = vlaneseq
        %v2641 = vshrl.u32 %v2640, 7
        %v2642 = vsub.s32 %v2639, %v2641
        %v2643 = vrot.slane %v2636, %v2642
        %v2645 = vunpack.c.l.s4 1966171168
        %v2646 = vunpack.c.0.s8 %v2645
        %v2647 = vlaneseq
        %v2648 = vshrl.u32 %v2647, 7
        %v2649 = vsub.s32 %v2646, %v2648
        %v2650 = vrot.slane %v2643, %v2649
        %2652 = vst [vmem:[%s1020] sm:$0x3] %v2650
        %s2653 = smul.u32 2, %s14
        %p2654 = scmp.lt.s32.totalorder %s2653, 3
        %s2655 = scalar_select %p2654, %s2653, 3
        %s2656 = scalar_lea.vmem %s3, %s2655
        // Predicated region
        $region71: #{_rnd_forward_impl.10} parent=65 // pred_check
          %p2657 = pneg %p105
        $region72: #{_rnd_forward_impl.10} parent=65 // pred_check_branch
          %2659 = sbr.rel (%p2657) target = $region74
        $region73: #{_rnd_forward_impl.10} parent=65 // pred_region
          %s2660 = smul.u32 2, %s14
        $region74: #{_rnd_forward_impl.10} parent=65 // pred_fallthru
          _
      $region66: #{_rnd_forward_impl.10} parent=5 // pred_fallthru
        _
      %p2661 = scmp.le.s32.totalorder 2, %s9
      // Predicated region
      $region75: #{_rnd_forward_impl.10} parent=5 // pred_check
        %p2662 = pneg %p2661
      $region76: #{_rnd_forward_impl.10} parent=5 // pred_check_branch
        %2664 = sbr.rel (%p2662) target = $region78
      $region77: #{_rnd_forward_impl.10} parent=5 // pred_region
        %s2665 = ssub.s32 %s9, 2
        // Predicated region
        $region79: #{_rnd_forward_impl.10} parent=77 // pred_check
          %p2666 = pneg %p111
        $region80: #{_rnd_forward_impl.10} parent=77 // pred_check_branch
          %2668 = sbr.rel (%p2666) target = $region82
        $region81: #{_rnd_forward_impl.10} parent=77 // pred_region
          %s2669 = smul.u32 2, %s15
          %p2670 = scmp.lt.s32.totalorder %s2669, 3
          %s2671 = scalar_select %p2670, %s2669, 3
          %s2672 = scalar_lea.vmem %s3, %s2671
        $region82: #{_rnd_forward_impl.10} parent=77 // pred_fallthru
          _
      $region78: #{_rnd_forward_impl.10} parent=5 // pred_fallthru
        _
    $region6: #{_rnd_forward_impl.10} parent=1 // loop_footer
      %s13 = sadd.s32 1, %s9
    $region7: #{_rnd_forward_impl.10} parent=1 // loop_footer_branch
      %8 = sbr.rel target = $region3
    $region8: #{_rnd_forward_impl.10} parent=1 // loop_exit
      _

// kernel: _rnd_forward_impl.11
$region0: #{_rnd_forward_impl.11}
  #allocation0 [shape = 'u32[]', space=smem, size = 0x4, offset = 0x4, fixed_abs, tag = 'smem constant byte address 0x4 - core index']
  #allocation1 [shape = 'u32[144,128]{1,0:T(1,128)}', space=vmem, size = 0x12000, scoped, tag = 'internal scratch']
  %s0 = inlined_call_operand.vmem [shape: bf16[2,512], index: 0, kind: input, shape index: {}]
  %s1 = inlined_call_operand.vmem [shape: bf16[512,512], index: 1, kind: input, shape index: {}]
  %s2 = inlined_call_operand.vmem [shape: f32[1,512], index: 2, kind: input, shape index: {}]
  %s3 = inlined_call_operand.vmem [shape: bf16[2,512], index: 3, kind: output, shape index: {}]
  %s4 = sld [smem:[#allocation0]]
  $region83: #{_rnd_forward_impl.11} parent=0
    _
  %s6 = ssub.s32 1, %s4
  %s7 = scalar_select 0, %s6, %s4
  $region1: #{_rnd_forward_impl.11} parent=0
    #allocation2 [shape = 'u8[524288]{0}', space=vmem, size = 0x80000, scoped, tag = 'input window, operand 1']
    loop: start=0, step=1, limit=4
    $region2: #{_rnd_forward_impl.11} parent=1 // loop_pre_header
      _
    $region3: #{_rnd_forward_impl.11} parent=1 // loop_header
      %s9 = sphi 0, %s13
      %p10 = scmp.ge.s32.totalorder %s9, 4
      %s17 = sphi 0, %s17
      %s19 = sphi 0, %s17
      %s20 = sphi 0, %s19
      %s34 = sphi 0, %s20
      %s40 = sphi 0, %s42
      %s43 = sphi 0, %s40
      %s44 = sphi 0, %s43
      %s60 = sphi 0, %s44
      %s66 = sphi 0, %s68
      %s69 = sphi 0, %s66
      %s70 = sphi 0, %s69
      %s86 = sphi 0, %s70
      %s92 = sphi 0, %s94
      %s95 = sphi 0, %s92
      %s96 = sphi 0, %s95
      %s112 = sphi 0, %s96
    $region4: #{_rnd_forward_impl.11} parent=1 // loop_header_branch
      %12 = sbr.rel (%p10) target = $region8
    $region5: #{_rnd_forward_impl.11} parent=1 // loop_body
      %s14 = ssub.s32 %s9, 1
      %s15 = ssub.s32 %s9, 2
      %s16 = sadd.s32 %s9, 1
      %s18 = sadd.s32 %s17, 1
      %p21 = scmp.eq.s32.totalorder %s9, 1
      %p22 = scmp.ne.s32.totalorder %s17, %s19
      %p23 = scmp.eq.s32.totalorder %s9, 0
      %p24 = por %p22, %p23
      %p25 = scmp.ne.s32.totalorder %s17, %s19
      %p26 = scmp.eq.s32.totalorder %s14, 1
      %p27 = por %p25, %p26
      %p28 = scmp.ne.s32.totalorder %s19, %s20
      %p29 = scmp.eq.s32.totalorder %s14, 0
      %p30 = por %p28, %p29
      %p31 = scmp.ne.s32.totalorder %s19, %s20
      %p32 = scmp.eq.s32.totalorder %s15, 1
      %p33 = por %p31, %p32
      %p35 = scmp.ne.s32.totalorder %s20, %s34
      %p36 = scmp.eq.s32.totalorder %s15, 0
      %p37 = por %p35, %p36
      %s38 = ssub.s32 %s9, %s16
      %p39 = scmp.eq.s32.totalorder %s38, 0
      %s41 = sadd.s32 %s40, 1
      %s42 = scalar_select %p39, %s40, %s41
      %p45 = pneg %p39
      %p46 = scmp.eq.s32.totalorder %s9, 1
      %p47 = por %p45, %p46
      %p48 = scmp.ne.s32.totalorder %s40, %s43
      %p49 = scmp.eq.s32.totalorder %s9, 0
      %p50 = por %p48, %p49
      %p51 = scmp.ne.s32.totalorder %s40, %s43
      %p52 = scmp.eq.s32.totalorder %s14, 1
      %p53 = por %p51, %p52
      %p54 = scmp.ne.s32.totalorder %s43, %s44
      %p55 = scmp.eq.s32.totalorder %s14, 0
      %p56 = por %p54, %p55
      %p57 = scmp.ne.s32.totalorder %s43, %s44
      %p58 = scmp.eq.s32.totalorder %s15, 1
      %p59 = por %p57, %p58
      %p61 = scmp.ne.s32.totalorder %s44, %s60
      %p62 = scmp.eq.s32.totalorder %s15, 0
      %p63 = por %p61, %p62
      %s64 = ssub.s32 %s9, %s16
      %p65 = scmp.eq.s32.totalorder %s64, 0
      %s67 = sadd.s32 %s66, 1
      %s68 = scalar_select %p65, %s66, %s67
      %p71 = pneg %p65
      %p72 = scmp.eq.s32.totalorder %s9, 1
      %p73 = por %p71, %p72
      %p74 = scmp.ne.s32.totalorder %s66, %s69
      %p75 = scmp.eq.s32.totalorder %s9, 0
      %p76 = por %p74, %p75
      %p77 = scmp.ne.s32.totalorder %s66, %s69
      %p78 = scmp.eq.s32.totalorder %s14, 1
      %p79 = por %p77, %p78
      %p80 = scmp.ne.s32.totalorder %s69, %s70
      %p81 = scmp.eq.s32.totalorder %s14, 0
      %p82 = por %p80, %p81
      %p83 = scmp.ne.s32.totalorder %s69, %s70
      %p84 = scmp.eq.s32.totalorder %s15, 1
      %p85 = por %p83, %p84
      %p87 = scmp.ne.s32.totalorder %s70, %s86
      %p88 = scmp.eq.s32.totalorder %s15, 0
      %p89 = por %p87, %p88
      %s90 = ssub.s32 %s9, %s16
      %p91 = scmp.eq.s32.totalorder %s90, 0
      %s93 = sadd.s32 %s92, 1
      %s94 = scalar_select %p91, %s92, %s93
      %p97 = pneg %p91
      %p98 = scmp.eq.s32.totalorder %s9, 1
      %p99 = por %p97, %p98
      %p100 = scmp.ne.s32.totalorder %s92, %s95
      %p101 = scmp.eq.s32.totalorder %s9, 0
      %p102 = por %p100, %p101
      %p103 = scmp.ne.s32.totalorder %s92, %s95
      %p104 = scmp.eq.s32.totalorder %s14, 1
      %p105 = por %p103, %p104
      %p106 = scmp.ne.s32.totalorder %s95, %s96
      %p107 = scmp.eq.s32.totalorder %s14, 0
      %p108 = por %p106, %p107
      %p109 = scmp.ne.s32.totalorder %s95, %s96
      %p110 = scmp.eq.s32.totalorder %s15, 1
      %p111 = por %p109, %p110
      %p113 = scmp.ne.s32.totalorder %s96, %s112
      %p114 = scmp.eq.s32.totalorder %s15, 0
      %p115 = por %p113, %p114
      %p116 = scmp.le.s32.totalorder 1, %s9
      %p117 = scmp.lt.s32.totalorder %s9, 3
      %p118 = pnand %p116, %p117
      %p119 = pneg %p118
      // Predicated region
      $region9: #{_rnd_forward_impl.11} parent=5 // pred_check
        _
      $region10: #{_rnd_forward_impl.11} parent=5 // pred_check_branch
        %121 = sbr.rel (%p118) target = $region12
      $region11: #{_rnd_forward_impl.11} parent=5 // pred_region
        %s122 = ssub.s32 %s9, 1
        // Predicated region
        $region13: #{_rnd_forward_impl.11} parent=11 // pred_check
          %p123 = pneg %p30
        $region14: #{_rnd_forward_impl.11} parent=11 // pred_check_branch
          %125 = sbr.rel (%p123) target = $region16
        $region15: #{_rnd_forward_impl.11} parent=11 // pred_region
          _
        $region16: #{_rnd_forward_impl.11} parent=11 // pred_fallthru
          _
      $region12: #{_rnd_forward_impl.11} parent=5 // pred_fallthru
        _
      %p126 = scmp.lt.s32.totalorder %s9, 2
      // Predicated region
      $region17: #{_rnd_forward_impl.11} parent=5 // pred_check
        %p127 = pneg %p126
      $region18: #{_rnd_forward_impl.11} parent=5 // pred_check_branch
        %129 = sbr.rel (%p127) target = $region20
      $region19: #{_rnd_forward_impl.11} parent=5 // pred_region
        // Predicated region
        $region21: #{_rnd_forward_impl.11} parent=19 // pred_check
          %p130 = pneg %p50
        $region22: #{_rnd_forward_impl.11} parent=19 // pred_check_branch
          %132 = sbr.rel (%p130) target = $region24
        $region23: #{_rnd_forward_impl.11} parent=19 // pred_region
          %s133 = sand.u32 %s40, 1
          %s134 = sand.u32 %s40, 1
          %s135 = smul.addr %s134, 512
          %s136 = scalar_lea.vmem [#allocation2], %s135
          %s137 = smul.u32 2, %s9
          %s138 = smul.addr %s137, 4
          %s139 = scalar_lea.vmem %s1, %s138
          // Predicated region
          $region25: #{_rnd_forward_impl.11} parent=23 // pred_check
            _
          $region26: #{_rnd_forward_impl.11} parent=23 // pred_check_branch
            %141 = sbr.rel (0) target = $region28
          $region27: #{_rnd_forward_impl.11} parent=23 // pred_region
            // Predicated region
            $region29: #{_rnd_forward_impl.11} parent=27 // pred_check
              _
            $region30: #{_rnd_forward_impl.11} parent=27 // pred_check_branch
              %143 = sbr.rel (0) target = $region32
            $region31: #{_rnd_forward_impl.11} parent=27 // pred_region
              // Predicated region
              $region44: #{_rnd_forward_impl.11} parent=31 // pred_check
                _
              $region45: #{_rnd_forward_impl.11} parent=31 // pred_check_branch
                %285 = sbr.rel (0) target = $region47
              $region46: #{_rnd_forward_impl.11} parent=31 // pred_region
                loop: start=0, step=1, limit=1
                $region48: #{_rnd_forward_impl.11} parent=46 // loop_pre_header
                  _
                $region49: #{_rnd_forward_impl.11} parent=46 // loop_header
                  %s287 = sphi 0, %s291
                  %p288 = scmp.ge.s32.totalorder %s287, 1
                  %s292 = sphi %s139, %s139
                  %s293 = sphi %s136, %s136
                $region50: #{_rnd_forward_impl.11} parent=46 // loop_header_branch
                  %290 = sbr.rel (%p288) target = $region54
                $region51: #{_rnd_forward_impl.11} parent=46 // loop_body
                  %v294 = vld [vmem:[%s292] sm:$0xff]
                  %295 = vst [vmem:[%s293] sm:$0xff] %v294
                  %v296 = vld [vmem:[%s292 + $0x10] sm:$0xff]
                  %297 = vst [vmem:[%s293 + $0x8] sm:$0xff] %v296
                  %v298 = vld [vmem:[%s292 + $0x20] sm:$0xff]
                  %299 = vst [vmem:[%s293 + $0x10] sm:$0xff] %v298
                  %v300 = vld [vmem:[%s292 + $0x30] sm:$0xff]
                  %301 = vst [vmem:[%s293 + $0x18] sm:$0xff] %v300
                  %v302 = vld [vmem:[%s292 + $0x40] sm:$0xff]
                  %303 = vst [vmem:[%s293 + $0x20] sm:$0xff] %v302
                  %v304 = vld [vmem:[%s292 + $0x50] sm:$0xff]
                  %305 = vst [vmem:[%s293 + $0x28] sm:$0xff] %v304
                  %v306 = vld [vmem:[%s292 + $0x60] sm:$0xff]
                  %307 = vst [vmem:[%s293 + $0x30] sm:$0xff] %v306
                  %v308 = vld [vmem:[%s292 + $0x70] sm:$0xff]
                  %309 = vst [vmem:[%s293 + $0x38] sm:$0xff] %v308
                  %v310 = vld [vmem:[%s292 + $0x80] sm:$0xff]
                  %311 = vst [vmem:[%s293 + $0x40] sm:$0xff] %v310
                  %v312 = vld [vmem:[%s292 + $0x90] sm:$0xff]
                  %313 = vst [vmem:[%s293 + $0x48] sm:$0xff] %v312
                  %v314 = vld [vmem:[%s292 + $0xa0] sm:$0xff]
                  %315 = vst [vmem:[%s293 + $0x50] sm:$0xff] %v314
                  %v316 = vld [vmem:[%s292 + $0xb0] sm:$0xff]
                  %317 = vst [vmem:[%s293 + $0x58] sm:$0xff] %v316
                  %v318 = vld [vmem:[%s292 + $0xc0] sm:$0xff]
                  %319 = vst [vmem:[%s293 + $0x60] sm:$0xff] %v318
                  %v320 = vld [vmem:[%s292 + $0xd0] sm:$0xff]
                  %321 = vst [vmem:[%s293 + $0x68] sm:$0xff] %v320
                  %v322 = vld [vmem:[%s292 + $0xe0] sm:$0xff]
                  %323 = vst [vmem:[%s293 + $0x70] sm:$0xff] %v322
                  %v324 = vld [vmem:[%s292 + $0xf0] sm:$0xff]
                  %325 = vst [vmem:[%s293 + $0x78] sm:$0xff] %v324
                  %v326 = vld [vmem:[%s292 + $0x100] sm:$0xff]
                  %327 = vst [vmem:[%s293 + $0x80] sm:$0xff] %v326
                  %v328 = vld [vmem:[%s292 + $0x110] sm:$0xff]
                  %329 = vst [vmem:[%s293 + $0x88] sm:$0xff] %v328
                  %v330 = vld [vmem:[%s292 + $0x120] sm:$0xff]
                  %331 = vst [vmem:[%s293 + $0x90] sm:$0xff] %v330
                  %v332 = vld [vmem:[%s292 + $0x130] sm:$0xff]
                  %333 = vst [vmem:[%s293 + $0x98] sm:$0xff] %v332
                  %v334 = vld [vmem:[%s292 + $0x140] sm:$0xff]
                  %335 = vst [vmem:[%s293 + $0xa0] sm:$0xff] %v334
                  %v336 = vld [vmem:[%s292 + $0x150] sm:$0xff]
                  %337 = vst [vmem:[%s293 + $0xa8] sm:$0xff] %v336
                  %v338 = vld [vmem:[%s292 + $0x160] sm:$0xff]
                  %339 = vst [vmem:[%s293 + $0xb0] sm:$0xff] %v338
                  %v340 = vld [vmem:[%s292 + $0x170] sm:$0xff]
                  %341 = vst [vmem:[%s293 + $0xb8] sm:$0xff] %v340
                  %v342 = vld [vmem:[%s292 + $0x180] sm:$0xff]
                  %343 = vst [vmem:[%s293 + $0xc0] sm:$0xff] %v342
                  %v344 = vld [vmem:[%s292 + $0x190] sm:$0xff]
                  %345 = vst [vmem:[%s293 + $0xc8] sm:$0xff] %v344
                  %v346 = vld [vmem:[%s292 + $0x1a0] sm:$0xff]
                  %347 = vst [vmem:[%s293 + $0xd0] sm:$0xff] %v346
                  %v348 = vld [vmem:[%s292 + $0x1b0] sm:$0xff]
                  %349 = vst [vmem:[%s293 + $0xd8] sm:$0xff] %v348
                  %v350 = vld [vmem:[%s292 + $0x1c0] sm:$0xff]
                  %351 = vst [vmem:[%s293 + $0xe0] sm:$0xff] %v350
                  %v352 = vld [vmem:[%s292 + $0x1d0] sm:$0xff]
                  %353 = vst [vmem:[%s293 + $0xe8] sm:$0xff] %v352
                  %v354 = vld [vmem:[%s292 + $0x1e0] sm:$0xff]
                  %355 = vst [vmem:[%s293 + $0xf0] sm:$0xff] %v354
                  %v356 = vld [vmem:[%s292 + $0x1f0] sm:$0xff]
                  %357 = vst [vmem:[%s293 + $0xf8] sm:$0xff] %v356
                  %v358 = vld [vmem:[%s292 + $0x200] sm:$0xff]
                  %359 = vst [vmem:[%s293 + $0x100] sm:$0xff] %v358
                  %v360 = vld [vmem:[%s292 + $0x210] sm:$0xff]
                  %361 = vst [vmem:[%s293 + $0x108] sm:$0xff] %v360
                  %v362 = vld [vmem:[%s292 + $0x220] sm:$0xff]
                  %363 = vst [vmem:[%s293 + $0x110] sm:$0xff] %v362
                  %v364 = vld [vmem:[%s292 + $0x230] sm:$0xff]
                  %365 = vst [vmem:[%s293 + $0x118] sm:$0xff] %v364
                  %v366 = vld [vmem:[%s292 + $0x240] sm:$0xff]
                  %367 = vst [vmem:[%s293 + $0x120] sm:$0xff] %v366
                  %v368 = vld [vmem:[%s292 + $0x250] sm:$0xff]
                  %369 = vst [vmem:[%s293 + $0x128] sm:$0xff] %v368
                  %v370 = vld [vmem:[%s292 + $0x260] sm:$0xff]
                  %371 = vst [vmem:[%s293 + $0x130] sm:$0xff] %v370
                  %v372 = vld [vmem:[%s292 + $0x270] sm:$0xff]
                  %373 = vst [vmem:[%s293 + $0x138] sm:$0xff] %v372
                  %v374 = vld [vmem:[%s292 + $0x280] sm:$0xff]
                  %375 = vst [vmem:[%s293 + $0x140] sm:$0xff] %v374
                  %v376 = vld [vmem:[%s292 + $0x290] sm:$0xff]
                  %377 = vst [vmem:[%s293 + $0x148] sm:$0xff] %v376
                  %v378 = vld [vmem:[%s292 + $0x2a0] sm:$0xff]
                  %379 = vst [vmem:[%s293 + $0x150] sm:$0xff] %v378
                  %v380 = vld [vmem:[%s292 + $0x2b0] sm:$0xff]
                  %381 = vst [vmem:[%s293 + $0x158] sm:$0xff] %v380
                  %v382 = vld [vmem:[%s292 + $0x2c0] sm:$0xff]
                  %383 = vst [vmem:[%s293 + $0x160] sm:$0xff] %v382
                  %v384 = vld [vmem:[%s292 + $0x2d0] sm:$0xff]
                  %385 = vst [vmem:[%s293 + $0x168] sm:$0xff] %v384
                  %v386 = vld [vmem:[%s292 + $0x2e0] sm:$0xff]
                  %387 = vst [vmem:[%s293 + $0x170] sm:$0xff] %v386
                  %v388 = vld [vmem:[%s292 + $0x2f0] sm:$0xff]
                  %389 = vst [vmem:[%s293 + $0x178] sm:$0xff] %v388
                  %v390 = vld [vmem:[%s292 + $0x300] sm:$0xff]
                  %391 = vst [vmem:[%s293 + $0x180] sm:$0xff] %v390
                  %v392 = vld [vmem:[%s292 + $0x310] sm:$0xff]
                  %393 = vst [vmem:[%s293 + $0x188] sm:$0xff] %v392
                  %v394 = vld [vmem:[%s292 + $0x320] sm:$0xff]
                  %395 = vst [vmem:[%s293 + $0x190] sm:$0xff] %v394
                  %v396 = vld [vmem:[%s292 + $0x330] sm:$0xff]
                  %397 = vst [vmem:[%s293 + $0x198] sm:$0xff] %v396
                  %v398 = vld [vmem:[%s292 + $0x340] sm:$0xff]
                  %399 = vst [vmem:[%s293 + $0x1a0] sm:$0xff] %v398
                  %v400 = vld [vmem:[%s292 + $0x350] sm:$0xff]
                  %401 = vst [vmem:[%s293 + $0x1a8] sm:$0xff] %v400
                  %v402 = vld [vmem:[%s292 + $0x360] sm:$0xff]
                  %403 = vst [vmem:[%s293 + $0x1b0] sm:$0xff] %v402
                  %v404 = vld [vmem:[%s292 + $0x370] sm:$0xff]
                  %405 = vst [vmem:[%s293 + $0x1b8] sm:$0xff] %v404
                  %v406 = vld [vmem:[%s292 + $0x380] sm:$0xff]
                  %407 = vst [vmem:[%s293 + $0x1c0] sm:$0xff] %v406
                  %v408 = vld [vmem:[%s292 + $0x390] sm:$0xff]
                  %409 = vst [vmem:[%s293 + $0x1c8] sm:$0xff] %v408
                  %v410 = vld [vmem:[%s292 + $0x3a0] sm:$0xff]
                  %411 = vst [vmem:[%s293 + $0x1d0] sm:$0xff] %v410
                  %v412 = vld [vmem:[%s292 + $0x3b0] sm:$0xff]
                  %413 = vst [vmem:[%s293 + $0x1d8] sm:$0xff] %v412
                  %v414 = vld [vmem:[%s292 + $0x3c0] sm:$0xff]
                  %415 = vst [vmem:[%s293 + $0x1e0] sm:$0xff] %v414
                  %v416 = vld [vmem:[%s292 + $0x3d0] sm:$0xff]
                  %417 = vst [vmem:[%s293 + $0x1e8] sm:$0xff] %v416
                  %v418 = vld [vmem:[%s292 + $0x3e0] sm:$0xff]
                  %419 = vst [vmem:[%s293 + $0x1f0] sm:$0xff] %v418
                  %v420 = vld [vmem:[%s292 + $0x3f0] sm:$0xff]
                  %421 = vst [vmem:[%s293 + $0x1f8] sm:$0xff] %v420
                $region52: #{_rnd_forward_impl.11} parent=46 // loop_footer
                  %s291 = sadd.s32 1, %s287
                $region53: #{_rnd_forward_impl.11} parent=46 // loop_footer_branch
                  %286 = sbr.rel target = $region49
                $region54: #{_rnd_forward_impl.11} parent=46 // loop_exit
                  _
              $region47: #{_rnd_forward_impl.11} parent=31 // pred_fallthru
                _
              // Predicated region
              $region55: #{_rnd_forward_impl.11} parent=31 // pred_check
                _
              $region56: #{_rnd_forward_impl.11} parent=31 // pred_check_branch
                %423 = sbr.rel target = $region58
              $region57: #{_rnd_forward_impl.11} parent=31 // pred_region
                _
              $region58: #{_rnd_forward_impl.11} parent=31 // pred_fallthru
                _
            $region32: #{_rnd_forward_impl.11} parent=27 // pred_fallthru
              _
            // Predicated region
            $region33: #{_rnd_forward_impl.11} parent=27 // pred_check
              _
            $region34: #{_rnd_forward_impl.11} parent=27 // pred_check_branch
              %145 = sbr.rel target = $region36
            $region35: #{_rnd_forward_impl.11} parent=27 // pred_region
              %s147 = ssub.s32 256, 1
              loop: start=0, step=1, limit=1
              $region37: #{_rnd_forward_impl.11} parent=35 // loop_pre_header
                _
              $region38: #{_rnd_forward_impl.11} parent=35 // loop_header
                %s149 = sphi 0, %s153
                %p150 = scmp.ge.s32.totalorder %s149, 1
                %s154 = sphi %s139, %s139
                %s155 = sphi %s136, %s136
              $region39: #{_rnd_forward_impl.11} parent=35 // loop_header_branch
                %152 = sbr.rel (%p150) target = $region43
              $region40: #{_rnd_forward_impl.11} parent=35 // loop_body
                %v156 = vld [vmem:[%s154] sm:%s147]
                %157 = vst [vmem:[%s155] sm:%s147] %v156
                %v158 = vld [vmem:[%s154 + $0x10] sm:%s147]
                %159 = vst [vmem:[%s155 + $0x8] sm:%s147] %v158
                %v160 = vld [vmem:[%s154 + $0x20] sm:%s147]
                %161 = vst [vmem:[%s155 + $0x10] sm:%s147] %v160
                %v162 = vld [vmem:[%s154 + $0x30] sm:%s147]
                %163 = vst [vmem:[%s155 + $0x18] sm:%s147] %v162
                %v164 = vld [vmem:[%s154 + $0x40] sm:%s147]
                %165 = vst [vmem:[%s155 + $0x20] sm:%s147] %v164
                %v166 = vld [vmem:[%s154 + $0x50] sm:%s147]
                %167 = vst [vmem:[%s155 + $0x28] sm:%s147] %v166
                %v168 = vld [vmem:[%s154 + $0x60] sm:%s147]
                %169 = vst [vmem:[%s155 + $0x30] sm:%s147] %v168
                %v170 = vld [vmem:[%s154 + $0x70] sm:%s147]
                %171 = vst [vmem:[%s155 + $0x38] sm:%s147] %v170
                %v172 = vld [vmem:[%s154 + $0x80] sm:%s147]
                %173 = vst [vmem:[%s155 + $0x40] sm:%s147] %v172
                %v174 = vld [vmem:[%s154 + $0x90] sm:%s147]
                %175 = vst [vmem:[%s155 + $0x48] sm:%s147] %v174
                %v176 = vld [vmem:[%s154 + $0xa0] sm:%s147]
                %177 = vst [vmem:[%s155 + $0x50] sm:%s147] %v176
                %v178 = vld [vmem:[%s154 + $0xb0] sm:%s147]
                %179 = vst [vmem:[%s155 + $0x58] sm:%s147] %v178
                %v180 = vld [vmem:[%s154 + $0xc0] sm:%s147]
                %181 = vst [vmem:[%s155 + $0x60] sm:%s147] %v180
                %v182 = vld [vmem:[%s154 + $0xd0] sm:%s147]
                %183 = vst [vmem:[%s155 + $0x68] sm:%s147] %v182
                %v184 = vld [vmem:[%s154 + $0xe0] sm:%s147]
                %185 = vst [vmem:[%s155 + $0x70] sm:%s147] %v184
                %v186 = vld [vmem:[%s154 + $0xf0] sm:%s147]
                %187 = vst [vmem:[%s155 + $0x78] sm:%s147] %v186
                %v188 = vld [vmem:[%s154 + $0x100] sm:%s147]
                %189 = vst [vmem:[%s155 + $0x80] sm:%s147] %v188
                %v190 = vld [vmem:[%s154 + $0x110] sm:%s147]
                %191 = vst [vmem:[%s155 + $0x88] sm:%s147] %v190
                %v192 = vld [vmem:[%s154 + $0x120] sm:%s147]
                %193 = vst [vmem:[%s155 + $0x90] sm:%s147] %v192
                %v194 = vld [vmem:[%s154 + $0x130] sm:%s147]
                %195 = vst [vmem:[%s155 + $0x98] sm:%s147] %v194
                %v196 = vld [vmem:[%s154 + $0x140] sm:%s147]
                %197 = vst [vmem:[%s155 + $0xa0] sm:%s147] %v196
                %v198 = vld [vmem:[%s154 + $0x150] sm:%s147]
                %199 = vst [vmem:[%s155 + $0xa8] sm:%s147] %v198
                %v200 = vld [vmem:[%s154 + $0x160] sm:%s147]
                %201 = vst [vmem:[%s155 + $0xb0] sm:%s147] %v200
                %v202 = vld [vmem:[%s154 + $0x170] sm:%s147]
                %203 = vst [vmem:[%s155 + $0xb8] sm:%s147] %v202
                %v204 = vld [vmem:[%s154 + $0x180] sm:%s147]
                %205 = vst [vmem:[%s155 + $0xc0] sm:%s147] %v204
                %v206 = vld [vmem:[%s154 + $0x190] sm:%s147]
                %207 = vst [vmem:[%s155 + $0xc8] sm:%s147] %v206
                %v208 = vld [vmem:[%s154 + $0x1a0] sm:%s147]
                %209 = vst [vmem:[%s155 + $0xd0] sm:%s147] %v208
                %v210 = vld [vmem:[%s154 + $0x1b0] sm:%s147]
                %211 = vst [vmem:[%s155 + $0xd8] sm:%s147] %v210
                %v212 = vld [vmem:[%s154 + $0x1c0] sm:%s147]
                %213 = vst [vmem:[%s155 + $0xe0] sm:%s147] %v212
                %v214 = vld [vmem:[%s154 + $0x1d0] sm:%s147]
                %215 = vst [vmem:[%s155 + $0xe8] sm:%s147] %v214
                %v216 = vld [vmem:[%s154 + $0x1e0] sm:%s147]
                %217 = vst [vmem:[%s155 + $0xf0] sm:%s147] %v216
                %v218 = vld [vmem:[%s154 + $0x1f0] sm:%s147]
                %219 = vst [vmem:[%s155 + $0xf8] sm:%s147] %v218
                %v220 = vld [vmem:[%s154 + $0x200] sm:%s147]
                %221 = vst [vmem:[%s155 + $0x100] sm:%s147] %v220
                %v222 = vld [vmem:[%s154 + $0x210] sm:%s147]
                %223 = vst [vmem:[%s155 + $0x108] sm:%s147] %v222
                %v224 = vld [vmem:[%s154 + $0x220] sm:%s147]
                %225 = vst [vmem:[%s155 + $0x110] sm:%s147] %v224
                %v226 = vld [vmem:[%s154 + $0x230] sm:%s147]
                %227 = vst [vmem:[%s155 + $0x118] sm:%s147] %v226
                %v228 = vld [vmem:[%s154 + $0x240] sm:%s147]
                %229 = vst [vmem:[%s155 + $0x120] sm:%s147] %v228
                %v230 = vld [vmem:[%s154 + $0x250] sm:%s147]
                %231 = vst [vmem:[%s155 + $0x128] sm:%s147] %v230
                %v232 = vld [vmem:[%s154 + $0x260] sm:%s147]
                %233 = vst [vmem:[%s155 + $0x130] sm:%s147] %v232
                %v234 = vld [vmem:[%s154 + $0x270] sm:%s147]
                %235 = vst [vmem:[%s155 + $0x138] sm:%s147] %v234
                %v236 = vld [vmem:[%s154 + $0x280] sm:%s147]
                %237 = vst [vmem:[%s155 + $0x140] sm:%s147] %v236
                %v238 = vld [vmem:[%s154 + $0x290] sm:%s147]
                %239 = vst [vmem:[%s155 + $0x148] sm:%s147] %v238
                %v240 = vld [vmem:[%s154 + $0x2a0] sm:%s147]
                %241 = vst [vmem:[%s155 + $0x150] sm:%s147] %v240
                %v242 = vld [vmem:[%s154 + $0x2b0] sm:%s147]
                %243 = vst [vmem:[%s155 + $0x158] sm:%s147] %v242
                %v244 = vld [vmem:[%s154 + $0x2c0] sm:%s147]
                %245 = vst [vmem:[%s155 + $0x160] sm:%s147] %v244
                %v246 = vld [vmem:[%s154 + $0x2d0] sm:%s147]
                %247 = vst [vmem:[%s155 + $0x168] sm:%s147] %v246
                %v248 = vld [vmem:[%s154 + $0x2e0] sm:%s147]
                %249 = vst [vmem:[%s155 + $0x170] sm:%s147] %v248
                %v250 = vld [vmem:[%s154 + $0x2f0] sm:%s147]
                %251 = vst [vmem:[%s155 + $0x178] sm:%s147] %v250
                %v252 = vld [vmem:[%s154 + $0x300] sm:%s147]
                %253 = vst [vmem:[%s155 + $0x180] sm:%s147] %v252
                %v254 = vld [vmem:[%s154 + $0x310] sm:%s147]
                %255 = vst [vmem:[%s155 + $0x188] sm:%s147] %v254
                %v256 = vld [vmem:[%s154 + $0x320] sm:%s147]
                %257 = vst [vmem:[%s155 + $0x190] sm:%s147] %v256
                %v258 = vld [vmem:[%s154 + $0x330] sm:%s147]
                %259 = vst [vmem:[%s155 + $0x198] sm:%s147] %v258
                %v260 = vld [vmem:[%s154 + $0x340] sm:%s147]
                %261 = vst [vmem:[%s155 + $0x1a0] sm:%s147] %v260
                %v262 = vld [vmem:[%s154 + $0x350] sm:%s147]
                %263 = vst [vmem:[%s155 + $0x1a8] sm:%s147] %v262
                %v264 = vld [vmem:[%s154 + $0x360] sm:%s147]
                %265 = vst [vmem:[%s155 + $0x1b0] sm:%s147] %v264
                %v266 = vld [vmem:[%s154 + $0x370] sm:%s147]
                %267 = vst [vmem:[%s155 + $0x1b8] sm:%s147] %v266
                %v268 = vld [vmem:[%s154 + $0x380] sm:%s147]
                %269 = vst [vmem:[%s155 + $0x1c0] sm:%s147] %v268
                %v270 = vld [vmem:[%s154 + $0x390] sm:%s147]
                %271 = vst [vmem:[%s155 + $0x1c8] sm:%s147] %v270
                %v272 = vld [vmem:[%s154 + $0x3a0] sm:%s147]
                %273 = vst [vmem:[%s155 + $0x1d0] sm:%s147] %v272
                %v274 = vld [vmem:[%s154 + $0x3b0] sm:%s147]
                %275 = vst [vmem:[%s155 + $0x1d8] sm:%s147] %v274
                %v276 = vld [vmem:[%s154 + $0x3c0] sm:%s147]
                %277 = vst [vmem:[%s155 + $0x1e0] sm:%s147] %v276
                %v278 = vld [vmem:[%s154 + $0x3d0] sm:%s147]
                %279 = vst [vmem:[%s155 + $0x1e8] sm:%s147] %v278
                %v280 = vld [vmem:[%s154 + $0x3e0] sm:%s147]
                %281 = vst [vmem:[%s155 + $0x1f0] sm:%s147] %v280
                %v282 = vld [vmem:[%s154 + $0x3f0] sm:%s147]
                %283 = vst [vmem:[%s155 + $0x1f8] sm:%s147] %v282
              $region41: #{_rnd_forward_impl.11} parent=35 // loop_footer
                %s153 = sadd.s32 1, %s149
              $region42: #{_rnd_forward_impl.11} parent=35 // loop_footer_branch
                %148 = sbr.rel target = $region38
              $region43: #{_rnd_forward_impl.11} parent=35 // loop_exit
                _
            $region36: #{_rnd_forward_impl.11} parent=27 // pred_fallthru
              _
          $region28: #{_rnd_forward_impl.11} parent=23 // pred_fallthru
            _
          %424 = vnop
        $region24: #{_rnd_forward_impl.11} parent=19 // pred_fallthru
          _
        // Predicated region
        $region59: #{_rnd_forward_impl.11} parent=19 // pred_check
          %p425 = pneg %p76
        $region60: #{_rnd_forward_impl.11} parent=19 // pred_check_branch
          %427 = sbr.rel (%p425) target = $region62
        $region61: #{_rnd_forward_impl.11} parent=19 // pred_region
          %s428 = smul.u32 2, %s9
          %p429 = scmp.lt.s32.totalorder %s428, 3
          %s430 = scalar_select %p429, %s428, 3
          %s431 = scalar_lea.vmem %s2, %s430
          %s432 = smul.u32 2, %s9
        $region62: #{_rnd_forward_impl.11} parent=19 // pred_fallthru
          _
      $region20: #{_rnd_forward_impl.11} parent=5 // pred_fallthru
        _
      %p433 = scmp.le.s32.totalorder 1, %s9
      %p434 = scmp.lt.s32.totalorder %s9, 3
      %p435 = pnand %p433, %p434
      %p436 = pneg %p435
      // Predicated region
      $region63: #{_rnd_forward_impl.11} parent=5 // pred_check
        _
      $region64: #{_rnd_forward_impl.11} parent=5 // pred_check_branch
        %438 = sbr.rel (%p435) target = $region66
      $region65: #{_rnd_forward_impl.11} parent=5 // pred_region
        %s439 = ssub.s32 %s9, 1
        %s440 = sand.u32 %s43, 1
        %s441 = sand.u32 %s43, 1
        %s442 = smul.addr %s441, 512
        %s443 = scalar_lea.vmem [#allocation2], %s442
        // Predicated region
        $region67: #{_rnd_forward_impl.11} parent=65 // pred_check
          %p444 = pneg %p56
        $region68: #{_rnd_forward_impl.11} parent=65 // pred_check_branch
          %446 = sbr.rel (%p444) target = $region70
        $region69: #{_rnd_forward_impl.11} parent=65 // pred_region
          _
        $region70: #{_rnd_forward_impl.11} parent=65 // pred_fallthru
          _
        %p447 = pneg %p30
        %p448 = pneg %p27
        %s449 = sand.u32 %s43, 1
        %s450 = sand.u32 %s43, 1
        %s451 = smul.addr %s450, 512
        %s452 = scalar_lea.vmem [#allocation2], %s451
        %p453 = pneg %p56
        %p454 = pneg %p53
        %s455 = smul.u32 2, %s14
        %p456 = scmp.lt.s32.totalorder %s455, 3
        %s457 = scalar_select %p456, %s455, 3
        %s458 = scalar_lea.vmem %s2, %s457
        %p459 = pneg %p82
        %p460 = pneg %p79
        %p461 = pneg %p108
        %p462 = pneg %p105
        %s463 = smul.u32 2, %s14
        %p464 = scmp.lt.s32.totalorder %s463, 3
        %s465 = scalar_select %p464, %s463, 3
        %s466 = scalar_lea.vmem %s3, %s465
        %s467 = smul.u32 2, %s14
        %s468 = smul.u32 2, %s14
        %p469 = scmp.lt.s32.totalorder %s468, 3
        %s470 = scalar_select %p469, %s468, 3
        %s471 = scalar_lea.vmem %s2, %s470
        %s472 = smul.u32 2, %s14
        %s473 = smul.u32 2, %s14
        %p474 = scmp.lt.s32.totalorder %s473, 3
        %s475 = scalar_select %p474, %s473, 3
        %s476 = scalar_lea.vmem %s3, %s475
        %s477 = smul.u32 2, %s14
        %v478 = vld [vmem:[%s0] sm:$0xf]
        %v479 = vld [vmem:[%s443] sm:$0xff]
        %v480 = vld [vmem:[%s443 + $0x8] sm:$0xff]
        %v481 = vld [vmem:[%s443 + $0x10] sm:$0xff]
        %v482 = vld [vmem:[%s443 + $0x18] sm:$0xff]
        %v483 = vld [vmem:[%s443 + $0x20] sm:$0xff]
        %v484 = vld [vmem:[%s443 + $0x28] sm:$0xff]
        %v485 = vld [vmem:[%s443 + $0x30] sm:$0xff]
        %v486 = vld [vmem:[%s443 + $0x38] sm:$0xff]
        %v487 = vld [vmem:[%s443 + $0x40] sm:$0xff]
        %v488 = vld [vmem:[%s443 + $0x48] sm:$0xff]
        %v489 = vld [vmem:[%s443 + $0x50] sm:$0xff]
        %v490 = vld [vmem:[%s443 + $0x58] sm:$0xff]
        %v491 = vld [vmem:[%s443 + $0x60] sm:$0xff]
        %v492 = vld [vmem:[%s443 + $0x68] sm:$0xff]
        %v493 = vld [vmem:[%s443 + $0x70] sm:$0xff]
        %v494 = vld [vmem:[%s443 + $0x78] sm:$0xff]
        %v495 = vld [vmem:[%s443 + $0x80] sm:$0xff]
        %v496 = vld [vmem:[%s443 + $0x88] sm:$0xff]
        %v497 = vld [vmem:[%s443 + $0x90] sm:$0xff]
        %v498 = vld [vmem:[%s443 + $0x98] sm:$0xff]
        %v499 = vld [vmem:[%s443 + $0xa0] sm:$0xff]
        %v500 = vld [vmem:[%s443 + $0xa8] sm:$0xff]
        %v501 = vld [vmem:[%s443 + $0xb0] sm:$0xff]
        %v502 = vld [vmem:[%s443 + $0xb8] sm:$0xff]
        %v503 = vld [vmem:[%s443 + $0xc0] sm:$0xff]
        %v504 = vld [vmem:[%s443 + $0xc8] sm:$0xff]
        %v505 = vld [vmem:[%s443 + $0xd0] sm:$0xff]
        %v506 = vld [vmem:[%s443 + $0xd8] sm:$0xff]
        %v507 = vld [vmem:[%s443 + $0xe0] sm:$0xff]
        %v508 = vld [vmem:[%s443 + $0xe8] sm:$0xff]
        %v509 = vld [vmem:[%s443 + $0xf0] sm:$0xff]
        %v510 = vld [vmem:[%s443 + $0xf8] sm:$0xff]
        %v511 = vld [vmem:[%s443 + $0x100] sm:$0xff]
        %v512 = vld [vmem:[%s443 + $0x108] sm:$0xff]
        %v513 = vld [vmem:[%s443 + $0x110] sm:$0xff]
        %v514 = vld [vmem:[%s443 + $0x118] sm:$0xff]
        %v515 = vld [vmem:[%s443 + $0x120] sm:$0xff]
        %v516 = vld [vmem:[%s443 + $0x128] sm:$0xff]
        %v517 = vld [vmem:[%s443 + $0x130] sm:$0xff]
        %v518 = vld [vmem:[%s443 + $0x138] sm:$0xff]
        %v519 = vld [vmem:[%s443 + $0x140] sm:$0xff]
        %v520 = vld [vmem:[%s443 + $0x148] sm:$0xff]
        %v521 = vld [vmem:[%s443 + $0x150] sm:$0xff]
        %v522 = vld [vmem:[%s443 + $0x158] sm:$0xff]
        %v523 = vld [vmem:[%s443 + $0x160] sm:$0xff]
        %v524 = vld [vmem:[%s443 + $0x168] sm:$0xff]
        %v525 = vld [vmem:[%s443 + $0x170] sm:$0xff]
        %v526 = vld [vmem:[%s443 + $0x178] sm:$0xff]
        %v527 = vld [vmem:[%s443 + $0x180] sm:$0xff]
        %v528 = vld [vmem:[%s443 + $0x188] sm:$0xff]
        %v529 = vld [vmem:[%s443 + $0x190] sm:$0xff]
        %v530 = vld [vmem:[%s443 + $0x198] sm:$0xff]
        %v531 = vld [vmem:[%s443 + $0x1a0] sm:$0xff]
        %v532 = vld [vmem:[%s443 + $0x1a8] sm:$0xff]
        %v533 = vld [vmem:[%s443 + $0x1b0] sm:$0xff]
        %v534 = vld [vmem:[%s443 + $0x1b8] sm:$0xff]
        %v535 = vld [vmem:[%s443 + $0x1c0] sm:$0xff]
        %v536 = vld [vmem:[%s443 + $0x1c8] sm:$0xff]
        %v537 = vld [vmem:[%s443 + $0x1d0] sm:$0xff]
        %v538 = vld [vmem:[%s443 + $0x1d8] sm:$0xff]
        %v539 = vld [vmem:[%s443 + $0x1e0] sm:$0xff]
        %v540 = vld [vmem:[%s443 + $0x1e8] sm:$0xff]
        %v541 = vld [vmem:[%s443 + $0x1f0] sm:$0xff]
        %v542 = vld [vmem:[%s443 + $0x1f8] sm:$0xff]
        %v543 = vld [vmem:[%s471] sm:$0x3]
        %v545 = vlaneseq
        %v546 = vshrl.u32 %v545, 7
        %v547 = vsub.s32 0, %v546
        %v548 = vrot.slane %v543, %v547
        %v549 = vlaneseq
        %v550 = vshrl.u32 %v549, 7
        %v551 = vsub.s32 1, %v550
        %v552 = vrot.slane %v543, %v551
        %v557 = vunpack.c.l.s4 1966171168
        %v558 = vunpack.c.0.s8 %v557
        %v559 = vlaneseq
        %v560 = vshrl.u32 %v559, 7
        %v561 = vsub.s32 %v558, %v560
        %v562 = vrot.slane %v478, %v561
        %v563 = vcombine.high %v562, %v562
        %v565 = vunpack.c.l.s4 1966171168
        %v566 = vunpack.c.0.s8 %v565
        %v567 = vlaneseq
        %v568 = vshrl.u32 %v567, 7
        %v569 = vsub.s32 %v566, %v568
        %v570 = vrot.slane %v562, %v569
        %v572 = vunpack.c.l.s4 1966171168
        %v573 = vunpack.c.0.s8 %v572
        %v574 = vlaneseq
        %v575 = vshrl.u32 %v574, 7
        %v576 = vsub.s32 %v573, %v575
        %v577 = vrot.slane %v563, %v576
        %v578 = vcombine.high %v570, %v570
        %v579 = vcombine.high %v577, %v577
        %v648 = vunpack.c.l.b16 %v479
        %v649 = vunpack.c.h.b16 %v479
        %v650 = vunpack.c.l.b16 %v480
        %v651 = vunpack.c.h.b16 %v480
        %v652 = vunpack.c.l.b16 %v481
        %v653 = vunpack.c.h.b16 %v481
        %v654 = vunpack.c.l.b16 %v482
        %v655 = vunpack.c.h.b16 %v482
        %v656 = vunpack.c.l.b16 %v483
        %v657 = vunpack.c.h.b16 %v483
        %v658 = vunpack.c.l.b16 %v484
        %v659 = vunpack.c.h.b16 %v484
        %v660 = vunpack.c.l.b16 %v485
        %v661 = vunpack.c.h.b16 %v485
        %v662 = vunpack.c.l.b16 %v486
        %v663 = vunpack.c.h.b16 %v486
        %v664 = vunpack.c.l.b16 %v487
        %v665 = vunpack.c.h.b16 %v487
        %v666 = vunpack.c.l.b16 %v488
        %v667 = vunpack.c.h.b16 %v488
        %v668 = vunpack.c.l.b16 %v489
        %v669 = vunpack.c.h.b16 %v489
        %v670 = vunpack.c.l.b16 %v490
        %v671 = vunpack.c.h.b16 %v490
        %v672 = vunpack.c.l.b16 %v491
        %v673 = vunpack.c.h.b16 %v491
        %v674 = vunpack.c.l.b16 %v492
        %v675 = vunpack.c.h.b16 %v492
        %v676 = vunpack.c.l.b16 %v493
        %v677 = vunpack.c.h.b16 %v493
        %v678 = vunpack.c.l.b16 %v494
        %v679 = vunpack.c.h.b16 %v494
        %v680 = vunpack.c.l.b16 %v495
        %v681 = vunpack.c.h.b16 %v495
        %v682 = vunpack.c.l.b16 %v496
        %v683 = vunpack.c.h.b16 %v496
        %v684 = vunpack.c.l.b16 %v497
        %v685 = vunpack.c.h.b16 %v497
        %v686 = vunpack.c.l.b16 %v498
        %v687 = vunpack.c.h.b16 %v498
        %v688 = vunpack.c.l.b16 %v499
        %v689 = vunpack.c.h.b16 %v499
        %v690 = vunpack.c.l.b16 %v500
        %v691 = vunpack.c.h.b16 %v500
        %v692 = vunpack.c.l.b16 %v501
        %v693 = vunpack.c.h.b16 %v501
        %v694 = vunpack.c.l.b16 %v502
        %v695 = vunpack.c.h.b16 %v502
        %v696 = vunpack.c.l.b16 %v503
        %v697 = vunpack.c.h.b16 %v503
        %v698 = vunpack.c.l.b16 %v504
        %v699 = vunpack.c.h.b16 %v504
        %v700 = vunpack.c.l.b16 %v505
        %v701 = vunpack.c.h.b16 %v505
        %v702 = vunpack.c.l.b16 %v506
        %v703 = vunpack.c.h.b16 %v506
        %v704 = vunpack.c.l.b16 %v507
        %v705 = vunpack.c.h.b16 %v507
        %v706 = vunpack.c.l.b16 %v508
        %v707 = vunpack.c.h.b16 %v508
        %v708 = vunpack.c.l.b16 %v509
        %v709 = vunpack.c.h.b16 %v509
        %v710 = vunpack.c.l.b16 %v510
        %v711 = vunpack.c.h.b16 %v510
        %v712 = vunpack.c.l.b16 %v511
        %v713 = vunpack.c.h.b16 %v511
        %v714 = vunpack.c.l.b16 %v512
        %v715 = vunpack.c.h.b16 %v512
        %v716 = vunpack.c.l.b16 %v513
        %v717 = vunpack.c.h.b16 %v513
        %v718 = vunpack.c.l.b16 %v514
        %v719 = vunpack.c.h.b16 %v514
        %v720 = vunpack.c.l.b16 %v515
        %v721 = vunpack.c.h.b16 %v515
        %v722 = vunpack.c.l.b16 %v516
        %v723 = vunpack.c.h.b16 %v516
        %v724 = vunpack.c.l.b16 %v517
        %v725 = vunpack.c.h.b16 %v517
        %v726 = vunpack.c.l.b16 %v518
        %v727 = vunpack.c.h.b16 %v518
        %v728 = vunpack.c.l.b16 %v519
        %v729 = vunpack.c.h.b16 %v519
        %v730 = vunpack.c.l.b16 %v520
        %v731 = vunpack.c.h.b16 %v520
        %v732 = vunpack.c.l.b16 %v521
        %v733 = vunpack.c.h.b16 %v521
        %v734 = vunpack.c.l.b16 %v522
        %v735 = vunpack.c.h.b16 %v522
        %v736 = vunpack.c.l.b16 %v523
        %v737 = vunpack.c.h.b16 %v523
        %v738 = vunpack.c.l.b16 %v524
        %v739 = vunpack.c.h.b16 %v524
        %v740 = vunpack.c.l.b16 %v525
        %v741 = vunpack.c.h.b16 %v525
        %v742 = vunpack.c.l.b16 %v526
        %v743 = vunpack.c.h.b16 %v526
        %v744 = vunpack.c.l.b16 %v527
        %v745 = vunpack.c.h.b16 %v527
        %v746 = vunpack.c.l.b16 %v528
        %v747 = vunpack.c.h.b16 %v528
        %v748 = vunpack.c.l.b16 %v529
        %v749 = vunpack.c.h.b16 %v529
        %v750 = vunpack.c.l.b16 %v530
        %v751 = vunpack.c.h.b16 %v530
        %v752 = vunpack.c.l.b16 %v531
        %v753 = vunpack.c.h.b16 %v531
        %v754 = vunpack.c.l.b16 %v532
        %v755 = vunpack.c.h.b16 %v532
        %v756 = vunpack.c.l.b16 %v533
        %v757 = vunpack.c.h.b16 %v533
        %v758 = vunpack.c.l.b16 %v534
        %v759 = vunpack.c.h.b16 %v534
        %v760 = vunpack.c.l.b16 %v535
        %v761 = vunpack.c.h.b16 %v535
        %v762 = vunpack.c.l.b16 %v536
        %v763 = vunpack.c.h.b16 %v536
        %v764 = vunpack.c.l.b16 %v537
        %v765 = vunpack.c.h.b16 %v537
        %v766 = vunpack.c.l.b16 %v538
        %v767 = vunpack.c.h.b16 %v538
        %v768 = vunpack.c.l.b16 %v539
        %v769 = vunpack.c.h.b16 %v539
        %v770 = vunpack.c.l.b16 %v540
        %v771 = vunpack.c.h.b16 %v540
        %v772 = vunpack.c.l.b16 %v541
        %v773 = vunpack.c.h.b16 %v541
        %v774 = vunpack.c.l.b16 %v542
        %v775 = vunpack.c.h.b16 %v542
        %v776 = vpack.c.b16 %v650, %v648
        %v777 = vpack.c.b16 %v651, %v649
        %v778 = vpack.c.b16 %v654, %v652
        %v779 = vpack.c.b16 %v655, %v653
        %v780 = vpack.c.b16 %v658, %v656
        %v781 = vpack.c.b16 %v659, %v657
        %v782 = vpack.c.b16 %v662, %v660
        %v783 = vpack.c.b16 %v663, %v661
        %v784 = vpack.c.b16 %v666, %v664
        %v785 = vpack.c.b16 %v667, %v665
        %v786 = vpack.c.b16 %v670, %v668
        %v787 = vpack.c.b16 %v671, %v669
        %v788 = vpack.c.b16 %v674, %v672
        %v789 = vpack.c.b16 %v675, %v673
        %v790 = vpack.c.b16 %v678, %v676
        %v791 = vpack.c.b16 %v679, %v677
        %v792 = vpack.c.b16 %v682, %v680
        %v793 = vpack.c.b16 %v683, %v681
        %v794 = vpack.c.b16 %v686, %v684
        %v795 = vpack.c.b16 %v687, %v685
        %v796 = vpack.c.b16 %v690, %v688
        %v797 = vpack.c.b16 %v691, %v689
        %v798 = vpack.c.b16 %v694, %v692
        %v799 = vpack.c.b16 %v695, %v693
        %v800 = vpack.c.b16 %v698, %v696
        %v801 = vpack.c.b16 %v699, %v697
        %v802 = vpack.c.b16 %v702, %v700
        %v803 = vpack.c.b16 %v703, %v701
        %v804 = vpack.c.b16 %v706, %v704
        %v805 = vpack.c.b16 %v707, %v705
        %v806 = vpack.c.b16 %v710, %v708
        %v807 = vpack.c.b16 %v711, %v709
        %v808 = vpack.c.b16 %v714, %v712
        %v809 = vpack.c.b16 %v715, %v713
        %v810 = vpack.c.b16 %v718, %v716
        %v811 = vpack.c.b16 %v719, %v717
        %v812 = vpack.c.b16 %v722, %v720
        %v813 = vpack.c.b16 %v723, %v721
        %v814 = vpack.c.b16 %v726, %v724
        %v815 = vpack.c.b16 %v727, %v725
        %v816 = vpack.c.b16 %v730, %v728
        %v817 = vpack.c.b16 %v731, %v729
        %v818 = vpack.c.b16 %v734, %v732
        %v819 = vpack.c.b16 %v735, %v733
        %v820 = vpack.c.b16 %v738, %v736
        %v821 = vpack.c.b16 %v739, %v737
        %v822 = vpack.c.b16 %v742, %v740
        %v823 = vpack.c.b16 %v743, %v741
        %v824 = vpack.c.b16 %v746, %v744
        %v825 = vpack.c.b16 %v747, %v745
        %v826 = vpack.c.b16 %v750, %v748
        %v827 = vpack.c.b16 %v751, %v749
        %v828 = vpack.c.b16 %v754, %v752
        %v829 = vpack.c.b16 %v755, %v753
        %v830 = vpack.c.b16 %v758, %v756
        %v831 = vpack.c.b16 %v759, %v757
        %v832 = vpack.c.b16 %v762, %v760
        %v833 = vpack.c.b16 %v763, %v761
        %v834 = vpack.c.b16 %v766, %v764
        %v835 = vpack.c.b16 %v767, %v765
        %v836 = vpack.c.b16 %v770, %v768
        %v837 = vpack.c.b16 %v771, %v769
        %v838 = vpack.c.b16 %v774, %v772
        %v839 = vpack.c.b16 %v775, %v773
        %904 = vmatprep.subr.bf16.mxu0 %v791
        %905 = vmatpush1.bf16.msra.mxu0 %v790
        %906 = vmatprep.subr.bf16.mxu0 %v789
        %907 = vmatpush1.bf16.msra.mxu0 %v788
        %908 = vmatprep.subr.bf16.mxu0 %v787
        %909 = vmatpush1.bf16.msra.mxu0 %v786
        %910 = vmatprep.subr.bf16.mxu0 %v785
        %911 = vmatpush1.bf16.msra.mxu0 %v784
        %912 = vmatprep.subr.bf16.mxu0 %v783
        %913 = vmatpush1.bf16.msra.mxu0 %v782
        %914 = vmatprep.subr.bf16.mxu0 %v781
        %915 = vmatpush1.bf16.msra.mxu0 %v780
        %916 = vmatprep.subr.bf16.mxu0 %v779
        %917 = vmatpush1.bf16.msra.mxu0 %v778
        %918 = vmatprep.subr.bf16.mxu0 %v777
        %919 = vmatpush1.bf16.msra.mxu0 %v776
        %920 = vmatprep.subr.bf16.mxu0 %v807
        %921 = vmatpush2.bf16.msra.mxu0 %v806
        %922 = vmatprep.subr.bf16.mxu0 %v805
        %923 = vmatpush2.bf16.msra.mxu0 %v804
        %924 = vmatprep.subr.bf16.mxu0 %v803
        %925 = vmatpush2.bf16.msra.mxu0 %v802
        %926 = vmatprep.subr.bf16.mxu0 %v801
        %927 = vmatpush2.bf16.msra.mxu0 %v800
        %928 = vmatprep.subr.bf16.mxu0 %v799
        %929 = vmatpush2.bf16.msra.mxu0 %v798
        %930 = vmatprep.subr.bf16.mxu0 %v797
        %931 = vmatpush2.bf16.msra.mxu0 %v796
        %932 = vmatprep.subr.bf16.mxu0 %v795
        %933 = vmatpush2.bf16.msra.mxu0 %v794
        %934 = vmatprep.subr.bf16.mxu0 %v793
        %935 = vmatpush2.bf16.msra.mxu0 %v792
        %936 = vmatprep.mubr.bf16.mxu0 %v577
        %937 = vmatmul.mubr.bf16.gmra.mxu0 %v570
        %v938 = vpop.f32.mrf.mxu0
        %v939 = vadd.f32 %v548, %v938
        %v940 = vpop.f32.mrf.mxu0
        %v941 = vadd.f32 %v552, %v940
        %v942 = vpop.f32.mrf.mxu0
        %v943 = vpop.f32.mrf.mxu0
        %944 = vdwg.mxu0
        %945 = vmatprep.subr.bf16.mxu0 %v823
        %946 = vmatpush1.bf16.msra.mxu0 %v822
        %947 = vmatprep.subr.bf16.mxu0 %v821
        %948 = vmatpush1.bf16.msra.mxu0 %v820
        %949 = vmatprep.subr.bf16.mxu0 %v819
        %950 = vmatpush1.bf16.msra.mxu0 %v818
        %951 = vmatprep.subr.bf16.mxu0 %v817
        %952 = vmatpush1.bf16.msra.mxu0 %v816
        %953 = vmatprep.subr.bf16.mxu0 %v815
        %954 = vmatpush1.bf16.msra.mxu0 %v814
        %955 = vmatprep.subr.bf16.mxu0 %v813
        %956 = vmatpush1.bf16.msra.mxu0 %v812
        %957 = vmatprep.subr.bf16.mxu0 %v811
        %958 = vmatpush1.bf16.msra.mxu0 %v810
        %959 = vmatprep.subr.bf16.mxu0 %v809
        %960 = vmatpush1.bf16.msra.mxu0 %v808
        %961 = vmatprep.subr.bf16.mxu0 %v839
        %962 = vmatpush2.bf16.msra.mxu0 %v838
        %963 = vmatprep.subr.bf16.mxu0 %v837
        %964 = vmatpush2.bf16.msra.mxu0 %v836
        %965 = vmatprep.subr.bf16.mxu0 %v835
        %966 = vmatpush2.bf16.msra.mxu0 %v834
        %967 = vmatprep.subr.bf16.mxu0 %v833
        %968 = vmatpush2.bf16.msra.mxu0 %v832
        %969 = vmatprep.subr.bf16.mxu0 %v831
        %970 = vmatpush2.bf16.msra.mxu0 %v830
        %971 = vmatprep.subr.bf16.mxu0 %v829
        %972 = vmatpush2.bf16.msra.mxu0 %v828
        %973 = vmatprep.subr.bf16.mxu0 %v827
        %974 = vmatpush2.bf16.msra.mxu0 %v826
        %975 = vmatprep.subr.bf16.mxu0 %v825
        %976 = vmatpush2.bf16.msra.mxu0 %v824
        %977 = vmatprep.mubr.bf16.mxu0 %v579
        %978 = vmatmul.mubr.bf16.gmra.mxu0 %v578
        %v979 = vpop.f32.mrf.mxu0
        %v980 = vadd.f32 %v939, %v979
        %v981 = vpop.f32.mrf.mxu0
        %v982 = vadd.f32 %v941, %v981
        %v983 = vpop.f32.mrf.mxu0
        %v984 = vpop.f32.mrf.mxu0
        %985 = vdwg.mxu0
        %v986 = vmax.f32 %v980, 0.0
        %v987 = vmax.f32 %v982, 0.0
        %v988 = vpack.c.bf16 %v986, %v986
        %v989 = vpack.c.bf16 %v987, %v987
        %v992 = vcombine.low %v988, %v989
        %v994 = vunpack.c.l.s4 1966171168
        %v995 = vunpack.c.0.s8 %v994
        %v996 = vlaneseq
        %v997 = vshrl.u32 %v996, 7
        %v998 = vsub.s32 %v995, %v997
        %v999 = vrot.slane %v992, %v998
        %v1001 = vunpack.c.l.s4 1966171168
        %v1002 = vunpack.c.0.s8 %v1001
        %v1003 = vlaneseq
        %v1004 = vshrl.u32 %v1003, 7
        %v1005 = vsub.s32 %v1002, %v1004
        %v1006 = vrot.slane %v999, %v1005
        %1008 = vst [vmem:[%s476] sm:$0x3] %v1006
        %s1009 = smul.u32 2, %s14
        %p1010 = scmp.lt.s32.totalorder %s1009, 3
        %s1011 = scalar_select %p1010, %s1009, 3
        %s1012 = scalar_lea.vmem %s3, %s1011
        // Predicated region
        $region71: #{_rnd_forward_impl.11} parent=65 // pred_check
          %p1013 = pneg %p105
        $region72: #{_rnd_forward_impl.11} parent=65 // pred_check_branch
          %1015 = sbr.rel (%p1013) target = $region74
        $region73: #{_rnd_forward_impl.11} parent=65 // pred_region
          %s1016 = smul.u32 2, %s14
        $region74: #{_rnd_forward_impl.11} parent=65 // pred_fallthru
          _
      $region66: #{_rnd_forward_impl.11} parent=5 // pred_fallthru
        _
      %p1017 = scmp.le.s32.totalorder 2, %s9
      // Predicated region
      $region75: #{_rnd_forward_impl.11} parent=5 // pred_check
        %p1018 = pneg %p1017
      $region76: #{_rnd_forward_impl.11} parent=5 // pred_check_branch
        %1020 = sbr.rel (%p1018) target = $region78
      $region77: #{_rnd_forward_impl.11} parent=5 // pred_region
        %s1021 = ssub.s32 %s9, 2
        // Predicated region
        $region79: #{_rnd_forward_impl.11} parent=77 // pred_check
          %p1022 = pneg %p111
        $region80: #{_rnd_forward_impl.11} parent=77 // pred_check_branch
          %1024 = sbr.rel (%p1022) target = $region82
        $region81: #{_rnd_forward_impl.11} parent=77 // pred_region
          %s1025 = smul.u32 2, %s15
          %p1026 = scmp.lt.s32.totalorder %s1025, 3
          %s1027 = scalar_select %p1026, %s1025, 3
          %s1028 = scalar_lea.vmem %s3, %s1027
        $region82: #{_rnd_forward_impl.11} parent=77 // pred_fallthru
          _
      $region78: #{_rnd_forward_impl.11} parent=5 // pred_fallthru
        _
    $region6: #{_rnd_forward_impl.11} parent=1 // loop_footer
      %s13 = sadd.s32 1, %s9
    $region7: #{_rnd_forward_impl.11} parent=1 // loop_footer_branch
      %8 = sbr.rel target = $region3
    $region8: #{_rnd_forward_impl.11} parent=1 // loop_exit
      _

// kernel: _rnd_forward_impl.12
$region0: #{_rnd_forward_impl.12}
  #allocation0 [shape = 'u32[]', space=smem, size = 0x4, offset = 0x4, fixed_abs, tag = 'smem constant byte address 0x4 - core index']
  #allocation1 [shape = 'u32[144,128]{1,0:T(1,128)}', space=vmem, size = 0x12000, scoped, tag = 'internal scratch']
  %s0 = inlined_call_operand.vmem [shape: bf16[2,512], index: 0, kind: input, shape index: {}]
  %s1 = inlined_call_operand.vmem [shape: bf16[512,512], index: 1, kind: input, shape index: {}]
  %s2 = inlined_call_operand.vmem [shape: f32[1,512], index: 2, kind: input, shape index: {}]
  %s3 = inlined_call_operand.hbm [shape: f32[2,512], index: 3, kind: output, shape index: {}]
  %s4 = sld [smem:[#allocation0]]
  $region83: #{_rnd_forward_impl.12} parent=0
    _
  %s6 = ssub.s32 1, %s4
  %s7 = scalar_select 0, %s6, %s4
  $region1: #{_rnd_forward_impl.12} parent=0
    #allocation2 [shape = 'u8[524288]{0}', space=vmem, size = 0x80000, scoped, tag = 'input window, operand 1']
    #allocation3 [shape = 'u8[4096]{0}', space=vmem, size = 0x1000, scoped, tag = 'output window, operand 0']
    #allocation4 [shape = 's32[2]{0}', space=sflag, size = 0x8, scoped, tag = 'scoped memory for _rnd_forward_impl.12']
    %8 = vsyncpa [#allocation4], 0
    %s9 = scalar_lea.sflag [#allocation4], 1
    %10 = vsyncpa %s9, 0
    loop: start=0, step=1, limit=4
    $region2: #{_rnd_forward_impl.12} parent=1 // loop_pre_header
      _
    $region3: #{_rnd_forward_impl.12} parent=1 // loop_header
      %s12 = sphi 0, %s16
      %p13 = scmp.ge.s32.totalorder %s12, 4
      %s20 = sphi 0, %s20
      %s22 = sphi 0, %s20
      %s23 = sphi 0, %s22
      %s37 = sphi 0, %s23
      %s43 = sphi 0, %s45
      %s46 = sphi 0, %s43
      %s47 = sphi 0, %s46
      %s63 = sphi 0, %s47
      %s69 = sphi 0, %s71
      %s72 = sphi 0, %s69
      %s73 = sphi 0, %s72
      %s89 = sphi 0, %s73
      %s95 = sphi 0, %s97
      %s98 = sphi 0, %s95
      %s99 = sphi 0, %s98
      %s115 = sphi 0, %s99
    $region4: #{_rnd_forward_impl.12} parent=1 // loop_header_branch
      %15 = sbr.rel (%p13) target = $region8
    $region5: #{_rnd_forward_impl.12} parent=1 // loop_body
      %s17 = ssub.s32 %s12, 1
      %s18 = ssub.s32 %s12, 2
      %s19 = sadd.s32 %s12, 1
      %s21 = sadd.s32 %s20, 1
      %p24 = scmp.eq.s32.totalorder %s12, 1
      %p25 = scmp.ne.s32.totalorder %s20, %s22
      %p26 = scmp.eq.s32.totalorder %s12, 0
      %p27 = por %p25, %p26
      %p28 = scmp.ne.s32.totalorder %s20, %s22
      %p29 = scmp.eq.s32.totalorder %s17, 1
      %p30 = por %p28, %p29
      %p31 = scmp.ne.s32.totalorder %s22, %s23
      %p32 = scmp.eq.s32.totalorder %s17, 0
      %p33 = por %p31, %p32
      %p34 = scmp.ne.s32.totalorder %s22, %s23
      %p35 = scmp.eq.s32.totalorder %s18, 1
      %p36 = por %p34, %p35
      %p38 = scmp.ne.s32.totalorder %s23, %s37
      %p39 = scmp.eq.s32.totalorder %s18, 0
      %p40 = por %p38, %p39
      %s41 = ssub.s32 %s12, %s19
      %p42 = scmp.eq.s32.totalorder %s41, 0
      %s44 = sadd.s32 %s43, 1
      %s45 = scalar_select %p42, %s43, %s44
      %p48 = pneg %p42
      %p49 = scmp.eq.s32.totalorder %s12, 1
      %p50 = por %p48, %p49
      %p51 = scmp.ne.s32.totalorder %s43, %s46
      %p52 = scmp.eq.s32.totalorder %s12, 0
      %p53 = por %p51, %p52
      %p54 = scmp.ne.s32.totalorder %s43, %s46
      %p55 = scmp.eq.s32.totalorder %s17, 1
      %p56 = por %p54, %p55
      %p57 = scmp.ne.s32.totalorder %s46, %s47
      %p58 = scmp.eq.s32.totalorder %s17, 0
      %p59 = por %p57, %p58
      %p60 = scmp.ne.s32.totalorder %s46, %s47
      %p61 = scmp.eq.s32.totalorder %s18, 1
      %p62 = por %p60, %p61
      %p64 = scmp.ne.s32.totalorder %s47, %s63
      %p65 = scmp.eq.s32.totalorder %s18, 0
      %p66 = por %p64, %p65
      %s67 = ssub.s32 %s12, %s19
      %p68 = scmp.eq.s32.totalorder %s67, 0
      %s70 = sadd.s32 %s69, 1
      %s71 = scalar_select %p68, %s69, %s70
      %p74 = pneg %p68
      %p75 = scmp.eq.s32.totalorder %s12, 1
      %p76 = por %p74, %p75
      %p77 = scmp.ne.s32.totalorder %s69, %s72
      %p78 = scmp.eq.s32.totalorder %s12, 0
      %p79 = por %p77, %p78
      %p80 = scmp.ne.s32.totalorder %s69, %s72
      %p81 = scmp.eq.s32.totalorder %s17, 1
      %p82 = por %p80, %p81
      %p83 = scmp.ne.s32.totalorder %s72, %s73
      %p84 = scmp.eq.s32.totalorder %s17, 0
      %p85 = por %p83, %p84
      %p86 = scmp.ne.s32.totalorder %s72, %s73
      %p87 = scmp.eq.s32.totalorder %s18, 1
      %p88 = por %p86, %p87
      %p90 = scmp.ne.s32.totalorder %s73, %s89
      %p91 = scmp.eq.s32.totalorder %s18, 0
      %p92 = por %p90, %p91
      %s93 = ssub.s32 %s12, %s19
      %p94 = scmp.eq.s32.totalorder %s93, 0
      %s96 = sadd.s32 %s95, 1
      %s97 = scalar_select %p94, %s95, %s96
      %p100 = pneg %p94
      %p101 = scmp.eq.s32.totalorder %s12, 1
      %p102 = por %p100, %p101
      %p103 = scmp.ne.s32.totalorder %s95, %s98
      %p104 = scmp.eq.s32.totalorder %s12, 0
      %p105 = por %p103, %p104
      %p106 = scmp.ne.s32.totalorder %s95, %s98
      %p107 = scmp.eq.s32.totalorder %s17, 1
      %p108 = por %p106, %p107
      %p109 = scmp.ne.s32.totalorder %s98, %s99
      %p110 = scmp.eq.s32.totalorder %s17, 0
      %p111 = por %p109, %p110
      %p112 = scmp.ne.s32.totalorder %s98, %s99
      %p113 = scmp.eq.s32.totalorder %s18, 1
      %p114 = por %p112, %p113
      %p116 = scmp.ne.s32.totalorder %s99, %s115
      %p117 = scmp.eq.s32.totalorder %s18, 0
      %p118 = por %p116, %p117
      %p119 = scmp.le.s32.totalorder 1, %s12
      %p120 = scmp.lt.s32.totalorder %s12, 3
      %p121 = pnand %p119, %p120
      %p122 = pneg %p121
      // Predicated region
      $region9: #{_rnd_forward_impl.12} parent=5 // pred_check
        _
      $region10: #{_rnd_forward_impl.12} parent=5 // pred_check_branch
        %124 = sbr.rel (%p121) target = $region12
      $region11: #{_rnd_forward_impl.12} parent=5 // pred_region
        %s125 = ssub.s32 %s12, 1
        // Predicated region
        $region13: #{_rnd_forward_impl.12} parent=11 // pred_check
          %p126 = pneg %p33
        $region14: #{_rnd_forward_impl.12} parent=11 // pred_check_branch
          %128 = sbr.rel (%p126) target = $region16
        $region15: #{_rnd_forward_impl.12} parent=11 // pred_region
          _
        $region16: #{_rnd_forward_impl.12} parent=11 // pred_fallthru
          _
      $region12: #{_rnd_forward_impl.12} parent=5 // pred_fallthru
        _
      %p129 = scmp.lt.s32.totalorder %s12, 2
      // Predicated region
      $region17: #{_rnd_forward_impl.12} parent=5 // pred_check
        %p130 = pneg %p129
      $region18: #{_rnd_forward_impl.12} parent=5 // pred_check_branch
        %132 = sbr.rel (%p130) target = $region20
      $region19: #{_rnd_forward_impl.12} parent=5 // pred_region
        // Predicated region
        $region21: #{_rnd_forward_impl.12} parent=19 // pred_check
          %p133 = pneg %p53
        $region22: #{_rnd_forward_impl.12} parent=19 // pred_check_branch
          %135 = sbr.rel (%p133) target = $region24
        $region23: #{_rnd_forward_impl.12} parent=19 // pred_region
          %s136 = sand.u32 %s43, 1
          %s137 = sand.u32 %s43, 1
          %s138 = smul.addr %s137, 512
          %s139 = scalar_lea.vmem [#allocation2], %s138
          %s140 = smul.u32 2, %s12
          %s141 = smul.addr %s140, 4
          %s142 = scalar_lea.vmem %s1, %s141
          // Predicated region
          $region25: #{_rnd_forward_impl.12} parent=23 // pred_check
            _
          $region26: #{_rnd_forward_impl.12} parent=23 // pred_check_branch
            %144 = sbr.rel (0) target = $region28
          $region27: #{_rnd_forward_impl.12} parent=23 // pred_region
            // Predicated region
            $region29: #{_rnd_forward_impl.12} parent=27 // pred_check
              _
            $region30: #{_rnd_forward_impl.12} parent=27 // pred_check_branch
              %146 = sbr.rel (0) target = $region32
            $region31: #{_rnd_forward_impl.12} parent=27 // pred_region
              // Predicated region
              $region44: #{_rnd_forward_impl.12} parent=31 // pred_check
                _
              $region45: #{_rnd_forward_impl.12} parent=31 // pred_check_branch
                %288 = sbr.rel (0) target = $region47
              $region46: #{_rnd_forward_impl.12} parent=31 // pred_region
                loop: start=0, step=1, limit=1
                $region48: #{_rnd_forward_impl.12} parent=46 // loop_pre_header
                  _
                $region49: #{_rnd_forward_impl.12} parent=46 // loop_header
                  %s290 = sphi 0, %s294
                  %p291 = scmp.ge.s32.totalorder %s290, 1
                  %s295 = sphi %s142, %s142
                  %s296 = sphi %s139, %s139
                $region50: #{_rnd_forward_impl.12} parent=46 // loop_header_branch
                  %293 = sbr.rel (%p291) target = $region54
                $region51: #{_rnd_forward_impl.12} parent=46 // loop_body
                  %v297 = vld [vmem:[%s295] sm:$0xff]
                  %298 = vst [vmem:[%s296] sm:$0xff] %v297
                  %v299 = vld [vmem:[%s295 + $0x10] sm:$0xff]
                  %300 = vst [vmem:[%s296 + $0x8] sm:$0xff] %v299
                  %v301 = vld [vmem:[%s295 + $0x20] sm:$0xff]
                  %302 = vst [vmem:[%s296 + $0x10] sm:$0xff] %v301
                  %v303 = vld [vmem:[%s295 + $0x30] sm:$0xff]
                  %304 = vst [vmem:[%s296 + $0x18] sm:$0xff] %v303
                  %v305 = vld [vmem:[%s295 + $0x40] sm:$0xff]
                  %306 = vst [vmem:[%s296 + $0x20] sm:$0xff] %v305
                  %v307 = vld [vmem:[%s295 + $0x50] sm:$0xff]
                  %308 = vst [vmem:[%s296 + $0x28] sm:$0xff] %v307
                  %v309 = vld [vmem:[%s295 + $0x60] sm:$0xff]
                  %310 = vst [vmem:[%s296 + $0x30] sm:$0xff] %v309
                  %v311 = vld [vmem:[%s295 + $0x70] sm:$0xff]
                  %312 = vst [vmem:[%s296 + $0x38] sm:$0xff] %v311
                  %v313 = vld [vmem:[%s295 + $0x80] sm:$0xff]
                  %314 = vst [vmem:[%s296 + $0x40] sm:$0xff] %v313
                  %v315 = vld [vmem:[%s295 + $0x90] sm:$0xff]
                  %316 = vst [vmem:[%s296 + $0x48] sm:$0xff] %v315
                  %v317 = vld [vmem:[%s295 + $0xa0] sm:$0xff]
                  %318 = vst [vmem:[%s296 + $0x50] sm:$0xff] %v317
                  %v319 = vld [vmem:[%s295 + $0xb0] sm:$0xff]
                  %320 = vst [vmem:[%s296 + $0x58] sm:$0xff] %v319
                  %v321 = vld [vmem:[%s295 + $0xc0] sm:$0xff]
                  %322 = vst [vmem:[%s296 + $0x60] sm:$0xff] %v321
                  %v323 = vld [vmem:[%s295 + $0xd0] sm:$0xff]
                  %324 = vst [vmem:[%s296 + $0x68] sm:$0xff] %v323
                  %v325 = vld [vmem:[%s295 + $0xe0] sm:$0xff]
                  %326 = vst [vmem:[%s296 + $0x70] sm:$0xff] %v325
                  %v327 = vld [vmem:[%s295 + $0xf0] sm:$0xff]
                  %328 = vst [vmem:[%s296 + $0x78] sm:$0xff] %v327
                  %v329 = vld [vmem:[%s295 + $0x100] sm:$0xff]
                  %330 = vst [vmem:[%s296 + $0x80] sm:$0xff] %v329
                  %v331 = vld [vmem:[%s295 + $0x110] sm:$0xff]
                  %332 = vst [vmem:[%s296 + $0x88] sm:$0xff] %v331
                  %v333 = vld [vmem:[%s295 + $0x120] sm:$0xff]
                  %334 = vst [vmem:[%s296 + $0x90] sm:$0xff] %v333
                  %v335 = vld [vmem:[%s295 + $0x130] sm:$0xff]
                  %336 = vst [vmem:[%s296 + $0x98] sm:$0xff] %v335
                  %v337 = vld [vmem:[%s295 + $0x140] sm:$0xff]
                  %338 = vst [vmem:[%s296 + $0xa0] sm:$0xff] %v337
                  %v339 = vld [vmem:[%s295 + $0x150] sm:$0xff]
                  %340 = vst [vmem:[%s296 + $0xa8] sm:$0xff] %v339
                  %v341 = vld [vmem:[%s295 + $0x160] sm:$0xff]
                  %342 = vst [vmem:[%s296 + $0xb0] sm:$0xff] %v341
                  %v343 = vld [vmem:[%s295 + $0x170] sm:$0xff]
                  %344 = vst [vmem:[%s296 + $0xb8] sm:$0xff] %v343
                  %v345 = vld [vmem:[%s295 + $0x180] sm:$0xff]
                  %346 = vst [vmem:[%s296 + $0xc0] sm:$0xff] %v345
                  %v347 = vld [vmem:[%s295 + $0x190] sm:$0xff]
                  %348 = vst [vmem:[%s296 + $0xc8] sm:$0xff] %v347
                  %v349 = vld [vmem:[%s295 + $0x1a0] sm:$0xff]
                  %350 = vst [vmem:[%s296 + $0xd0] sm:$0xff] %v349
                  %v351 = vld [vmem:[%s295 + $0x1b0] sm:$0xff]
                  %352 = vst [vmem:[%s296 + $0xd8] sm:$0xff] %v351
                  %v353 = vld [vmem:[%s295 + $0x1c0] sm:$0xff]
                  %354 = vst [vmem:[%s296 + $0xe0] sm:$0xff] %v353
                  %v355 = vld [vmem:[%s295 + $0x1d0] sm:$0xff]
                  %356 = vst [vmem:[%s296 + $0xe8] sm:$0xff] %v355
                  %v357 = vld [vmem:[%s295 + $0x1e0] sm:$0xff]
                  %358 = vst [vmem:[%s296 + $0xf0] sm:$0xff] %v357
                  %v359 = vld [vmem:[%s295 + $0x1f0] sm:$0xff]
                  %360 = vst [vmem:[%s296 + $0xf8] sm:$0xff] %v359
                  %v361 = vld [vmem:[%s295 + $0x200] sm:$0xff]
                  %362 = vst [vmem:[%s296 + $0x100] sm:$0xff] %v361
                  %v363 = vld [vmem:[%s295 + $0x210] sm:$0xff]
                  %364 = vst [vmem:[%s296 + $0x108] sm:$0xff] %v363
                  %v365 = vld [vmem:[%s295 + $0x220] sm:$0xff]
                  %366 = vst [vmem:[%s296 + $0x110] sm:$0xff] %v365
                  %v367 = vld [vmem:[%s295 + $0x230] sm:$0xff]
                  %368 = vst [vmem:[%s296 + $0x118] sm:$0xff] %v367
                  %v369 = vld [vmem:[%s295 + $0x240] sm:$0xff]
                  %370 = vst [vmem:[%s296 + $0x120] sm:$0xff] %v369
                  %v371 = vld [vmem:[%s295 + $0x250] sm:$0xff]
                  %372 = vst [vmem:[%s296 + $0x128] sm:$0xff] %v371
                  %v373 = vld [vmem:[%s295 + $0x260] sm:$0xff]
                  %374 = vst [vmem:[%s296 + $0x130] sm:$0xff] %v373
                  %v375 = vld [vmem:[%s295 + $0x270] sm:$0xff]
                  %376 = vst [vmem:[%s296 + $0x138] sm:$0xff] %v375
                  %v377 = vld [vmem:[%s295 + $0x280] sm:$0xff]
                  %378 = vst [vmem:[%s296 + $0x140] sm:$0xff] %v377
                  %v379 = vld [vmem:[%s295 + $0x290] sm:$0xff]
                  %380 = vst [vmem:[%s296 + $0x148] sm:$0xff] %v379
                  %v381 = vld [vmem:[%s295 + $0x2a0] sm:$0xff]
                  %382 = vst [vmem:[%s296 + $0x150] sm:$0xff] %v381
                  %v383 = vld [vmem:[%s295 + $0x2b0] sm:$0xff]
                  %384 = vst [vmem:[%s296 + $0x158] sm:$0xff] %v383
                  %v385 = vld [vmem:[%s295 + $0x2c0] sm:$0xff]
                  %386 = vst [vmem:[%s296 + $0x160] sm:$0xff] %v385
                  %v387 = vld [vmem:[%s295 + $0x2d0] sm:$0xff]
                  %388 = vst [vmem:[%s296 + $0x168] sm:$0xff] %v387
                  %v389 = vld [vmem:[%s295 + $0x2e0] sm:$0xff]
                  %390 = vst [vmem:[%s296 + $0x170] sm:$0xff] %v389
                  %v391 = vld [vmem:[%s295 + $0x2f0] sm:$0xff]
                  %392 = vst [vmem:[%s296 + $0x178] sm:$0xff] %v391
                  %v393 = vld [vmem:[%s295 + $0x300] sm:$0xff]
                  %394 = vst [vmem:[%s296 + $0x180] sm:$0xff] %v393
                  %v395 = vld [vmem:[%s295 + $0x310] sm:$0xff]
                  %396 = vst [vmem:[%s296 + $0x188] sm:$0xff] %v395
                  %v397 = vld [vmem:[%s295 + $0x320] sm:$0xff]
                  %398 = vst [vmem:[%s296 + $0x190] sm:$0xff] %v397
                  %v399 = vld [vmem:[%s295 + $0x330] sm:$0xff]
                  %400 = vst [vmem:[%s296 + $0x198] sm:$0xff] %v399
                  %v401 = vld [vmem:[%s295 + $0x340] sm:$0xff]
                  %402 = vst [vmem:[%s296 + $0x1a0] sm:$0xff] %v401
                  %v403 = vld [vmem:[%s295 + $0x350] sm:$0xff]
                  %404 = vst [vmem:[%s296 + $0x1a8] sm:$0xff] %v403
                  %v405 = vld [vmem:[%s295 + $0x360] sm:$0xff]
                  %406 = vst [vmem:[%s296 + $0x1b0] sm:$0xff] %v405
                  %v407 = vld [vmem:[%s295 + $0x370] sm:$0xff]
                  %408 = vst [vmem:[%s296 + $0x1b8] sm:$0xff] %v407
                  %v409 = vld [vmem:[%s295 + $0x380] sm:$0xff]
                  %410 = vst [vmem:[%s296 + $0x1c0] sm:$0xff] %v409
                  %v411 = vld [vmem:[%s295 + $0x390] sm:$0xff]
                  %412 = vst [vmem:[%s296 + $0x1c8] sm:$0xff] %v411
                  %v413 = vld [vmem:[%s295 + $0x3a0] sm:$0xff]
                  %414 = vst [vmem:[%s296 + $0x1d0] sm:$0xff] %v413
                  %v415 = vld [vmem:[%s295 + $0x3b0] sm:$0xff]
                  %416 = vst [vmem:[%s296 + $0x1d8] sm:$0xff] %v415
                  %v417 = vld [vmem:[%s295 + $0x3c0] sm:$0xff]
                  %418 = vst [vmem:[%s296 + $0x1e0] sm:$0xff] %v417
                  %v419 = vld [vmem:[%s295 + $0x3d0] sm:$0xff]
                  %420 = vst [vmem:[%s296 + $0x1e8] sm:$0xff] %v419
                  %v421 = vld [vmem:[%s295 + $0x3e0] sm:$0xff]
                  %422 = vst [vmem:[%s296 + $0x1f0] sm:$0xff] %v421
                  %v423 = vld [vmem:[%s295 + $0x3f0] sm:$0xff]
                  %424 = vst [vmem:[%s296 + $0x1f8] sm:$0xff] %v423
                $region52: #{_rnd_forward_impl.12} parent=46 // loop_footer
                  %s294 = sadd.s32 1, %s290
                $region53: #{_rnd_forward_impl.12} parent=46 // loop_footer_branch
                  %289 = sbr.rel target = $region49
                $region54: #{_rnd_forward_impl.12} parent=46 // loop_exit
                  _
              $region47: #{_rnd_forward_impl.12} parent=31 // pred_fallthru
                _
              // Predicated region
              $region55: #{_rnd_forward_impl.12} parent=31 // pred_check
                _
              $region56: #{_rnd_forward_impl.12} parent=31 // pred_check_branch
                %426 = sbr.rel target = $region58
              $region57: #{_rnd_forward_impl.12} parent=31 // pred_region
                _
              $region58: #{_rnd_forward_impl.12} parent=31 // pred_fallthru
                _
            $region32: #{_rnd_forward_impl.12} parent=27 // pred_fallthru
              _
            // Predicated region
            $region33: #{_rnd_forward_impl.12} parent=27 // pred_check
              _
            $region34: #{_rnd_forward_impl.12} parent=27 // pred_check_branch
              %148 = sbr.rel target = $region36
            $region35: #{_rnd_forward_impl.12} parent=27 // pred_region
              %s150 = ssub.s32 256, 1
              loop: start=0, step=1, limit=1
              $region37: #{_rnd_forward_impl.12} parent=35 // loop_pre_header
                _
              $region38: #{_rnd_forward_impl.12} parent=35 // loop_header
                %s152 = sphi 0, %s156
                %p153 = scmp.ge.s32.totalorder %s152, 1
                %s157 = sphi %s142, %s142
                %s158 = sphi %s139, %s139
              $region39: #{_rnd_forward_impl.12} parent=35 // loop_header_branch
                %155 = sbr.rel (%p153) target = $region43
              $region40: #{_rnd_forward_impl.12} parent=35 // loop_body
                %v159 = vld [vmem:[%s157] sm:%s150]
                %160 = vst [vmem:[%s158] sm:%s150] %v159
                %v161 = vld [vmem:[%s157 + $0x10] sm:%s150]
                %162 = vst [vmem:[%s158 + $0x8] sm:%s150] %v161
                %v163 = vld [vmem:[%s157 + $0x20] sm:%s150]
                %164 = vst [vmem:[%s158 + $0x10] sm:%s150] %v163
                %v165 = vld [vmem:[%s157 + $0x30] sm:%s150]
                %166 = vst [vmem:[%s158 + $0x18] sm:%s150] %v165
                %v167 = vld [vmem:[%s157 + $0x40] sm:%s150]
                %168 = vst [vmem:[%s158 + $0x20] sm:%s150] %v167
                %v169 = vld [vmem:[%s157 + $0x50] sm:%s150]
                %170 = vst [vmem:[%s158 + $0x28] sm:%s150] %v169
                %v171 = vld [vmem:[%s157 + $0x60] sm:%s150]
                %172 = vst [vmem:[%s158 + $0x30] sm:%s150] %v171
                %v173 = vld [vmem:[%s157 + $0x70] sm:%s150]
                %174 = vst [vmem:[%s158 + $0x38] sm:%s150] %v173
                %v175 = vld [vmem:[%s157 + $0x80] sm:%s150]
                %176 = vst [vmem:[%s158 + $0x40] sm:%s150] %v175
                %v177 = vld [vmem:[%s157 + $0x90] sm:%s150]
                %178 = vst [vmem:[%s158 + $0x48] sm:%s150] %v177
                %v179 = vld [vmem:[%s157 + $0xa0] sm:%s150]
                %180 = vst [vmem:[%s158 + $0x50] sm:%s150] %v179
                %v181 = vld [vmem:[%s157 + $0xb0] sm:%s150]
                %182 = vst [vmem:[%s158 + $0x58] sm:%s150] %v181
                %v183 = vld [vmem:[%s157 + $0xc0] sm:%s150]
                %184 = vst [vmem:[%s158 + $0x60] sm:%s150] %v183
                %v185 = vld [vmem:[%s157 + $0xd0] sm:%s150]
                %186 = vst [vmem:[%s158 + $0x68] sm:%s150] %v185
                %v187 = vld [vmem:[%s157 + $0xe0] sm:%s150]
                %188 = vst [vmem:[%s158 + $0x70] sm:%s150] %v187
                %v189 = vld [vmem:[%s157 + $0xf0] sm:%s150]
                %190 = vst [vmem:[%s158 + $0x78] sm:%s150] %v189
                %v191 = vld [vmem:[%s157 + $0x100] sm:%s150]
                %192 = vst [vmem:[%s158 + $0x80] sm:%s150] %v191
                %v193 = vld [vmem:[%s157 + $0x110] sm:%s150]
                %194 = vst [vmem:[%s158 + $0x88] sm:%s150] %v193
                %v195 = vld [vmem:[%s157 + $0x120] sm:%s150]
                %196 = vst [vmem:[%s158 + $0x90] sm:%s150] %v195
                %v197 = vld [vmem:[%s157 + $0x130] sm:%s150]
                %198 = vst [vmem:[%s158 + $0x98] sm:%s150] %v197
                %v199 = vld [vmem:[%s157 + $0x140] sm:%s150]
                %200 = vst [vmem:[%s158 + $0xa0] sm:%s150] %v199
                %v201 = vld [vmem:[%s157 + $0x150] sm:%s150]
                %202 = vst [vmem:[%s158 + $0xa8] sm:%s150] %v201
                %v203 = vld [vmem:[%s157 + $0x160] sm:%s150]
                %204 = vst [vmem:[%s158 + $0xb0] sm:%s150] %v203
                %v205 = vld [vmem:[%s157 + $0x170] sm:%s150]
                %206 = vst [vmem:[%s158 + $0xb8] sm:%s150] %v205
                %v207 = vld [vmem:[%s157 + $0x180] sm:%s150]
                %208 = vst [vmem:[%s158 + $0xc0] sm:%s150] %v207
                %v209 = vld [vmem:[%s157 + $0x190] sm:%s150]
                %210 = vst [vmem:[%s158 + $0xc8] sm:%s150] %v209
                %v211 = vld [vmem:[%s157 + $0x1a0] sm:%s150]
                %212 = vst [vmem:[%s158 + $0xd0] sm:%s150] %v211
                %v213 = vld [vmem:[%s157 + $0x1b0] sm:%s150]
                %214 = vst [vmem:[%s158 + $0xd8] sm:%s150] %v213
                %v215 = vld [vmem:[%s157 + $0x1c0] sm:%s150]
                %216 = vst [vmem:[%s158 + $0xe0] sm:%s150] %v215
                %v217 = vld [vmem:[%s157 + $0x1d0] sm:%s150]
                %218 = vst [vmem:[%s158 + $0xe8] sm:%s150] %v217
                %v219 = vld [vmem:[%s157 + $0x1e0] sm:%s150]
                %220 = vst [vmem:[%s158 + $0xf0] sm:%s150] %v219
                %v221 = vld [vmem:[%s157 + $0x1f0] sm:%s150]
                %222 = vst [vmem:[%s158 + $0xf8] sm:%s150] %v221
                %v223 = vld [vmem:[%s157 + $0x200] sm:%s150]
                %224 = vst [vmem:[%s158 + $0x100] sm:%s150] %v223
                %v225 = vld [vmem:[%s157 + $0x210] sm:%s150]
                %226 = vst [vmem:[%s158 + $0x108] sm:%s150] %v225
                %v227 = vld [vmem:[%s157 + $0x220] sm:%s150]
                %228 = vst [vmem:[%s158 + $0x110] sm:%s150] %v227
                %v229 = vld [vmem:[%s157 + $0x230] sm:%s150]
                %230 = vst [vmem:[%s158 + $0x118] sm:%s150] %v229
                %v231 = vld [vmem:[%s157 + $0x240] sm:%s150]
                %232 = vst [vmem:[%s158 + $0x120] sm:%s150] %v231
                %v233 = vld [vmem:[%s157 + $0x250] sm:%s150]
                %234 = vst [vmem:[%s158 + $0x128] sm:%s150] %v233
                %v235 = vld [vmem:[%s157 + $0x260] sm:%s150]
                %236 = vst [vmem:[%s158 + $0x130] sm:%s150] %v235
                %v237 = vld [vmem:[%s157 + $0x270] sm:%s150]
                %238 = vst [vmem:[%s158 + $0x138] sm:%s150] %v237
                %v239 = vld [vmem:[%s157 + $0x280] sm:%s150]
                %240 = vst [vmem:[%s158 + $0x140] sm:%s150] %v239
                %v241 = vld [vmem:[%s157 + $0x290] sm:%s150]
                %242 = vst [vmem:[%s158 + $0x148] sm:%s150] %v241
                %v243 = vld [vmem:[%s157 + $0x2a0] sm:%s150]
                %244 = vst [vmem:[%s158 + $0x150] sm:%s150] %v243
                %v245 = vld [vmem:[%s157 + $0x2b0] sm:%s150]
                %246 = vst [vmem:[%s158 + $0x158] sm:%s150] %v245
                %v247 = vld [vmem:[%s157 + $0x2c0] sm:%s150]
                %248 = vst [vmem:[%s158 + $0x160] sm:%s150] %v247
                %v249 = vld [vmem:[%s157 + $0x2d0] sm:%s150]
                %250 = vst [vmem:[%s158 + $0x168] sm:%s150] %v249
                %v251 = vld [vmem:[%s157 + $0x2e0] sm:%s150]
                %252 = vst [vmem:[%s158 + $0x170] sm:%s150] %v251
                %v253 = vld [vmem:[%s157 + $0x2f0] sm:%s150]
                %254 = vst [vmem:[%s158 + $0x178] sm:%s150] %v253
                %v255 = vld [vmem:[%s157 + $0x300] sm:%s150]
                %256 = vst [vmem:[%s158 + $0x180] sm:%s150] %v255
                %v257 = vld [vmem:[%s157 + $0x310] sm:%s150]
                %258 = vst [vmem:[%s158 + $0x188] sm:%s150] %v257
                %v259 = vld [vmem:[%s157 + $0x320] sm:%s150]
                %260 = vst [vmem:[%s158 + $0x190] sm:%s150] %v259
                %v261 = vld [vmem:[%s157 + $0x330] sm:%s150]
                %262 = vst [vmem:[%s158 + $0x198] sm:%s150] %v261
                %v263 = vld [vmem:[%s157 + $0x340] sm:%s150]
                %264 = vst [vmem:[%s158 + $0x1a0] sm:%s150] %v263
                %v265 = vld [vmem:[%s157 + $0x350] sm:%s150]
                %266 = vst [vmem:[%s158 + $0x1a8] sm:%s150] %v265
                %v267 = vld [vmem:[%s157 + $0x360] sm:%s150]
                %268 = vst [vmem:[%s158 + $0x1b0] sm:%s150] %v267
                %v269 = vld [vmem:[%s157 + $0x370] sm:%s150]
                %270 = vst [vmem:[%s158 + $0x1b8] sm:%s150] %v269
                %v271 = vld [vmem:[%s157 + $0x380] sm:%s150]
                %272 = vst [vmem:[%s158 + $0x1c0] sm:%s150] %v271
                %v273 = vld [vmem:[%s157 + $0x390] sm:%s150]
                %274 = vst [vmem:[%s158 + $0x1c8] sm:%s150] %v273
                %v275 = vld [vmem:[%s157 + $0x3a0] sm:%s150]
                %276 = vst [vmem:[%s158 + $0x1d0] sm:%s150] %v275
                %v277 = vld [vmem:[%s157 + $0x3b0] sm:%s150]
                %278 = vst [vmem:[%s158 + $0x1d8] sm:%s150] %v277
                %v279 = vld [vmem:[%s157 + $0x3c0] sm:%s150]
                %280 = vst [vmem:[%s158 + $0x1e0] sm:%s150] %v279
                %v281 = vld [vmem:[%s157 + $0x3d0] sm:%s150]
                %282 = vst [vmem:[%s158 + $0x1e8] sm:%s150] %v281
                %v283 = vld [vmem:[%s157 + $0x3e0] sm:%s150]
                %284 = vst [vmem:[%s158 + $0x1f0] sm:%s150] %v283
                %v285 = vld [vmem:[%s157 + $0x3f0] sm:%s150]
                %286 = vst [vmem:[%s158 + $0x1f8] sm:%s150] %v285
              $region41: #{_rnd_forward_impl.12} parent=35 // loop_footer
                %s156 = sadd.s32 1, %s152
              $region42: #{_rnd_forward_impl.12} parent=35 // loop_footer_branch
                %151 = sbr.rel target = $region38
              $region43: #{_rnd_forward_impl.12} parent=35 // loop_exit
                _
            $region36: #{_rnd_forward_impl.12} parent=27 // pred_fallthru
              _
          $region28: #{_rnd_forward_impl.12} parent=23 // pred_fallthru
            _
          %427 = vnop
        $region24: #{_rnd_forward_impl.12} parent=19 // pred_fallthru
          _
        // Predicated region
        $region59: #{_rnd_forward_impl.12} parent=19 // pred_check
          %p428 = pneg %p79
        $region60: #{_rnd_forward_impl.12} parent=19 // pred_check_branch
          %430 = sbr.rel (%p428) target = $region62
        $region61: #{_rnd_forward_impl.12} parent=19 // pred_region
          %s431 = smul.u32 2, %s12
          %p432 = scmp.lt.s32.totalorder %s431, 3
          %s433 = scalar_select %p432, %s431, 3
          %s434 = scalar_lea.vmem %s2, %s433
          %s435 = smul.u32 2, %s12
        $region62: #{_rnd_forward_impl.12} parent=19 // pred_fallthru
          _
      $region20: #{_rnd_forward_impl.12} parent=5 // pred_fallthru
        _
      %p436 = scmp.le.s32.totalorder 1, %s12
      %p437 = scmp.lt.s32.totalorder %s12, 3
      %p438 = pnand %p436, %p437
      %p439 = pneg %p438
      // Predicated region
      $region63: #{_rnd_forward_impl.12} parent=5 // pred_check
        _
      $region64: #{_rnd_forward_impl.12} parent=5 // pred_check_branch
        %441 = sbr.rel (%p438) target = $region66
      $region65: #{_rnd_forward_impl.12} parent=5 // pred_region
        %s442 = ssub.s32 %s12, 1
        %s443 = sand.u32 %s46, 1
        %s444 = sand.u32 %s46, 1
        %s445 = smul.addr %s444, 512
        %s446 = scalar_lea.vmem [#allocation2], %s445
        // Predicated region
        $region67: #{_rnd_forward_impl.12} parent=65 // pred_check
          %p447 = pneg %p59
        $region68: #{_rnd_forward_impl.12} parent=65 // pred_check_branch
          %449 = sbr.rel (%p447) target = $region70
        $region69: #{_rnd_forward_impl.12} parent=65 // pred_region
          _
        $region70: #{_rnd_forward_impl.12} parent=65 // pred_fallthru
          _
        %p450 = pneg %p33
        %p451 = pneg %p30
        %s452 = sand.u32 %s46, 1
        %s453 = sand.u32 %s46, 1
        %s454 = smul.addr %s453, 512
        %s455 = scalar_lea.vmem [#allocation2], %s454
        %p456 = pneg %p59
        %p457 = pneg %p56
        %s458 = smul.u32 2, %s17
        %p459 = scmp.lt.s32.totalorder %s458, 3
        %s460 = scalar_select %p459, %s458, 3
        %s461 = scalar_lea.vmem %s2, %s460
        %p462 = pneg %p85
        %p463 = pneg %p82
        %p464 = pneg %p111
        %p465 = pneg %p108
        %s466 = sand.u32 %s98, 1
        %s467 = scalar_lea.sflag [#allocation4], %s466
        %s468 = sand.u32 %s98, 1
        %s469 = smul.addr %s468, 4
        %s470 = scalar_lea.vmem [#allocation3], %s469
        %s471 = smul.u32 2, %s17
        %s472 = smul.u32 2, %s17
        %p473 = scmp.lt.s32.totalorder %s472, 3
        %s474 = scalar_select %p473, %s472, 3
        %s475 = scalar_lea.vmem %s2, %s474
        %s476 = smul.u32 2, %s17
        %s477 = smul.u32 2, %s17
        %v478 = vld [vmem:[%s0] sm:$0xf]
        %v479 = vld [vmem:[%s446] sm:$0xff]
        %v480 = vld [vmem:[%s446 + $0x8] sm:$0xff]
        %v481 = vld [vmem:[%s446 + $0x10] sm:$0xff]
        %v482 = vld [vmem:[%s446 + $0x18] sm:$0xff]
        %v483 = vld [vmem:[%s446 + $0x20] sm:$0xff]
        %v484 = vld [vmem:[%s446 + $0x28] sm:$0xff]
        %v485 = vld [vmem:[%s446 + $0x30] sm:$0xff]
        %v486 = vld [vmem:[%s446 + $0x38] sm:$0xff]
        %v487 = vld [vmem:[%s446 + $0x40] sm:$0xff]
        %v488 = vld [vmem:[%s446 + $0x48] sm:$0xff]
        %v489 = vld [vmem:[%s446 + $0x50] sm:$0xff]
        %v490 = vld [vmem:[%s446 + $0x58] sm:$0xff]
        %v491 = vld [vmem:[%s446 + $0x60] sm:$0xff]
        %v492 = vld [vmem:[%s446 + $0x68] sm:$0xff]
        %v493 = vld [vmem:[%s446 + $0x70] sm:$0xff]
        %v494 = vld [vmem:[%s446 + $0x78] sm:$0xff]
        %v495 = vld [vmem:[%s446 + $0x80] sm:$0xff]
        %v496 = vld [vmem:[%s446 + $0x88] sm:$0xff]
        %v497 = vld [vmem:[%s446 + $0x90] sm:$0xff]
        %v498 = vld [vmem:[%s446 + $0x98] sm:$0xff]
        %v499 = vld [vmem:[%s446 + $0xa0] sm:$0xff]
        %v500 = vld [vmem:[%s446 + $0xa8] sm:$0xff]
        %v501 = vld [vmem:[%s446 + $0xb0] sm:$0xff]
        %v502 = vld [vmem:[%s446 + $0xb8] sm:$0xff]
        %v503 = vld [vmem:[%s446 + $0xc0] sm:$0xff]
        %v504 = vld [vmem:[%s446 + $0xc8] sm:$0xff]
        %v505 = vld [vmem:[%s446 + $0xd0] sm:$0xff]
        %v506 = vld [vmem:[%s446 + $0xd8] sm:$0xff]
        %v507 = vld [vmem:[%s446 + $0xe0] sm:$0xff]
        %v508 = vld [vmem:[%s446 + $0xe8] sm:$0xff]
        %v509 = vld [vmem:[%s446 + $0xf0] sm:$0xff]
        %v510 = vld [vmem:[%s446 + $0xf8] sm:$0xff]
        %v511 = vld [vmem:[%s446 + $0x100] sm:$0xff]
        %v512 = vld [vmem:[%s446 + $0x108] sm:$0xff]
        %v513 = vld [vmem:[%s446 + $0x110] sm:$0xff]
        %v514 = vld [vmem:[%s446 + $0x118] sm:$0xff]
        %v515 = vld [vmem:[%s446 + $0x120] sm:$0xff]
        %v516 = vld [vmem:[%s446 + $0x128] sm:$0xff]
        %v517 = vld [vmem:[%s446 + $0x130] sm:$0xff]
        %v518 = vld [vmem:[%s446 + $0x138] sm:$0xff]
        %v519 = vld [vmem:[%s446 + $0x140] sm:$0xff]
        %v520 = vld [vmem:[%s446 + $0x148] sm:$0xff]
        %v521 = vld [vmem:[%s446 + $0x150] sm:$0xff]
        %v522 = vld [vmem:[%s446 + $0x158] sm:$0xff]
        %v523 = vld [vmem:[%s446 + $0x160] sm:$0xff]
        %v524 = vld [vmem:[%s446 + $0x168] sm:$0xff]
        %v525 = vld [vmem:[%s446 + $0x170] sm:$0xff]
        %v526 = vld [vmem:[%s446 + $0x178] sm:$0xff]
        %v527 = vld [vmem:[%s446 + $0x180] sm:$0xff]
        %v528 = vld [vmem:[%s446 + $0x188] sm:$0xff]
        %v529 = vld [vmem:[%s446 + $0x190] sm:$0xff]
        %v530 = vld [vmem:[%s446 + $0x198] sm:$0xff]
        %v531 = vld [vmem:[%s446 + $0x1a0] sm:$0xff]
        %v532 = vld [vmem:[%s446 + $0x1a8] sm:$0xff]
        %v533 = vld [vmem:[%s446 + $0x1b0] sm:$0xff]
        %v534 = vld [vmem:[%s446 + $0x1b8] sm:$0xff]
        %v535 = vld [vmem:[%s446 + $0x1c0] sm:$0xff]
        %v536 = vld [vmem:[%s446 + $0x1c8] sm:$0xff]
        %v537 = vld [vmem:[%s446 + $0x1d0] sm:$0xff]
        %v538 = vld [vmem:[%s446 + $0x1d8] sm:$0xff]
        %v539 = vld [vmem:[%s446 + $0x1e0] sm:$0xff]
        %v540 = vld [vmem:[%s446 + $0x1e8] sm:$0xff]
        %v541 = vld [vmem:[%s446 + $0x1f0] sm:$0xff]
        %v542 = vld [vmem:[%s446 + $0x1f8] sm:$0xff]
        %v543 = vld [vmem:[%s475] sm:$0x3]
        %v545 = vlaneseq
        %v546 = vshrl.u32 %v545, 7
        %v547 = vsub.s32 0, %v546
        %v548 = vrot.slane %v543, %v547
        %v549 = vlaneseq
        %v550 = vshrl.u32 %v549, 7
        %v551 = vsub.s32 1, %v550
        %v552 = vrot.slane %v543, %v551
        %v557 = vunpack.c.l.s4 1966171168
        %v558 = vunpack.c.0.s8 %v557
        %v559 = vlaneseq
        %v560 = vshrl.u32 %v559, 7
        %v561 = vsub.s32 %v558, %v560
        %v562 = vrot.slane %v478, %v561
        %v563 = vcombine.high %v562, %v562
        %v565 = vunpack.c.l.s4 1966171168
        %v566 = vunpack.c.0.s8 %v565
        %v567 = vlaneseq
        %v568 = vshrl.u32 %v567, 7
        %v569 = vsub.s32 %v566, %v568
        %v570 = vrot.slane %v562, %v569
        %v572 = vunpack.c.l.s4 1966171168
        %v573 = vunpack.c.0.s8 %v572
        %v574 = vlaneseq
        %v575 = vshrl.u32 %v574, 7
        %v576 = vsub.s32 %v573, %v575
        %v577 = vrot.slane %v563, %v576
        %v578 = vcombine.high %v570, %v570
        %v579 = vcombine.high %v577, %v577
        %v648 = vunpack.c.l.b16 %v479
        %v649 = vunpack.c.h.b16 %v479
        %v650 = vunpack.c.l.b16 %v480
        %v651 = vunpack.c.h.b16 %v480
        %v652 = vunpack.c.l.b16 %v481
        %v653 = vunpack.c.h.b16 %v481
        %v654 = vunpack.c.l.b16 %v482
        %v655 = vunpack.c.h.b16 %v482
        %v656 = vunpack.c.l.b16 %v483
        %v657 = vunpack.c.h.b16 %v483
        %v658 = vunpack.c.l.b16 %v484
        %v659 = vunpack.c.h.b16 %v484
        %v660 = vunpack.c.l.b16 %v485
        %v661 = vunpack.c.h.b16 %v485
        %v662 = vunpack.c.l.b16 %v486
        %v663 = vunpack.c.h.b16 %v486
        %v664 = vunpack.c.l.b16 %v487
        %v665 = vunpack.c.h.b16 %v487
        %v666 = vunpack.c.l.b16 %v488
        %v667 = vunpack.c.h.b16 %v488
        %v668 = vunpack.c.l.b16 %v489
        %v669 = vunpack.c.h.b16 %v489
        %v670 = vunpack.c.l.b16 %v490
        %v671 = vunpack.c.h.b16 %v490
        %v672 = vunpack.c.l.b16 %v491
        %v673 = vunpack.c.h.b16 %v491
        %v674 = vunpack.c.l.b16 %v492
        %v675 = vunpack.c.h.b16 %v492
        %v676 = vunpack.c.l.b16 %v493
        %v677 = vunpack.c.h.b16 %v493
        %v678 = vunpack.c.l.b16 %v494
        %v679 = vunpack.c.h.b16 %v494
        %v680 = vunpack.c.l.b16 %v495
        %v681 = vunpack.c.h.b16 %v495
        %v682 = vunpack.c.l.b16 %v496
        %v683 = vunpack.c.h.b16 %v496
        %v684 = vunpack.c.l.b16 %v497
        %v685 = vunpack.c.h.b16 %v497
        %v686 = vunpack.c.l.b16 %v498
        %v687 = vunpack.c.h.b16 %v498
        %v688 = vunpack.c.l.b16 %v499
        %v689 = vunpack.c.h.b16 %v499
        %v690 = vunpack.c.l.b16 %v500
        %v691 = vunpack.c.h.b16 %v500
        %v692 = vunpack.c.l.b16 %v501
        %v693 = vunpack.c.h.b16 %v501
        %v694 = vunpack.c.l.b16 %v502
        %v695 = vunpack.c.h.b16 %v502
        %v696 = vunpack.c.l.b16 %v503
        %v697 = vunpack.c.h.b16 %v503
        %v698 = vunpack.c.l.b16 %v504
        %v699 = vunpack.c.h.b16 %v504
        %v700 = vunpack.c.l.b16 %v505
        %v701 = vunpack.c.h.b16 %v505
        %v702 = vunpack.c.l.b16 %v506
        %v703 = vunpack.c.h.b16 %v506
        %v704 = vunpack.c.l.b16 %v507
        %v705 = vunpack.c.h.b16 %v507
        %v706 = vunpack.c.l.b16 %v508
        %v707 = vunpack.c.h.b16 %v508
        %v708 = vunpack.c.l.b16 %v509
        %v709 = vunpack.c.h.b16 %v509
        %v710 = vunpack.c.l.b16 %v510
        %v711 = vunpack.c.h.b16 %v510
        %v712 = vunpack.c.l.b16 %v511
        %v713 = vunpack.c.h.b16 %v511
        %v714 = vunpack.c.l.b16 %v512
        %v715 = vunpack.c.h.b16 %v512
        %v716 = vunpack.c.l.b16 %v513
        %v717 = vunpack.c.h.b16 %v513
        %v718 = vunpack.c.l.b16 %v514
        %v719 = vunpack.c.h.b16 %v514
        %v720 = vunpack.c.l.b16 %v515
        %v721 = vunpack.c.h.b16 %v515
        %v722 = vunpack.c.l.b16 %v516
        %v723 = vunpack.c.h.b16 %v516
        %v724 = vunpack.c.l.b16 %v517
        %v725 = vunpack.c.h.b16 %v517
        %v726 = vunpack.c.l.b16 %v518
        %v727 = vunpack.c.h.b16 %v518
        %v728 = vunpack.c.l.b16 %v519
        %v729 = vunpack.c.h.b16 %v519
        %v730 = vunpack.c.l.b16 %v520
        %v731 = vunpack.c.h.b16 %v520
        %v732 = vunpack.c.l.b16 %v521
        %v733 = vunpack.c.h.b16 %v521
        %v734 = vunpack.c.l.b16 %v522
        %v735 = vunpack.c.h.b16 %v522
        %v736 = vunpack.c.l.b16 %v523
        %v737 = vunpack.c.h.b16 %v523
        %v738 = vunpack.c.l.b16 %v524
        %v739 = vunpack.c.h.b16 %v524
        %v740 = vunpack.c.l.b16 %v525
        %v741 = vunpack.c.h.b16 %v525
        %v742 = vunpack.c.l.b16 %v526
        %v743 = vunpack.c.h.b16 %v526
        %v744 = vunpack.c.l.b16 %v527
        %v745 = vunpack.c.h.b16 %v527
        %v746 = vunpack.c.l.b16 %v528
        %v747 = vunpack.c.h.b16 %v528
        %v748 = vunpack.c.l.b16 %v529
        %v749 = vunpack.c.h.b16 %v529
        %v750 = vunpack.c.l.b16 %v530
        %v751 = vunpack.c.h.b16 %v530
        %v752 = vunpack.c.l.b16 %v531
        %v753 = vunpack.c.h.b16 %v531
        %v754 = vunpack.c.l.b16 %v532
        %v755 = vunpack.c.h.b16 %v532
        %v756 = vunpack.c.l.b16 %v533
        %v757 = vunpack.c.h.b16 %v533
        %v758 = vunpack.c.l.b16 %v534
        %v759 = vunpack.c.h.b16 %v534
        %v760 = vunpack.c.l.b16 %v535
        %v761 = vunpack.c.h.b16 %v535
        %v762 = vunpack.c.l.b16 %v536
        %v763 = vunpack.c.h.b16 %v536
        %v764 = vunpack.c.l.b16 %v537
        %v765 = vunpack.c.h.b16 %v537
        %v766 = vunpack.c.l.b16 %v538
        %v767 = vunpack.c.h.b16 %v538
        %v768 = vunpack.c.l.b16 %v539
        %v769 = vunpack.c.h.b16 %v539
        %v770 = vunpack.c.l.b16 %v540
        %v771 = vunpack.c.h.b16 %v540
        %v772 = vunpack.c.l.b16 %v541
        %v773 = vunpack.c.h.b16 %v541
        %v774 = vunpack.c.l.b16 %v542
        %v775 = vunpack.c.h.b16 %v542
        %v776 = vpack.c.b16 %v650, %v648
        %v777 = vpack.c.b16 %v651, %v649
        %v778 = vpack.c.b16 %v654, %v652
        %v779 = vpack.c.b16 %v655, %v653
        %v780 = vpack.c.b16 %v658, %v656
        %v781 = vpack.c.b16 %v659, %v657
        %v782 = vpack.c.b16 %v662, %v660
        %v783 = vpack.c.b16 %v663, %v661
        %v784 = vpack.c.b16 %v666, %v664
        %v785 = vpack.c.b16 %v667, %v665
        %v786 = vpack.c.b16 %v670, %v668
        %v787 = vpack.c.b16 %v671, %v669
        %v788 = vpack.c.b16 %v674, %v672
        %v789 = vpack.c.b16 %v675, %v673
        %v790 = vpack.c.b16 %v678, %v676
        %v791 = vpack.c.b16 %v679, %v677
        %v792 = vpack.c.b16 %v682, %v680
        %v793 = vpack.c.b16 %v683, %v681
        %v794 = vpack.c.b16 %v686, %v684
        %v795 = vpack.c.b16 %v687, %v685
        %v796 = vpack.c.b16 %v690, %v688
        %v797 = vpack.c.b16 %v691, %v689
        %v798 = vpack.c.b16 %v694, %v692
        %v799 = vpack.c.b16 %v695, %v693
        %v800 = vpack.c.b16 %v698, %v696
        %v801 = vpack.c.b16 %v699, %v697
        %v802 = vpack.c.b16 %v702, %v700
        %v803 = vpack.c.b16 %v703, %v701
        %v804 = vpack.c.b16 %v706, %v704
        %v805 = vpack.c.b16 %v707, %v705
        %v806 = vpack.c.b16 %v710, %v708
        %v807 = vpack.c.b16 %v711, %v709
        %v808 = vpack.c.b16 %v714, %v712
        %v809 = vpack.c.b16 %v715, %v713
        %v810 = vpack.c.b16 %v718, %v716
        %v811 = vpack.c.b16 %v719, %v717
        %v812 = vpack.c.b16 %v722, %v720
        %v813 = vpack.c.b16 %v723, %v721
        %v814 = vpack.c.b16 %v726, %v724
        %v815 = vpack.c.b16 %v727, %v725
        %v816 = vpack.c.b16 %v730, %v728
        %v817 = vpack.c.b16 %v731, %v729
        %v818 = vpack.c.b16 %v734, %v732
        %v819 = vpack.c.b16 %v735, %v733
        %v820 = vpack.c.b16 %v738, %v736
        %v821 = vpack.c.b16 %v739, %v737
        %v822 = vpack.c.b16 %v742, %v740
        %v823 = vpack.c.b16 %v743, %v741
        %v824 = vpack.c.b16 %v746, %v744
        %v825 = vpack.c.b16 %v747, %v745
        %v826 = vpack.c.b16 %v750, %v748
        %v827 = vpack.c.b16 %v751, %v749
        %v828 = vpack.c.b16 %v754, %v752
        %v829 = vpack.c.b16 %v755, %v753
        %v830 = vpack.c.b16 %v758, %v756
        %v831 = vpack.c.b16 %v759, %v757
        %v832 = vpack.c.b16 %v762, %v760
        %v833 = vpack.c.b16 %v763, %v761
        %v834 = vpack.c.b16 %v766, %v764
        %v835 = vpack.c.b16 %v767, %v765
        %v836 = vpack.c.b16 %v770, %v768
        %v837 = vpack.c.b16 %v771, %v769
        %v838 = vpack.c.b16 %v774, %v772
        %v839 = vpack.c.b16 %v775, %v773
        %904 = vmatprep.subr.bf16.mxu0 %v791
        %905 = vmatpush1.bf16.msra.mxu0 %v790
        %906 = vmatprep.subr.bf16.mxu0 %v789
        %907 = vmatpush1.bf16.msra.mxu0 %v788
        %908 = vmatprep.subr.bf16.mxu0 %v787
        %909 = vmatpush1.bf16.msra.mxu0 %v786
        %910 = vmatprep.subr.bf16.mxu0 %v785
        %911 = vmatpush1.bf16.msra.mxu0 %v784
        %912 = vmatprep.subr.bf16.mxu0 %v783
        %913 = vmatpush1.bf16.msra.mxu0 %v782
        %914 = vmatprep.subr.bf16.mxu0 %v781
        %915 = vmatpush1.bf16.msra.mxu0 %v780
        %916 = vmatprep.subr.bf16.mxu0 %v779
        %917 = vmatpush1.bf16.msra.mxu0 %v778
        %918 = vmatprep.subr.bf16.mxu0 %v777
        %919 = vmatpush1.bf16.msra.mxu0 %v776
        %920 = vmatprep.subr.bf16.mxu0 %v807
        %921 = vmatpush2.bf16.msra.mxu0 %v806
        %922 = vmatprep.subr.bf16.mxu0 %v805
        %923 = vmatpush2.bf16.msra.mxu0 %v804
        %924 = vmatprep.subr.bf16.mxu0 %v803
        %925 = vmatpush2.bf16.msra.mxu0 %v802
        %926 = vmatprep.subr.bf16.mxu0 %v801
        %927 = vmatpush2.bf16.msra.mxu0 %v800
        %928 = vmatprep.subr.bf16.mxu0 %v799
        %929 = vmatpush2.bf16.msra.mxu0 %v798
        %930 = vmatprep.subr.bf16.mxu0 %v797
        %931 = vmatpush2.bf16.msra.mxu0 %v796
        %932 = vmatprep.subr.bf16.mxu0 %v795
        %933 = vmatpush2.bf16.msra.mxu0 %v794
        %934 = vmatprep.subr.bf16.mxu0 %v793
        %935 = vmatpush2.bf16.msra.mxu0 %v792
        %936 = vmatprep.mubr.bf16.mxu0 %v577
        %937 = vmatmul.mubr.bf16.gmra.mxu0 %v570
        %v938 = vpop.f32.mrf.mxu0
        %v939 = vadd.f32 %v548, %v938
        %v940 = vpop.f32.mrf.mxu0
        %v941 = vadd.f32 %v552, %v940
        %v942 = vpop.f32.mrf.mxu0
        %v943 = vpop.f32.mrf.mxu0
        %944 = vdwg.mxu0
        %945 = vmatprep.subr.bf16.mxu0 %v823
        %946 = vmatpush1.bf16.msra.mxu0 %v822
        %947 = vmatprep.subr.bf16.mxu0 %v821
        %948 = vmatpush1.bf16.msra.mxu0 %v820
        %949 = vmatprep.subr.bf16.mxu0 %v819
        %950 = vmatpush1.bf16.msra.mxu0 %v818
        %951 = vmatprep.subr.bf16.mxu0 %v817
        %952 = vmatpush1.bf16.msra.mxu0 %v816
        %953 = vmatprep.subr.bf16.mxu0 %v815
        %954 = vmatpush1.bf16.msra.mxu0 %v814
        %955 = vmatprep.subr.bf16.mxu0 %v813
        %956 = vmatpush1.bf16.msra.mxu0 %v812
        %957 = vmatprep.subr.bf16.mxu0 %v811
        %958 = vmatpush1.bf16.msra.mxu0 %v810
        %959 = vmatprep.subr.bf16.mxu0 %v809
        %960 = vmatpush1.bf16.msra.mxu0 %v808
        %961 = vmatprep.subr.bf16.mxu0 %v839
        %962 = vmatpush2.bf16.msra.mxu0 %v838
        %963 = vmatprep.subr.bf16.mxu0 %v837
        %964 = vmatpush2.bf16.msra.mxu0 %v836
        %965 = vmatprep.subr.bf16.mxu0 %v835
        %966 = vmatpush2.bf16.msra.mxu0 %v834
        %967 = vmatprep.subr.bf16.mxu0 %v833
        %968 = vmatpush2.bf16.msra.mxu0 %v832
        %969 = vmatprep.subr.bf16.mxu0 %v831
        %970 = vmatpush2.bf16.msra.mxu0 %v830
        %971 = vmatprep.subr.bf16.mxu0 %v829
        %972 = vmatpush2.bf16.msra.mxu0 %v828
        %973 = vmatprep.subr.bf16.mxu0 %v827
        %974 = vmatpush2.bf16.msra.mxu0 %v826
        %975 = vmatprep.subr.bf16.mxu0 %v825
        %976 = vmatpush2.bf16.msra.mxu0 %v824
        %977 = vmatprep.mubr.bf16.mxu0 %v579
        %978 = vmatmul.mubr.bf16.gmra.mxu0 %v578
        %v979 = vpop.f32.mrf.mxu0
        %v980 = vadd.f32 %v939, %v979
        %v981 = vpop.f32.mrf.mxu0
        %v982 = vadd.f32 %v941, %v981
        %v983 = vpop.f32.mrf.mxu0
        %v984 = vpop.f32.mrf.mxu0
        %985 = vdwg.mxu0
        %v988 = vcombine.low %v980, %v982
        %v990 = vunpack.c.l.s4 1983009808
        %v991 = vunpack.c.0.s8 %v990
        %v992 = vlaneseq
        %v993 = vshrl.u32 %v992, 7
        %v994 = vsub.s32 %v991, %v993
        %v995 = vrot.slane %v988, %v994
        %997 = vst [vmem:[%s470] sm:$0xf] %v995
        %s998 = sand.u32 %s98, 1
        %s999 = scalar_lea.sflag [#allocation4], %s998
        %s1000 = sand.u32 %s98, 1
        %s1001 = smul.addr %s1000, 4
        %s1002 = scalar_lea.vmem [#allocation3], %s1001
        // Predicated region
        $region71: #{_rnd_forward_impl.12} parent=65 // pred_check
          %p1003 = pneg %p108
        $region72: #{_rnd_forward_impl.12} parent=65 // pred_check_branch
          %1005 = sbr.rel (%p1003) target = $region74
        $region73: #{_rnd_forward_impl.12} parent=65 // pred_region
          %s1006 = smul.u32 2, %s17
          %s1008 = ssub.s32 64, 64
          %1009 = vsyncadd %s999, %s1008
          %s1010 = smul.addr %s1006, 32
          %s1011 = scalar_lea.hbm %s3, %s1010
          %s1013 = sshll.u32 %s1002, 4
          %s1014 = int_to_ptr.vmem [resolvable:$true] %s1013
          %1016 = dma.vmem_to_hbm [thread:$0]  %s1014, 64, %s1011, %s999
        $region74: #{_rnd_forward_impl.12} parent=65 // pred_fallthru
          _
      $region66: #{_rnd_forward_impl.12} parent=5 // pred_fallthru
        _
      %p1017 = scmp.le.s32.totalorder 2, %s12
      // Predicated region
      $region75: #{_rnd_forward_impl.12} parent=5 // pred_check
        %p1018 = pneg %p1017
      $region76: #{_rnd_forward_impl.12} parent=5 // pred_check_branch
        %1020 = sbr.rel (%p1018) target = $region78
      $region77: #{_rnd_forward_impl.12} parent=5 // pred_region
        %s1021 = ssub.s32 %s12, 2
        // Predicated region
        $region79: #{_rnd_forward_impl.12} parent=77 // pred_check
          %p1022 = pneg %p114
        $region80: #{_rnd_forward_impl.12} parent=77 // pred_check_branch
          %1024 = sbr.rel (%p1022) target = $region82
        $region81: #{_rnd_forward_impl.12} parent=77 // pred_region
          %s1025 = sand.u32 %s99, 1
          %s1026 = scalar_lea.sflag [#allocation4], %s1025
          %s1027 = sand.u32 %s99, 1
          %s1028 = smul.addr %s1027, 4
          %s1029 = scalar_lea.vmem [#allocation3], %s1028
          %1030 = dma.done %s1026, 64
        $region82: #{_rnd_forward_impl.12} parent=77 // pred_fallthru
          _
      $region78: #{_rnd_forward_impl.12} parent=5 // pred_fallthru
        _
    $region6: #{_rnd_forward_impl.12} parent=1 // loop_footer
      %s16 = sadd.s32 1, %s12
    $region7: #{_rnd_forward_impl.12} parent=1 // loop_footer_branch
      %11 = sbr.rel target = $region3
    $region8: #{_rnd_forward_impl.12} parent=1 // loop_exit
      _
    %1031 = vsyncpa [#allocation4], 1
    %s1032 = scalar_lea.sflag [#allocation4], 1
    %1033 = vsyncpa %s1032, 1

// kernel: _rnd_forward_impl.13
$region0: #{_rnd_forward_impl.13}
  #allocation0 [shape = 'u32[]', space=smem, size = 0x4, offset = 0x4, fixed_abs, tag = 'smem constant byte address 0x4 - core index']
  #allocation1 [shape = 'u32[144,128]{1,0:T(1,128)}', space=vmem, size = 0x12000, scoped, tag = 'internal scratch']
  %s0 = inlined_call_operand.vmem [shape: bf16[2,1600], index: 0, kind: input, shape index: {}]
  %s1 = inlined_call_operand.vmem [shape: bf16[1600,512], index: 1, kind: input, shape index: {}]
  %s2 = inlined_call_operand.vmem [shape: f32[1,512], index: 2, kind: input, shape index: {}]
  %s3 = inlined_call_operand.hbm [shape: f32[2,512], index: 3, kind: output, shape index: {}]
  %s4 = sld [smem:[#allocation0]]
  $region83: #{_rnd_forward_impl.13} parent=0
    _
  %s6 = ssub.s32 1, %s4
  %s7 = scalar_select 0, %s6, %s4
  $region1: #{_rnd_forward_impl.13} parent=0
    #allocation2 [shape = 'u8[1638400]{0}', space=vmem, size = 0x190000, scoped, tag = 'input window, operand 1']
    #allocation3 [shape = 'u8[4096]{0}', space=vmem, size = 0x1000, scoped, tag = 'output window, operand 0']
    #allocation4 [shape = 's32[2]{0}', space=sflag, size = 0x8, scoped, tag = 'scoped memory for _rnd_forward_impl.13']
    %8 = vsyncpa [#allocation4], 0
    %s9 = scalar_lea.sflag [#allocation4], 1
    %10 = vsyncpa %s9, 0
    loop: start=0, step=1, limit=4
    $region2: #{_rnd_forward_impl.13} parent=1 // loop_pre_header
      _
    $region3: #{_rnd_forward_impl.13} parent=1 // loop_header
      %s12 = sphi 0, %s16
      %p13 = scmp.ge.s32.totalorder %s12, 4
      %s20 = sphi 0, %s20
      %s22 = sphi 0, %s20
      %s23 = sphi 0, %s22
      %s37 = sphi 0, %s23
      %s43 = sphi 0, %s45
      %s46 = sphi 0, %s43
      %s47 = sphi 0, %s46
      %s63 = sphi 0, %s47
      %s69 = sphi 0, %s71
      %s72 = sphi 0, %s69
      %s73 = sphi 0, %s72
      %s89 = sphi 0, %s73
      %s95 = sphi 0, %s97
      %s98 = sphi 0, %s95
      %s99 = sphi 0, %s98
      %s115 = sphi 0, %s99
    $region4: #{_rnd_forward_impl.13} parent=1 // loop_header_branch
      %15 = sbr.rel (%p13) target = $region8
    $region5: #{_rnd_forward_impl.13} parent=1 // loop_body
      %s17 = ssub.s32 %s12, 1
      %s18 = ssub.s32 %s12, 2
      %s19 = sadd.s32 %s12, 1
      %s21 = sadd.s32 %s20, 1
      %p24 = scmp.eq.s32.totalorder %s12, 1
      %p25 = scmp.ne.s32.totalorder %s20, %s22
      %p26 = scmp.eq.s32.totalorder %s12, 0
      %p27 = por %p25, %p26
      %p28 = scmp.ne.s32.totalorder %s20, %s22
      %p29 = scmp.eq.s32.totalorder %s17, 1
      %p30 = por %p28, %p29
      %p31 = scmp.ne.s32.totalorder %s22, %s23
      %p32 = scmp.eq.s32.totalorder %s17, 0
      %p33 = por %p31, %p32
      %p34 = scmp.ne.s32.totalorder %s22, %s23
      %p35 = scmp.eq.s32.totalorder %s18, 1
      %p36 = por %p34, %p35
      %p38 = scmp.ne.s32.totalorder %s23, %s37
      %p39 = scmp.eq.s32.totalorder %s18, 0
      %p40 = por %p38, %p39
      %s41 = ssub.s32 %s12, %s19
      %p42 = scmp.eq.s32.totalorder %s41, 0
      %s44 = sadd.s32 %s43, 1
      %s45 = scalar_select %p42, %s43, %s44
      %p48 = pneg %p42
      %p49 = scmp.eq.s32.totalorder %s12, 1
      %p50 = por %p48, %p49
      %p51 = scmp.ne.s32.totalorder %s43, %s46
      %p52 = scmp.eq.s32.totalorder %s12, 0
      %p53 = por %p51, %p52
      %p54 = scmp.ne.s32.totalorder %s43, %s46
      %p55 = scmp.eq.s32.totalorder %s17, 1
      %p56 = por %p54, %p55
      %p57 = scmp.ne.s32.totalorder %s46, %s47
      %p58 = scmp.eq.s32.totalorder %s17, 0
      %p59 = por %p57, %p58
      %p60 = scmp.ne.s32.totalorder %s46, %s47
      %p61 = scmp.eq.s32.totalorder %s18, 1
      %p62 = por %p60, %p61
      %p64 = scmp.ne.s32.totalorder %s47, %s63
      %p65 = scmp.eq.s32.totalorder %s18, 0
      %p66 = por %p64, %p65
      %s67 = ssub.s32 %s12, %s19
      %p68 = scmp.eq.s32.totalorder %s67, 0
      %s70 = sadd.s32 %s69, 1
      %s71 = scalar_select %p68, %s69, %s70
      %p74 = pneg %p68
      %p75 = scmp.eq.s32.totalorder %s12, 1
      %p76 = por %p74, %p75
      %p77 = scmp.ne.s32.totalorder %s69, %s72
      %p78 = scmp.eq.s32.totalorder %s12, 0
      %p79 = por %p77, %p78
      %p80 = scmp.ne.s32.totalorder %s69, %s72
      %p81 = scmp.eq.s32.totalorder %s17, 1
      %p82 = por %p80, %p81
      %p83 = scmp.ne.s32.totalorder %s72, %s73
      %p84 = scmp.eq.s32.totalorder %s17, 0
      %p85 = por %p83, %p84
      %p86 = scmp.ne.s32.totalorder %s72, %s73
      %p87 = scmp.eq.s32.totalorder %s18, 1
      %p88 = por %p86, %p87
      %p90 = scmp.ne.s32.totalorder %s73, %s89
      %p91 = scmp.eq.s32.totalorder %s18, 0
      %p92 = por %p90, %p91
      %s93 = ssub.s32 %s12, %s19
      %p94 = scmp.eq.s32.totalorder %s93, 0
      %s96 = sadd.s32 %s95, 1
      %s97 = scalar_select %p94, %s95, %s96
      %p100 = pneg %p94
      %p101 = scmp.eq.s32.totalorder %s12, 1
      %p102 = por %p100, %p101
      %p103 = scmp.ne.s32.totalorder %s95, %s98
      %p104 = scmp.eq.s32.totalorder %s12, 0
      %p105 = por %p103, %p104
      %p106 = scmp.ne.s32.totalorder %s95, %s98
      %p107 = scmp.eq.s32.totalorder %s17, 1
      %p108 = por %p106, %p107
      %p109 = scmp.ne.s32.totalorder %s98, %s99
      %p110 = scmp.eq.s32.totalorder %s17, 0
      %p111 = por %p109, %p110
      %p112 = scmp.ne.s32.totalorder %s98, %s99
      %p113 = scmp.eq.s32.totalorder %s18, 1
      %p114 = por %p112, %p113
      %p116 = scmp.ne.s32.totalorder %s99, %s115
      %p117 = scmp.eq.s32.totalorder %s18, 0
      %p118 = por %p116, %p117
      %p119 = scmp.le.s32.totalorder 1, %s12
      %p120 = scmp.lt.s32.totalorder %s12, 3
      %p121 = pnand %p119, %p120
      %p122 = pneg %p121
      // Predicated region
      $region9: #{_rnd_forward_impl.13} parent=5 // pred_check
        _
      $region10: #{_rnd_forward_impl.13} parent=5 // pred_check_branch
        %124 = sbr.rel (%p121) target = $region12
      $region11: #{_rnd_forward_impl.13} parent=5 // pred_region
        %s125 = ssub.s32 %s12, 1
        // Predicated region
        $region13: #{_rnd_forward_impl.13} parent=11 // pred_check
          %p126 = pneg %p33
        $region14: #{_rnd_forward_impl.13} parent=11 // pred_check_branch
          %128 = sbr.rel (%p126) target = $region16
        $region15: #{_rnd_forward_impl.13} parent=11 // pred_region
          _
        $region16: #{_rnd_forward_impl.13} parent=11 // pred_fallthru
          _
      $region12: #{_rnd_forward_impl.13} parent=5 // pred_fallthru
        _
      %p129 = scmp.lt.s32.totalorder %s12, 2
      // Predicated region
      $region17: #{_rnd_forward_impl.13} parent=5 // pred_check
        %p130 = pneg %p129
      $region18: #{_rnd_forward_impl.13} parent=5 // pred_check_branch
        %132 = sbr.rel (%p130) target = $region20
      $region19: #{_rnd_forward_impl.13} parent=5 // pred_region
        // Predicated region
        $region21: #{_rnd_forward_impl.13} parent=19 // pred_check
          %p133 = pneg %p53
        $region22: #{_rnd_forward_impl.13} parent=19 // pred_check_branch
          %135 = sbr.rel (%p133) target = $region24
        $region23: #{_rnd_forward_impl.13} parent=19 // pred_region
          %s136 = sand.u32 %s43, 1
          %s137 = sand.u32 %s43, 1
          %s138 = smul.addr %s137, 1600
          %s139 = scalar_lea.vmem [#allocation2], %s138
          %s140 = smul.u32 2, %s12
          %s141 = smul.addr %s140, 4
          %s142 = scalar_lea.vmem %s1, %s141
          // Predicated region
          $region25: #{_rnd_forward_impl.13} parent=23 // pred_check
            _
          $region26: #{_rnd_forward_impl.13} parent=23 // pred_check_branch
            %144 = sbr.rel (0) target = $region28
          $region27: #{_rnd_forward_impl.13} parent=23 // pred_region
            // Predicated region
            $region29: #{_rnd_forward_impl.13} parent=27 // pred_check
              _
            $region30: #{_rnd_forward_impl.13} parent=27 // pred_check_branch
              %146 = sbr.rel (0) target = $region32
            $region31: #{_rnd_forward_impl.13} parent=27 // pred_region
              // Predicated region
              $region44: #{_rnd_forward_impl.13} parent=31 // pred_check
                _
              $region45: #{_rnd_forward_impl.13} parent=31 // pred_check_branch
                %560 = sbr.rel (0) target = $region47
              $region46: #{_rnd_forward_impl.13} parent=31 // pred_region
                loop: start=0, step=1, limit=1
                $region48: #{_rnd_forward_impl.13} parent=46 // loop_pre_header
                  _
                $region49: #{_rnd_forward_impl.13} parent=46 // loop_header
                  %s562 = sphi 0, %s566
                  %p563 = scmp.ge.s32.totalorder %s562, 1
                  %s567 = sphi %s142, %s142
                  %s568 = sphi %s139, %s139
                $region50: #{_rnd_forward_impl.13} parent=46 // loop_header_branch
                  %565 = sbr.rel (%p563) target = $region54
                $region51: #{_rnd_forward_impl.13} parent=46 // loop_body
                  %v569 = vld [vmem:[%s567] sm:$0xff]
                  %570 = vst [vmem:[%s568] sm:$0xff] %v569
                  %v571 = vld [vmem:[%s567 + $0x10] sm:$0xff]
                  %572 = vst [vmem:[%s568 + $0x8] sm:$0xff] %v571
                  %v573 = vld [vmem:[%s567 + $0x20] sm:$0xff]
                  %574 = vst [vmem:[%s568 + $0x10] sm:$0xff] %v573
                  %v575 = vld [vmem:[%s567 + $0x30] sm:$0xff]
                  %576 = vst [vmem:[%s568 + $0x18] sm:$0xff] %v575
                  %v577 = vld [vmem:[%s567 + $0x40] sm:$0xff]
                  %578 = vst [vmem:[%s568 + $0x20] sm:$0xff] %v577
                  %v579 = vld [vmem:[%s567 + $0x50] sm:$0xff]
                  %580 = vst [vmem:[%s568 + $0x28] sm:$0xff] %v579
                  %v581 = vld [vmem:[%s567 + $0x60] sm:$0xff]
                  %582 = vst [vmem:[%s568 + $0x30] sm:$0xff] %v581
                  %v583 = vld [vmem:[%s567 + $0x70] sm:$0xff]
                  %584 = vst [vmem:[%s568 + $0x38] sm:$0xff] %v583
                  %v585 = vld [vmem:[%s567 + $0x80] sm:$0xff]
                  %586 = vst [vmem:[%s568 + $0x40] sm:$0xff] %v585
                  %v587 = vld [vmem:[%s567 + $0x90] sm:$0xff]
                  %588 = vst [vmem:[%s568 + $0x48] sm:$0xff] %v587
                  %v589 = vld [vmem:[%s567 + $0xa0] sm:$0xff]
                  %590 = vst [vmem:[%s568 + $0x50] sm:$0xff] %v589
                  %v591 = vld [vmem:[%s567 + $0xb0] sm:$0xff]
                  %592 = vst [vmem:[%s568 + $0x58] sm:$0xff] %v591
                  %v593 = vld [vmem:[%s567 + $0xc0] sm:$0xff]
                  %594 = vst [vmem:[%s568 + $0x60] sm:$0xff] %v593
                  %v595 = vld [vmem:[%s567 + $0xd0] sm:$0xff]
                  %596 = vst [vmem:[%s568 + $0x68] sm:$0xff] %v595
                  %v597 = vld [vmem:[%s567 + $0xe0] sm:$0xff]
                  %598 = vst [vmem:[%s568 + $0x70] sm:$0xff] %v597
                  %v599 = vld [vmem:[%s567 + $0xf0] sm:$0xff]
                  %600 = vst [vmem:[%s568 + $0x78] sm:$0xff] %v599
                  %v601 = vld [vmem:[%s567 + $0x100] sm:$0xff]
                  %602 = vst [vmem:[%s568 + $0x80] sm:$0xff] %v601
                  %v603 = vld [vmem:[%s567 + $0x110] sm:$0xff]
                  %604 = vst [vmem:[%s568 + $0x88] sm:$0xff] %v603
                  %v605 = vld [vmem:[%s567 + $0x120] sm:$0xff]
                  %606 = vst [vmem:[%s568 + $0x90] sm:$0xff] %v605
                  %v607 = vld [vmem:[%s567 + $0x130] sm:$0xff]
                  %608 = vst [vmem:[%s568 + $0x98] sm:$0xff] %v607
                  %v609 = vld [vmem:[%s567 + $0x140] sm:$0xff]
                  %610 = vst [vmem:[%s568 + $0xa0] sm:$0xff] %v609
                  %v611 = vld [vmem:[%s567 + $0x150] sm:$0xff]
                  %612 = vst [vmem:[%s568 + $0xa8] sm:$0xff] %v611
                  %v613 = vld [vmem:[%s567 + $0x160] sm:$0xff]
                  %614 = vst [vmem:[%s568 + $0xb0] sm:$0xff] %v613
                  %v615 = vld [vmem:[%s567 + $0x170] sm:$0xff]
                  %616 = vst [vmem:[%s568 + $0xb8] sm:$0xff] %v615
                  %v617 = vld [vmem:[%s567 + $0x180] sm:$0xff]
                  %618 = vst [vmem:[%s568 + $0xc0] sm:$0xff] %v617
                  %v619 = vld [vmem:[%s567 + $0x190] sm:$0xff]
                  %620 = vst [vmem:[%s568 + $0xc8] sm:$0xff] %v619
                  %v621 = vld [vmem:[%s567 + $0x1a0] sm:$0xff]
                  %622 = vst [vmem:[%s568 + $0xd0] sm:$0xff] %v621
                  %v623 = vld [vmem:[%s567 + $0x1b0] sm:$0xff]
                  %624 = vst [vmem:[%s568 + $0xd8] sm:$0xff] %v623
                  %v625 = vld [vmem:[%s567 + $0x1c0] sm:$0xff]
                  %626 = vst [vmem:[%s568 + $0xe0] sm:$0xff] %v625
                  %v627 = vld [vmem:[%s567 + $0x1d0] sm:$0xff]
                  %628 = vst [vmem:[%s568 + $0xe8] sm:$0xff] %v627
                  %v629 = vld [vmem:[%s567 + $0x1e0] sm:$0xff]
                  %630 = vst [vmem:[%s568 + $0xf0] sm:$0xff] %v629
                  %v631 = vld [vmem:[%s567 + $0x1f0] sm:$0xff]
                  %632 = vst [vmem:[%s568 + $0xf8] sm:$0xff] %v631
                  %v633 = vld [vmem:[%s567 + $0x200] sm:$0xff]
                  %634 = vst [vmem:[%s568 + $0x100] sm:$0xff] %v633
                  %v635 = vld [vmem:[%s567 + $0x210] sm:$0xff]
                  %636 = vst [vmem:[%s568 + $0x108] sm:$0xff] %v635
                  %v637 = vld [vmem:[%s567 + $0x220] sm:$0xff]
                  %638 = vst [vmem:[%s568 + $0x110] sm:$0xff] %v637
                  %v639 = vld [vmem:[%s567 + $0x230] sm:$0xff]
                  %640 = vst [vmem:[%s568 + $0x118] sm:$0xff] %v639
                  %v641 = vld [vmem:[%s567 + $0x240] sm:$0xff]
                  %642 = vst [vmem:[%s568 + $0x120] sm:$0xff] %v641
                  %v643 = vld [vmem:[%s567 + $0x250] sm:$0xff]
                  %644 = vst [vmem:[%s568 + $0x128] sm:$0xff] %v643
                  %v645 = vld [vmem:[%s567 + $0x260] sm:$0xff]
                  %646 = vst [vmem:[%s568 + $0x130] sm:$0xff] %v645
                  %v647 = vld [vmem:[%s567 + $0x270] sm:$0xff]
                  %648 = vst [vmem:[%s568 + $0x138] sm:$0xff] %v647
                  %v649 = vld [vmem:[%s567 + $0x280] sm:$0xff]
                  %650 = vst [vmem:[%s568 + $0x140] sm:$0xff] %v649
                  %v651 = vld [vmem:[%s567 + $0x290] sm:$0xff]
                  %652 = vst [vmem:[%s568 + $0x148] sm:$0xff] %v651
                  %v653 = vld [vmem:[%s567 + $0x2a0] sm:$0xff]
                  %654 = vst [vmem:[%s568 + $0x150] sm:$0xff] %v653
                  %v655 = vld [vmem:[%s567 + $0x2b0] sm:$0xff]
                  %656 = vst [vmem:[%s568 + $0x158] sm:$0xff] %v655
                  %v657 = vld [vmem:[%s567 + $0x2c0] sm:$0xff]
                  %658 = vst [vmem:[%s568 + $0x160] sm:$0xff] %v657
                  %v659 = vld [vmem:[%s567 + $0x2d0] sm:$0xff]
                  %660 = vst [vmem:[%s568 + $0x168] sm:$0xff] %v659
                  %v661 = vld [vmem:[%s567 + $0x2e0] sm:$0xff]
                  %662 = vst [vmem:[%s568 + $0x170] sm:$0xff] %v661
                  %v663 = vld [vmem:[%s567 + $0x2f0] sm:$0xff]
                  %664 = vst [vmem:[%s568 + $0x178] sm:$0xff] %v663
                  %v665 = vld [vmem:[%s567 + $0x300] sm:$0xff]
                  %666 = vst [vmem:[%s568 + $0x180] sm:$0xff] %v665
                  %v667 = vld [vmem:[%s567 + $0x310] sm:$0xff]
                  %668 = vst [vmem:[%s568 + $0x188] sm:$0xff] %v667
                  %v669 = vld [vmem:[%s567 + $0x320] sm:$0xff]
                  %670 = vst [vmem:[%s568 + $0x190] sm:$0xff] %v669
                  %v671 = vld [vmem:[%s567 + $0x330] sm:$0xff]
                  %672 = vst [vmem:[%s568 + $0x198] sm:$0xff] %v671
                  %v673 = vld [vmem:[%s567 + $0x340] sm:$0xff]
                  %674 = vst [vmem:[%s568 + $0x1a0] sm:$0xff] %v673
                  %v675 = vld [vmem:[%s567 + $0x350] sm:$0xff]
                  %676 = vst [vmem:[%s568 + $0x1a8] sm:$0xff] %v675
                  %v677 = vld [vmem:[%s567 + $0x360] sm:$0xff]
                  %678 = vst [vmem:[%s568 + $0x1b0] sm:$0xff] %v677
                  %v679 = vld [vmem:[%s567 + $0x370] sm:$0xff]
                  %680 = vst [vmem:[%s568 + $0x1b8] sm:$0xff] %v679
                  %v681 = vld [vmem:[%s567 + $0x380] sm:$0xff]
                  %682 = vst [vmem:[%s568 + $0x1c0] sm:$0xff] %v681
                  %v683 = vld [vmem:[%s567 + $0x390] sm:$0xff]
                  %684 = vst [vmem:[%s568 + $0x1c8] sm:$0xff] %v683
                  %v685 = vld [vmem:[%s567 + $0x3a0] sm:$0xff]
                  %686 = vst [vmem:[%s568 + $0x1d0] sm:$0xff] %v685
                  %v687 = vld [vmem:[%s567 + $0x3b0] sm:$0xff]
                  %688 = vst [vmem:[%s568 + $0x1d8] sm:$0xff] %v687
                  %v689 = vld [vmem:[%s567 + $0x3c0] sm:$0xff]
                  %690 = vst [vmem:[%s568 + $0x1e0] sm:$0xff] %v689
                  %v691 = vld [vmem:[%s567 + $0x3d0] sm:$0xff]
                  %692 = vst [vmem:[%s568 + $0x1e8] sm:$0xff] %v691
                  %v693 = vld [vmem:[%s567 + $0x3e0] sm:$0xff]
                  %694 = vst [vmem:[%s568 + $0x1f0] sm:$0xff] %v693
                  %v695 = vld [vmem:[%s567 + $0x3f0] sm:$0xff]
                  %696 = vst [vmem:[%s568 + $0x1f8] sm:$0xff] %v695
                  %v697 = vld [vmem:[%s567 + $0x400] sm:$0xff]
                  %698 = vst [vmem:[%s568 + $0x200] sm:$0xff] %v697
                  %v699 = vld [vmem:[%s567 + $0x410] sm:$0xff]
                  %700 = vst [vmem:[%s568 + $0x208] sm:$0xff] %v699
                  %v701 = vld [vmem:[%s567 + $0x420] sm:$0xff]
                  %702 = vst [vmem:[%s568 + $0x210] sm:$0xff] %v701
                  %v703 = vld [vmem:[%s567 + $0x430] sm:$0xff]
                  %704 = vst [vmem:[%s568 + $0x218] sm:$0xff] %v703
                  %v705 = vld [vmem:[%s567 + $0x440] sm:$0xff]
                  %706 = vst [vmem:[%s568 + $0x220] sm:$0xff] %v705
                  %v707 = vld [vmem:[%s567 + $0x450] sm:$0xff]
                  %708 = vst [vmem:[%s568 + $0x228] sm:$0xff] %v707
                  %v709 = vld [vmem:[%s567 + $0x460] sm:$0xff]
                  %710 = vst [vmem:[%s568 + $0x230] sm:$0xff] %v709
                  %v711 = vld [vmem:[%s567 + $0x470] sm:$0xff]
                  %712 = vst [vmem:[%s568 + $0x238] sm:$0xff] %v711
                  %v713 = vld [vmem:[%s567 + $0x480] sm:$0xff]
                  %714 = vst [vmem:[%s568 + $0x240] sm:$0xff] %v713
                  %v715 = vld [vmem:[%s567 + $0x490] sm:$0xff]
                  %716 = vst [vmem:[%s568 + $0x248] sm:$0xff] %v715
                  %v717 = vld [vmem:[%s567 + $0x4a0] sm:$0xff]
                  %718 = vst [vmem:[%s568 + $0x250] sm:$0xff] %v717
                  %v719 = vld [vmem:[%s567 + $0x4b0] sm:$0xff]
                  %720 = vst [vmem:[%s568 + $0x258] sm:$0xff] %v719
                  %v721 = vld [vmem:[%s567 + $0x4c0] sm:$0xff]
                  %722 = vst [vmem:[%s568 + $0x260] sm:$0xff] %v721
                  %v723 = vld [vmem:[%s567 + $0x4d0] sm:$0xff]
                  %724 = vst [vmem:[%s568 + $0x268] sm:$0xff] %v723
                  %v725 = vld [vmem:[%s567 + $0x4e0] sm:$0xff]
                  %726 = vst [vmem:[%s568 + $0x270] sm:$0xff] %v725
                  %v727 = vld [vmem:[%s567 + $0x4f0] sm:$0xff]
                  %728 = vst [vmem:[%s568 + $0x278] sm:$0xff] %v727
                  %v729 = vld [vmem:[%s567 + $0x500] sm:$0xff]
                  %730 = vst [vmem:[%s568 + $0x280] sm:$0xff] %v729
                  %v731 = vld [vmem:[%s567 + $0x510] sm:$0xff]
                  %732 = vst [vmem:[%s568 + $0x288] sm:$0xff] %v731
                  %v733 = vld [vmem:[%s567 + $0x520] sm:$0xff]
                  %734 = vst [vmem:[%s568 + $0x290] sm:$0xff] %v733
                  %v735 = vld [vmem:[%s567 + $0x530] sm:$0xff]
                  %736 = vst [vmem:[%s568 + $0x298] sm:$0xff] %v735
                  %v737 = vld [vmem:[%s567 + $0x540] sm:$0xff]
                  %738 = vst [vmem:[%s568 + $0x2a0] sm:$0xff] %v737
                  %v739 = vld [vmem:[%s567 + $0x550] sm:$0xff]
                  %740 = vst [vmem:[%s568 + $0x2a8] sm:$0xff] %v739
                  %v741 = vld [vmem:[%s567 + $0x560] sm:$0xff]
                  %742 = vst [vmem:[%s568 + $0x2b0] sm:$0xff] %v741
                  %v743 = vld [vmem:[%s567 + $0x570] sm:$0xff]
                  %744 = vst [vmem:[%s568 + $0x2b8] sm:$0xff] %v743
                  %v745 = vld [vmem:[%s567 + $0x580] sm:$0xff]
                  %746 = vst [vmem:[%s568 + $0x2c0] sm:$0xff] %v745
                  %v747 = vld [vmem:[%s567 + $0x590] sm:$0xff]
                  %748 = vst [vmem:[%s568 + $0x2c8] sm:$0xff] %v747
                  %v749 = vld [vmem:[%s567 + $0x5a0] sm:$0xff]
                  %750 = vst [vmem:[%s568 + $0x2d0] sm:$0xff] %v749
                  %v751 = vld [vmem:[%s567 + $0x5b0] sm:$0xff]
                  %752 = vst [vmem:[%s568 + $0x2d8] sm:$0xff] %v751
                  %v753 = vld [vmem:[%s567 + $0x5c0] sm:$0xff]
                  %754 = vst [vmem:[%s568 + $0x2e0] sm:$0xff] %v753
                  %v755 = vld [vmem:[%s567 + $0x5d0] sm:$0xff]
                  %756 = vst [vmem:[%s568 + $0x2e8] sm:$0xff] %v755
                  %v757 = vld [vmem:[%s567 + $0x5e0] sm:$0xff]
                  %758 = vst [vmem:[%s568 + $0x2f0] sm:$0xff] %v757
                  %v759 = vld [vmem:[%s567 + $0x5f0] sm:$0xff]
                  %760 = vst [vmem:[%s568 + $0x2f8] sm:$0xff] %v759
                  %v761 = vld [vmem:[%s567 + $0x600] sm:$0xff]
                  %762 = vst [vmem:[%s568 + $0x300] sm:$0xff] %v761
                  %v763 = vld [vmem:[%s567 + $0x610] sm:$0xff]
                  %764 = vst [vmem:[%s568 + $0x308] sm:$0xff] %v763
                  %v765 = vld [vmem:[%s567 + $0x620] sm:$0xff]
                  %766 = vst [vmem:[%s568 + $0x310] sm:$0xff] %v765
                  %v767 = vld [vmem:[%s567 + $0x630] sm:$0xff]
                  %768 = vst [vmem:[%s568 + $0x318] sm:$0xff] %v767
                  %v769 = vld [vmem:[%s567 + $0x640] sm:$0xff]
                  %770 = vst [vmem:[%s568 + $0x320] sm:$0xff] %v769
                  %v771 = vld [vmem:[%s567 + $0x650] sm:$0xff]
                  %772 = vst [vmem:[%s568 + $0x328] sm:$0xff] %v771
                  %v773 = vld [vmem:[%s567 + $0x660] sm:$0xff]
                  %774 = vst [vmem:[%s568 + $0x330] sm:$0xff] %v773
                  %v775 = vld [vmem:[%s567 + $0x670] sm:$0xff]
                  %776 = vst [vmem:[%s568 + $0x338] sm:$0xff] %v775
                  %v777 = vld [vmem:[%s567 + $0x680] sm:$0xff]
                  %778 = vst [vmem:[%s568 + $0x340] sm:$0xff] %v777
                  %v779 = vld [vmem:[%s567 + $0x690] sm:$0xff]
                  %780 = vst [vmem:[%s568 + $0x348] sm:$0xff] %v779
                  %v781 = vld [vmem:[%s567 + $0x6a0] sm:$0xff]
                  %782 = vst [vmem:[%s568 + $0x350] sm:$0xff] %v781
                  %v783 = vld [vmem:[%s567 + $0x6b0] sm:$0xff]
                  %784 = vst [vmem:[%s568 + $0x358] sm:$0xff] %v783
                  %v785 = vld [vmem:[%s567 + $0x6c0] sm:$0xff]
                  %786 = vst [vmem:[%s568 + $0x360] sm:$0xff] %v785
                  %v787 = vld [vmem:[%s567 + $0x6d0] sm:$0xff]
                  %788 = vst [vmem:[%s568 + $0x368] sm:$0xff] %v787
                  %v789 = vld [vmem:[%s567 + $0x6e0] sm:$0xff]
                  %790 = vst [vmem:[%s568 + $0x370] sm:$0xff] %v789
                  %v791 = vld [vmem:[%s567 + $0x6f0] sm:$0xff]
                  %792 = vst [vmem:[%s568 + $0x378] sm:$0xff] %v791
                  %v793 = vld [vmem:[%s567 + $0x700] sm:$0xff]
                  %794 = vst [vmem:[%s568 + $0x380] sm:$0xff] %v793
                  %v795 = vld [vmem:[%s567 + $0x710] sm:$0xff]
                  %796 = vst [vmem:[%s568 + $0x388] sm:$0xff] %v795
                  %v797 = vld [vmem:[%s567 + $0x720] sm:$0xff]
                  %798 = vst [vmem:[%s568 + $0x390] sm:$0xff] %v797
                  %v799 = vld [vmem:[%s567 + $0x730] sm:$0xff]
                  %800 = vst [vmem:[%s568 + $0x398] sm:$0xff] %v799
                  %v801 = vld [vmem:[%s567 + $0x740] sm:$0xff]
                  %802 = vst [vmem:[%s568 + $0x3a0] sm:$0xff] %v801
                  %v803 = vld [vmem:[%s567 + $0x750] sm:$0xff]
                  %804 = vst [vmem:[%s568 + $0x3a8] sm:$0xff] %v803
                  %v805 = vld [vmem:[%s567 + $0x760] sm:$0xff]
                  %806 = vst [vmem:[%s568 + $0x3b0] sm:$0xff] %v805
                  %v807 = vld [vmem:[%s567 + $0x770] sm:$0xff]
                  %808 = vst [vmem:[%s568 + $0x3b8] sm:$0xff] %v807
                  %v809 = vld [vmem:[%s567 + $0x780] sm:$0xff]
                  %810 = vst [vmem:[%s568 + $0x3c0] sm:$0xff] %v809
                  %v811 = vld [vmem:[%s567 + $0x790] sm:$0xff]
                  %812 = vst [vmem:[%s568 + $0x3c8] sm:$0xff] %v811
                  %v813 = vld [vmem:[%s567 + $0x7a0] sm:$0xff]
                  %814 = vst [vmem:[%s568 + $0x3d0] sm:$0xff] %v813
                  %v815 = vld [vmem:[%s567 + $0x7b0] sm:$0xff]
                  %816 = vst [vmem:[%s568 + $0x3d8] sm:$0xff] %v815
                  %v817 = vld [vmem:[%s567 + $0x7c0] sm:$0xff]
                  %818 = vst [vmem:[%s568 + $0x3e0] sm:$0xff] %v817
                  %v819 = vld [vmem:[%s567 + $0x7d0] sm:$0xff]
                  %820 = vst [vmem:[%s568 + $0x3e8] sm:$0xff] %v819
                  %v821 = vld [vmem:[%s567 + $0x7e0] sm:$0xff]
                  %822 = vst [vmem:[%s568 + $0x3f0] sm:$0xff] %v821
                  %v823 = vld [vmem:[%s567 + $0x7f0] sm:$0xff]
                  %824 = vst [vmem:[%s568 + $0x3f8] sm:$0xff] %v823
                  %v825 = vld [vmem:[%s567 + $0x800] sm:$0xff]
                  %826 = vst [vmem:[%s568 + $0x400] sm:$0xff] %v825
                  %v827 = vld [vmem:[%s567 + $0x810] sm:$0xff]
                  %828 = vst [vmem:[%s568 + $0x408] sm:$0xff] %v827
                  %v829 = vld [vmem:[%s567 + $0x820] sm:$0xff]
                  %830 = vst [vmem:[%s568 + $0x410] sm:$0xff] %v829
                  %v831 = vld [vmem:[%s567 + $0x830] sm:$0xff]
                  %832 = vst [vmem:[%s568 + $0x418] sm:$0xff] %v831
                  %v833 = vld [vmem:[%s567 + $0x840] sm:$0xff]
                  %834 = vst [vmem:[%s568 + $0x420] sm:$0xff] %v833
                  %v835 = vld [vmem:[%s567 + $0x850] sm:$0xff]
                  %836 = vst [vmem:[%s568 + $0x428] sm:$0xff] %v835
                  %v837 = vld [vmem:[%s567 + $0x860] sm:$0xff]
                  %838 = vst [vmem:[%s568 + $0x430] sm:$0xff] %v837
                  %v839 = vld [vmem:[%s567 + $0x870] sm:$0xff]
                  %840 = vst [vmem:[%s568 + $0x438] sm:$0xff] %v839
                  %v841 = vld [vmem:[%s567 + $0x880] sm:$0xff]
                  %842 = vst [vmem:[%s568 + $0x440] sm:$0xff] %v841
                  %v843 = vld [vmem:[%s567 + $0x890] sm:$0xff]
                  %844 = vst [vmem:[%s568 + $0x448] sm:$0xff] %v843
                  %v845 = vld [vmem:[%s567 + $0x8a0] sm:$0xff]
                  %846 = vst [vmem:[%s568 + $0x450] sm:$0xff] %v845
                  %v847 = vld [vmem:[%s567 + $0x8b0] sm:$0xff]
                  %848 = vst [vmem:[%s568 + $0x458] sm:$0xff] %v847
                  %v849 = vld [vmem:[%s567 + $0x8c0] sm:$0xff]
                  %850 = vst [vmem:[%s568 + $0x460] sm:$0xff] %v849
                  %v851 = vld [vmem:[%s567 + $0x8d0] sm:$0xff]
                  %852 = vst [vmem:[%s568 + $0x468] sm:$0xff] %v851
                  %v853 = vld [vmem:[%s567 + $0x8e0] sm:$0xff]
                  %854 = vst [vmem:[%s568 + $0x470] sm:$0xff] %v853
                  %v855 = vld [vmem:[%s567 + $0x8f0] sm:$0xff]
                  %856 = vst [vmem:[%s568 + $0x478] sm:$0xff] %v855
                  %v857 = vld [vmem:[%s567 + $0x900] sm:$0xff]
                  %858 = vst [vmem:[%s568 + $0x480] sm:$0xff] %v857
                  %v859 = vld [vmem:[%s567 + $0x910] sm:$0xff]
                  %860 = vst [vmem:[%s568 + $0x488] sm:$0xff] %v859
                  %v861 = vld [vmem:[%s567 + $0x920] sm:$0xff]
                  %862 = vst [vmem:[%s568 + $0x490] sm:$0xff] %v861
                  %v863 = vld [vmem:[%s567 + $0x930] sm:$0xff]
                  %864 = vst [vmem:[%s568 + $0x498] sm:$0xff] %v863
                  %v865 = vld [vmem:[%s567 + $0x940] sm:$0xff]
                  %866 = vst [vmem:[%s568 + $0x4a0] sm:$0xff] %v865
                  %v867 = vld [vmem:[%s567 + $0x950] sm:$0xff]
                  %868 = vst [vmem:[%s568 + $0x4a8] sm:$0xff] %v867
                  %v869 = vld [vmem:[%s567 + $0x960] sm:$0xff]
                  %870 = vst [vmem:[%s568 + $0x4b0] sm:$0xff] %v869
                  %v871 = vld [vmem:[%s567 + $0x970] sm:$0xff]
                  %872 = vst [vmem:[%s568 + $0x4b8] sm:$0xff] %v871
                  %v873 = vld [vmem:[%s567 + $0x980] sm:$0xff]
                  %874 = vst [vmem:[%s568 + $0x4c0] sm:$0xff] %v873
                  %v875 = vld [vmem:[%s567 + $0x990] sm:$0xff]
                  %876 = vst [vmem:[%s568 + $0x4c8] sm:$0xff] %v875
                  %v877 = vld [vmem:[%s567 + $0x9a0] sm:$0xff]
                  %878 = vst [vmem:[%s568 + $0x4d0] sm:$0xff] %v877
                  %v879 = vld [vmem:[%s567 + $0x9b0] sm:$0xff]
                  %880 = vst [vmem:[%s568 + $0x4d8] sm:$0xff] %v879
                  %v881 = vld [vmem:[%s567 + $0x9c0] sm:$0xff]
                  %882 = vst [vmem:[%s568 + $0x4e0] sm:$0xff] %v881
                  %v883 = vld [vmem:[%s567 + $0x9d0] sm:$0xff]
                  %884 = vst [vmem:[%s568 + $0x4e8] sm:$0xff] %v883
                  %v885 = vld [vmem:[%s567 + $0x9e0] sm:$0xff]
                  %886 = vst [vmem:[%s568 + $0x4f0] sm:$0xff] %v885
                  %v887 = vld [vmem:[%s567 + $0x9f0] sm:$0xff]
                  %888 = vst [vmem:[%s568 + $0x4f8] sm:$0xff] %v887
                  %v889 = vld [vmem:[%s567 + $0xa00] sm:$0xff]
                  %890 = vst [vmem:[%s568 + $0x500] sm:$0xff] %v889
                  %v891 = vld [vmem:[%s567 + $0xa10] sm:$0xff]
                  %892 = vst [vmem:[%s568 + $0x508] sm:$0xff] %v891
                  %v893 = vld [vmem:[%s567 + $0xa20] sm:$0xff]
                  %894 = vst [vmem:[%s568 + $0x510] sm:$0xff] %v893
                  %v895 = vld [vmem:[%s567 + $0xa30] sm:$0xff]
                  %896 = vst [vmem:[%s568 + $0x518] sm:$0xff] %v895
                  %v897 = vld [vmem:[%s567 + $0xa40] sm:$0xff]
                  %898 = vst [vmem:[%s568 + $0x520] sm:$0xff] %v897
                  %v899 = vld [vmem:[%s567 + $0xa50] sm:$0xff]
                  %900 = vst [vmem:[%s568 + $0x528] sm:$0xff] %v899
                  %v901 = vld [vmem:[%s567 + $0xa60] sm:$0xff]
                  %902 = vst [vmem:[%s568 + $0x530] sm:$0xff] %v901
                  %v903 = vld [vmem:[%s567 + $0xa70] sm:$0xff]
                  %904 = vst [vmem:[%s568 + $0x538] sm:$0xff] %v903
                  %v905 = vld [vmem:[%s567 + $0xa80] sm:$0xff]
                  %906 = vst [vmem:[%s568 + $0x540] sm:$0xff] %v905
                  %v907 = vld [vmem:[%s567 + $0xa90] sm:$0xff]
                  %908 = vst [vmem:[%s568 + $0x548] sm:$0xff] %v907
                  %v909 = vld [vmem:[%s567 + $0xaa0] sm:$0xff]
                  %910 = vst [vmem:[%s568 + $0x550] sm:$0xff] %v909
                  %v911 = vld [vmem:[%s567 + $0xab0] sm:$0xff]
                  %912 = vst [vmem:[%s568 + $0x558] sm:$0xff] %v911
                  %v913 = vld [vmem:[%s567 + $0xac0] sm:$0xff]
                  %914 = vst [vmem:[%s568 + $0x560] sm:$0xff] %v913
                  %v915 = vld [vmem:[%s567 + $0xad0] sm:$0xff]
                  %916 = vst [vmem:[%s568 + $0x568] sm:$0xff] %v915
                  %v917 = vld [vmem:[%s567 + $0xae0] sm:$0xff]
                  %918 = vst [vmem:[%s568 + $0x570] sm:$0xff] %v917
                  %v919 = vld [vmem:[%s567 + $0xaf0] sm:$0xff]
                  %920 = vst [vmem:[%s568 + $0x578] sm:$0xff] %v919
                  %v921 = vld [vmem:[%s567 + $0xb00] sm:$0xff]
                  %922 = vst [vmem:[%s568 + $0x580] sm:$0xff] %v921
                  %v923 = vld [vmem:[%s567 + $0xb10] sm:$0xff]
                  %924 = vst [vmem:[%s568 + $0x588] sm:$0xff] %v923
                  %v925 = vld [vmem:[%s567 + $0xb20] sm:$0xff]
                  %926 = vst [vmem:[%s568 + $0x590] sm:$0xff] %v925
                  %v927 = vld [vmem:[%s567 + $0xb30] sm:$0xff]
                  %928 = vst [vmem:[%s568 + $0x598] sm:$0xff] %v927
                  %v929 = vld [vmem:[%s567 + $0xb40] sm:$0xff]
                  %930 = vst [vmem:[%s568 + $0x5a0] sm:$0xff] %v929
                  %v931 = vld [vmem:[%s567 + $0xb50] sm:$0xff]
                  %932 = vst [vmem:[%s568 + $0x5a8] sm:$0xff] %v931
                  %v933 = vld [vmem:[%s567 + $0xb60] sm:$0xff]
                  %934 = vst [vmem:[%s568 + $0x5b0] sm:$0xff] %v933
                  %v935 = vld [vmem:[%s567 + $0xb70] sm:$0xff]
                  %936 = vst [vmem:[%s568 + $0x5b8] sm:$0xff] %v935
                  %v937 = vld [vmem:[%s567 + $0xb80] sm:$0xff]
                  %938 = vst [vmem:[%s568 + $0x5c0] sm:$0xff] %v937
                  %v939 = vld [vmem:[%s567 + $0xb90] sm:$0xff]
                  %940 = vst [vmem:[%s568 + $0x5c8] sm:$0xff] %v939
                  %v941 = vld [vmem:[%s567 + $0xba0] sm:$0xff]
                  %942 = vst [vmem:[%s568 + $0x5d0] sm:$0xff] %v941
                  %v943 = vld [vmem:[%s567 + $0xbb0] sm:$0xff]
                  %944 = vst [vmem:[%s568 + $0x5d8] sm:$0xff] %v943
                  %v945 = vld [vmem:[%s567 + $0xbc0] sm:$0xff]
                  %946 = vst [vmem:[%s568 + $0x5e0] sm:$0xff] %v945
                  %v947 = vld [vmem:[%s567 + $0xbd0] sm:$0xff]
                  %948 = vst [vmem:[%s568 + $0x5e8] sm:$0xff] %v947
                  %v949 = vld [vmem:[%s567 + $0xbe0] sm:$0xff]
                  %950 = vst [vmem:[%s568 + $0x5f0] sm:$0xff] %v949
                  %v951 = vld [vmem:[%s567 + $0xbf0] sm:$0xff]
                  %952 = vst [vmem:[%s568 + $0x5f8] sm:$0xff] %v951
                  %v953 = vld [vmem:[%s567 + $0xc00] sm:$0xff]
                  %954 = vst [vmem:[%s568 + $0x600] sm:$0xff] %v953
                  %v955 = vld [vmem:[%s567 + $0xc10] sm:$0xff]
                  %956 = vst [vmem:[%s568 + $0x608] sm:$0xff] %v955
                  %v957 = vld [vmem:[%s567 + $0xc20] sm:$0xff]
                  %958 = vst [vmem:[%s568 + $0x610] sm:$0xff] %v957
                  %v959 = vld [vmem:[%s567 + $0xc30] sm:$0xff]
                  %960 = vst [vmem:[%s568 + $0x618] sm:$0xff] %v959
                  %v961 = vld [vmem:[%s567 + $0xc40] sm:$0xff]
                  %962 = vst [vmem:[%s568 + $0x620] sm:$0xff] %v961
                  %v963 = vld [vmem:[%s567 + $0xc50] sm:$0xff]
                  %964 = vst [vmem:[%s568 + $0x628] sm:$0xff] %v963
                  %v965 = vld [vmem:[%s567 + $0xc60] sm:$0xff]
                  %966 = vst [vmem:[%s568 + $0x630] sm:$0xff] %v965
                  %v967 = vld [vmem:[%s567 + $0xc70] sm:$0xff]
                  %968 = vst [vmem:[%s568 + $0x638] sm:$0xff] %v967
                $region52: #{_rnd_forward_impl.13} parent=46 // loop_footer
                  %s566 = sadd.s32 1, %s562
                $region53: #{_rnd_forward_impl.13} parent=46 // loop_footer_branch
                  %561 = sbr.rel target = $region49
                $region54: #{_rnd_forward_impl.13} parent=46 // loop_exit
                  _
              $region47: #{_rnd_forward_impl.13} parent=31 // pred_fallthru
                _
              // Predicated region
              $region55: #{_rnd_forward_impl.13} parent=31 // pred_check
                _
              $region56: #{_rnd_forward_impl.13} parent=31 // pred_check_branch
                %970 = sbr.rel target = $region58
              $region57: #{_rnd_forward_impl.13} parent=31 // pred_region
                _
              $region58: #{_rnd_forward_impl.13} parent=31 // pred_fallthru
                _
            $region32: #{_rnd_forward_impl.13} parent=27 // pred_fallthru
              _
            // Predicated region
            $region33: #{_rnd_forward_impl.13} parent=27 // pred_check
              _
            $region34: #{_rnd_forward_impl.13} parent=27 // pred_check_branch
              %148 = sbr.rel target = $region36
            $region35: #{_rnd_forward_impl.13} parent=27 // pred_region
              %s150 = ssub.s32 256, 1
              loop: start=0, step=1, limit=1
              $region37: #{_rnd_forward_impl.13} parent=35 // loop_pre_header
                _
              $region38: #{_rnd_forward_impl.13} parent=35 // loop_header
                %s152 = sphi 0, %s156
                %p153 = scmp.ge.s32.totalorder %s152, 1
                %s157 = sphi %s142, %s142
                %s158 = sphi %s139, %s139
              $region39: #{_rnd_forward_impl.13} parent=35 // loop_header_branch
                %155 = sbr.rel (%p153) target = $region43
              $region40: #{_rnd_forward_impl.13} parent=35 // loop_body
                %v159 = vld [vmem:[%s157] sm:%s150]
                %160 = vst [vmem:[%s158] sm:%s150] %v159
                %v161 = vld [vmem:[%s157 + $0x10] sm:%s150]
                %162 = vst [vmem:[%s158 + $0x8] sm:%s150] %v161
                %v163 = vld [vmem:[%s157 + $0x20] sm:%s150]
                %164 = vst [vmem:[%s158 + $0x10] sm:%s150] %v163
                %v165 = vld [vmem:[%s157 + $0x30] sm:%s150]
                %166 = vst [vmem:[%s158 + $0x18] sm:%s150] %v165
                %v167 = vld [vmem:[%s157 + $0x40] sm:%s150]
                %168 = vst [vmem:[%s158 + $0x20] sm:%s150] %v167
                %v169 = vld [vmem:[%s157 + $0x50] sm:%s150]
                %170 = vst [vmem:[%s158 + $0x28] sm:%s150] %v169
                %v171 = vld [vmem:[%s157 + $0x60] sm:%s150]
                %172 = vst [vmem:[%s158 + $0x30] sm:%s150] %v171
                %v173 = vld [vmem:[%s157 + $0x70] sm:%s150]
                %174 = vst [vmem:[%s158 + $0x38] sm:%s150] %v173
                %v175 = vld [vmem:[%s157 + $0x80] sm:%s150]
                %176 = vst [vmem:[%s158 + $0x40] sm:%s150] %v175
                %v177 = vld [vmem:[%s157 + $0x90] sm:%s150]
                %178 = vst [vmem:[%s158 + $0x48] sm:%s150] %v177
                %v179 = vld [vmem:[%s157 + $0xa0] sm:%s150]
                %180 = vst [vmem:[%s158 + $0x50] sm:%s150] %v179
                %v181 = vld [vmem:[%s157 + $0xb0] sm:%s150]
                %182 = vst [vmem:[%s158 + $0x58] sm:%s150] %v181
                %v183 = vld [vmem:[%s157 + $0xc0] sm:%s150]
                %184 = vst [vmem:[%s158 + $0x60] sm:%s150] %v183
                %v185 = vld [vmem:[%s157 + $0xd0] sm:%s150]
                %186 = vst [vmem:[%s158 + $0x68] sm:%s150] %v185
                %v187 = vld [vmem:[%s157 + $0xe0] sm:%s150]
                %188 = vst [vmem:[%s158 + $0x70] sm:%s150] %v187
                %v189 = vld [vmem:[%s157 + $0xf0] sm:%s150]
                %190 = vst [vmem:[%s158 + $0x78] sm:%s150] %v189
                %v191 = vld [vmem:[%s157 + $0x100] sm:%s150]
                %192 = vst [vmem:[%s158 + $0x80] sm:%s150] %v191
                %v193 = vld [vmem:[%s157 + $0x110] sm:%s150]
                %194 = vst [vmem:[%s158 + $0x88] sm:%s150] %v193
                %v195 = vld [vmem:[%s157 + $0x120] sm:%s150]
                %196 = vst [vmem:[%s158 + $0x90] sm:%s150] %v195
                %v197 = vld [vmem:[%s157 + $0x130] sm:%s150]
                %198 = vst [vmem:[%s158 + $0x98] sm:%s150] %v197
                %v199 = vld [vmem:[%s157 + $0x140] sm:%s150]
                %200 = vst [vmem:[%s158 + $0xa0] sm:%s150] %v199
                %v201 = vld [vmem:[%s157 + $0x150] sm:%s150]
                %202 = vst [vmem:[%s158 + $0xa8] sm:%s150] %v201
                %v203 = vld [vmem:[%s157 + $0x160] sm:%s150]
                %204 = vst [vmem:[%s158 + $0xb0] sm:%s150] %v203
                %v205 = vld [vmem:[%s157 + $0x170] sm:%s150]
                %206 = vst [vmem:[%s158 + $0xb8] sm:%s150] %v205
                %v207 = vld [vmem:[%s157 + $0x180] sm:%s150]
                %208 = vst [vmem:[%s158 + $0xc0] sm:%s150] %v207
                %v209 = vld [vmem:[%s157 + $0x190] sm:%s150]
                %210 = vst [vmem:[%s158 + $0xc8] sm:%s150] %v209
                %v211 = vld [vmem:[%s157 + $0x1a0] sm:%s150]
                %212 = vst [vmem:[%s158 + $0xd0] sm:%s150] %v211
                %v213 = vld [vmem:[%s157 + $0x1b0] sm:%s150]
                %214 = vst [vmem:[%s158 + $0xd8] sm:%s150] %v213
                %v215 = vld [vmem:[%s157 + $0x1c0] sm:%s150]
                %216 = vst [vmem:[%s158 + $0xe0] sm:%s150] %v215
                %v217 = vld [vmem:[%s157 + $0x1d0] sm:%s150]
                %218 = vst [vmem:[%s158 + $0xe8] sm:%s150] %v217
                %v219 = vld [vmem:[%s157 + $0x1e0] sm:%s150]
                %220 = vst [vmem:[%s158 + $0xf0] sm:%s150] %v219
                %v221 = vld [vmem:[%s157 + $0x1f0] sm:%s150]
                %222 = vst [vmem:[%s158 + $0xf8] sm:%s150] %v221
                %v223 = vld [vmem:[%s157 + $0x200] sm:%s150]
                %224 = vst [vmem:[%s158 + $0x100] sm:%s150] %v223
                %v225 = vld [vmem:[%s157 + $0x210] sm:%s150]
                %226 = vst [vmem:[%s158 + $0x108] sm:%s150] %v225
                %v227 = vld [vmem:[%s157 + $0x220] sm:%s150]
                %228 = vst [vmem:[%s158 + $0x110] sm:%s150] %v227
                %v229 = vld [vmem:[%s157 + $0x230] sm:%s150]
                %230 = vst [vmem:[%s158 + $0x118] sm:%s150] %v229
                %v231 = vld [vmem:[%s157 + $0x240] sm:%s150]
                %232 = vst [vmem:[%s158 + $0x120] sm:%s150] %v231
                %v233 = vld [vmem:[%s157 + $0x250] sm:%s150]
                %234 = vst [vmem:[%s158 + $0x128] sm:%s150] %v233
                %v235 = vld [vmem:[%s157 + $0x260] sm:%s150]
                %236 = vst [vmem:[%s158 + $0x130] sm:%s150] %v235
                %v237 = vld [vmem:[%s157 + $0x270] sm:%s150]
                %238 = vst [vmem:[%s158 + $0x138] sm:%s150] %v237
                %v239 = vld [vmem:[%s157 + $0x280] sm:%s150]
                %240 = vst [vmem:[%s158 + $0x140] sm:%s150] %v239
                %v241 = vld [vmem:[%s157 + $0x290] sm:%s150]
                %242 = vst [vmem:[%s158 + $0x148] sm:%s150] %v241
                %v243 = vld [vmem:[%s157 + $0x2a0] sm:%s150]
                %244 = vst [vmem:[%s158 + $0x150] sm:%s150] %v243
                %v245 = vld [vmem:[%s157 + $0x2b0] sm:%s150]
                %246 = vst [vmem:[%s158 + $0x158] sm:%s150] %v245
                %v247 = vld [vmem:[%s157 + $0x2c0] sm:%s150]
                %248 = vst [vmem:[%s158 + $0x160] sm:%s150] %v247
                %v249 = vld [vmem:[%s157 + $0x2d0] sm:%s150]
                %250 = vst [vmem:[%s158 + $0x168] sm:%s150] %v249
                %v251 = vld [vmem:[%s157 + $0x2e0] sm:%s150]
                %252 = vst [vmem:[%s158 + $0x170] sm:%s150] %v251
                %v253 = vld [vmem:[%s157 + $0x2f0] sm:%s150]
                %254 = vst [vmem:[%s158 + $0x178] sm:%s150] %v253
                %v255 = vld [vmem:[%s157 + $0x300] sm:%s150]
                %256 = vst [vmem:[%s158 + $0x180] sm:%s150] %v255
                %v257 = vld [vmem:[%s157 + $0x310] sm:%s150]
                %258 = vst [vmem:[%s158 + $0x188] sm:%s150] %v257
                %v259 = vld [vmem:[%s157 + $0x320] sm:%s150]
                %260 = vst [vmem:[%s158 + $0x190] sm:%s150] %v259
                %v261 = vld [vmem:[%s157 + $0x330] sm:%s150]
                %262 = vst [vmem:[%s158 + $0x198] sm:%s150] %v261
                %v263 = vld [vmem:[%s157 + $0x340] sm:%s150]
                %264 = vst [vmem:[%s158 + $0x1a0] sm:%s150] %v263
                %v265 = vld [vmem:[%s157 + $0x350] sm:%s150]
                %266 = vst [vmem:[%s158 + $0x1a8] sm:%s150] %v265
                %v267 = vld [vmem:[%s157 + $0x360] sm:%s150]
                %268 = vst [vmem:[%s158 + $0x1b0] sm:%s150] %v267
                %v269 = vld [vmem:[%s157 + $0x370] sm:%s150]
                %270 = vst [vmem:[%s158 + $0x1b8] sm:%s150] %v269
                %v271 = vld [vmem:[%s157 + $0x380] sm:%s150]
                %272 = vst [vmem:[%s158 + $0x1c0] sm:%s150] %v271
                %v273 = vld [vmem:[%s157 + $0x390] sm:%s150]
                %274 = vst [vmem:[%s158 + $0x1c8] sm:%s150] %v273
                %v275 = vld [vmem:[%s157 + $0x3a0] sm:%s150]
                %276 = vst [vmem:[%s158 + $0x1d0] sm:%s150] %v275
                %v277 = vld [vmem:[%s157 + $0x3b0] sm:%s150]
                %278 = vst [vmem:[%s158 + $0x1d8] sm:%s150] %v277
                %v279 = vld [vmem:[%s157 + $0x3c0] sm:%s150]
                %280 = vst [vmem:[%s158 + $0x1e0] sm:%s150] %v279
                %v281 = vld [vmem:[%s157 + $0x3d0] sm:%s150]
                %282 = vst [vmem:[%s158 + $0x1e8] sm:%s150] %v281
                %v283 = vld [vmem:[%s157 + $0x3e0] sm:%s150]
                %284 = vst [vmem:[%s158 + $0x1f0] sm:%s150] %v283
                %v285 = vld [vmem:[%s157 + $0x3f0] sm:%s150]
                %286 = vst [vmem:[%s158 + $0x1f8] sm:%s150] %v285
                %v287 = vld [vmem:[%s157 + $0x400] sm:%s150]
                %288 = vst [vmem:[%s158 + $0x200] sm:%s150] %v287
                %v289 = vld [vmem:[%s157 + $0x410] sm:%s150]
                %290 = vst [vmem:[%s158 + $0x208] sm:%s150] %v289
                %v291 = vld [vmem:[%s157 + $0x420] sm:%s150]
                %292 = vst [vmem:[%s158 + $0x210] sm:%s150] %v291
                %v293 = vld [vmem:[%s157 + $0x430] sm:%s150]
                %294 = vst [vmem:[%s158 + $0x218] sm:%s150] %v293
                %v295 = vld [vmem:[%s157 + $0x440] sm:%s150]
                %296 = vst [vmem:[%s158 + $0x220] sm:%s150] %v295
                %v297 = vld [vmem:[%s157 + $0x450] sm:%s150]
                %298 = vst [vmem:[%s158 + $0x228] sm:%s150] %v297
                %v299 = vld [vmem:[%s157 + $0x460] sm:%s150]
                %300 = vst [vmem:[%s158 + $0x230] sm:%s150] %v299
                %v301 = vld [vmem:[%s157 + $0x470] sm:%s150]
                %302 = vst [vmem:[%s158 + $0x238] sm:%s150] %v301
                %v303 = vld [vmem:[%s157 + $0x480] sm:%s150]
                %304 = vst [vmem:[%s158 + $0x240] sm:%s150] %v303
                %v305 = vld [vmem:[%s157 + $0x490] sm:%s150]
                %306 = vst [vmem:[%s158 + $0x248] sm:%s150] %v305
                %v307 = vld [vmem:[%s157 + $0x4a0] sm:%s150]
                %308 = vst [vmem:[%s158 + $0x250] sm:%s150] %v307
                %v309 = vld [vmem:[%s157 + $0x4b0] sm:%s150]
                %310 = vst [vmem:[%s158 + $0x258] sm:%s150] %v309
                %v311 = vld [vmem:[%s157 + $0x4c0] sm:%s150]
                %312 = vst [vmem:[%s158 + $0x260] sm:%s150] %v311
                %v313 = vld [vmem:[%s157 + $0x4d0] sm:%s150]
                %314 = vst [vmem:[%s158 + $0x268] sm:%s150] %v313
                %v315 = vld [vmem:[%s157 + $0x4e0] sm:%s150]
                %316 = vst [vmem:[%s158 + $0x270] sm:%s150] %v315
                %v317 = vld [vmem:[%s157 + $0x4f0] sm:%s150]
                %318 = vst [vmem:[%s158 + $0x278] sm:%s150] %v317
                %v319 = vld [vmem:[%s157 + $0x500] sm:%s150]
                %320 = vst [vmem:[%s158 + $0x280] sm:%s150] %v319
                %v321 = vld [vmem:[%s157 + $0x510] sm:%s150]
                %322 = vst [vmem:[%s158 + $0x288] sm:%s150] %v321
                %v323 = vld [vmem:[%s157 + $0x520] sm:%s150]
                %324 = vst [vmem:[%s158 + $0x290] sm:%s150] %v323
                %v325 = vld [vmem:[%s157 + $0x530] sm:%s150]
                %326 = vst [vmem:[%s158 + $0x298] sm:%s150] %v325
                %v327 = vld [vmem:[%s157 + $0x540] sm:%s150]
                %328 = vst [vmem:[%s158 + $0x2a0] sm:%s150] %v327
                %v329 = vld [vmem:[%s157 + $0x550] sm:%s150]
                %330 = vst [vmem:[%s158 + $0x2a8] sm:%s150] %v329
                %v331 = vld [vmem:[%s157 + $0x560] sm:%s150]
                %332 = vst [vmem:[%s158 + $0x2b0] sm:%s150] %v331
                %v333 = vld [vmem:[%s157 + $0x570] sm:%s150]
                %334 = vst [vmem:[%s158 + $0x2b8] sm:%s150] %v333
                %v335 = vld [vmem:[%s157 + $0x580] sm:%s150]
                %336 = vst [vmem:[%s158 + $0x2c0] sm:%s150] %v335
                %v337 = vld [vmem:[%s157 + $0x590] sm:%s150]
                %338 = vst [vmem:[%s158 + $0x2c8] sm:%s150] %v337
                %v339 = vld [vmem:[%s157 + $0x5a0] sm:%s150]
                %340 = vst [vmem:[%s158 + $0x2d0] sm:%s150] %v339
                %v341 = vld [vmem:[%s157 + $0x5b0] sm:%s150]
                %342 = vst [vmem:[%s158 + $0x2d8] sm:%s150] %v341
                %v343 = vld [vmem:[%s157 + $0x5c0] sm:%s150]
                %344 = vst [vmem:[%s158 + $0x2e0] sm:%s150] %v343
                %v345 = vld [vmem:[%s157 + $0x5d0] sm:%s150]
                %346 = vst [vmem:[%s158 + $0x2e8] sm:%s150] %v345
                %v347 = vld [vmem:[%s157 + $0x5e0] sm:%s150]
                %348 = vst [vmem:[%s158 + $0x2f0] sm:%s150] %v347
                %v349 = vld [vmem:[%s157 + $0x5f0] sm:%s150]
                %350 = vst [vmem:[%s158 + $0x2f8] sm:%s150] %v349
                %v351 = vld [vmem:[%s157 + $0x600] sm:%s150]
                %352 = vst [vmem:[%s158 + $0x300] sm:%s150] %v351
                %v353 = vld [vmem:[%s157 + $0x610] sm:%s150]
                %354 = vst [vmem:[%s158 + $0x308] sm:%s150] %v353
                %v355 = vld [vmem:[%s157 + $0x620] sm:%s150]
                %356 = vst [vmem:[%s158 + $0x310] sm:%s150] %v355
                %v357 = vld [vmem:[%s157 + $0x630] sm:%s150]
                %358 = vst [vmem:[%s158 + $0x318] sm:%s150] %v357
                %v359 = vld [vmem:[%s157 + $0x640] sm:%s150]
                %360 = vst [vmem:[%s158 + $0x320] sm:%s150] %v359
                %v361 = vld [vmem:[%s157 + $0x650] sm:%s150]
                %362 = vst [vmem:[%s158 + $0x328] sm:%s150] %v361
                %v363 = vld [vmem:[%s157 + $0x660] sm:%s150]
                %364 = vst [vmem:[%s158 + $0x330] sm:%s150] %v363
                %v365 = vld [vmem:[%s157 + $0x670] sm:%s150]
                %366 = vst [vmem:[%s158 + $0x338] sm:%s150] %v365
                %v367 = vld [vmem:[%s157 + $0x680] sm:%s150]
                %368 = vst [vmem:[%s158 + $0x340] sm:%s150] %v367
                %v369 = vld [vmem:[%s157 + $0x690] sm:%s150]
                %370 = vst [vmem:[%s158 + $0x348] sm:%s150] %v369
                %v371 = vld [vmem:[%s157 + $0x6a0] sm:%s150]
                %372 = vst [vmem:[%s158 + $0x350] sm:%s150] %v371
                %v373 = vld [vmem:[%s157 + $0x6b0] sm:%s150]
                %374 = vst [vmem:[%s158 + $0x358] sm:%s150] %v373
                %v375 = vld [vmem:[%s157 + $0x6c0] sm:%s150]
                %376 = vst [vmem:[%s158 + $0x360] sm:%s150] %v375
                %v377 = vld [vmem:[%s157 + $0x6d0] sm:%s150]
                %378 = vst [vmem:[%s158 + $0x368] sm:%s150] %v377
                %v379 = vld [vmem:[%s157 + $0x6e0] sm:%s150]
                %380 = vst [vmem:[%s158 + $0x370] sm:%s150] %v379
                %v381 = vld [vmem:[%s157 + $0x6f0] sm:%s150]
                %382 = vst [vmem:[%s158 + $0x378] sm:%s150] %v381
                %v383 = vld [vmem:[%s157 + $0x700] sm:%s150]
                %384 = vst [vmem:[%s158 + $0x380] sm:%s150] %v383
                %v385 = vld [vmem:[%s157 + $0x710] sm:%s150]
                %386 = vst [vmem:[%s158 + $0x388] sm:%s150] %v385
                %v387 = vld [vmem:[%s157 + $0x720] sm:%s150]
                %388 = vst [vmem:[%s158 + $0x390] sm:%s150] %v387
                %v389 = vld [vmem:[%s157 + $0x730] sm:%s150]
                %390 = vst [vmem:[%s158 + $0x398] sm:%s150] %v389
                %v391 = vld [vmem:[%s157 + $0x740] sm:%s150]
                %392 = vst [vmem:[%s158 + $0x3a0] sm:%s150] %v391
                %v393 = vld [vmem:[%s157 + $0x750] sm:%s150]
                %394 = vst [vmem:[%s158 + $0x3a8] sm:%s150] %v393
                %v395 = vld [vmem:[%s157 + $0x760] sm:%s150]
                %396 = vst [vmem:[%s158 + $0x3b0] sm:%s150] %v395
                %v397 = vld [vmem:[%s157 + $0x770] sm:%s150]
                %398 = vst [vmem:[%s158 + $0x3b8] sm:%s150] %v397
                %v399 = vld [vmem:[%s157 + $0x780] sm:%s150]
                %400 = vst [vmem:[%s158 + $0x3c0] sm:%s150] %v399
                %v401 = vld [vmem:[%s157 + $0x790] sm:%s150]
                %402 = vst [vmem:[%s158 + $0x3c8] sm:%s150] %v401
                %v403 = vld [vmem:[%s157 + $0x7a0] sm:%s150]
                %404 = vst [vmem:[%s158 + $0x3d0] sm:%s150] %v403
                %v405 = vld [vmem:[%s157 + $0x7b0] sm:%s150]
                %406 = vst [vmem:[%s158 + $0x3d8] sm:%s150] %v405
                %v407 = vld [vmem:[%s157 + $0x7c0] sm:%s150]
                %408 = vst [vmem:[%s158 + $0x3e0] sm:%s150] %v407
                %v409 = vld [vmem:[%s157 + $0x7d0] sm:%s150]
                %410 = vst [vmem:[%s158 + $0x3e8] sm:%s150] %v409
                %v411 = vld [vmem:[%s157 + $0x7e0] sm:%s150]
                %412 = vst [vmem:[%s158 + $0x3f0] sm:%s150] %v411
                %v413 = vld [vmem:[%s157 + $0x7f0] sm:%s150]
                %414 = vst [vmem:[%s158 + $0x3f8] sm:%s150] %v413
                %v415 = vld [vmem:[%s157 + $0x800] sm:%s150]
                %416 = vst [vmem:[%s158 + $0x400] sm:%s150] %v415
                %v417 = vld [vmem:[%s157 + $0x810] sm:%s150]
                %418 = vst [vmem:[%s158 + $0x408] sm:%s150] %v417
                %v419 = vld [vmem:[%s157 + $0x820] sm:%s150]
                %420 = vst [vmem:[%s158 + $0x410] sm:%s150] %v419
                %v421 = vld [vmem:[%s157 + $0x830] sm:%s150]
                %422 = vst [vmem:[%s158 + $0x418] sm:%s150] %v421
                %v423 = vld [vmem:[%s157 + $0x840] sm:%s150]
                %424 = vst [vmem:[%s158 + $0x420] sm:%s150] %v423
                %v425 = vld [vmem:[%s157 + $0x850] sm:%s150]
                %426 = vst [vmem:[%s158 + $0x428] sm:%s150] %v425
                %v427 = vld [vmem:[%s157 + $0x860] sm:%s150]
                %428 = vst [vmem:[%s158 + $0x430] sm:%s150] %v427
                %v429 = vld [vmem:[%s157 + $0x870] sm:%s150]
                %430 = vst [vmem:[%s158 + $0x438] sm:%s150] %v429
                %v431 = vld [vmem:[%s157 + $0x880] sm:%s150]
                %432 = vst [vmem:[%s158 + $0x440] sm:%s150] %v431
                %v433 = vld [vmem:[%s157 + $0x890] sm:%s150]
                %434 = vst [vmem:[%s158 + $0x448] sm:%s150] %v433
                %v435 = vld [vmem:[%s157 + $0x8a0] sm:%s150]
                %436 = vst [vmem:[%s158 + $0x450] sm:%s150] %v435
                %v437 = vld [vmem:[%s157 + $0x8b0] sm:%s150]
                %438 = vst [vmem:[%s158 + $0x458] sm:%s150] %v437
                %v439 = vld [vmem:[%s157 + $0x8c0] sm:%s150]
                %440 = vst [vmem:[%s158 + $0x460] sm:%s150] %v439
                %v441 = vld [vmem:[%s157 + $0x8d0] sm:%s150]
                %442 = vst [vmem:[%s158 + $0x468] sm:%s150] %v441
                %v443 = vld [vmem:[%s157 + $0x8e0] sm:%s150]
                %444 = vst [vmem:[%s158 + $0x470] sm:%s150] %v443
                %v445 = vld [vmem:[%s157 + $0x8f0] sm:%s150]
                %446 = vst [vmem:[%s158 + $0x478] sm:%s150] %v445
                %v447 = vld [vmem:[%s157 + $0x900] sm:%s150]
                %448 = vst [vmem:[%s158 + $0x480] sm:%s150] %v447
                %v449 = vld [vmem:[%s157 + $0x910] sm:%s150]
                %450 = vst [vmem:[%s158 + $0x488] sm:%s150] %v449
                %v451 = vld [vmem:[%s157 + $0x920] sm:%s150]
                %452 = vst [vmem:[%s158 + $0x490] sm:%s150] %v451
                %v453 = vld [vmem:[%s157 + $0x930] sm:%s150]
                %454 = vst [vmem:[%s158 + $0x498] sm:%s150] %v453
                %v455 = vld [vmem:[%s157 + $0x940] sm:%s150]
                %456 = vst [vmem:[%s158 + $0x4a0] sm:%s150] %v455
                %v457 = vld [vmem:[%s157 + $0x950] sm:%s150]
                %458 = vst [vmem:[%s158 + $0x4a8] sm:%s150] %v457
                %v459 = vld [vmem:[%s157 + $0x960] sm:%s150]
                %460 = vst [vmem:[%s158 + $0x4b0] sm:%s150] %v459
                %v461 = vld [vmem:[%s157 + $0x970] sm:%s150]
                %462 = vst [vmem:[%s158 + $0x4b8] sm:%s150] %v461
                %v463 = vld [vmem:[%s157 + $0x980] sm:%s150]
                %464 = vst [vmem:[%s158 + $0x4c0] sm:%s150] %v463
                %v465 = vld [vmem:[%s157 + $0x990] sm:%s150]
                %466 = vst [vmem:[%s158 + $0x4c8] sm:%s150] %v465
                %v467 = vld [vmem:[%s157 + $0x9a0] sm:%s150]
                %468 = vst [vmem:[%s158 + $0x4d0] sm:%s150] %v467
                %v469 = vld [vmem:[%s157 + $0x9b0] sm:%s150]
                %470 = vst [vmem:[%s158 + $0x4d8] sm:%s150] %v469
                %v471 = vld [vmem:[%s157 + $0x9c0] sm:%s150]
                %472 = vst [vmem:[%s158 + $0x4e0] sm:%s150] %v471
                %v473 = vld [vmem:[%s157 + $0x9d0] sm:%s150]
                %474 = vst [vmem:[%s158 + $0x4e8] sm:%s150] %v473
                %v475 = vld [vmem:[%s157 + $0x9e0] sm:%s150]
                %476 = vst [vmem:[%s158 + $0x4f0] sm:%s150] %v475
                %v477 = vld [vmem:[%s157 + $0x9f0] sm:%s150]
                %478 = vst [vmem:[%s158 + $0x4f8] sm:%s150] %v477
                %v479 = vld [vmem:[%s157 + $0xa00] sm:%s150]
                %480 = vst [vmem:[%s158 + $0x500] sm:%s150] %v479
                %v481 = vld [vmem:[%s157 + $0xa10] sm:%s150]
                %482 = vst [vmem:[%s158 + $0x508] sm:%s150] %v481
                %v483 = vld [vmem:[%s157 + $0xa20] sm:%s150]
                %484 = vst [vmem:[%s158 + $0x510] sm:%s150] %v483
                %v485 = vld [vmem:[%s157 + $0xa30] sm:%s150]
                %486 = vst [vmem:[%s158 + $0x518] sm:%s150] %v485
                %v487 = vld [vmem:[%s157 + $0xa40] sm:%s150]
                %488 = vst [vmem:[%s158 + $0x520] sm:%s150] %v487
                %v489 = vld [vmem:[%s157 + $0xa50] sm:%s150]
                %490 = vst [vmem:[%s158 + $0x528] sm:%s150] %v489
                %v491 = vld [vmem:[%s157 + $0xa60] sm:%s150]
                %492 = vst [vmem:[%s158 + $0x530] sm:%s150] %v491
                %v493 = vld [vmem:[%s157 + $0xa70] sm:%s150]
                %494 = vst [vmem:[%s158 + $0x538] sm:%s150] %v493
                %v495 = vld [vmem:[%s157 + $0xa80] sm:%s150]
                %496 = vst [vmem:[%s158 + $0x540] sm:%s150] %v495
                %v497 = vld [vmem:[%s157 + $0xa90] sm:%s150]
                %498 = vst [vmem:[%s158 + $0x548] sm:%s150] %v497
                %v499 = vld [vmem:[%s157 + $0xaa0] sm:%s150]
                %500 = vst [vmem:[%s158 + $0x550] sm:%s150] %v499
                %v501 = vld [vmem:[%s157 + $0xab0] sm:%s150]
                %502 = vst [vmem:[%s158 + $0x558] sm:%s150] %v501
                %v503 = vld [vmem:[%s157 + $0xac0] sm:%s150]
                %504 = vst [vmem:[%s158 + $0x560] sm:%s150] %v503
                %v505 = vld [vmem:[%s157 + $0xad0] sm:%s150]
                %506 = vst [vmem:[%s158 + $0x568] sm:%s150] %v505
                %v507 = vld [vmem:[%s157 + $0xae0] sm:%s150]
                %508 = vst [vmem:[%s158 + $0x570] sm:%s150] %v507
                %v509 = vld [vmem:[%s157 + $0xaf0] sm:%s150]
                %510 = vst [vmem:[%s158 + $0x578] sm:%s150] %v509
                %v511 = vld [vmem:[%s157 + $0xb00] sm:%s150]
                %512 = vst [vmem:[%s158 + $0x580] sm:%s150] %v511
                %v513 = vld [vmem:[%s157 + $0xb10] sm:%s150]
                %514 = vst [vmem:[%s158 + $0x588] sm:%s150] %v513
                %v515 = vld [vmem:[%s157 + $0xb20] sm:%s150]
                %516 = vst [vmem:[%s158 + $0x590] sm:%s150] %v515
                %v517 = vld [vmem:[%s157 + $0xb30] sm:%s150]
                %518 = vst [vmem:[%s158 + $0x598] sm:%s150] %v517
                %v519 = vld [vmem:[%s157 + $0xb40] sm:%s150]
                %520 = vst [vmem:[%s158 + $0x5a0] sm:%s150] %v519
                %v521 = vld [vmem:[%s157 + $0xb50] sm:%s150]
                %522 = vst [vmem:[%s158 + $0x5a8] sm:%s150] %v521
                %v523 = vld [vmem:[%s157 + $0xb60] sm:%s150]
                %524 = vst [vmem:[%s158 + $0x5b0] sm:%s150] %v523
                %v525 = vld [vmem:[%s157 + $0xb70] sm:%s150]
                %526 = vst [vmem:[%s158 + $0x5b8] sm:%s150] %v525
                %v527 = vld [vmem:[%s157 + $0xb80] sm:%s150]
                %528 = vst [vmem:[%s158 + $0x5c0] sm:%s150] %v527
                %v529 = vld [vmem:[%s157 + $0xb90] sm:%s150]
                %530 = vst [vmem:[%s158 + $0x5c8] sm:%s150] %v529
                %v531 = vld [vmem:[%s157 + $0xba0] sm:%s150]
                %532 = vst [vmem:[%s158 + $0x5d0] sm:%s150] %v531
                %v533 = vld [vmem:[%s157 + $0xbb0] sm:%s150]
                %534 = vst [vmem:[%s158 + $0x5d8] sm:%s150] %v533
                %v535 = vld [vmem:[%s157 + $0xbc0] sm:%s150]
                %536 = vst [vmem:[%s158 + $0x5e0] sm:%s150] %v535
                %v537 = vld [vmem:[%s157 + $0xbd0] sm:%s150]
                %538 = vst [vmem:[%s158 + $0x5e8] sm:%s150] %v537
                %v539 = vld [vmem:[%s157 + $0xbe0] sm:%s150]
                %540 = vst [vmem:[%s158 + $0x5f0] sm:%s150] %v539
                %v541 = vld [vmem:[%s157 + $0xbf0] sm:%s150]
                %542 = vst [vmem:[%s158 + $0x5f8] sm:%s150] %v541
                %v543 = vld [vmem:[%s157 + $0xc00] sm:%s150]
                %544 = vst [vmem:[%s158 + $0x600] sm:%s150] %v543
                %v545 = vld [vmem:[%s157 + $0xc10] sm:%s150]
                %546 = vst [vmem:[%s158 + $0x608] sm:%s150] %v545
                %v547 = vld [vmem:[%s157 + $0xc20] sm:%s150]
                %548 = vst [vmem:[%s158 + $0x610] sm:%s150] %v547
                %v549 = vld [vmem:[%s157 + $0xc30] sm:%s150]
                %550 = vst [vmem:[%s158 + $0x618] sm:%s150] %v549
                %v551 = vld [vmem:[%s157 + $0xc40] sm:%s150]
                %552 = vst [vmem:[%s158 + $0x620] sm:%s150] %v551
                %v553 = vld [vmem:[%s157 + $0xc50] sm:%s150]
                %554 = vst [vmem:[%s158 + $0x628] sm:%s150] %v553
                %v555 = vld [vmem:[%s157 + $0xc60] sm:%s150]
                %556 = vst [vmem:[%s158 + $0x630] sm:%s150] %v555
                %v557 = vld [vmem:[%s157 + $0xc70] sm:%s150]
                %558 = vst [vmem:[%s158 + $0x638] sm:%s150] %v557
              $region41: #{_rnd_forward_impl.13} parent=35 // loop_footer
                %s156 = sadd.s32 1, %s152
              $region42: #{_rnd_forward_impl.13} parent=35 // loop_footer_branch
                %151 = sbr.rel target = $region38
              $region43: #{_rnd_forward_impl.13} parent=35 // loop_exit
                _
            $region36: #{_rnd_forward_impl.13} parent=27 // pred_fallthru
              _
          $region28: #{_rnd_forward_impl.13} parent=23 // pred_fallthru
            _
          %971 = vnop
        $region24: #{_rnd_forward_impl.13} parent=19 // pred_fallthru
          _
        // Predicated region
        $region59: #{_rnd_forward_impl.13} parent=19 // pred_check
          %p972 = pneg %p79
        $region60: #{_rnd_forward_impl.13} parent=19 // pred_check_branch
          %974 = sbr.rel (%p972) target = $region62
        $region61: #{_rnd_forward_impl.13} parent=19 // pred_region
          %s975 = smul.u32 2, %s12
          %p976 = scmp.lt.s32.totalorder %s975, 3
          %s977 = scalar_select %p976, %s975, 3
          %s978 = scalar_lea.vmem %s2, %s977
          %s979 = smul.u32 2, %s12
        $region62: #{_rnd_forward_impl.13} parent=19 // pred_fallthru
          _
      $region20: #{_rnd_forward_impl.13} parent=5 // pred_fallthru
        _
      %p980 = scmp.le.s32.totalorder 1, %s12
      %p981 = scmp.lt.s32.totalorder %s12, 3
      %p982 = pnand %p980, %p981
      %p983 = pneg %p982
      // Predicated region
      $region63: #{_rnd_forward_impl.13} parent=5 // pred_check
        _
      $region64: #{_rnd_forward_impl.13} parent=5 // pred_check_branch
        %985 = sbr.rel (%p982) target = $region66
      $region65: #{_rnd_forward_impl.13} parent=5 // pred_region
        %s986 = ssub.s32 %s12, 1
        %s987 = sand.u32 %s46, 1
        %s988 = sand.u32 %s46, 1
        %s989 = smul.addr %s988, 1600
        %s990 = scalar_lea.vmem [#allocation2], %s989
        // Predicated region
        $region67: #{_rnd_forward_impl.13} parent=65 // pred_check
          %p991 = pneg %p59
        $region68: #{_rnd_forward_impl.13} parent=65 // pred_check_branch
          %993 = sbr.rel (%p991) target = $region70
        $region69: #{_rnd_forward_impl.13} parent=65 // pred_region
          _
        $region70: #{_rnd_forward_impl.13} parent=65 // pred_fallthru
          _
        %p994 = pneg %p33
        %p995 = pneg %p30
        %s996 = sand.u32 %s46, 1
        %s997 = sand.u32 %s46, 1
        %s998 = smul.addr %s997, 1600
        %s999 = scalar_lea.vmem [#allocation2], %s998
        %p1000 = pneg %p59
        %p1001 = pneg %p56
        %s1002 = smul.u32 2, %s17
        %p1003 = scmp.lt.s32.totalorder %s1002, 3
        %s1004 = scalar_select %p1003, %s1002, 3
        %s1005 = scalar_lea.vmem %s2, %s1004
        %p1006 = pneg %p85
        %p1007 = pneg %p82
        %p1008 = pneg %p111
        %p1009 = pneg %p108
        %s1010 = sand.u32 %s98, 1
        %s1011 = scalar_lea.sflag [#allocation4], %s1010
        %s1012 = sand.u32 %s98, 1
        %s1013 = smul.addr %s1012, 4
        %s1014 = scalar_lea.vmem [#allocation3], %s1013
        %s1015 = smul.u32 2, %s17
        %s1016 = smul.u32 2, %s17
        %p1017 = scmp.lt.s32.totalorder %s1016, 3
        %s1018 = scalar_select %p1017, %s1016, 3
        %s1019 = scalar_lea.vmem %s2, %s1018
        %s1020 = smul.u32 2, %s17
        %s1021 = smul.u32 2, %s17
        %v1023 = vld [vmem:[%s0] sm:$0xff]
        %v1024 = vld [vmem:[%s0 + $0x8] sm:$0x1f]
        %v1025 = vld [vmem:[%s990] sm:$0xff]
        %v1026 = vld [vmem:[%s990 + $0x8] sm:$0xff]
        %v1027 = vld [vmem:[%s990 + $0x10] sm:$0xff]
        %v1028 = vld [vmem:[%s990 + $0x18] sm:$0xff]
        %v1029 = vld [vmem:[%s990 + $0x20] sm:$0xff]
        %v1030 = vld [vmem:[%s990 + $0x28] sm:$0xff]
        %v1031 = vld [vmem:[%s990 + $0x30] sm:$0xff]
        %v1032 = vld [vmem:[%s990 + $0x38] sm:$0xff]
        %v1033 = vld [vmem:[%s990 + $0x40] sm:$0xff]
        %v1034 = vld [vmem:[%s990 + $0x48] sm:$0xff]
        %v1035 = vld [vmem:[%s990 + $0x50] sm:$0xff]
        %v1036 = vld [vmem:[%s990 + $0x58] sm:$0xff]
        %v1037 = vld [vmem:[%s990 + $0x60] sm:$0xff]
        %v1038 = vld [vmem:[%s990 + $0x68] sm:$0xff]
        %v1039 = vld [vmem:[%s990 + $0x70] sm:$0xff]
        %v1040 = vld [vmem:[%s990 + $0x78] sm:$0xff]
        %v1041 = vld [vmem:[%s990 + $0x80] sm:$0xff]
        %v1042 = vld [vmem:[%s990 + $0x88] sm:$0xff]
        %v1043 = vld [vmem:[%s990 + $0x90] sm:$0xff]
        %v1044 = vld [vmem:[%s990 + $0x98] sm:$0xff]
        %v1045 = vld [vmem:[%s990 + $0xa0] sm:$0xff]
        %v1046 = vld [vmem:[%s990 + $0xa8] sm:$0xff]
        %v1047 = vld [vmem:[%s990 + $0xb0] sm:$0xff]
        %v1048 = vld [vmem:[%s990 + $0xb8] sm:$0xff]
        %v1049 = vld [vmem:[%s990 + $0xc0] sm:$0xff]
        %v1050 = vld [vmem:[%s990 + $0xc8] sm:$0xff]
        %v1051 = vld [vmem:[%s990 + $0xd0] sm:$0xff]
        %v1052 = vld [vmem:[%s990 + $0xd8] sm:$0xff]
        %v1053 = vld [vmem:[%s990 + $0xe0] sm:$0xff]
        %v1054 = vld [vmem:[%s990 + $0xe8] sm:$0xff]
        %v1055 = vld [vmem:[%s990 + $0xf0] sm:$0xff]
        %v1056 = vld [vmem:[%s990 + $0xf8] sm:$0xff]
        %v1057 = vld [vmem:[%s990 + $0x100] sm:$0xff]
        %v1058 = vld [vmem:[%s990 + $0x108] sm:$0xff]
        %v1059 = vld [vmem:[%s990 + $0x110] sm:$0xff]
        %v1060 = vld [vmem:[%s990 + $0x118] sm:$0xff]
        %v1061 = vld [vmem:[%s990 + $0x120] sm:$0xff]
        %v1062 = vld [vmem:[%s990 + $0x128] sm:$0xff]
        %v1063 = vld [vmem:[%s990 + $0x130] sm:$0xff]
        %v1064 = vld [vmem:[%s990 + $0x138] sm:$0xff]
        %v1065 = vld [vmem:[%s990 + $0x140] sm:$0xff]
        %v1066 = vld [vmem:[%s990 + $0x148] sm:$0xff]
        %v1067 = vld [vmem:[%s990 + $0x150] sm:$0xff]
        %v1068 = vld [vmem:[%s990 + $0x158] sm:$0xff]
        %v1069 = vld [vmem:[%s990 + $0x160] sm:$0xff]
        %v1070 = vld [vmem:[%s990 + $0x168] sm:$0xff]
        %v1071 = vld [vmem:[%s990 + $0x170] sm:$0xff]
        %v1072 = vld [vmem:[%s990 + $0x178] sm:$0xff]
        %v1073 = vld [vmem:[%s990 + $0x180] sm:$0xff]
        %v1074 = vld [vmem:[%s990 + $0x188] sm:$0xff]
        %v1075 = vld [vmem:[%s990 + $0x190] sm:$0xff]
        %v1076 = vld [vmem:[%s990 + $0x198] sm:$0xff]
        %v1077 = vld [vmem:[%s990 + $0x1a0] sm:$0xff]
        %v1078 = vld [vmem:[%s990 + $0x1a8] sm:$0xff]
        %v1079 = vld [vmem:[%s990 + $0x1b0] sm:$0xff]
        %v1080 = vld [vmem:[%s990 + $0x1b8] sm:$0xff]
        %v1081 = vld [vmem:[%s990 + $0x1c0] sm:$0xff]
        %v1082 = vld [vmem:[%s990 + $0x1c8] sm:$0xff]
        %v1083 = vld [vmem:[%s990 + $0x1d0] sm:$0xff]
        %v1084 = vld [vmem:[%s990 + $0x1d8] sm:$0xff]
        %v1085 = vld [vmem:[%s990 + $0x1e0] sm:$0xff]
        %v1086 = vld [vmem:[%s990 + $0x1e8] sm:$0xff]
        %v1087 = vld [vmem:[%s990 + $0x1f0] sm:$0xff]
        %v1088 = vld [vmem:[%s990 + $0x1f8] sm:$0xff]
        %v1089 = vld [vmem:[%s990 + $0x200] sm:$0xff]
        %v1090 = vld [vmem:[%s990 + $0x208] sm:$0xff]
        %v1091 = vld [vmem:[%s990 + $0x210] sm:$0xff]
        %v1092 = vld [vmem:[%s990 + $0x218] sm:$0xff]
        %v1093 = vld [vmem:[%s990 + $0x220] sm:$0xff]
        %v1094 = vld [vmem:[%s990 + $0x228] sm:$0xff]
        %v1095 = vld [vmem:[%s990 + $0x230] sm:$0xff]
        %v1096 = vld [vmem:[%s990 + $0x238] sm:$0xff]
        %v1097 = vld [vmem:[%s990 + $0x240] sm:$0xff]
        %v1098 = vld [vmem:[%s990 + $0x248] sm:$0xff]
        %v1099 = vld [vmem:[%s990 + $0x250] sm:$0xff]
        %v1100 = vld [vmem:[%s990 + $0x258] sm:$0xff]
        %v1101 = vld [vmem:[%s990 + $0x260] sm:$0xff]
        %v1102 = vld [vmem:[%s990 + $0x268] sm:$0xff]
        %v1103 = vld [vmem:[%s990 + $0x270] sm:$0xff]
        %v1104 = vld [vmem:[%s990 + $0x278] sm:$0xff]
        %v1105 = vld [vmem:[%s990 + $0x280] sm:$0xff]
        %v1106 = vld [vmem:[%s990 + $0x288] sm:$0xff]
        %v1107 = vld [vmem:[%s990 + $0x290] sm:$0xff]
        %v1108 = vld [vmem:[%s990 + $0x298] sm:$0xff]
        %v1109 = vld [vmem:[%s990 + $0x2a0] sm:$0xff]
        %v1110 = vld [vmem:[%s990 + $0x2a8] sm:$0xff]
        %v1111 = vld [vmem:[%s990 + $0x2b0] sm:$0xff]
        %v1112 = vld [vmem:[%s990 + $0x2b8] sm:$0xff]
        %v1113 = vld [vmem:[%s990 + $0x2c0] sm:$0xff]
        %v1114 = vld [vmem:[%s990 + $0x2c8] sm:$0xff]
        %v1115 = vld [vmem:[%s990 + $0x2d0] sm:$0xff]
        %v1116 = vld [vmem:[%s990 + $0x2d8] sm:$0xff]
        %v1117 = vld [vmem:[%s990 + $0x2e0] sm:$0xff]
        %v1118 = vld [vmem:[%s990 + $0x2e8] sm:$0xff]
        %v1119 = vld [vmem:[%s990 + $0x2f0] sm:$0xff]
        %v1120 = vld [vmem:[%s990 + $0x2f8] sm:$0xff]
        %v1121 = vld [vmem:[%s990 + $0x300] sm:$0xff]
        %v1122 = vld [vmem:[%s990 + $0x308] sm:$0xff]
        %v1123 = vld [vmem:[%s990 + $0x310] sm:$0xff]
        %v1124 = vld [vmem:[%s990 + $0x318] sm:$0xff]
        %v1125 = vld [vmem:[%s990 + $0x320] sm:$0xff]
        %v1126 = vld [vmem:[%s990 + $0x328] sm:$0xff]
        %v1127 = vld [vmem:[%s990 + $0x330] sm:$0xff]
        %v1128 = vld [vmem:[%s990 + $0x338] sm:$0xff]
        %v1129 = vld [vmem:[%s990 + $0x340] sm:$0xff]
        %v1130 = vld [vmem:[%s990 + $0x348] sm:$0xff]
        %v1131 = vld [vmem:[%s990 + $0x350] sm:$0xff]
        %v1132 = vld [vmem:[%s990 + $0x358] sm:$0xff]
        %v1133 = vld [vmem:[%s990 + $0x360] sm:$0xff]
        %v1134 = vld [vmem:[%s990 + $0x368] sm:$0xff]
        %v1135 = vld [vmem:[%s990 + $0x370] sm:$0xff]
        %v1136 = vld [vmem:[%s990 + $0x378] sm:$0xff]
        %v1137 = vld [vmem:[%s990 + $0x380] sm:$0xff]
        %v1138 = vld [vmem:[%s990 + $0x388] sm:$0xff]
        %v1139 = vld [vmem:[%s990 + $0x390] sm:$0xff]
        %v1140 = vld [vmem:[%s990 + $0x398] sm:$0xff]
        %v1141 = vld [vmem:[%s990 + $0x3a0] sm:$0xff]
        %v1142 = vld [vmem:[%s990 + $0x3a8] sm:$0xff]
        %v1143 = vld [vmem:[%s990 + $0x3b0] sm:$0xff]
        %v1144 = vld [vmem:[%s990 + $0x3b8] sm:$0xff]
        %v1145 = vld [vmem:[%s990 + $0x3c0] sm:$0xff]
        %v1146 = vld [vmem:[%s990 + $0x3c8] sm:$0xff]
        %v1147 = vld [vmem:[%s990 + $0x3d0] sm:$0xff]
        %v1148 = vld [vmem:[%s990 + $0x3d8] sm:$0xff]
        %v1149 = vld [vmem:[%s990 + $0x3e0] sm:$0xff]
        %v1150 = vld [vmem:[%s990 + $0x3e8] sm:$0xff]
        %v1151 = vld [vmem:[%s990 + $0x3f0] sm:$0xff]
        %v1152 = vld [vmem:[%s990 + $0x3f8] sm:$0xff]
        %v1153 = vld [vmem:[%s990 + $0x400] sm:$0xff]
        %v1154 = vld [vmem:[%s990 + $0x408] sm:$0xff]
        %v1155 = vld [vmem:[%s990 + $0x410] sm:$0xff]
        %v1156 = vld [vmem:[%s990 + $0x418] sm:$0xff]
        %v1157 = vld [vmem:[%s990 + $0x420] sm:$0xff]
        %v1158 = vld [vmem:[%s990 + $0x428] sm:$0xff]
        %v1159 = vld [vmem:[%s990 + $0x430] sm:$0xff]
        %v1160 = vld [vmem:[%s990 + $0x438] sm:$0xff]
        %v1161 = vld [vmem:[%s990 + $0x440] sm:$0xff]
        %v1162 = vld [vmem:[%s990 + $0x448] sm:$0xff]
        %v1163 = vld [vmem:[%s990 + $0x450] sm:$0xff]
        %v1164 = vld [vmem:[%s990 + $0x458] sm:$0xff]
        %v1165 = vld [vmem:[%s990 + $0x460] sm:$0xff]
        %v1166 = vld [vmem:[%s990 + $0x468] sm:$0xff]
        %v1167 = vld [vmem:[%s990 + $0x470] sm:$0xff]
        %v1168 = vld [vmem:[%s990 + $0x478] sm:$0xff]
        %v1169 = vld [vmem:[%s990 + $0x480] sm:$0xff]
        %v1170 = vld [vmem:[%s990 + $0x488] sm:$0xff]
        %v1171 = vld [vmem:[%s990 + $0x490] sm:$0xff]
        %v1172 = vld [vmem:[%s990 + $0x498] sm:$0xff]
        %v1173 = vld [vmem:[%s990 + $0x4a0] sm:$0xff]
        %v1174 = vld [vmem:[%s990 + $0x4a8] sm:$0xff]
        %v1175 = vld [vmem:[%s990 + $0x4b0] sm:$0xff]
        %v1176 = vld [vmem:[%s990 + $0x4b8] sm:$0xff]
        %v1177 = vld [vmem:[%s990 + $0x4c0] sm:$0xff]
        %v1178 = vld [vmem:[%s990 + $0x4c8] sm:$0xff]
        %v1179 = vld [vmem:[%s990 + $0x4d0] sm:$0xff]
        %v1180 = vld [vmem:[%s990 + $0x4d8] sm:$0xff]
        %v1181 = vld [vmem:[%s990 + $0x4e0] sm:$0xff]
        %v1182 = vld [vmem:[%s990 + $0x4e8] sm:$0xff]
        %v1183 = vld [vmem:[%s990 + $0x4f0] sm:$0xff]
        %v1184 = vld [vmem:[%s990 + $0x4f8] sm:$0xff]
        %v1185 = vld [vmem:[%s990 + $0x500] sm:$0xff]
        %v1186 = vld [vmem:[%s990 + $0x508] sm:$0xff]
        %v1187 = vld [vmem:[%s990 + $0x510] sm:$0xff]
        %v1188 = vld [vmem:[%s990 + $0x518] sm:$0xff]
        %v1189 = vld [vmem:[%s990 + $0x520] sm:$0xff]
        %v1190 = vld [vmem:[%s990 + $0x528] sm:$0xff]
        %v1191 = vld [vmem:[%s990 + $0x530] sm:$0xff]
        %v1192 = vld [vmem:[%s990 + $0x538] sm:$0xff]
        %v1193 = vld [vmem:[%s990 + $0x540] sm:$0xff]
        %v1194 = vld [vmem:[%s990 + $0x548] sm:$0xff]
        %v1195 = vld [vmem:[%s990 + $0x550] sm:$0xff]
        %v1196 = vld [vmem:[%s990 + $0x558] sm:$0xff]
        %v1197 = vld [vmem:[%s990 + $0x560] sm:$0xff]
        %v1198 = vld [vmem:[%s990 + $0x568] sm:$0xff]
        %v1199 = vld [vmem:[%s990 + $0x570] sm:$0xff]
        %v1200 = vld [vmem:[%s990 + $0x578] sm:$0xff]
        %v1201 = vld [vmem:[%s990 + $0x580] sm:$0xff]
        %v1202 = vld [vmem:[%s990 + $0x588] sm:$0xff]
        %v1203 = vld [vmem:[%s990 + $0x590] sm:$0xff]
        %v1204 = vld [vmem:[%s990 + $0x598] sm:$0xff]
        %v1205 = vld [vmem:[%s990 + $0x5a0] sm:$0xff]
        %v1206 = vld [vmem:[%s990 + $0x5a8] sm:$0xff]
        %v1207 = vld [vmem:[%s990 + $0x5b0] sm:$0xff]
        %v1208 = vld [vmem:[%s990 + $0x5b8] sm:$0xff]
        %v1209 = vld [vmem:[%s990 + $0x5c0] sm:$0xff]
        %v1210 = vld [vmem:[%s990 + $0x5c8] sm:$0xff]
        %v1211 = vld [vmem:[%s990 + $0x5d0] sm:$0xff]
        %v1212 = vld [vmem:[%s990 + $0x5d8] sm:$0xff]
        %v1213 = vld [vmem:[%s990 + $0x5e0] sm:$0xff]
        %v1214 = vld [vmem:[%s990 + $0x5e8] sm:$0xff]
        %v1215 = vld [vmem:[%s990 + $0x5f0] sm:$0xff]
        %v1216 = vld [vmem:[%s990 + $0x5f8] sm:$0xff]
        %v1217 = vld [vmem:[%s990 + $0x600] sm:$0xff]
        %v1218 = vld [vmem:[%s990 + $0x608] sm:$0xff]
        %v1219 = vld [vmem:[%s990 + $0x610] sm:$0xff]
        %v1220 = vld [vmem:[%s990 + $0x618] sm:$0xff]
        %v1221 = vld [vmem:[%s990 + $0x620] sm:$0xff]
        %v1222 = vld [vmem:[%s990 + $0x628] sm:$0xff]
        %v1223 = vld [vmem:[%s990 + $0x630] sm:$0xff]
        %v1224 = vld [vmem:[%s990 + $0x638] sm:$0xff]
        %v1225 = vld [vmem:[%s1019] sm:$0x3]
        %v1227 = vlaneseq
        %v1228 = vshrl.u32 %v1227, 7
        %v1229 = vsub.s32 0, %v1228
        %v1230 = vrot.slane %v1225, %v1229
        %v1231 = vlaneseq
        %v1232 = vshrl.u32 %v1231, 7
        %v1233 = vsub.s32 1, %v1232
        %v1234 = vrot.slane %v1225, %v1233
        %v1239 = vcombine.high %v1023, %v1023
        %v1241 = vunpack.c.l.s4 1966171168
        %v1242 = vunpack.c.0.s8 %v1241
        %v1243 = vlaneseq
        %v1244 = vshrl.u32 %v1243, 7
        %v1245 = vsub.s32 %v1242, %v1244
        %v1246 = vrot.slane %v1023, %v1245
        %v1248 = vunpack.c.l.s4 1966171168
        %v1249 = vunpack.c.0.s8 %v1248
        %v1250 = vlaneseq
        %v1251 = vshrl.u32 %v1250, 7
        %v1252 = vsub.s32 %v1249, %v1251
        %v1253 = vrot.slane %v1239, %v1252
        %v1254 = vcombine.high %v1246, %v1246
        %v1255 = vcombine.high %v1253, %v1253
        %v1257 = vunpack.c.l.s4 1966171168
        %v1258 = vunpack.c.0.s8 %v1257
        %v1259 = vlaneseq
        %v1260 = vshrl.u32 %v1259, 7
        %v1261 = vsub.s32 %v1258, %v1260
        %v1262 = vrot.slane %v1246, %v1261
        %v1264 = vunpack.c.l.s4 1966171168
        %v1265 = vunpack.c.0.s8 %v1264
        %v1266 = vlaneseq
        %v1267 = vshrl.u32 %v1266, 7
        %v1268 = vsub.s32 %v1265, %v1267
        %v1269 = vrot.slane %v1253, %v1268
        %v1271 = vunpack.c.l.s4 1966171168
        %v1272 = vunpack.c.0.s8 %v1271
        %v1273 = vlaneseq
        %v1274 = vshrl.u32 %v1273, 7
        %v1275 = vsub.s32 %v1272, %v1274
        %v1276 = vrot.slane %v1254, %v1275
        %v1278 = vunpack.c.l.s4 1966171168
        %v1279 = vunpack.c.0.s8 %v1278
        %v1280 = vlaneseq
        %v1281 = vshrl.u32 %v1280, 7
        %v1282 = vsub.s32 %v1279, %v1281
        %v1283 = vrot.slane %v1255, %v1282
        %v1284 = vcombine.high %v1262, %v1262
        %v1285 = vcombine.high %v1269, %v1269
        %v1286 = vcombine.high %v1276, %v1276
        %v1287 = vcombine.high %v1283, %v1283
        %v1288 = vcombine.high %v1024, %v1024
        %v1290 = vunpack.c.l.s4 1966171168
        %v1291 = vunpack.c.0.s8 %v1290
        %v1292 = vlaneseq
        %v1293 = vshrl.u32 %v1292, 7
        %v1294 = vsub.s32 %v1291, %v1293
        %v1295 = vrot.slane %v1024, %v1294
        %v1297 = vunpack.c.l.s4 1966171168
        %v1298 = vunpack.c.0.s8 %v1297
        %v1299 = vlaneseq
        %v1300 = vshrl.u32 %v1299, 7
        %v1301 = vsub.s32 %v1298, %v1300
        %v1302 = vrot.slane %v1288, %v1301
        %v1303 = vcombine.high %v1295, %v1295
        %v1305 = vunpack.c.l.s4 1966171168
        %v1306 = vunpack.c.0.s8 %v1305
        %v1307 = vlaneseq
        %v1308 = vshrl.u32 %v1307, 7
        %v1309 = vsub.s32 %v1306, %v1308
        %v1310 = vrot.slane %v1295, %v1309
        %v1312 = vunpack.c.l.s4 1966171168
        %v1313 = vunpack.c.0.s8 %v1312
        %v1314 = vlaneseq
        %v1315 = vshrl.u32 %v1314, 7
        %v1316 = vsub.s32 %v1313, %v1315
        %v1317 = vrot.slane %v1302, %v1316
        %v1319 = vunpack.c.l.s4 1966171168
        %v1320 = vunpack.c.0.s8 %v1319
        %v1321 = vlaneseq
        %v1322 = vshrl.u32 %v1321, 7
        %v1323 = vsub.s32 %v1320, %v1322
        %v1324 = vrot.slane %v1303, %v1323
        %v1325 = vcombine.high %v1310, %v1310
        %v1326 = vcombine.high %v1324, %v1324
        %v1539 = vunpack.c.l.b16 %v1025
        %v1540 = vunpack.c.h.b16 %v1025
        %v1541 = vunpack.c.l.b16 %v1026
        %v1542 = vunpack.c.h.b16 %v1026
        %v1543 = vunpack.c.l.b16 %v1027
        %v1544 = vunpack.c.h.b16 %v1027
        %v1545 = vunpack.c.l.b16 %v1028
        %v1546 = vunpack.c.h.b16 %v1028
        %v1547 = vunpack.c.l.b16 %v1029
        %v1548 = vunpack.c.h.b16 %v1029
        %v1549 = vunpack.c.l.b16 %v1030
        %v1550 = vunpack.c.h.b16 %v1030
        %v1551 = vunpack.c.l.b16 %v1031
        %v1552 = vunpack.c.h.b16 %v1031
        %v1553 = vunpack.c.l.b16 %v1032
        %v1554 = vunpack.c.h.b16 %v1032
        %v1555 = vunpack.c.l.b16 %v1033
        %v1556 = vunpack.c.h.b16 %v1033
        %v1557 = vunpack.c.l.b16 %v1034
        %v1558 = vunpack.c.h.b16 %v1034
        %v1559 = vunpack.c.l.b16 %v1035
        %v1560 = vunpack.c.h.b16 %v1035
        %v1561 = vunpack.c.l.b16 %v1036
        %v1562 = vunpack.c.h.b16 %v1036
        %v1563 = vunpack.c.l.b16 %v1037
        %v1564 = vunpack.c.h.b16 %v1037
        %v1565 = vunpack.c.l.b16 %v1038
        %v1566 = vunpack.c.h.b16 %v1038
        %v1567 = vunpack.c.l.b16 %v1039
        %v1568 = vunpack.c.h.b16 %v1039
        %v1569 = vunpack.c.l.b16 %v1040
        %v1570 = vunpack.c.h.b16 %v1040
        %v1571 = vunpack.c.l.b16 %v1041
        %v1572 = vunpack.c.h.b16 %v1041
        %v1573 = vunpack.c.l.b16 %v1042
        %v1574 = vunpack.c.h.b16 %v1042
        %v1575 = vunpack.c.l.b16 %v1043
        %v1576 = vunpack.c.h.b16 %v1043
        %v1577 = vunpack.c.l.b16 %v1044
        %v1578 = vunpack.c.h.b16 %v1044
        %v1579 = vunpack.c.l.b16 %v1045
        %v1580 = vunpack.c.h.b16 %v1045
        %v1581 = vunpack.c.l.b16 %v1046
        %v1582 = vunpack.c.h.b16 %v1046
        %v1583 = vunpack.c.l.b16 %v1047
        %v1584 = vunpack.c.h.b16 %v1047
        %v1585 = vunpack.c.l.b16 %v1048
        %v1586 = vunpack.c.h.b16 %v1048
        %v1587 = vunpack.c.l.b16 %v1049
        %v1588 = vunpack.c.h.b16 %v1049
        %v1589 = vunpack.c.l.b16 %v1050
        %v1590 = vunpack.c.h.b16 %v1050
        %v1591 = vunpack.c.l.b16 %v1051
        %v1592 = vunpack.c.h.b16 %v1051
        %v1593 = vunpack.c.l.b16 %v1052
        %v1594 = vunpack.c.h.b16 %v1052
        %v1595 = vunpack.c.l.b16 %v1053
        %v1596 = vunpack.c.h.b16 %v1053
        %v1597 = vunpack.c.l.b16 %v1054
        %v1598 = vunpack.c.h.b16 %v1054
        %v1599 = vunpack.c.l.b16 %v1055
        %v1600 = vunpack.c.h.b16 %v1055
        %v1601 = vunpack.c.l.b16 %v1056
        %v1602 = vunpack.c.h.b16 %v1056
        %v1603 = vunpack.c.l.b16 %v1057
        %v1604 = vunpack.c.h.b16 %v1057
        %v1605 = vunpack.c.l.b16 %v1058
        %v1606 = vunpack.c.h.b16 %v1058
        %v1607 = vunpack.c.l.b16 %v1059
        %v1608 = vunpack.c.h.b16 %v1059
        %v1609 = vunpack.c.l.b16 %v1060
        %v1610 = vunpack.c.h.b16 %v1060
        %v1611 = vunpack.c.l.b16 %v1061
        %v1612 = vunpack.c.h.b16 %v1061
        %v1613 = vunpack.c.l.b16 %v1062
        %v1614 = vunpack.c.h.b16 %v1062
        %v1615 = vunpack.c.l.b16 %v1063
        %v1616 = vunpack.c.h.b16 %v1063
        %v1617 = vunpack.c.l.b16 %v1064
        %v1618 = vunpack.c.h.b16 %v1064
        %v1619 = vunpack.c.l.b16 %v1065
        %v1620 = vunpack.c.h.b16 %v1065
        %v1621 = vunpack.c.l.b16 %v1066
        %v1622 = vunpack.c.h.b16 %v1066
        %v1623 = vunpack.c.l.b16 %v1067
        %v1624 = vunpack.c.h.b16 %v1067
        %v1625 = vunpack.c.l.b16 %v1068
        %v1626 = vunpack.c.h.b16 %v1068
        %v1627 = vunpack.c.l.b16 %v1069
        %v1628 = vunpack.c.h.b16 %v1069
        %v1629 = vunpack.c.l.b16 %v1070
        %v1630 = vunpack.c.h.b16 %v1070
        %v1631 = vunpack.c.l.b16 %v1071
        %v1632 = vunpack.c.h.b16 %v1071
        %v1633 = vunpack.c.l.b16 %v1072
        %v1634 = vunpack.c.h.b16 %v1072
        %v1635 = vunpack.c.l.b16 %v1073
        %v1636 = vunpack.c.h.b16 %v1073
        %v1637 = vunpack.c.l.b16 %v1074
        %v1638 = vunpack.c.h.b16 %v1074
        %v1639 = vunpack.c.l.b16 %v1075
        %v1640 = vunpack.c.h.b16 %v1075
        %v1641 = vunpack.c.l.b16 %v1076
        %v1642 = vunpack.c.h.b16 %v1076
        %v1643 = vunpack.c.l.b16 %v1077
        %v1644 = vunpack.c.h.b16 %v1077
        %v1645 = vunpack.c.l.b16 %v1078
        %v1646 = vunpack.c.h.b16 %v1078
        %v1647 = vunpack.c.l.b16 %v1079
        %v1648 = vunpack.c.h.b16 %v1079
        %v1649 = vunpack.c.l.b16 %v1080
        %v1650 = vunpack.c.h.b16 %v1080
        %v1651 = vunpack.c.l.b16 %v1081
        %v1652 = vunpack.c.h.b16 %v1081
        %v1653 = vunpack.c.l.b16 %v1082
        %v1654 = vunpack.c.h.b16 %v1082
        %v1655 = vunpack.c.l.b16 %v1083
        %v1656 = vunpack.c.h.b16 %v1083
        %v1657 = vunpack.c.l.b16 %v1084
        %v1658 = vunpack.c.h.b16 %v1084
        %v1659 = vunpack.c.l.b16 %v1085
        %v1660 = vunpack.c.h.b16 %v1085
        %v1661 = vunpack.c.l.b16 %v1086
        %v1662 = vunpack.c.h.b16 %v1086
        %v1663 = vunpack.c.l.b16 %v1087
        %v1664 = vunpack.c.h.b16 %v1087
        %v1665 = vunpack.c.l.b16 %v1088
        %v1666 = vunpack.c.h.b16 %v1088
        %v1667 = vunpack.c.l.b16 %v1089
        %v1668 = vunpack.c.h.b16 %v1089
        %v1669 = vunpack.c.l.b16 %v1090
        %v1670 = vunpack.c.h.b16 %v1090
        %v1671 = vunpack.c.l.b16 %v1091
        %v1672 = vunpack.c.h.b16 %v1091
        %v1673 = vunpack.c.l.b16 %v1092
        %v1674 = vunpack.c.h.b16 %v1092
        %v1675 = vunpack.c.l.b16 %v1093
        %v1676 = vunpack.c.h.b16 %v1093
        %v1677 = vunpack.c.l.b16 %v1094
        %v1678 = vunpack.c.h.b16 %v1094
        %v1679 = vunpack.c.l.b16 %v1095
        %v1680 = vunpack.c.h.b16 %v1095
        %v1681 = vunpack.c.l.b16 %v1096
        %v1682 = vunpack.c.h.b16 %v1096
        %v1683 = vunpack.c.l.b16 %v1097
        %v1684 = vunpack.c.h.b16 %v1097
        %v1685 = vunpack.c.l.b16 %v1098
        %v1686 = vunpack.c.h.b16 %v1098
        %v1687 = vunpack.c.l.b16 %v1099
        %v1688 = vunpack.c.h.b16 %v1099
        %v1689 = vunpack.c.l.b16 %v1100
        %v1690 = vunpack.c.h.b16 %v1100
        %v1691 = vunpack.c.l.b16 %v1101
        %v1692 = vunpack.c.h.b16 %v1101
        %v1693 = vunpack.c.l.b16 %v1102
        %v1694 = vunpack.c.h.b16 %v1102
        %v1695 = vunpack.c.l.b16 %v1103
        %v1696 = vunpack.c.h.b16 %v1103
        %v1697 = vunpack.c.l.b16 %v1104
        %v1698 = vunpack.c.h.b16 %v1104
        %v1699 = vunpack.c.l.b16 %v1105
        %v1700 = vunpack.c.h.b16 %v1105
        %v1701 = vunpack.c.l.b16 %v1106
        %v1702 = vunpack.c.h.b16 %v1106
        %v1703 = vunpack.c.l.b16 %v1107
        %v1704 = vunpack.c.h.b16 %v1107
        %v1705 = vunpack.c.l.b16 %v1108
        %v1706 = vunpack.c.h.b16 %v1108
        %v1707 = vunpack.c.l.b16 %v1109
        %v1708 = vunpack.c.h.b16 %v1109
        %v1709 = vunpack.c.l.b16 %v1110
        %v1710 = vunpack.c.h.b16 %v1110
        %v1711 = vunpack.c.l.b16 %v1111
        %v1712 = vunpack.c.h.b16 %v1111
        %v1713 = vunpack.c.l.b16 %v1112
        %v1714 = vunpack.c.h.b16 %v1112
        %v1715 = vunpack.c.l.b16 %v1113
        %v1716 = vunpack.c.h.b16 %v1113
        %v1717 = vunpack.c.l.b16 %v1114
        %v1718 = vunpack.c.h.b16 %v1114
        %v1719 = vunpack.c.l.b16 %v1115
        %v1720 = vunpack.c.h.b16 %v1115
        %v1721 = vunpack.c.l.b16 %v1116
        %v1722 = vunpack.c.h.b16 %v1116
        %v1723 = vunpack.c.l.b16 %v1117
        %v1724 = vunpack.c.h.b16 %v1117
        %v1725 = vunpack.c.l.b16 %v1118
        %v1726 = vunpack.c.h.b16 %v1118
        %v1727 = vunpack.c.l.b16 %v1119
        %v1728 = vunpack.c.h.b16 %v1119
        %v1729 = vunpack.c.l.b16 %v1120
        %v1730 = vunpack.c.h.b16 %v1120
        %v1731 = vunpack.c.l.b16 %v1121
        %v1732 = vunpack.c.h.b16 %v1121
        %v1733 = vunpack.c.l.b16 %v1122
        %v1734 = vunpack.c.h.b16 %v1122
        %v1735 = vunpack.c.l.b16 %v1123
        %v1736 = vunpack.c.h.b16 %v1123
        %v1737 = vunpack.c.l.b16 %v1124
        %v1738 = vunpack.c.h.b16 %v1124
        %v1739 = vunpack.c.l.b16 %v1125
        %v1740 = vunpack.c.h.b16 %v1125
        %v1741 = vunpack.c.l.b16 %v1126
        %v1742 = vunpack.c.h.b16 %v1126
        %v1743 = vunpack.c.l.b16 %v1127
        %v1744 = vunpack.c.h.b16 %v1127
        %v1745 = vunpack.c.l.b16 %v1128
        %v1746 = vunpack.c.h.b16 %v1128
        %v1747 = vunpack.c.l.b16 %v1129
        %v1748 = vunpack.c.h.b16 %v1129
        %v1749 = vunpack.c.l.b16 %v1130
        %v1750 = vunpack.c.h.b16 %v1130
        %v1751 = vunpack.c.l.b16 %v1131
        %v1752 = vunpack.c.h.b16 %v1131
        %v1753 = vunpack.c.l.b16 %v1132
        %v1754 = vunpack.c.h.b16 %v1132
        %v1755 = vunpack.c.l.b16 %v1133
        %v1756 = vunpack.c.h.b16 %v1133
        %v1757 = vunpack.c.l.b16 %v1134
        %v1758 = vunpack.c.h.b16 %v1134
        %v1759 = vunpack.c.l.b16 %v1135
        %v1760 = vunpack.c.h.b16 %v1135
        %v1761 = vunpack.c.l.b16 %v1136
        %v1762 = vunpack.c.h.b16 %v1136
        %v1763 = vunpack.c.l.b16 %v1137
        %v1764 = vunpack.c.h.b16 %v1137
        %v1765 = vunpack.c.l.b16 %v1138
        %v1766 = vunpack.c.h.b16 %v1138
        %v1767 = vunpack.c.l.b16 %v1139
        %v1768 = vunpack.c.h.b16 %v1139
        %v1769 = vunpack.c.l.b16 %v1140
        %v1770 = vunpack.c.h.b16 %v1140
        %v1771 = vunpack.c.l.b16 %v1141
        %v1772 = vunpack.c.h.b16 %v1141
        %v1773 = vunpack.c.l.b16 %v1142
        %v1774 = vunpack.c.h.b16 %v1142
        %v1775 = vunpack.c.l.b16 %v1143
        %v1776 = vunpack.c.h.b16 %v1143
        %v1777 = vunpack.c.l.b16 %v1144
        %v1778 = vunpack.c.h.b16 %v1144
        %v1779 = vunpack.c.l.b16 %v1145
        %v1780 = vunpack.c.h.b16 %v1145
        %v1781 = vunpack.c.l.b16 %v1146
        %v1782 = vunpack.c.h.b16 %v1146
        %v1783 = vunpack.c.l.b16 %v1147
        %v1784 = vunpack.c.h.b16 %v1147
        %v1785 = vunpack.c.l.b16 %v1148
        %v1786 = vunpack.c.h.b16 %v1148
        %v1787 = vunpack.c.l.b16 %v1149
        %v1788 = vunpack.c.h.b16 %v1149
        %v1789 = vunpack.c.l.b16 %v1150
        %v1790 = vunpack.c.h.b16 %v1150
        %v1791 = vunpack.c.l.b16 %v1151
        %v1792 = vunpack.c.h.b16 %v1151
        %v1793 = vunpack.c.l.b16 %v1152
        %v1794 = vunpack.c.h.b16 %v1152
        %v1795 = vunpack.c.l.b16 %v1153
        %v1796 = vunpack.c.h.b16 %v1153
        %v1797 = vunpack.c.l.b16 %v1154
        %v1798 = vunpack.c.h.b16 %v1154
        %v1799 = vunpack.c.l.b16 %v1155
        %v1800 = vunpack.c.h.b16 %v1155
        %v1801 = vunpack.c.l.b16 %v1156
        %v1802 = vunpack.c.h.b16 %v1156
        %v1803 = vunpack.c.l.b16 %v1157
        %v1804 = vunpack.c.h.b16 %v1157
        %v1805 = vunpack.c.l.b16 %v1158
        %v1806 = vunpack.c.h.b16 %v1158
        %v1807 = vunpack.c.l.b16 %v1159
        %v1808 = vunpack.c.h.b16 %v1159
        %v1809 = vunpack.c.l.b16 %v1160
        %v1810 = vunpack.c.h.b16 %v1160
        %v1811 = vunpack.c.l.b16 %v1161
        %v1812 = vunpack.c.h.b16 %v1161
        %v1813 = vunpack.c.l.b16 %v1162
        %v1814 = vunpack.c.h.b16 %v1162
        %v1815 = vunpack.c.l.b16 %v1163
        %v1816 = vunpack.c.h.b16 %v1163
        %v1817 = vunpack.c.l.b16 %v1164
        %v1818 = vunpack.c.h.b16 %v1164
        %v1819 = vunpack.c.l.b16 %v1165
        %v1820 = vunpack.c.h.b16 %v1165
        %v1821 = vunpack.c.l.b16 %v1166
        %v1822 = vunpack.c.h.b16 %v1166
        %v1823 = vunpack.c.l.b16 %v1167
        %v1824 = vunpack.c.h.b16 %v1167
        %v1825 = vunpack.c.l.b16 %v1168
        %v1826 = vunpack.c.h.b16 %v1168
        %v1827 = vunpack.c.l.b16 %v1169
        %v1828 = vunpack.c.h.b16 %v1169
        %v1829 = vunpack.c.l.b16 %v1170
        %v1830 = vunpack.c.h.b16 %v1170
        %v1831 = vunpack.c.l.b16 %v1171
        %v1832 = vunpack.c.h.b16 %v1171
        %v1833 = vunpack.c.l.b16 %v1172
        %v1834 = vunpack.c.h.b16 %v1172
        %v1835 = vunpack.c.l.b16 %v1173
        %v1836 = vunpack.c.h.b16 %v1173
        %v1837 = vunpack.c.l.b16 %v1174
        %v1838 = vunpack.c.h.b16 %v1174
        %v1839 = vunpack.c.l.b16 %v1175
        %v1840 = vunpack.c.h.b16 %v1175
        %v1841 = vunpack.c.l.b16 %v1176
        %v1842 = vunpack.c.h.b16 %v1176
        %v1843 = vunpack.c.l.b16 %v1177
        %v1844 = vunpack.c.h.b16 %v1177
        %v1845 = vunpack.c.l.b16 %v1178
        %v1846 = vunpack.c.h.b16 %v1178
        %v1847 = vunpack.c.l.b16 %v1179
        %v1848 = vunpack.c.h.b16 %v1179
        %v1849 = vunpack.c.l.b16 %v1180
        %v1850 = vunpack.c.h.b16 %v1180
        %v1851 = vunpack.c.l.b16 %v1181
        %v1852 = vunpack.c.h.b16 %v1181
        %v1853 = vunpack.c.l.b16 %v1182
        %v1854 = vunpack.c.h.b16 %v1182
        %v1855 = vunpack.c.l.b16 %v1183
        %v1856 = vunpack.c.h.b16 %v1183
        %v1857 = vunpack.c.l.b16 %v1184
        %v1858 = vunpack.c.h.b16 %v1184
        %v1859 = vunpack.c.l.b16 %v1185
        %v1860 = vunpack.c.h.b16 %v1185
        %v1861 = vunpack.c.l.b16 %v1186
        %v1862 = vunpack.c.h.b16 %v1186
        %v1863 = vunpack.c.l.b16 %v1187
        %v1864 = vunpack.c.h.b16 %v1187
        %v1865 = vunpack.c.l.b16 %v1188
        %v1866 = vunpack.c.h.b16 %v1188
        %v1867 = vunpack.c.l.b16 %v1189
        %v1868 = vunpack.c.h.b16 %v1189
        %v1869 = vunpack.c.l.b16 %v1190
        %v1870 = vunpack.c.h.b16 %v1190
        %v1871 = vunpack.c.l.b16 %v1191
        %v1872 = vunpack.c.h.b16 %v1191
        %v1873 = vunpack.c.l.b16 %v1192
        %v1874 = vunpack.c.h.b16 %v1192
        %v1875 = vunpack.c.l.b16 %v1193
        %v1876 = vunpack.c.h.b16 %v1193
        %v1877 = vunpack.c.l.b16 %v1194
        %v1878 = vunpack.c.h.b16 %v1194
        %v1879 = vunpack.c.l.b16 %v1195
        %v1880 = vunpack.c.h.b16 %v1195
        %v1881 = vunpack.c.l.b16 %v1196
        %v1882 = vunpack.c.h.b16 %v1196
        %v1883 = vunpack.c.l.b16 %v1197
        %v1884 = vunpack.c.h.b16 %v1197
        %v1885 = vunpack.c.l.b16 %v1198
        %v1886 = vunpack.c.h.b16 %v1198
        %v1887 = vunpack.c.l.b16 %v1199
        %v1888 = vunpack.c.h.b16 %v1199
        %v1889 = vunpack.c.l.b16 %v1200
        %v1890 = vunpack.c.h.b16 %v1200
        %v1891 = vunpack.c.l.b16 %v1201
        %v1892 = vunpack.c.h.b16 %v1201
        %v1893 = vunpack.c.l.b16 %v1202
        %v1894 = vunpack.c.h.b16 %v1202
        %v1895 = vunpack.c.l.b16 %v1203
        %v1896 = vunpack.c.h.b16 %v1203
        %v1897 = vunpack.c.l.b16 %v1204
        %v1898 = vunpack.c.h.b16 %v1204
        %v1899 = vunpack.c.l.b16 %v1205
        %v1900 = vunpack.c.h.b16 %v1205
        %v1901 = vunpack.c.l.b16 %v1206
        %v1902 = vunpack.c.h.b16 %v1206
        %v1903 = vunpack.c.l.b16 %v1207
        %v1904 = vunpack.c.h.b16 %v1207
        %v1905 = vunpack.c.l.b16 %v1208
        %v1906 = vunpack.c.h.b16 %v1208
        %v1907 = vunpack.c.l.b16 %v1209
        %v1908 = vunpack.c.h.b16 %v1209
        %v1909 = vunpack.c.l.b16 %v1210
        %v1910 = vunpack.c.h.b16 %v1210
        %v1911 = vunpack.c.l.b16 %v1211
        %v1912 = vunpack.c.h.b16 %v1211
        %v1913 = vunpack.c.l.b16 %v1212
        %v1914 = vunpack.c.h.b16 %v1212
        %v1915 = vunpack.c.l.b16 %v1213
        %v1916 = vunpack.c.h.b16 %v1213
        %v1917 = vunpack.c.l.b16 %v1214
        %v1918 = vunpack.c.h.b16 %v1214
        %v1919 = vunpack.c.l.b16 %v1215
        %v1920 = vunpack.c.h.b16 %v1215
        %v1921 = vunpack.c.l.b16 %v1216
        %v1922 = vunpack.c.h.b16 %v1216
        %v1923 = vunpack.c.l.b16 %v1217
        %v1924 = vunpack.c.h.b16 %v1217
        %v1925 = vunpack.c.l.b16 %v1218
        %v1926 = vunpack.c.h.b16 %v1218
        %v1927 = vunpack.c.l.b16 %v1219
        %v1928 = vunpack.c.h.b16 %v1219
        %v1929 = vunpack.c.l.b16 %v1220
        %v1930 = vunpack.c.h.b16 %v1220
        %v1931 = vunpack.c.l.b16 %v1221
        %v1932 = vunpack.c.h.b16 %v1221
        %v1933 = vunpack.c.l.b16 %v1222
        %v1934 = vunpack.c.h.b16 %v1222
        %v1935 = vunpack.c.l.b16 %v1223
        %v1936 = vunpack.c.h.b16 %v1223
        %v1937 = vunpack.c.l.b16 %v1224
        %v1938 = vunpack.c.h.b16 %v1224
        %v1939 = vpack.c.b16 %v1541, %v1539
        %v1940 = vpack.c.b16 %v1542, %v1540
        %v1941 = vpack.c.b16 %v1545, %v1543
        %v1942 = vpack.c.b16 %v1546, %v1544
        %v1943 = vpack.c.b16 %v1549, %v1547
        %v1944 = vpack.c.b16 %v1550, %v1548
        %v1945 = vpack.c.b16 %v1553, %v1551
        %v1946 = vpack.c.b16 %v1554, %v1552
        %v1947 = vpack.c.b16 %v1557, %v1555
        %v1948 = vpack.c.b16 %v1558, %v1556
        %v1949 = vpack.c.b16 %v1561, %v1559
        %v1950 = vpack.c.b16 %v1562, %v1560
        %v1951 = vpack.c.b16 %v1565, %v1563
        %v1952 = vpack.c.b16 %v1566, %v1564
        %v1953 = vpack.c.b16 %v1569, %v1567
        %v1954 = vpack.c.b16 %v1570, %v1568
        %v1955 = vpack.c.b16 %v1573, %v1571
        %v1956 = vpack.c.b16 %v1574, %v1572
        %v1957 = vpack.c.b16 %v1577, %v1575
        %v1958 = vpack.c.b16 %v1578, %v1576
        %v1959 = vpack.c.b16 %v1581, %v1579
        %v1960 = vpack.c.b16 %v1582, %v1580
        %v1961 = vpack.c.b16 %v1585, %v1583
        %v1962 = vpack.c.b16 %v1586, %v1584
        %v1963 = vpack.c.b16 %v1589, %v1587
        %v1964 = vpack.c.b16 %v1590, %v1588
        %v1965 = vpack.c.b16 %v1593, %v1591
        %v1966 = vpack.c.b16 %v1594, %v1592
        %v1967 = vpack.c.b16 %v1597, %v1595
        %v1968 = vpack.c.b16 %v1598, %v1596
        %v1969 = vpack.c.b16 %v1601, %v1599
        %v1970 = vpack.c.b16 %v1602, %v1600
        %v1971 = vpack.c.b16 %v1605, %v1603
        %v1972 = vpack.c.b16 %v1606, %v1604
        %v1973 = vpack.c.b16 %v1609, %v1607
        %v1974 = vpack.c.b16 %v1610, %v1608
        %v1975 = vpack.c.b16 %v1613, %v1611
        %v1976 = vpack.c.b16 %v1614, %v1612
        %v1977 = vpack.c.b16 %v1617, %v1615
        %v1978 = vpack.c.b16 %v1618, %v1616
        %v1979 = vpack.c.b16 %v1621, %v1619
        %v1980 = vpack.c.b16 %v1622, %v1620
        %v1981 = vpack.c.b16 %v1625, %v1623
        %v1982 = vpack.c.b16 %v1626, %v1624
        %v1983 = vpack.c.b16 %v1629, %v1627
        %v1984 = vpack.c.b16 %v1630, %v1628
        %v1985 = vpack.c.b16 %v1633, %v1631
        %v1986 = vpack.c.b16 %v1634, %v1632
        %v1987 = vpack.c.b16 %v1637, %v1635
        %v1988 = vpack.c.b16 %v1638, %v1636
        %v1989 = vpack.c.b16 %v1641, %v1639
        %v1990 = vpack.c.b16 %v1642, %v1640
        %v1991 = vpack.c.b16 %v1645, %v1643
        %v1992 = vpack.c.b16 %v1646, %v1644
        %v1993 = vpack.c.b16 %v1649, %v1647
        %v1994 = vpack.c.b16 %v1650, %v1648
        %v1995 = vpack.c.b16 %v1653, %v1651
        %v1996 = vpack.c.b16 %v1654, %v1652
        %v1997 = vpack.c.b16 %v1657, %v1655
        %v1998 = vpack.c.b16 %v1658, %v1656
        %v1999 = vpack.c.b16 %v1661, %v1659
        %v2000 = vpack.c.b16 %v1662, %v1660
        %v2001 = vpack.c.b16 %v1665, %v1663
        %v2002 = vpack.c.b16 %v1666, %v1664
        %v2003 = vpack.c.b16 %v1669, %v1667
        %v2004 = vpack.c.b16 %v1670, %v1668
        %v2005 = vpack.c.b16 %v1673, %v1671
        %v2006 = vpack.c.b16 %v1674, %v1672
        %v2007 = vpack.c.b16 %v1677, %v1675
        %v2008 = vpack.c.b16 %v1678, %v1676
        %v2009 = vpack.c.b16 %v1681, %v1679
        %v2010 = vpack.c.b16 %v1682, %v1680
        %v2011 = vpack.c.b16 %v1685, %v1683
        %v2012 = vpack.c.b16 %v1686, %v1684
        %v2013 = vpack.c.b16 %v1689, %v1687
        %v2014 = vpack.c.b16 %v1690, %v1688
        %v2015 = vpack.c.b16 %v1693, %v1691
        %v2016 = vpack.c.b16 %v1694, %v1692
        %v2017 = vpack.c.b16 %v1697, %v1695
        %v2018 = vpack.c.b16 %v1698, %v1696
        %v2019 = vpack.c.b16 %v1701, %v1699
        %v2020 = vpack.c.b16 %v1702, %v1700
        %v2021 = vpack.c.b16 %v1705, %v1703
        %v2022 = vpack.c.b16 %v1706, %v1704
        %v2023 = vpack.c.b16 %v1709, %v1707
        %v2024 = vpack.c.b16 %v1710, %v1708
        %v2025 = vpack.c.b16 %v1713, %v1711
        %v2026 = vpack.c.b16 %v1714, %v1712
        %v2027 = vpack.c.b16 %v1717, %v1715
        %v2028 = vpack.c.b16 %v1718, %v1716
        %v2029 = vpack.c.b16 %v1721, %v1719
        %v2030 = vpack.c.b16 %v1722, %v1720
        %v2031 = vpack.c.b16 %v1725, %v1723
        %v2032 = vpack.c.b16 %v1726, %v1724
        %v2033 = vpack.c.b16 %v1729, %v1727
        %v2034 = vpack.c.b16 %v1730, %v1728
        %v2035 = vpack.c.b16 %v1733, %v1731
        %v2036 = vpack.c.b16 %v1734, %v1732
        %v2037 = vpack.c.b16 %v1737, %v1735
        %v2038 = vpack.c.b16 %v1738, %v1736
        %v2039 = vpack.c.b16 %v1741, %v1739
        %v2040 = vpack.c.b16 %v1742, %v1740
        %v2041 = vpack.c.b16 %v1745, %v1743
        %v2042 = vpack.c.b16 %v1746, %v1744
        %v2043 = vpack.c.b16 %v1749, %v1747
        %v2044 = vpack.c.b16 %v1750, %v1748
        %v2045 = vpack.c.b16 %v1753, %v1751
        %v2046 = vpack.c.b16 %v1754, %v1752
        %v2047 = vpack.c.b16 %v1757, %v1755
        %v2048 = vpack.c.b16 %v1758, %v1756
        %v2049 = vpack.c.b16 %v1761, %v1759
        %v2050 = vpack.c.b16 %v1762, %v1760
        %v2051 = vpack.c.b16 %v1765, %v1763
        %v2052 = vpack.c.b16 %v1766, %v1764
        %v2053 = vpack.c.b16 %v1769, %v1767
        %v2054 = vpack.c.b16 %v1770, %v1768
        %v2055 = vpack.c.b16 %v1773, %v1771
        %v2056 = vpack.c.b16 %v1774, %v1772
        %v2057 = vpack.c.b16 %v1777, %v1775
        %v2058 = vpack.c.b16 %v1778, %v1776
        %v2059 = vpack.c.b16 %v1781, %v1779
        %v2060 = vpack.c.b16 %v1782, %v1780
        %v2061 = vpack.c.b16 %v1785, %v1783
        %v2062 = vpack.c.b16 %v1786, %v1784
        %v2063 = vpack.c.b16 %v1789, %v1787
        %v2064 = vpack.c.b16 %v1790, %v1788
        %v2065 = vpack.c.b16 %v1793, %v1791
        %v2066 = vpack.c.b16 %v1794, %v1792
        %v2067 = vpack.c.b16 %v1797, %v1795
        %v2068 = vpack.c.b16 %v1798, %v1796
        %v2069 = vpack.c.b16 %v1801, %v1799
        %v2070 = vpack.c.b16 %v1802, %v1800
        %v2071 = vpack.c.b16 %v1805, %v1803
        %v2072 = vpack.c.b16 %v1806, %v1804
        %v2073 = vpack.c.b16 %v1809, %v1807
        %v2074 = vpack.c.b16 %v1810, %v1808
        %v2075 = vpack.c.b16 %v1813, %v1811
        %v2076 = vpack.c.b16 %v1814, %v1812
        %v2077 = vpack.c.b16 %v1817, %v1815
        %v2078 = vpack.c.b16 %v1818, %v1816
        %v2079 = vpack.c.b16 %v1821, %v1819
        %v2080 = vpack.c.b16 %v1822, %v1820
        %v2081 = vpack.c.b16 %v1825, %v1823
        %v2082 = vpack.c.b16 %v1826, %v1824
        %v2083 = vpack.c.b16 %v1829, %v1827
        %v2084 = vpack.c.b16 %v1830, %v1828
        %v2085 = vpack.c.b16 %v1833, %v1831
        %v2086 = vpack.c.b16 %v1834, %v1832
        %v2087 = vpack.c.b16 %v1837, %v1835
        %v2088 = vpack.c.b16 %v1838, %v1836
        %v2089 = vpack.c.b16 %v1841, %v1839
        %v2090 = vpack.c.b16 %v1842, %v1840
        %v2091 = vpack.c.b16 %v1845, %v1843
        %v2092 = vpack.c.b16 %v1846, %v1844
        %v2093 = vpack.c.b16 %v1849, %v1847
        %v2094 = vpack.c.b16 %v1850, %v1848
        %v2095 = vpack.c.b16 %v1853, %v1851
        %v2096 = vpack.c.b16 %v1854, %v1852
        %v2097 = vpack.c.b16 %v1857, %v1855
        %v2098 = vpack.c.b16 %v1858, %v1856
        %v2099 = vpack.c.b16 %v1861, %v1859
        %v2100 = vpack.c.b16 %v1862, %v1860
        %v2101 = vpack.c.b16 %v1865, %v1863
        %v2102 = vpack.c.b16 %v1866, %v1864
        %v2103 = vpack.c.b16 %v1869, %v1867
        %v2104 = vpack.c.b16 %v1870, %v1868
        %v2105 = vpack.c.b16 %v1873, %v1871
        %v2106 = vpack.c.b16 %v1874, %v1872
        %v2107 = vpack.c.b16 %v1877, %v1875
        %v2108 = vpack.c.b16 %v1878, %v1876
        %v2109 = vpack.c.b16 %v1881, %v1879
        %v2110 = vpack.c.b16 %v1882, %v1880
        %v2111 = vpack.c.b16 %v1885, %v1883
        %v2112 = vpack.c.b16 %v1886, %v1884
        %v2113 = vpack.c.b16 %v1889, %v1887
        %v2114 = vpack.c.b16 %v1890, %v1888
        %v2115 = vpack.c.b16 %v1893, %v1891
        %v2116 = vpack.c.b16 %v1894, %v1892
        %v2117 = vpack.c.b16 %v1897, %v1895
        %v2118 = vpack.c.b16 %v1898, %v1896
        %v2119 = vpack.c.b16 %v1901, %v1899
        %v2120 = vpack.c.b16 %v1902, %v1900
        %v2121 = vpack.c.b16 %v1905, %v1903
        %v2122 = vpack.c.b16 %v1906, %v1904
        %v2123 = vpack.c.b16 %v1909, %v1907
        %v2124 = vpack.c.b16 %v1910, %v1908
        %v2125 = vpack.c.b16 %v1913, %v1911
        %v2126 = vpack.c.b16 %v1914, %v1912
        %v2127 = vpack.c.b16 %v1917, %v1915
        %v2128 = vpack.c.b16 %v1918, %v1916
        %v2129 = vpack.c.b16 %v1921, %v1919
        %v2130 = vpack.c.b16 %v1922, %v1920
        %v2131 = vpack.c.b16 %v1925, %v1923
        %v2132 = vpack.c.b16 %v1926, %v1924
        %v2133 = vpack.c.b16 %v1929, %v1927
        %v2134 = vpack.c.b16 %v1930, %v1928
        %v2135 = vpack.c.b16 %v1933, %v1931
        %v2136 = vpack.c.b16 %v1934, %v1932
        %v2137 = vpack.c.b16 %v1937, %v1935
        %v2138 = vpack.c.b16 %v1938, %v1936
        %vm2339 = vcmask 523264
        %v2341 = vsel %vm2339, %v1317, 0
        %2343 = vmatprep.subr.bf16.mxu0 %v1954
        %2344 = vmatpush1.bf16.msra.mxu0 %v1953
        %2345 = vmatprep.subr.bf16.mxu0 %v1952
        %2346 = vmatpush1.bf16.msra.mxu0 %v1951
        %2347 = vmatprep.subr.bf16.mxu0 %v1950
        %2348 = vmatpush1.bf16.msra.mxu0 %v1949
        %2349 = vmatprep.subr.bf16.mxu0 %v1948
        %2350 = vmatpush1.bf16.msra.mxu0 %v1947
        %2351 = vmatprep.subr.bf16.mxu0 %v1946
        %2352 = vmatpush1.bf16.msra.mxu0 %v1945
        %2353 = vmatprep.subr.bf16.mxu0 %v1944
        %2354 = vmatpush1.bf16.msra.mxu0 %v1943
        %2355 = vmatprep.subr.bf16.mxu0 %v1942
        %2356 = vmatpush1.bf16.msra.mxu0 %v1941
        %2357 = vmatprep.subr.bf16.mxu0 %v1940
        %2358 = vmatpush1.bf16.msra.mxu0 %v1939
        %2359 = vmatprep.subr.bf16.mxu0 %v1970
        %2360 = vmatpush2.bf16.msra.mxu0 %v1969
        %2361 = vmatprep.subr.bf16.mxu0 %v1968
        %2362 = vmatpush2.bf16.msra.mxu0 %v1967
        %2363 = vmatprep.subr.bf16.mxu0 %v1966
        %2364 = vmatpush2.bf16.msra.mxu0 %v1965
        %2365 = vmatprep.subr.bf16.mxu0 %v1964
        %2366 = vmatpush2.bf16.msra.mxu0 %v1963
        %2367 = vmatprep.subr.bf16.mxu0 %v1962
        %2368 = vmatpush2.bf16.msra.mxu0 %v1961
        %2369 = vmatprep.subr.bf16.mxu0 %v1960
        %2370 = vmatpush2.bf16.msra.mxu0 %v1959
        %2371 = vmatprep.subr.bf16.mxu0 %v1958
        %2372 = vmatpush2.bf16.msra.mxu0 %v1957
        %2373 = vmatprep.subr.bf16.mxu0 %v1956
        %2374 = vmatpush2.bf16.msra.mxu0 %v1955
        %2375 = vmatprep.mubr.bf16.mxu0 %v1276
        %2376 = vmatmul.mubr.bf16.gmra.mxu0 %v1262
        %v2377 = vpop.f32.mrf.mxu0
        %v2378 = vadd.f32 %v1230, %v2377
        %v2379 = vpop.f32.mrf.mxu0
        %v2380 = vadd.f32 %v1234, %v2379
        %v2381 = vpop.f32.mrf.mxu0
        %v2382 = vpop.f32.mrf.mxu0
        %2383 = vdwg.mxu0
        %2384 = vmatprep.subr.bf16.mxu0 %v1986
        %2385 = vmatpush1.bf16.msra.mxu0 %v1985
        %2386 = vmatprep.subr.bf16.mxu0 %v1984
        %2387 = vmatpush1.bf16.msra.mxu0 %v1983
        %2388 = vmatprep.subr.bf16.mxu0 %v1982
        %2389 = vmatpush1.bf16.msra.mxu0 %v1981
        %2390 = vmatprep.subr.bf16.mxu0 %v1980
        %2391 = vmatpush1.bf16.msra.mxu0 %v1979
        %2392 = vmatprep.subr.bf16.mxu0 %v1978
        %2393 = vmatpush1.bf16.msra.mxu0 %v1977
        %2394 = vmatprep.subr.bf16.mxu0 %v1976
        %2395 = vmatpush1.bf16.msra.mxu0 %v1975
        %2396 = vmatprep.subr.bf16.mxu0 %v1974
        %2397 = vmatpush1.bf16.msra.mxu0 %v1973
        %2398 = vmatprep.subr.bf16.mxu0 %v1972
        %2399 = vmatpush1.bf16.msra.mxu0 %v1971
        %2400 = vmatprep.subr.bf16.mxu0 %v2002
        %2401 = vmatpush2.bf16.msra.mxu0 %v2001
        %2402 = vmatprep.subr.bf16.mxu0 %v2000
        %2403 = vmatpush2.bf16.msra.mxu0 %v1999
        %2404 = vmatprep.subr.bf16.mxu0 %v1998
        %2405 = vmatpush2.bf16.msra.mxu0 %v1997
        %2406 = vmatprep.subr.bf16.mxu0 %v1996
        %2407 = vmatpush2.bf16.msra.mxu0 %v1995
        %2408 = vmatprep.subr.bf16.mxu0 %v1994
        %2409 = vmatpush2.bf16.msra.mxu0 %v1993
        %2410 = vmatprep.subr.bf16.mxu0 %v1992
        %2411 = vmatpush2.bf16.msra.mxu0 %v1991
        %2412 = vmatprep.subr.bf16.mxu0 %v1990
        %2413 = vmatpush2.bf16.msra.mxu0 %v1989
        %2414 = vmatprep.subr.bf16.mxu0 %v1988
        %2415 = vmatpush2.bf16.msra.mxu0 %v1987
        %2416 = vmatprep.mubr.bf16.mxu0 %v1286
        %2417 = vmatmul.mubr.bf16.gmra.mxu0 %v1284
        %v2418 = vpop.f32.mrf.mxu0
        %v2419 = vadd.f32 %v2378, %v2418
        %v2420 = vpop.f32.mrf.mxu0
        %v2421 = vadd.f32 %v2380, %v2420
        %v2422 = vpop.f32.mrf.mxu0
        %v2423 = vpop.f32.mrf.mxu0
        %2424 = vdwg.mxu0
        %2425 = vmatprep.subr.bf16.mxu0 %v2018
        %2426 = vmatpush1.bf16.msra.mxu0 %v2017
        %2427 = vmatprep.subr.bf16.mxu0 %v2016
        %2428 = vmatpush1.bf16.msra.mxu0 %v2015
        %2429 = vmatprep.subr.bf16.mxu0 %v2014
        %2430 = vmatpush1.bf16.msra.mxu0 %v2013
        %2431 = vmatprep.subr.bf16.mxu0 %v2012
        %2432 = vmatpush1.bf16.msra.mxu0 %v2011
        %2433 = vmatprep.subr.bf16.mxu0 %v2010
        %2434 = vmatpush1.bf16.msra.mxu0 %v2009
        %2435 = vmatprep.subr.bf16.mxu0 %v2008
        %2436 = vmatpush1.bf16.msra.mxu0 %v2007
        %2437 = vmatprep.subr.bf16.mxu0 %v2006
        %2438 = vmatpush1.bf16.msra.mxu0 %v2005
        %2439 = vmatprep.subr.bf16.mxu0 %v2004
        %2440 = vmatpush1.bf16.msra.mxu0 %v2003
        %2441 = vmatprep.subr.bf16.mxu0 %v2034
        %2442 = vmatpush2.bf16.msra.mxu0 %v2033
        %2443 = vmatprep.subr.bf16.mxu0 %v2032
        %2444 = vmatpush2.bf16.msra.mxu0 %v2031
        %2445 = vmatprep.subr.bf16.mxu0 %v2030
        %2446 = vmatpush2.bf16.msra.mxu0 %v2029
        %2447 = vmatprep.subr.bf16.mxu0 %v2028
        %2448 = vmatpush2.bf16.msra.mxu0 %v2027
        %2449 = vmatprep.subr.bf16.mxu0 %v2026
        %2450 = vmatpush2.bf16.msra.mxu0 %v2025
        %2451 = vmatprep.subr.bf16.mxu0 %v2024
        %2452 = vmatpush2.bf16.msra.mxu0 %v2023
        %2453 = vmatprep.subr.bf16.mxu0 %v2022
        %2454 = vmatpush2.bf16.msra.mxu0 %v2021
        %2455 = vmatprep.subr.bf16.mxu0 %v2020
        %2456 = vmatpush2.bf16.msra.mxu0 %v2019
        %2457 = vmatprep.mubr.bf16.mxu0 %v1283
        %2458 = vmatmul.mubr.bf16.gmra.mxu0 %v1269
        %v2459 = vpop.f32.mrf.mxu0
        %v2460 = vadd.f32 %v2419, %v2459
        %v2461 = vpop.f32.mrf.mxu0
        %v2462 = vadd.f32 %v2421, %v2461
        %v2463 = vpop.f32.mrf.mxu0
        %v2464 = vpop.f32.mrf.mxu0
        %2465 = vdwg.mxu0
        %2466 = vmatprep.subr.bf16.mxu0 %v2050
        %2467 = vmatpush1.bf16.msra.mxu0 %v2049
        %2468 = vmatprep.subr.bf16.mxu0 %v2048
        %2469 = vmatpush1.bf16.msra.mxu0 %v2047
        %2470 = vmatprep.subr.bf16.mxu0 %v2046
        %2471 = vmatpush1.bf16.msra.mxu0 %v2045
        %2472 = vmatprep.subr.bf16.mxu0 %v2044
        %2473 = vmatpush1.bf16.msra.mxu0 %v2043
        %2474 = vmatprep.subr.bf16.mxu0 %v2042
        %2475 = vmatpush1.bf16.msra.mxu0 %v2041
        %2476 = vmatprep.subr.bf16.mxu0 %v2040
        %2477 = vmatpush1.bf16.msra.mxu0 %v2039
        %2478 = vmatprep.subr.bf16.mxu0 %v2038
        %2479 = vmatpush1.bf16.msra.mxu0 %v2037
        %2480 = vmatprep.subr.bf16.mxu0 %v2036
        %2481 = vmatpush1.bf16.msra.mxu0 %v2035
        %2482 = vmatprep.subr.bf16.mxu0 %v2066
        %2483 = vmatpush2.bf16.msra.mxu0 %v2065
        %2484 = vmatprep.subr.bf16.mxu0 %v2064
        %2485 = vmatpush2.bf16.msra.mxu0 %v2063
        %2486 = vmatprep.subr.bf16.mxu0 %v2062
        %2487 = vmatpush2.bf16.msra.mxu0 %v2061
        %2488 = vmatprep.subr.bf16.mxu0 %v2060
        %2489 = vmatpush2.bf16.msra.mxu0 %v2059
        %2490 = vmatprep.subr.bf16.mxu0 %v2058
        %2491 = vmatpush2.bf16.msra.mxu0 %v2057
        %2492 = vmatprep.subr.bf16.mxu0 %v2056
        %2493 = vmatpush2.bf16.msra.mxu0 %v2055
        %2494 = vmatprep.subr.bf16.mxu0 %v2054
        %2495 = vmatpush2.bf16.msra.mxu0 %v2053
        %2496 = vmatprep.subr.bf16.mxu0 %v2052
        %2497 = vmatpush2.bf16.msra.mxu0 %v2051
        %2498 = vmatprep.mubr.bf16.mxu0 %v1287
        %2499 = vmatmul.mubr.bf16.gmra.mxu0 %v1285
        %v2500 = vpop.f32.mrf.mxu0
        %v2501 = vadd.f32 %v2460, %v2500
        %v2502 = vpop.f32.mrf.mxu0
        %v2503 = vadd.f32 %v2462, %v2502
        %v2504 = vpop.f32.mrf.mxu0
        %v2505 = vpop.f32.mrf.mxu0
        %2506 = vdwg.mxu0
        %2507 = vmatprep.subr.bf16.mxu0 %v2082
        %2508 = vmatpush1.bf16.msra.mxu0 %v2081
        %2509 = vmatprep.subr.bf16.mxu0 %v2080
        %2510 = vmatpush1.bf16.msra.mxu0 %v2079
        %2511 = vmatprep.subr.bf16.mxu0 %v2078
        %2512 = vmatpush1.bf16.msra.mxu0 %v2077
        %2513 = vmatprep.subr.bf16.mxu0 %v2076
        %2514 = vmatpush1.bf16.msra.mxu0 %v2075
        %2515 = vmatprep.subr.bf16.mxu0 %v2074
        %2516 = vmatpush1.bf16.msra.mxu0 %v2073
        %2517 = vmatprep.subr.bf16.mxu0 %v2072
        %2518 = vmatpush1.bf16.msra.mxu0 %v2071
        %2519 = vmatprep.subr.bf16.mxu0 %v2070
        %2520 = vmatpush1.bf16.msra.mxu0 %v2069
        %2521 = vmatprep.subr.bf16.mxu0 %v2068
        %2522 = vmatpush1.bf16.msra.mxu0 %v2067
        %2523 = vmatprep.subr.bf16.mxu0 %v2098
        %2524 = vmatpush2.bf16.msra.mxu0 %v2097
        %2525 = vmatprep.subr.bf16.mxu0 %v2096
        %2526 = vmatpush2.bf16.msra.mxu0 %v2095
        %2527 = vmatprep.subr.bf16.mxu0 %v2094
        %2528 = vmatpush2.bf16.msra.mxu0 %v2093
        %2529 = vmatprep.subr.bf16.mxu0 %v2092
        %2530 = vmatpush2.bf16.msra.mxu0 %v2091
        %2531 = vmatprep.subr.bf16.mxu0 %v2090
        %2532 = vmatpush2.bf16.msra.mxu0 %v2089
        %2533 = vmatprep.subr.bf16.mxu0 %v2088
        %2534 = vmatpush2.bf16.msra.mxu0 %v2087
        %2535 = vmatprep.subr.bf16.mxu0 %v2086
        %2536 = vmatpush2.bf16.msra.mxu0 %v2085
        %2537 = vmatprep.subr.bf16.mxu0 %v2084
        %2538 = vmatpush2.bf16.msra.mxu0 %v2083
        %2539 = vmatprep.mubr.bf16.mxu0 %v1324
        %2540 = vmatmul.mubr.bf16.gmra.mxu0 %v1310
        %v2541 = vpop.f32.mrf.mxu0
        %v2542 = vadd.f32 %v2501, %v2541
        %v2543 = vpop.f32.mrf.mxu0
        %v2544 = vadd.f32 %v2503, %v2543
        %v2545 = vpop.f32.mrf.mxu0
        %v2546 = vpop.f32.mrf.mxu0
        %2547 = vdwg.mxu0
        %2548 = vmatprep.subr.bf16.mxu0 %v2114
        %2549 = vmatpush1.bf16.msra.mxu0 %v2113
        %2550 = vmatprep.subr.bf16.mxu0 %v2112
        %2551 = vmatpush1.bf16.msra.mxu0 %v2111
        %2552 = vmatprep.subr.bf16.mxu0 %v2110
        %2553 = vmatpush1.bf16.msra.mxu0 %v2109
        %2554 = vmatprep.subr.bf16.mxu0 %v2108
        %2555 = vmatpush1.bf16.msra.mxu0 %v2107
        %2556 = vmatprep.subr.bf16.mxu0 %v2106
        %2557 = vmatpush1.bf16.msra.mxu0 %v2105
        %2558 = vmatprep.subr.bf16.mxu0 %v2104
        %2559 = vmatpush1.bf16.msra.mxu0 %v2103
        %2560 = vmatprep.subr.bf16.mxu0 %v2102
        %2561 = vmatpush1.bf16.msra.mxu0 %v2101
        %2562 = vmatprep.subr.bf16.mxu0 %v2100
        %2563 = vmatpush1.bf16.msra.mxu0 %v2099
        %2564 = vmatprep.subr.bf16.mxu0 %v2130
        %2565 = vmatpush2.bf16.msra.mxu0 %v2129
        %2566 = vmatprep.subr.bf16.mxu0 %v2128
        %2567 = vmatpush2.bf16.msra.mxu0 %v2127
        %2568 = vmatprep.subr.bf16.mxu0 %v2126
        %2569 = vmatpush2.bf16.msra.mxu0 %v2125
        %2570 = vmatprep.subr.bf16.mxu0 %v2124
        %2571 = vmatpush2.bf16.msra.mxu0 %v2123
        %2572 = vmatprep.subr.bf16.mxu0 %v2122
        %2573 = vmatpush2.bf16.msra.mxu0 %v2121
        %2574 = vmatprep.subr.bf16.mxu0 %v2120
        %2575 = vmatpush2.bf16.msra.mxu0 %v2119
        %2576 = vmatprep.subr.bf16.mxu0 %v2118
        %2577 = vmatpush2.bf16.msra.mxu0 %v2117
        %2578 = vmatprep.subr.bf16.mxu0 %v2116
        %2579 = vmatpush2.bf16.msra.mxu0 %v2115
        %2580 = vmatprep.mubr.bf16.mxu0 %v1326
        %2581 = vmatmul.mubr.bf16.gmra.mxu0 %v1325
        %v2582 = vpop.f32.mrf.mxu0
        %v2583 = vadd.f32 %v2542, %v2582
        %v2584 = vpop.f32.mrf.mxu0
        %v2585 = vadd.f32 %v2544, %v2584
        %v2586 = vpop.f32.mrf.mxu0
        %v2587 = vpop.f32.mrf.mxu0
        %2588 = vdwg.mxu0
        %2589 = vmatprep.subr.bf16.mxu0 0
        %2590 = vmatpush1.bf16.msra.mxu0 0
        %2591 = vmatprep.subr.bf16.mxu0 0
        %2592 = vmatpush1.bf16.msra.mxu0 0
        %2593 = vmatprep.subr.bf16.mxu0 0
        %2594 = vmatpush1.bf16.msra.mxu0 0
        %2595 = vmatprep.subr.bf16.mxu0 0
        %2596 = vmatpush1.bf16.msra.mxu0 0
        %2597 = vmatprep.subr.bf16.mxu0 %v2138
        %2598 = vmatpush1.bf16.msra.mxu0 %v2137
        %2599 = vmatprep.subr.bf16.mxu0 %v2136
        %2600 = vmatpush1.bf16.msra.mxu0 %v2135
        %2601 = vmatprep.subr.bf16.mxu0 %v2134
        %2602 = vmatpush1.bf16.msra.mxu0 %v2133
        %2603 = vmatprep.subr.bf16.mxu0 %v2132
        %2604 = vmatpush1.bf16.msra.mxu0 %v2131
        %2605 = vmatprep.subr.bf16.mxu0 0
        %2606 = vmatpush2.bf16.msra.mxu0 0
        %2607 = vmatprep.subr.bf16.mxu0 0
        %2608 = vmatpush2.bf16.msra.mxu0 0
        %2609 = vmatprep.subr.bf16.mxu0 0
        %2610 = vmatpush2.bf16.msra.mxu0 0
        %2611 = vmatprep.subr.bf16.mxu0 0
        %2612 = vmatpush2.bf16.msra.mxu0 0
        %2613 = vmatprep.subr.bf16.mxu0 0
        %2614 = vmatpush2.bf16.msra.mxu0 0
        %2615 = vmatprep.subr.bf16.mxu0 0
        %2616 = vmatpush2.bf16.msra.mxu0 0
        %2617 = vmatprep.subr.bf16.mxu0 0
        %2618 = vmatpush2.bf16.msra.mxu0 0
        %2619 = vmatprep.subr.bf16.mxu0 0
        %2620 = vmatpush2.bf16.msra.mxu0 0
        %2621 = vmatprep.mubr.bf16.mxu0 0
        %2622 = vmatmul.mubr.bf16.gmra.mxu0 %v2341
        %v2623 = vpop.f32.mrf.mxu0
        %v2624 = vadd.f32 %v2583, %v2623
        %v2625 = vpop.f32.mrf.mxu0
        %v2626 = vadd.f32 %v2585, %v2625
        %v2627 = vpop.f32.mrf.mxu0
        %v2628 = vpop.f32.mrf.mxu0
        %2629 = vdwg.mxu0
        %v2632 = vcombine.low %v2624, %v2626
        %v2634 = vunpack.c.l.s4 1983009808
        %v2635 = vunpack.c.0.s8 %v2634
        %v2636 = vlaneseq
        %v2637 = vshrl.u32 %v2636, 7
        %v2638 = vsub.s32 %v2635, %v2637
        %v2639 = vrot.slane %v2632, %v2638
        %2641 = vst [vmem:[%s1014] sm:$0xf] %v2639
        %s2642 = sand.u32 %s98, 1
        %s2643 = scalar_lea.sflag [#allocation4], %s2642
        %s2644 = sand.u32 %s98, 1
        %s2645 = smul.addr %s2644, 4
        %s2646 = scalar_lea.vmem [#allocation3], %s2645
        // Predicated region
        $region71: #{_rnd_forward_impl.13} parent=65 // pred_check
          %p2647 = pneg %p108
        $region72: #{_rnd_forward_impl.13} parent=65 // pred_check_branch
          %2649 = sbr.rel (%p2647) target = $region74
        $region73: #{_rnd_forward_impl.13} parent=65 // pred_region
          %s2650 = smul.u32 2, %s17
          %s2652 = ssub.s32 64, 64
          %2653 = vsyncadd %s2643, %s2652
          %s2654 = smul.addr %s2650, 32
          %s2655 = scalar_lea.hbm %s3, %s2654
          %s2657 = sshll.u32 %s2646, 4
          %s2658 = int_to_ptr.vmem [resolvable:$true] %s2657
          %2660 = dma.vmem_to_hbm [thread:$0]  %s2658, 64, %s2655, %s2643
        $region74: #{_rnd_forward_impl.13} parent=65 // pred_fallthru
          _
      $region66: #{_rnd_forward_impl.13} parent=5 // pred_fallthru
        _
      %p2661 = scmp.le.s32.totalorder 2, %s12
      // Predicated region
      $region75: #{_rnd_forward_impl.13} parent=5 // pred_check
        %p2662 = pneg %p2661
      $region76: #{_rnd_forward_impl.13} parent=5 // pred_check_branch
        %2664 = sbr.rel (%p2662) target = $region78
      $region77: #{_rnd_forward_impl.13} parent=5 // pred_region
        %s2665 = ssub.s32 %s12, 2
        // Predicated region
        $region79: #{_rnd_forward_impl.13} parent=77 // pred_check
          %p2666 = pneg %p114
        $region80: #{_rnd_forward_impl.13} parent=77 // pred_check_branch
          %2668 = sbr.rel (%p2666) target = $region82
        $region81: #{_rnd_forward_impl.13} parent=77 // pred_region
          %s2669 = sand.u32 %s99, 1
          %s2670 = scalar_lea.sflag [#allocation4], %s2669
          %s2671 = sand.u32 %s99, 1
          %s2672 = smul.addr %s2671, 4
          %s2673 = scalar_lea.vmem [#allocation3], %s2672
          %2674 = dma.done %s2670, 64
        $region82: #{_rnd_forward_impl.13} parent=77 // pred_fallthru
          _
      $region78: #{_rnd_forward_impl.13} parent=5 // pred_fallthru
        _
    $region6: #{_rnd_forward_impl.13} parent=1 // loop_footer
      %s16 = sadd.s32 1, %s12
    $region7: #{_rnd_forward_impl.13} parent=1 // loop_footer_branch
      %11 = sbr.rel target = $region3
    $region8: #{_rnd_forward_impl.13} parent=1 // loop_exit
      _
    %2675 = vsyncpa [#allocation4], 1
    %s2676 = scalar_lea.sflag [#allocation4], 1
    %2677 = vsyncpa %s2676, 1

</llo_original>
